<compile_context>
chip_gen: v7x
topology: tpu7x:2x2x1
jax: 0.10.0
libtpu: 0.0.40
codegen_flags: <defaults>
</compile_context>

<pallas_src>
import functools

import jax
import jax.numpy as jnp
from jax.experimental import pallas as pl
from jax.experimental.pallas import tpu as pltpu


def _fused_two_layer_kernel(xq_ref, w1_ref, b1_ref, a1_ref, w2_ref, b2_ref, a2_ref,
                            o_ref, act_ref, *, c1, c2, k, t2, w1c, w2c, tband):
    """One (batch, row-band) grid step.

    xq_ref : (1, 1, 4*tband, Wq) VMEM - pixel-unshuffled input band (4 quadrants stacked on rows)
    w1_ref : (c1*k*k,)   SMEM  - layer-1 weights with BN scale folded in, order [c, kh, kw]
    b1_ref : (c1,)       SMEM  - folded BN bias, layer 1
    a1_ref : (1,)        SMEM  - PReLU alpha, layer 1
    w2_ref : (c2*c1*k*k,) SMEM - layer-2 weights (BN folded), order [co, ci, kh, kw]
    b2_ref : (c2,)       SMEM
    a2_ref : (1,)        SMEM
    o_ref  : (1, c2, t2, w2c) VMEM - NCHW output band
    act_ref: (c1, t1, w1c)    VMEM scratch - layer-1 activation (stays on chip)
    """
    t1 = t2 + (k - 1)

    # ---- layer 1: Conv(1->c1, k, stride 2) + folded BN + PReLU, as per-tap VPU FMAs ----
    acc1 = [jnp.zeros((t1, w1c), jnp.float32) for _ in range(c1)]
    for kh in range(k):
        for kw in range(k):
            p = (kh % 2) * 2 + (kw % 2)        # which stride-2 quadrant
            dh, dw = kh // 2, kw // 2          # shift inside that quadrant
            r0 = p * tband + dh
            sl = xq_ref[0, 0, r0:r0 + t1, dw:dw + w1c]
            for c in range(c1):
                acc1[c] = acc1[c] + w1_ref[(c * k + kh) * k + kw] * sl
    alpha1 = a1_ref[0]
    for c in range(c1):
        y = acc1[c] + b1_ref[c]                # BN already folded into weights + bias
        act_ref[c] = jnp.where(y > 0, y, alpha1 * y)   # PReLU (single shared alpha)

    # ---- layer 2: Conv(c1->c2, k, stride 1) + folded BN + PReLU on VMEM-resident act ----
    acc2 = [jnp.zeros((t2, w2c), jnp.float32) for _ in range(c2)]
    for ci in range(c1):
        for kh in range(k):
            for kw in range(k):
                sl = act_ref[ci, kh:kh + t2, kw:kw + w2c]
                for co in range(c2):
                    acc2[co] = acc2[co] + w2_ref[((co * c1 + ci) * k + kh) * k + kw] * sl
    alpha2 = a2_ref[0]
    for co in range(c2):
        y = acc2[co] + b2_ref[co]
        o_ref[0, co] = jnp.where(y > 0, y, alpha2 * y)


def fused_conv_bn_prelu_x2(x, p1, p2, *, eps=1e-5, t2_target=32):
    """Fused [Conv(s=2)+BN+PReLU] -> [Conv(s=1)+BN+PReLU]. x: (B, 1, H, W) -> (B, C2, H2, W2) NCHW."""
    B, cin, H, W = x.shape
    C1, cin1, K, Kb = p1["w"].shape
    C2, c1b, K2, K2b = p2["w"].shape
    assert cin == 1 and cin1 == 1 and c1b == C1
    assert K == Kb == K2 == K2b and K % 2 == 1
    assert p1["stride"] == 2 and p2["stride"] == 1

    H1 = (H - K) // 2 + 1
    W1 = (W - K) // 2 + 1
    H2 = H1 - (K - 1)
    W2 = W1 - (K - 1)
    assert H2 >= 1 and W2 >= 1

    # --- row-band tiling over layer-2 output rows (second grid axis) ---
    if H2 <= t2_target:
        T2, nb = H2, 1
    else:
        T2 = max(8, (t2_target // 8) * 8)   # multiple of 8 -> aligned output row tiles
        nb = -(-H2 // T2)
    H2p = nb * T2
    halo = (K - 1) + (K - 1) // 2           # quadrant-row halo needed per band
    Tband = T2 + halo

    # --- pixel-unshuffle: stride-2 conv becomes 4 stride-1 shifted views ---
    Hq = max(H2p + halo, (H + 1) // 2)
    Wq = max(W1 + (K - 1) // 2, (W + 1) // 2)
    Hp, Wp = 2 * Hq, 2 * Wq
    xp = jnp.pad(x[:, 0].astype(jnp.float32), ((0, 0), (0, Hp - H), (0, Wp - W)))
    xq = xp.reshape(B, Hq, 2, Wq, 2).transpose(0, 2, 4, 1, 3).reshape(B, 4, Hq, Wq)
    # Overlapping row-bands (tiny ~halo/T2 duplication) so the kernel gets a plain
    # BlockSpec-pipelined window instead of an HBM-materialized im2col matrix.
    xq_bands = jnp.stack(
        [xq[:, :, j * T2: j * T2 + Tband, :].reshape(B, 4 * Tband, Wq) for j in range(nb)],
        axis=1)                              # (B, nb, 4*Tband, Wq)

    # --- fold eval-mode BatchNorm into conv weights / bias ---
    s1 = p1["gamma"] / jnp.sqrt(p1["var"] + eps)
    w1 = (p1["w"][:, 0] * s1[:, None, None]).astype(jnp.float32).reshape(-1)
    b1 = (p1["beta"] - p1["mean"] * s1).astype(jnp.float32)
    s2 = p2["gamma"] / jnp.sqrt(p2["var"] + eps)
    w2 = (p2["w"] * s2[:, None, None, None]).astype(jnp.float32).reshape(-1)
    b2 = (p2["beta"] - p2["mean"] * s2).astype(jnp.float32)
    a1 = jnp.asarray(p1["alpha"], jnp.float32).reshape(1)
    a2 = jnp.asarray(p2["alpha"], jnp.float32).reshape(1)

    T1 = T2 + (K - 1)
    kernel = functools.partial(_fused_two_layer_kernel, c1=C1, c2=C2, k=K,
                               t2=T2, w1c=W1, w2c=W2, tband=Tband)
    smem = pl.BlockSpec(memory_space=pltpu.MemorySpace.SMEM)

    out = pl.pallas_call(
        kernel,
        out_shape=jax.ShapeDtypeStruct((B, C2, H2p, W2), jnp.float32),
        grid=(B, nb),
        in_specs=[
            pl.BlockSpec((1, 1, 4 * Tband, Wq), lambda n, j: (n, j, 0, 0)),
            smem, smem, smem,        # layer-1 folded weights / bias / alpha
            smem, smem, smem,        # layer-2 folded weights / bias / alpha
        ],
        out_specs=pl.BlockSpec((1, C2, T2, W2), lambda n, j: (n, 0, j, 0)),
        scratch_shapes=[pltpu.VMEM((C1, T1, W1), jnp.float32)],
        compiler_params=pltpu.CompilerParams(
            dimension_semantics=("parallel", "parallel")),
    )(xq_bands, w1, b1, a1, w2, b2, a2)

    return out[:, :, :H2, :]


def init_basic_conv_params(key, layer_sizes, units, unit_scaling=1):
    """Deterministic synthetic parameters mirroring BasicConv.__init__ shapes."""
    params = []
    nin = 1
    stride = 2  # bn=True, pooling=None -> conv stride 2 for all but last layer
    for size in layer_sizes[:-1]:
        key, k1, k2, k3, k4 = jax.random.split(key, 5)
        params.append(dict(
            w=0.1 * jax.random.normal(k1, (units, nin, size, size), jnp.float32),
            gamma=1.0 + 0.1 * jax.random.normal(k2, (units,), jnp.float32),
            beta=0.1 * jax.random.normal(k3, (units,), jnp.float32),
            mean=0.05 * jax.random.normal(k4, (units,), jnp.float32),
            var=0.9 * jnp.ones((units,), jnp.float32),
            alpha=jnp.float32(0.25),          # PyTorch PReLU default init
            stride=stride,
        ))
        nin = units
        units *= unit_scaling
    size = layer_sizes[-1]
    key, k1, k2, k3, k4 = jax.random.split(key, 5)
    params.append(dict(
        w=0.1 * jax.random.normal(k1, (units, nin, size, size), jnp.float32),
        gamma=1.0 + 0.1 * jax.random.normal(k2, (units,), jnp.float32),
        beta=0.1 * jax.random.normal(k3, (units,), jnp.float32),
        mean=0.05 * jax.random.normal(k4, (units,), jnp.float32),
        var=0.9 * jnp.ones((units,), jnp.float32),
        alpha=jnp.float32(0.25),
        stride=1,                              # final conv has stride 1
    ))
    return params


def basic_conv_forward(params, x):
    """Matches BasicConv.forward (filled=False): NCHW (or NHW) in -> NCHW out."""
    if x.ndim < 4:
        x = x[:, None, :, :]                   # unsqueeze(1)
    assert len(params) == 2, "fused kernel specialized to the 2-layer [5,5] config"
    return fused_conv_bn_prelu_x2(x, params[0], params[1])


def _ref_layer(x_nchw, p, eps=1e-5):
    y = jax.lax.conv_general_dilated(
        x_nchw, p["w"], (p["stride"], p["stride"]), "VALID",
        dimension_numbers=("NCHW", "OIHW", "NCHW"),
        precision=jax.lax.Precision.HIGHEST)
    scale = p["gamma"] / jnp.sqrt(p["var"] + eps)
    shift = p["beta"] - p["mean"] * scale
    y = y * scale[None, :, None, None] + shift[None, :, None, None]
    return jnp.where(y > 0, y, p["alpha"] * y)


if __name__ == "__main__":
    key = jax.random.PRNGKey(0)
    kp, kx = jax.random.split(key)

    layer_sizes = [5, 5]
    units = 4
    params = init_basic_conv_params(kp, layer_sizes, units)

    # 3-D input (B, H, W) -> forward unsqueezes a channel dim, like PyTorch.
    x = jax.random.normal(kx, (2, 16, 16), jnp.float32)

    out = basic_conv_forward(params, x)
    out = jax.block_until_ready(out)
    assert out.shape == (2, 4, 2, 2), out.shape

    # Pure-JAX reference check of the same forward pass.
    xr = x[:, None, :, :]
    for p in params:
        xr = _ref_layer(xr, p)
    assert jnp.allclose(out, xr, atol=1e-3, rtol=1e-3), float(jnp.max(jnp.abs(out - xr)))

    print("KERNEL_OK")
</pallas_src>

<mosaic_0001>
module attributes {stable_mosaic.version = 11 : i64} {
  func.func @_fused_two_layer_kernel(%arg0: i32, %arg1: i32, %arg2: memref<1x1x32x8xf32, #tpu.memory_space<vmem>>, %arg3: memref<100xf32, #tpu.memory_space<smem>>, %arg4: memref<4xf32, #tpu.memory_space<smem>>, %arg5: memref<1xf32, #tpu.memory_space<smem>>, %arg6: memref<400xf32, #tpu.memory_space<smem>>, %arg7: memref<4xf32, #tpu.memory_space<smem>>, %arg8: memref<1xf32, #tpu.memory_space<smem>>, %arg9: memref<1x4x2x2xf32, #tpu.memory_space<vmem>>, %arg10: memref<4x6x6xf32, #tpu.memory_space<vmem>>) attributes {dimension_semantics = [#tpu.dimension_semantics<parallel>, #tpu.dimension_semantics<parallel>], iteration_bounds = array<i64: 2, 1>, scalar_prefetch = 0 : i64, scratch_operands = 1 : i64, tpu.core_type = #tpu.core_type<tc>, window_params = [{transform_indices = @transform_0, window_bounds = array<i64: 1, 1, 32, 8>}, {transform_indices = @transform_1, window_bounds = array<i64: 100>}, {transform_indices = @transform_2, window_bounds = array<i64: 4>}, {transform_indices = @transform_3, window_bounds = array<i64: 1>}, {transform_indices = @transform_4, window_bounds = array<i64: 400>}, {transform_indices = @transform_5, window_bounds = array<i64: 4>}, {transform_indices = @transform_6, window_bounds = array<i64: 1>}, {transform_indices = @transform_7, window_bounds = array<i64: 1, 4, 2, 2>}]} {
    %cst = arith.constant 0.000000e+00 : f32
    %0 = vector.broadcast %cst : f32 to vector<6x6xf32>
    %cst_0 = arith.constant 0.000000e+00 : f32
    %1 = vector.broadcast %cst_0 : f32 to vector<6x6xf32>
    %cst_1 = arith.constant 0.000000e+00 : f32
    %2 = vector.broadcast %cst_1 : f32 to vector<6x6xf32>
    %cst_2 = arith.constant 0.000000e+00 : f32
    %3 = vector.broadcast %cst_2 : f32 to vector<6x6xf32>
    %c0 = arith.constant 0 : index
    %c0_3 = arith.constant 0 : index
    %c0_4 = arith.constant 0 : index
    %c0_5 = arith.constant 0 : index
    %4 = vector.load %arg2[%c0, %c0_3, %c0_4, %c0_5] : memref<1x1x32x8xf32, #tpu.memory_space<vmem>>, vector<1x1x6x6xf32>
    %5 = vector.shape_cast %4 : vector<1x1x6x6xf32> to vector<6x6xf32>
    %c0_6 = arith.constant 0 : index
    %6 = memref.load %arg3[%c0_6] : memref<100xf32, #tpu.memory_space<smem>>
    %7 = vector.broadcast %6 : f32 to vector<6x6xf32>
    %8 = arith.mulf %7, %5 : vector<6x6xf32>
    %9 = arith.addf %0, %8 : vector<6x6xf32>
    %c25 = arith.constant 25 : index
    %10 = memref.load %arg3[%c25] : memref<100xf32, #tpu.memory_space<smem>>
    %11 = vector.broadcast %10 : f32 to vector<6x6xf32>
    %12 = arith.mulf %11, %5 : vector<6x6xf32>
    %13 = arith.addf %1, %12 : vector<6x6xf32>
    %c50 = arith.constant 50 : index
    %14 = memref.load %arg3[%c50] : memref<100xf32, #tpu.memory_space<smem>>
    %15 = vector.broadcast %14 : f32 to vector<6x6xf32>
    %16 = arith.mulf %15, %5 : vector<6x6xf32>
    %17 = arith.addf %2, %16 : vector<6x6xf32>
    %c75 = arith.constant 75 : index
    %18 = memref.load %arg3[%c75] : memref<100xf32, #tpu.memory_space<smem>>
    %19 = vector.broadcast %18 : f32 to vector<6x6xf32>
    %20 = arith.mulf %19, %5 : vector<6x6xf32>
    %21 = arith.addf %3, %20 : vector<6x6xf32>
    %c0_7 = arith.constant 0 : index
    %c0_8 = arith.constant 0 : index
    %c8 = arith.constant 8 : index
    %c0_9 = arith.constant 0 : index
    %22 = vector.load %arg2[%c0_7, %c0_8, %c8, %c0_9] : memref<1x1x32x8xf32, #tpu.memory_space<vmem>>, vector<1x1x6x6xf32>
    %23 = vector.shape_cast %22 : vector<1x1x6x6xf32> to vector<6x6xf32>
    %c1 = arith.constant 1 : index
    %24 = memref.load %arg3[%c1] : memref<100xf32, #tpu.memory_space<smem>>
    %25 = vector.broadcast %24 : f32 to vector<6x6xf32>
    %26 = arith.mulf %25, %23 : vector<6x6xf32>
    %27 = arith.addf %9, %26 : vector<6x6xf32>
    %c26 = arith.constant 26 : index
    %28 = memref.load %arg3[%c26] : memref<100xf32, #tpu.memory_space<smem>>
    %29 = vector.broadcast %28 : f32 to vector<6x6xf32>
    %30 = arith.mulf %29, %23 : vector<6x6xf32>
    %31 = arith.addf %13, %30 : vector<6x6xf32>
    %c51 = arith.constant 51 : index
    %32 = memref.load %arg3[%c51] : memref<100xf32, #tpu.memory_space<smem>>
    %33 = vector.broadcast %32 : f32 to vector<6x6xf32>
    %34 = arith.mulf %33, %23 : vector<6x6xf32>
    %35 = arith.addf %17, %34 : vector<6x6xf32>
    %c76 = arith.constant 76 : index
    %36 = memref.load %arg3[%c76] : memref<100xf32, #tpu.memory_space<smem>>
    %37 = vector.broadcast %36 : f32 to vector<6x6xf32>
    %38 = arith.mulf %37, %23 : vector<6x6xf32>
    %39 = arith.addf %21, %38 : vector<6x6xf32>
    %c0_10 = arith.constant 0 : index
    %c0_11 = arith.constant 0 : index
    %c0_12 = arith.constant 0 : index
    %c1_13 = arith.constant 1 : index
    %40 = vector.load %arg2[%c0_10, %c0_11, %c0_12, %c1_13] : memref<1x1x32x8xf32, #tpu.memory_space<vmem>>, vector<1x1x6x6xf32>
    %41 = vector.shape_cast %40 : vector<1x1x6x6xf32> to vector<6x6xf32>
    %c2 = arith.constant 2 : index
    %42 = memref.load %arg3[%c2] : memref<100xf32, #tpu.memory_space<smem>>
    %43 = vector.broadcast %42 : f32 to vector<6x6xf32>
    %44 = arith.mulf %43, %41 : vector<6x6xf32>
    %45 = arith.addf %27, %44 : vector<6x6xf32>
    %c27 = arith.constant 27 : index
    %46 = memref.load %arg3[%c27] : memref<100xf32, #tpu.memory_space<smem>>
    %47 = vector.broadcast %46 : f32 to vector<6x6xf32>
    %48 = arith.mulf %47, %41 : vector<6x6xf32>
    %49 = arith.addf %31, %48 : vector<6x6xf32>
    %c52 = arith.constant 52 : index
    %50 = memref.load %arg3[%c52] : memref<100xf32, #tpu.memory_space<smem>>
    %51 = vector.broadcast %50 : f32 to vector<6x6xf32>
    %52 = arith.mulf %51, %41 : vector<6x6xf32>
    %53 = arith.addf %35, %52 : vector<6x6xf32>
    %c77 = arith.constant 77 : index
    %54 = memref.load %arg3[%c77] : memref<100xf32, #tpu.memory_space<smem>>
    %55 = vector.broadcast %54 : f32 to vector<6x6xf32>
    %56 = arith.mulf %55, %41 : vector<6x6xf32>
    %57 = arith.addf %39, %56 : vector<6x6xf32>
    %c0_14 = arith.constant 0 : index
    %c0_15 = arith.constant 0 : index
    %c8_16 = arith.constant 8 : index
    %c1_17 = arith.constant 1 : index
    %58 = vector.load %arg2[%c0_14, %c0_15, %c8_16, %c1_17] : memref<1x1x32x8xf32, #tpu.memory_space<vmem>>, vector<1x1x6x6xf32>
    %59 = vector.shape_cast %58 : vector<1x1x6x6xf32> to vector<6x6xf32>
    %c3 = arith.constant 3 : index
    %60 = memref.load %arg3[%c3] : memref<100xf32, #tpu.memory_space<smem>>
    %61 = vector.broadcast %60 : f32 to vector<6x6xf32>
    %62 = arith.mulf %61, %59 : vector<6x6xf32>
    %63 = arith.addf %45, %62 : vector<6x6xf32>
    %c28 = arith.constant 28 : index
    %64 = memref.load %arg3[%c28] : memref<100xf32, #tpu.memory_space<smem>>
    %65 = vector.broadcast %64 : f32 to vector<6x6xf32>
    %66 = arith.mulf %65, %59 : vector<6x6xf32>
    %67 = arith.addf %49, %66 : vector<6x6xf32>
    %c53 = arith.constant 53 : index
    %68 = memref.load %arg3[%c53] : memref<100xf32, #tpu.memory_space<smem>>
    %69 = vector.broadcast %68 : f32 to vector<6x6xf32>
    %70 = arith.mulf %69, %59 : vector<6x6xf32>
    %71 = arith.addf %53, %70 : vector<6x6xf32>
    %c78 = arith.constant 78 : index
    %72 = memref.load %arg3[%c78] : memref<100xf32, #tpu.memory_space<smem>>
    %73 = vector.broadcast %72 : f32 to vector<6x6xf32>
    %74 = arith.mulf %73, %59 : vector<6x6xf32>
    %75 = arith.addf %57, %74 : vector<6x6xf32>
    %c0_18 = arith.constant 0 : index
    %c0_19 = arith.constant 0 : index
    %c0_20 = arith.constant 0 : index
    %c2_21 = arith.constant 2 : index
    %76 = vector.load %arg2[%c0_18, %c0_19, %c0_20, %c2_21] : memref<1x1x32x8xf32, #tpu.memory_space<vmem>>, vector<1x1x6x6xf32>
    %77 = vector.shape_cast %76 : vector<1x1x6x6xf32> to vector<6x6xf32>
    %c4 = arith.constant 4 : index
    %78 = memref.load %arg3[%c4] : memref<100xf32, #tpu.memory_space<smem>>
    %79 = vector.broadcast %78 : f32 to vector<6x6xf32>
    %80 = arith.mulf %79, %77 : vector<6x6xf32>
    %81 = arith.addf %63, %80 : vector<6x6xf32>
    %c29 = arith.constant 29 : index
    %82 = memref.load %arg3[%c29] : memref<100xf32, #tpu.memory_space<smem>>
    %83 = vector.broadcast %82 : f32 to vector<6x6xf32>
    %84 = arith.mulf %83, %77 : vector<6x6xf32>
    %85 = arith.addf %67, %84 : vector<6x6xf32>
    %c54 = arith.constant 54 : index
    %86 = memref.load %arg3[%c54] : memref<100xf32, #tpu.memory_space<smem>>
    %87 = vector.broadcast %86 : f32 to vector<6x6xf32>
    %88 = arith.mulf %87, %77 : vector<6x6xf32>
    %89 = arith.addf %71, %88 : vector<6x6xf32>
    %c79 = arith.constant 79 : index
    %90 = memref.load %arg3[%c79] : memref<100xf32, #tpu.memory_space<smem>>
    %91 = vector.broadcast %90 : f32 to vector<6x6xf32>
    %92 = arith.mulf %91, %77 : vector<6x6xf32>
    %93 = arith.addf %75, %92 : vector<6x6xf32>
    %c0_22 = arith.constant 0 : index
    %c0_23 = arith.constant 0 : index
    %c16 = arith.constant 16 : index
    %c0_24 = arith.constant 0 : index
    %94 = vector.load %arg2[%c0_22, %c0_23, %c16, %c0_24] : memref<1x1x32x8xf32, #tpu.memory_space<vmem>>, vector<1x1x6x6xf32>
    %95 = vector.shape_cast %94 : vector<1x1x6x6xf32> to vector<6x6xf32>
    %c5 = arith.constant 5 : index
    %96 = memref.load %arg3[%c5] : memref<100xf32, #tpu.memory_space<smem>>
    %97 = vector.broadcast %96 : f32 to vector<6x6xf32>
    %98 = arith.mulf %97, %95 : vector<6x6xf32>
    %99 = arith.addf %81, %98 : vector<6x6xf32>
    %c30 = arith.constant 30 : index
    %100 = memref.load %arg3[%c30] : memref<100xf32, #tpu.memory_space<smem>>
    %101 = vector.broadcast %100 : f32 to vector<6x6xf32>
    %102 = arith.mulf %101, %95 : vector<6x6xf32>
    %103 = arith.addf %85, %102 : vector<6x6xf32>
    %c55 = arith.constant 55 : index
    %104 = memref.load %arg3[%c55] : memref<100xf32, #tpu.memory_space<smem>>
    %105 = vector.broadcast %104 : f32 to vector<6x6xf32>
    %106 = arith.mulf %105, %95 : vector<6x6xf32>
    %107 = arith.addf %89, %106 : vector<6x6xf32>
    %c80 = arith.constant 80 : index
    %108 = memref.load %arg3[%c80] : memref<100xf32, #tpu.memory_space<smem>>
    %109 = vector.broadcast %108 : f32 to vector<6x6xf32>
    %110 = arith.mulf %109, %95 : vector<6x6xf32>
    %111 = arith.addf %93, %110 : vector<6x6xf32>
    %c0_25 = arith.constant 0 : index
    %c0_26 = arith.constant 0 : index
    %c24 = arith.constant 24 : index
    %c0_27 = arith.constant 0 : index
    %112 = vector.load %arg2[%c0_25, %c0_26, %c24, %c0_27] : memref<1x1x32x8xf32, #tpu.memory_space<vmem>>, vector<1x1x6x6xf32>
    %113 = vector.shape_cast %112 : vector<1x1x6x6xf32> to vector<6x6xf32>
    %c6 = arith.constant 6 : index
    %114 = memref.load %arg3[%c6] : memref<100xf32, #tpu.memory_space<smem>>
    %115 = vector.broadcast %114 : f32 to vector<6x6xf32>
    %116 = arith.mulf %115, %113 : vector<6x6xf32>
    %117 = arith.addf %99, %116 : vector<6x6xf32>
    %c31 = arith.constant 31 : index
    %118 = memref.load %arg3[%c31] : memref<100xf32, #tpu.memory_space<smem>>
    %119 = vector.broadcast %118 : f32 to vector<6x6xf32>
    %120 = arith.mulf %119, %113 : vector<6x6xf32>
    %121 = arith.addf %103, %120 : vector<6x6xf32>
    %c56 = arith.constant 56 : index
    %122 = memref.load %arg3[%c56] : memref<100xf32, #tpu.memory_space<smem>>
    %123 = vector.broadcast %122 : f32 to vector<6x6xf32>
    %124 = arith.mulf %123, %113 : vector<6x6xf32>
    %125 = arith.addf %107, %124 : vector<6x6xf32>
    %c81 = arith.constant 81 : index
    %126 = memref.load %arg3[%c81] : memref<100xf32, #tpu.memory_space<smem>>
    %127 = vector.broadcast %126 : f32 to vector<6x6xf32>
    %128 = arith.mulf %127, %113 : vector<6x6xf32>
    %129 = arith.addf %111, %128 : vector<6x6xf32>
    %c0_28 = arith.constant 0 : index
    %c0_29 = arith.constant 0 : index
    %c16_30 = arith.constant 16 : index
    %c1_31 = arith.constant 1 : index
    %130 = vector.load %arg2[%c0_28, %c0_29, %c16_30, %c1_31] : memref<1x1x32x8xf32, #tpu.memory_space<vmem>>, vector<1x1x6x6xf32>
    %131 = vector.shape_cast %130 : vector<1x1x6x6xf32> to vector<6x6xf32>
    %c7 = arith.constant 7 : index
    %132 = memref.load %arg3[%c7] : memref<100xf32, #tpu.memory_space<smem>>
    %133 = vector.broadcast %132 : f32 to vector<6x6xf32>
    %134 = arith.mulf %133, %131 : vector<6x6xf32>
    %135 = arith.addf %117, %134 : vector<6x6xf32>
    %c32 = arith.constant 32 : index
    %136 = memref.load %arg3[%c32] : memref<100xf32, #tpu.memory_space<smem>>
    %137 = vector.broadcast %136 : f32 to vector<6x6xf32>
    %138 = arith.mulf %137, %131 : vector<6x6xf32>
    %139 = arith.addf %121, %138 : vector<6x6xf32>
    %c57 = arith.constant 57 : index
    %140 = memref.load %arg3[%c57] : memref<100xf32, #tpu.memory_space<smem>>
    %141 = vector.broadcast %140 : f32 to vector<6x6xf32>
    %142 = arith.mulf %141, %131 : vector<6x6xf32>
    %143 = arith.addf %125, %142 : vector<6x6xf32>
    %c82 = arith.constant 82 : index
    %144 = memref.load %arg3[%c82] : memref<100xf32, #tpu.memory_space<smem>>
    %145 = vector.broadcast %144 : f32 to vector<6x6xf32>
    %146 = arith.mulf %145, %131 : vector<6x6xf32>
    %147 = arith.addf %129, %146 : vector<6x6xf32>
    %c0_32 = arith.constant 0 : index
    %c0_33 = arith.constant 0 : index
    %c24_34 = arith.constant 24 : index
    %c1_35 = arith.constant 1 : index
    %148 = vector.load %arg2[%c0_32, %c0_33, %c24_34, %c1_35] : memref<1x1x32x8xf32, #tpu.memory_space<vmem>>, vector<1x1x6x6xf32>
    %149 = vector.shape_cast %148 : vector<1x1x6x6xf32> to vector<6x6xf32>
    %c8_36 = arith.constant 8 : index
    %150 = memref.load %arg3[%c8_36] : memref<100xf32, #tpu.memory_space<smem>>
    %151 = vector.broadcast %150 : f32 to vector<6x6xf32>
    %152 = arith.mulf %151, %149 : vector<6x6xf32>
    %153 = arith.addf %135, %152 : vector<6x6xf32>
    %c33 = arith.constant 33 : index
    %154 = memref.load %arg3[%c33] : memref<100xf32, #tpu.memory_space<smem>>
    %155 = vector.broadcast %154 : f32 to vector<6x6xf32>
    %156 = arith.mulf %155, %149 : vector<6x6xf32>
    %157 = arith.addf %139, %156 : vector<6x6xf32>
    %c58 = arith.constant 58 : index
    %158 = memref.load %arg3[%c58] : memref<100xf32, #tpu.memory_space<smem>>
    %159 = vector.broadcast %158 : f32 to vector<6x6xf32>
    %160 = arith.mulf %159, %149 : vector<6x6xf32>
    %161 = arith.addf %143, %160 : vector<6x6xf32>
    %c83 = arith.constant 83 : index
    %162 = memref.load %arg3[%c83] : memref<100xf32, #tpu.memory_space<smem>>
    %163 = vector.broadcast %162 : f32 to vector<6x6xf32>
    %164 = arith.mulf %163, %149 : vector<6x6xf32>
    %165 = arith.addf %147, %164 : vector<6x6xf32>
    %c0_37 = arith.constant 0 : index
    %c0_38 = arith.constant 0 : index
    %c16_39 = arith.constant 16 : index
    %c2_40 = arith.constant 2 : index
    %166 = vector.load %arg2[%c0_37, %c0_38, %c16_39, %c2_40] : memref<1x1x32x8xf32, #tpu.memory_space<vmem>>, vector<1x1x6x6xf32>
    %167 = vector.shape_cast %166 : vector<1x1x6x6xf32> to vector<6x6xf32>
    %c9 = arith.constant 9 : index
    %168 = memref.load %arg3[%c9] : memref<100xf32, #tpu.memory_space<smem>>
    %169 = vector.broadcast %168 : f32 to vector<6x6xf32>
    %170 = arith.mulf %169, %167 : vector<6x6xf32>
    %171 = arith.addf %153, %170 : vector<6x6xf32>
    %c34 = arith.constant 34 : index
    %172 = memref.load %arg3[%c34] : memref<100xf32, #tpu.memory_space<smem>>
    %173 = vector.broadcast %172 : f32 to vector<6x6xf32>
    %174 = arith.mulf %173, %167 : vector<6x6xf32>
    %175 = arith.addf %157, %174 : vector<6x6xf32>
    %c59 = arith.constant 59 : index
    %176 = memref.load %arg3[%c59] : memref<100xf32, #tpu.memory_space<smem>>
    %177 = vector.broadcast %176 : f32 to vector<6x6xf32>
    %178 = arith.mulf %177, %167 : vector<6x6xf32>
    %179 = arith.addf %161, %178 : vector<6x6xf32>
    %c84 = arith.constant 84 : index
    %180 = memref.load %arg3[%c84] : memref<100xf32, #tpu.memory_space<smem>>
    %181 = vector.broadcast %180 : f32 to vector<6x6xf32>
    %182 = arith.mulf %181, %167 : vector<6x6xf32>
    %183 = arith.addf %165, %182 : vector<6x6xf32>
    %c0_41 = arith.constant 0 : index
    %c0_42 = arith.constant 0 : index
    %c1_43 = arith.constant 1 : index
    %c0_44 = arith.constant 0 : index
    %184 = vector.load %arg2[%c0_41, %c0_42, %c1_43, %c0_44] : memref<1x1x32x8xf32, #tpu.memory_space<vmem>>, vector<1x1x6x6xf32>
    %185 = vector.shape_cast %184 : vector<1x1x6x6xf32> to vector<6x6xf32>
    %c10 = arith.constant 10 : index
    %186 = memref.load %arg3[%c10] : memref<100xf32, #tpu.memory_space<smem>>
    %187 = vector.broadcast %186 : f32 to vector<6x6xf32>
    %188 = arith.mulf %187, %185 : vector<6x6xf32>
    %189 = arith.addf %171, %188 : vector<6x6xf32>
    %c35 = arith.constant 35 : index
    %190 = memref.load %arg3[%c35] : memref<100xf32, #tpu.memory_space<smem>>
    %191 = vector.broadcast %190 : f32 to vector<6x6xf32>
    %192 = arith.mulf %191, %185 : vector<6x6xf32>
    %193 = arith.addf %175, %192 : vector<6x6xf32>
    %c60 = arith.constant 60 : index
    %194 = memref.load %arg3[%c60] : memref<100xf32, #tpu.memory_space<smem>>
    %195 = vector.broadcast %194 : f32 to vector<6x6xf32>
    %196 = arith.mulf %195, %185 : vector<6x6xf32>
    %197 = arith.addf %179, %196 : vector<6x6xf32>
    %c85 = arith.constant 85 : index
    %198 = memref.load %arg3[%c85] : memref<100xf32, #tpu.memory_space<smem>>
    %199 = vector.broadcast %198 : f32 to vector<6x6xf32>
    %200 = arith.mulf %199, %185 : vector<6x6xf32>
    %201 = arith.addf %183, %200 : vector<6x6xf32>
    %c0_45 = arith.constant 0 : index
    %c0_46 = arith.constant 0 : index
    %c9_47 = arith.constant 9 : index
    %c0_48 = arith.constant 0 : index
    %202 = vector.load %arg2[%c0_45, %c0_46, %c9_47, %c0_48] : memref<1x1x32x8xf32, #tpu.memory_space<vmem>>, vector<1x1x6x6xf32>
    %203 = vector.shape_cast %202 : vector<1x1x6x6xf32> to vector<6x6xf32>
    %c11 = arith.constant 11 : index
    %204 = memref.load %arg3[%c11] : memref<100xf32, #tpu.memory_space<smem>>
    %205 = vector.broadcast %204 : f32 to vector<6x6xf32>
    %206 = arith.mulf %205, %203 : vector<6x6xf32>
    %207 = arith.addf %189, %206 : vector<6x6xf32>
    %c36 = arith.constant 36 : index
    %208 = memref.load %arg3[%c36] : memref<100xf32, #tpu.memory_space<smem>>
    %209 = vector.broadcast %208 : f32 to vector<6x6xf32>
    %210 = arith.mulf %209, %203 : vector<6x6xf32>
    %211 = arith.addf %193, %210 : vector<6x6xf32>
    %c61 = arith.constant 61 : index
    %212 = memref.load %arg3[%c61] : memref<100xf32, #tpu.memory_space<smem>>
    %213 = vector.broadcast %212 : f32 to vector<6x6xf32>
    %214 = arith.mulf %213, %203 : vector<6x6xf32>
    %215 = arith.addf %197, %214 : vector<6x6xf32>
    %c86 = arith.constant 86 : index
    %216 = memref.load %arg3[%c86] : memref<100xf32, #tpu.memory_space<smem>>
    %217 = vector.broadcast %216 : f32 to vector<6x6xf32>
    %218 = arith.mulf %217, %203 : vector<6x6xf32>
    %219 = arith.addf %201, %218 : vector<6x6xf32>
    %c0_49 = arith.constant 0 : index
    %c0_50 = arith.constant 0 : index
    %c1_51 = arith.constant 1 : index
    %c1_52 = arith.constant 1 : index
    %220 = vector.load %arg2[%c0_49, %c0_50, %c1_51, %c1_52] : memref<1x1x32x8xf32, #tpu.memory_space<vmem>>, vector<1x1x6x6xf32>
    %221 = vector.shape_cast %220 : vector<1x1x6x6xf32> to vector<6x6xf32>
    %c12 = arith.constant 12 : index
    %222 = memref.load %arg3[%c12] : memref<100xf32, #tpu.memory_space<smem>>
    %223 = vector.broadcast %222 : f32 to vector<6x6xf32>
    %224 = arith.mulf %223, %221 : vector<6x6xf32>
    %225 = arith.addf %207, %224 : vector<6x6xf32>
    %c37 = arith.constant 37 : index
    %226 = memref.load %arg3[%c37] : memref<100xf32, #tpu.memory_space<smem>>
    %227 = vector.broadcast %226 : f32 to vector<6x6xf32>
    %228 = arith.mulf %227, %221 : vector<6x6xf32>
    %229 = arith.addf %211, %228 : vector<6x6xf32>
    %c62 = arith.constant 62 : index
    %230 = memref.load %arg3[%c62] : memref<100xf32, #tpu.memory_space<smem>>
    %231 = vector.broadcast %230 : f32 to vector<6x6xf32>
    %232 = arith.mulf %231, %221 : vector<6x6xf32>
    %233 = arith.addf %215, %232 : vector<6x6xf32>
    %c87 = arith.constant 87 : index
    %234 = memref.load %arg3[%c87] : memref<100xf32, #tpu.memory_space<smem>>
    %235 = vector.broadcast %234 : f32 to vector<6x6xf32>
    %236 = arith.mulf %235, %221 : vector<6x6xf32>
    %237 = arith.addf %219, %236 : vector<6x6xf32>
    %c0_53 = arith.constant 0 : index
    %c0_54 = arith.constant 0 : index
    %c9_55 = arith.constant 9 : index
    %c1_56 = arith.constant 1 : index
    %238 = vector.load %arg2[%c0_53, %c0_54, %c9_55, %c1_56] : memref<1x1x32x8xf32, #tpu.memory_space<vmem>>, vector<1x1x6x6xf32>
    %239 = vector.shape_cast %238 : vector<1x1x6x6xf32> to vector<6x6xf32>
    %c13 = arith.constant 13 : index
    %240 = memref.load %arg3[%c13] : memref<100xf32, #tpu.memory_space<smem>>
    %241 = vector.broadcast %240 : f32 to vector<6x6xf32>
    %242 = arith.mulf %241, %239 : vector<6x6xf32>
    %243 = arith.addf %225, %242 : vector<6x6xf32>
    %c38 = arith.constant 38 : index
    %244 = memref.load %arg3[%c38] : memref<100xf32, #tpu.memory_space<smem>>
    %245 = vector.broadcast %244 : f32 to vector<6x6xf32>
    %246 = arith.mulf %245, %239 : vector<6x6xf32>
    %247 = arith.addf %229, %246 : vector<6x6xf32>
    %c63 = arith.constant 63 : index
    %248 = memref.load %arg3[%c63] : memref<100xf32, #tpu.memory_space<smem>>
    %249 = vector.broadcast %248 : f32 to vector<6x6xf32>
    %250 = arith.mulf %249, %239 : vector<6x6xf32>
    %251 = arith.addf %233, %250 : vector<6x6xf32>
    %c88 = arith.constant 88 : index
    %252 = memref.load %arg3[%c88] : memref<100xf32, #tpu.memory_space<smem>>
    %253 = vector.broadcast %252 : f32 to vector<6x6xf32>
    %254 = arith.mulf %253, %239 : vector<6x6xf32>
    %255 = arith.addf %237, %254 : vector<6x6xf32>
    %c0_57 = arith.constant 0 : index
    %c0_58 = arith.constant 0 : index
    %c1_59 = arith.constant 1 : index
    %c2_60 = arith.constant 2 : index
    %256 = vector.load %arg2[%c0_57, %c0_58, %c1_59, %c2_60] : memref<1x1x32x8xf32, #tpu.memory_space<vmem>>, vector<1x1x6x6xf32>
    %257 = vector.shape_cast %256 : vector<1x1x6x6xf32> to vector<6x6xf32>
    %c14 = arith.constant 14 : index
    %258 = memref.load %arg3[%c14] : memref<100xf32, #tpu.memory_space<smem>>
    %259 = vector.broadcast %258 : f32 to vector<6x6xf32>
    %260 = arith.mulf %259, %257 : vector<6x6xf32>
    %261 = arith.addf %243, %260 : vector<6x6xf32>
    %c39 = arith.constant 39 : index
    %262 = memref.load %arg3[%c39] : memref<100xf32, #tpu.memory_space<smem>>
    %263 = vector.broadcast %262 : f32 to vector<6x6xf32>
    %264 = arith.mulf %263, %257 : vector<6x6xf32>
    %265 = arith.addf %247, %264 : vector<6x6xf32>
    %c64 = arith.constant 64 : index
    %266 = memref.load %arg3[%c64] : memref<100xf32, #tpu.memory_space<smem>>
    %267 = vector.broadcast %266 : f32 to vector<6x6xf32>
    %268 = arith.mulf %267, %257 : vector<6x6xf32>
    %269 = arith.addf %251, %268 : vector<6x6xf32>
    %c89 = arith.constant 89 : index
    %270 = memref.load %arg3[%c89] : memref<100xf32, #tpu.memory_space<smem>>
    %271 = vector.broadcast %270 : f32 to vector<6x6xf32>
    %272 = arith.mulf %271, %257 : vector<6x6xf32>
    %273 = arith.addf %255, %272 : vector<6x6xf32>
    %c0_61 = arith.constant 0 : index
    %c0_62 = arith.constant 0 : index
    %c17 = arith.constant 17 : index
    %c0_63 = arith.constant 0 : index
    %274 = vector.load %arg2[%c0_61, %c0_62, %c17, %c0_63] : memref<1x1x32x8xf32, #tpu.memory_space<vmem>>, vector<1x1x6x6xf32>
    %275 = vector.shape_cast %274 : vector<1x1x6x6xf32> to vector<6x6xf32>
    %c15 = arith.constant 15 : index
    %276 = memref.load %arg3[%c15] : memref<100xf32, #tpu.memory_space<smem>>
    %277 = vector.broadcast %276 : f32 to vector<6x6xf32>
    %278 = arith.mulf %277, %275 : vector<6x6xf32>
    %279 = arith.addf %261, %278 : vector<6x6xf32>
    %c40 = arith.constant 40 : index
    %280 = memref.load %arg3[%c40] : memref<100xf32, #tpu.memory_space<smem>>
    %281 = vector.broadcast %280 : f32 to vector<6x6xf32>
    %282 = arith.mulf %281, %275 : vector<6x6xf32>
    %283 = arith.addf %265, %282 : vector<6x6xf32>
    %c65 = arith.constant 65 : index
    %284 = memref.load %arg3[%c65] : memref<100xf32, #tpu.memory_space<smem>>
    %285 = vector.broadcast %284 : f32 to vector<6x6xf32>
    %286 = arith.mulf %285, %275 : vector<6x6xf32>
    %287 = arith.addf %269, %286 : vector<6x6xf32>
    %c90 = arith.constant 90 : index
    %288 = memref.load %arg3[%c90] : memref<100xf32, #tpu.memory_space<smem>>
    %289 = vector.broadcast %288 : f32 to vector<6x6xf32>
    %290 = arith.mulf %289, %275 : vector<6x6xf32>
    %291 = arith.addf %273, %290 : vector<6x6xf32>
    %c0_64 = arith.constant 0 : index
    %c0_65 = arith.constant 0 : index
    %c25_66 = arith.constant 25 : index
    %c0_67 = arith.constant 0 : index
    %292 = vector.load %arg2[%c0_64, %c0_65, %c25_66, %c0_67] : memref<1x1x32x8xf32, #tpu.memory_space<vmem>>, vector<1x1x6x6xf32>
    %293 = vector.shape_cast %292 : vector<1x1x6x6xf32> to vector<6x6xf32>
    %c16_68 = arith.constant 16 : index
    %294 = memref.load %arg3[%c16_68] : memref<100xf32, #tpu.memory_space<smem>>
    %295 = vector.broadcast %294 : f32 to vector<6x6xf32>
    %296 = arith.mulf %295, %293 : vector<6x6xf32>
    %297 = arith.addf %279, %296 : vector<6x6xf32>
    %c41 = arith.constant 41 : index
    %298 = memref.load %arg3[%c41] : memref<100xf32, #tpu.memory_space<smem>>
    %299 = vector.broadcast %298 : f32 to vector<6x6xf32>
    %300 = arith.mulf %299, %293 : vector<6x6xf32>
    %301 = arith.addf %283, %300 : vector<6x6xf32>
    %c66 = arith.constant 66 : index
    %302 = memref.load %arg3[%c66] : memref<100xf32, #tpu.memory_space<smem>>
    %303 = vector.broadcast %302 : f32 to vector<6x6xf32>
    %304 = arith.mulf %303, %293 : vector<6x6xf32>
    %305 = arith.addf %287, %304 : vector<6x6xf32>
    %c91 = arith.constant 91 : index
    %306 = memref.load %arg3[%c91] : memref<100xf32, #tpu.memory_space<smem>>
    %307 = vector.broadcast %306 : f32 to vector<6x6xf32>
    %308 = arith.mulf %307, %293 : vector<6x6xf32>
    %309 = arith.addf %291, %308 : vector<6x6xf32>
    %c0_69 = arith.constant 0 : index
    %c0_70 = arith.constant 0 : index
    %c17_71 = arith.constant 17 : index
    %c1_72 = arith.constant 1 : index
    %310 = vector.load %arg2[%c0_69, %c0_70, %c17_71, %c1_72] : memref<1x1x32x8xf32, #tpu.memory_space<vmem>>, vector<1x1x6x6xf32>
    %311 = vector.shape_cast %310 : vector<1x1x6x6xf32> to vector<6x6xf32>
    %c17_73 = arith.constant 17 : index
    %312 = memref.load %arg3[%c17_73] : memref<100xf32, #tpu.memory_space<smem>>
    %313 = vector.broadcast %312 : f32 to vector<6x6xf32>
    %314 = arith.mulf %313, %311 : vector<6x6xf32>
    %315 = arith.addf %297, %314 : vector<6x6xf32>
    %c42 = arith.constant 42 : index
    %316 = memref.load %arg3[%c42] : memref<100xf32, #tpu.memory_space<smem>>
    %317 = vector.broadcast %316 : f32 to vector<6x6xf32>
    %318 = arith.mulf %317, %311 : vector<6x6xf32>
    %319 = arith.addf %301, %318 : vector<6x6xf32>
    %c67 = arith.constant 67 : index
    %320 = memref.load %arg3[%c67] : memref<100xf32, #tpu.memory_space<smem>>
    %321 = vector.broadcast %320 : f32 to vector<6x6xf32>
    %322 = arith.mulf %321, %311 : vector<6x6xf32>
    %323 = arith.addf %305, %322 : vector<6x6xf32>
    %c92 = arith.constant 92 : index
    %324 = memref.load %arg3[%c92] : memref<100xf32, #tpu.memory_space<smem>>
    %325 = vector.broadcast %324 : f32 to vector<6x6xf32>
    %326 = arith.mulf %325, %311 : vector<6x6xf32>
    %327 = arith.addf %309, %326 : vector<6x6xf32>
    %c0_74 = arith.constant 0 : index
    %c0_75 = arith.constant 0 : index
    %c25_76 = arith.constant 25 : index
    %c1_77 = arith.constant 1 : index
    %328 = vector.load %arg2[%c0_74, %c0_75, %c25_76, %c1_77] : memref<1x1x32x8xf32, #tpu.memory_space<vmem>>, vector<1x1x6x6xf32>
    %329 = vector.shape_cast %328 : vector<1x1x6x6xf32> to vector<6x6xf32>
    %c18 = arith.constant 18 : index
    %330 = memref.load %arg3[%c18] : memref<100xf32, #tpu.memory_space<smem>>
    %331 = vector.broadcast %330 : f32 to vector<6x6xf32>
    %332 = arith.mulf %331, %329 : vector<6x6xf32>
    %333 = arith.addf %315, %332 : vector<6x6xf32>
    %c43 = arith.constant 43 : index
    %334 = memref.load %arg3[%c43] : memref<100xf32, #tpu.memory_space<smem>>
    %335 = vector.broadcast %334 : f32 to vector<6x6xf32>
    %336 = arith.mulf %335, %329 : vector<6x6xf32>
    %337 = arith.addf %319, %336 : vector<6x6xf32>
    %c68 = arith.constant 68 : index
    %338 = memref.load %arg3[%c68] : memref<100xf32, #tpu.memory_space<smem>>
    %339 = vector.broadcast %338 : f32 to vector<6x6xf32>
    %340 = arith.mulf %339, %329 : vector<6x6xf32>
    %341 = arith.addf %323, %340 : vector<6x6xf32>
    %c93 = arith.constant 93 : index
    %342 = memref.load %arg3[%c93] : memref<100xf32, #tpu.memory_space<smem>>
    %343 = vector.broadcast %342 : f32 to vector<6x6xf32>
    %344 = arith.mulf %343, %329 : vector<6x6xf32>
    %345 = arith.addf %327, %344 : vector<6x6xf32>
    %c0_78 = arith.constant 0 : index
    %c0_79 = arith.constant 0 : index
    %c17_80 = arith.constant 17 : index
    %c2_81 = arith.constant 2 : index
    %346 = vector.load %arg2[%c0_78, %c0_79, %c17_80, %c2_81] : memref<1x1x32x8xf32, #tpu.memory_space<vmem>>, vector<1x1x6x6xf32>
    %347 = vector.shape_cast %346 : vector<1x1x6x6xf32> to vector<6x6xf32>
    %c19 = arith.constant 19 : index
    %348 = memref.load %arg3[%c19] : memref<100xf32, #tpu.memory_space<smem>>
    %349 = vector.broadcast %348 : f32 to vector<6x6xf32>
    %350 = arith.mulf %349, %347 : vector<6x6xf32>
    %351 = arith.addf %333, %350 : vector<6x6xf32>
    %c44 = arith.constant 44 : index
    %352 = memref.load %arg3[%c44] : memref<100xf32, #tpu.memory_space<smem>>
    %353 = vector.broadcast %352 : f32 to vector<6x6xf32>
    %354 = arith.mulf %353, %347 : vector<6x6xf32>
    %355 = arith.addf %337, %354 : vector<6x6xf32>
    %c69 = arith.constant 69 : index
    %356 = memref.load %arg3[%c69] : memref<100xf32, #tpu.memory_space<smem>>
    %357 = vector.broadcast %356 : f32 to vector<6x6xf32>
    %358 = arith.mulf %357, %347 : vector<6x6xf32>
    %359 = arith.addf %341, %358 : vector<6x6xf32>
    %c94 = arith.constant 94 : index
    %360 = memref.load %arg3[%c94] : memref<100xf32, #tpu.memory_space<smem>>
    %361 = vector.broadcast %360 : f32 to vector<6x6xf32>
    %362 = arith.mulf %361, %347 : vector<6x6xf32>
    %363 = arith.addf %345, %362 : vector<6x6xf32>
    %c0_82 = arith.constant 0 : index
    %c0_83 = arith.constant 0 : index
    %c2_84 = arith.constant 2 : index
    %c0_85 = arith.constant 0 : index
    %364 = vector.load %arg2[%c0_82, %c0_83, %c2_84, %c0_85] : memref<1x1x32x8xf32, #tpu.memory_space<vmem>>, vector<1x1x6x6xf32>
    %365 = vector.shape_cast %364 : vector<1x1x6x6xf32> to vector<6x6xf32>
    %c20 = arith.constant 20 : index
    %366 = memref.load %arg3[%c20] : memref<100xf32, #tpu.memory_space<smem>>
    %367 = vector.broadcast %366 : f32 to vector<6x6xf32>
    %368 = arith.mulf %367, %365 : vector<6x6xf32>
    %369 = arith.addf %351, %368 : vector<6x6xf32>
    %c45 = arith.constant 45 : index
    %370 = memref.load %arg3[%c45] : memref<100xf32, #tpu.memory_space<smem>>
    %371 = vector.broadcast %370 : f32 to vector<6x6xf32>
    %372 = arith.mulf %371, %365 : vector<6x6xf32>
    %373 = arith.addf %355, %372 : vector<6x6xf32>
    %c70 = arith.constant 70 : index
    %374 = memref.load %arg3[%c70] : memref<100xf32, #tpu.memory_space<smem>>
    %375 = vector.broadcast %374 : f32 to vector<6x6xf32>
    %376 = arith.mulf %375, %365 : vector<6x6xf32>
    %377 = arith.addf %359, %376 : vector<6x6xf32>
    %c95 = arith.constant 95 : index
    %378 = memref.load %arg3[%c95] : memref<100xf32, #tpu.memory_space<smem>>
    %379 = vector.broadcast %378 : f32 to vector<6x6xf32>
    %380 = arith.mulf %379, %365 : vector<6x6xf32>
    %381 = arith.addf %363, %380 : vector<6x6xf32>
    %c0_86 = arith.constant 0 : index
    %c0_87 = arith.constant 0 : index
    %c10_88 = arith.constant 10 : index
    %c0_89 = arith.constant 0 : index
    %382 = vector.load %arg2[%c0_86, %c0_87, %c10_88, %c0_89] : memref<1x1x32x8xf32, #tpu.memory_space<vmem>>, vector<1x1x6x6xf32>
    %383 = vector.shape_cast %382 : vector<1x1x6x6xf32> to vector<6x6xf32>
    %c21 = arith.constant 21 : index
    %384 = memref.load %arg3[%c21] : memref<100xf32, #tpu.memory_space<smem>>
    %385 = vector.broadcast %384 : f32 to vector<6x6xf32>
    %386 = arith.mulf %385, %383 : vector<6x6xf32>
    %387 = arith.addf %369, %386 : vector<6x6xf32>
    %c46 = arith.constant 46 : index
    %388 = memref.load %arg3[%c46] : memref<100xf32, #tpu.memory_space<smem>>
    %389 = vector.broadcast %388 : f32 to vector<6x6xf32>
    %390 = arith.mulf %389, %383 : vector<6x6xf32>
    %391 = arith.addf %373, %390 : vector<6x6xf32>
    %c71 = arith.constant 71 : index
    %392 = memref.load %arg3[%c71] : memref<100xf32, #tpu.memory_space<smem>>
    %393 = vector.broadcast %392 : f32 to vector<6x6xf32>
    %394 = arith.mulf %393, %383 : vector<6x6xf32>
    %395 = arith.addf %377, %394 : vector<6x6xf32>
    %c96 = arith.constant 96 : index
    %396 = memref.load %arg3[%c96] : memref<100xf32, #tpu.memory_space<smem>>
    %397 = vector.broadcast %396 : f32 to vector<6x6xf32>
    %398 = arith.mulf %397, %383 : vector<6x6xf32>
    %399 = arith.addf %381, %398 : vector<6x6xf32>
    %c0_90 = arith.constant 0 : index
    %c0_91 = arith.constant 0 : index
    %c2_92 = arith.constant 2 : index
    %c1_93 = arith.constant 1 : index
    %400 = vector.load %arg2[%c0_90, %c0_91, %c2_92, %c1_93] : memref<1x1x32x8xf32, #tpu.memory_space<vmem>>, vector<1x1x6x6xf32>
    %401 = vector.shape_cast %400 : vector<1x1x6x6xf32> to vector<6x6xf32>
    %c22 = arith.constant 22 : index
    %402 = memref.load %arg3[%c22] : memref<100xf32, #tpu.memory_space<smem>>
    %403 = vector.broadcast %402 : f32 to vector<6x6xf32>
    %404 = arith.mulf %403, %401 : vector<6x6xf32>
    %405 = arith.addf %387, %404 : vector<6x6xf32>
    %c47 = arith.constant 47 : index
    %406 = memref.load %arg3[%c47] : memref<100xf32, #tpu.memory_space<smem>>
    %407 = vector.broadcast %406 : f32 to vector<6x6xf32>
    %408 = arith.mulf %407, %401 : vector<6x6xf32>
    %409 = arith.addf %391, %408 : vector<6x6xf32>
    %c72 = arith.constant 72 : index
    %410 = memref.load %arg3[%c72] : memref<100xf32, #tpu.memory_space<smem>>
    %411 = vector.broadcast %410 : f32 to vector<6x6xf32>
    %412 = arith.mulf %411, %401 : vector<6x6xf32>
    %413 = arith.addf %395, %412 : vector<6x6xf32>
    %c97 = arith.constant 97 : index
    %414 = memref.load %arg3[%c97] : memref<100xf32, #tpu.memory_space<smem>>
    %415 = vector.broadcast %414 : f32 to vector<6x6xf32>
    %416 = arith.mulf %415, %401 : vector<6x6xf32>
    %417 = arith.addf %399, %416 : vector<6x6xf32>
    %c0_94 = arith.constant 0 : index
    %c0_95 = arith.constant 0 : index
    %c10_96 = arith.constant 10 : index
    %c1_97 = arith.constant 1 : index
    %418 = vector.load %arg2[%c0_94, %c0_95, %c10_96, %c1_97] : memref<1x1x32x8xf32, #tpu.memory_space<vmem>>, vector<1x1x6x6xf32>
    %419 = vector.shape_cast %418 : vector<1x1x6x6xf32> to vector<6x6xf32>
    %c23 = arith.constant 23 : index
    %420 = memref.load %arg3[%c23] : memref<100xf32, #tpu.memory_space<smem>>
    %421 = vector.broadcast %420 : f32 to vector<6x6xf32>
    %422 = arith.mulf %421, %419 : vector<6x6xf32>
    %423 = arith.addf %405, %422 : vector<6x6xf32>
    %c48 = arith.constant 48 : index
    %424 = memref.load %arg3[%c48] : memref<100xf32, #tpu.memory_space<smem>>
    %425 = vector.broadcast %424 : f32 to vector<6x6xf32>
    %426 = arith.mulf %425, %419 : vector<6x6xf32>
    %427 = arith.addf %409, %426 : vector<6x6xf32>
    %c73 = arith.constant 73 : index
    %428 = memref.load %arg3[%c73] : memref<100xf32, #tpu.memory_space<smem>>
    %429 = vector.broadcast %428 : f32 to vector<6x6xf32>
    %430 = arith.mulf %429, %419 : vector<6x6xf32>
    %431 = arith.addf %413, %430 : vector<6x6xf32>
    %c98 = arith.constant 98 : index
    %432 = memref.load %arg3[%c98] : memref<100xf32, #tpu.memory_space<smem>>
    %433 = vector.broadcast %432 : f32 to vector<6x6xf32>
    %434 = arith.mulf %433, %419 : vector<6x6xf32>
    %435 = arith.addf %417, %434 : vector<6x6xf32>
    %c0_98 = arith.constant 0 : index
    %c0_99 = arith.constant 0 : index
    %c2_100 = arith.constant 2 : index
    %c2_101 = arith.constant 2 : index
    %436 = vector.load %arg2[%c0_98, %c0_99, %c2_100, %c2_101] : memref<1x1x32x8xf32, #tpu.memory_space<vmem>>, vector<1x1x6x6xf32>
    %437 = vector.shape_cast %436 : vector<1x1x6x6xf32> to vector<6x6xf32>
    %c24_102 = arith.constant 24 : index
    %438 = memref.load %arg3[%c24_102] : memref<100xf32, #tpu.memory_space<smem>>
    %439 = vector.broadcast %438 : f32 to vector<6x6xf32>
    %440 = arith.mulf %439, %437 : vector<6x6xf32>
    %441 = arith.addf %423, %440 : vector<6x6xf32>
    %c49 = arith.constant 49 : index
    %442 = memref.load %arg3[%c49] : memref<100xf32, #tpu.memory_space<smem>>
    %443 = vector.broadcast %442 : f32 to vector<6x6xf32>
    %444 = arith.mulf %443, %437 : vector<6x6xf32>
    %445 = arith.addf %427, %444 : vector<6x6xf32>
    %c74 = arith.constant 74 : index
    %446 = memref.load %arg3[%c74] : memref<100xf32, #tpu.memory_space<smem>>
    %447 = vector.broadcast %446 : f32 to vector<6x6xf32>
    %448 = arith.mulf %447, %437 : vector<6x6xf32>
    %449 = arith.addf %431, %448 : vector<6x6xf32>
    %c99 = arith.constant 99 : index
    %450 = memref.load %arg3[%c99] : memref<100xf32, #tpu.memory_space<smem>>
    %451 = vector.broadcast %450 : f32 to vector<6x6xf32>
    %452 = arith.mulf %451, %437 : vector<6x6xf32>
    %453 = arith.addf %435, %452 : vector<6x6xf32>
    %c0_103 = arith.constant 0 : index
    %454 = memref.load %arg5[%c0_103] : memref<1xf32, #tpu.memory_space<smem>>
    %c0_104 = arith.constant 0 : index
    %455 = memref.load %arg4[%c0_104] : memref<4xf32, #tpu.memory_space<smem>>
    %456 = vector.broadcast %455 : f32 to vector<6x6xf32>
    %457 = arith.addf %441, %456 : vector<6x6xf32>
    %cst_105 = arith.constant 0.000000e+00 : f32
    %458 = vector.broadcast %cst_105 : f32 to vector<6x6xf32>
    %459 = arith.cmpf ogt, %457, %458 : vector<6x6xf32>
    %460 = vector.broadcast %454 : f32 to vector<6x6xf32>
    %461 = arith.mulf %460, %457 : vector<6x6xf32>
    %462 = arith.select %459, %457, %461 : vector<6x6xi1>, vector<6x6xf32>
    %c0_106 = arith.constant 0 : index
    %c0_107 = arith.constant 0 : index
    %c0_108 = arith.constant 0 : index
    %463 = vector.load %arg10[%c0_106, %c0_107, %c0_108] : memref<4x6x6xf32, #tpu.memory_space<vmem>>, vector<1x6x6xf32>
    %464 = vector.shape_cast %463 : vector<1x6x6xf32> to vector<6x6xf32>
    %465 = vector.shape_cast %462 : vector<6x6xf32> to vector<1x6x6xf32>
    tpu.vector_store %arg10[%c0_106, %c0_107, %c0_108], %465 {strides = array<i32>} : memref<4x6x6xf32, #tpu.memory_space<vmem>>, vector<1x6x6xf32>,
    %c1_109 = arith.constant 1 : index
    %466 = memref.load %arg4[%c1_109] : memref<4xf32, #tpu.memory_space<smem>>
    %467 = vector.broadcast %466 : f32 to vector<6x6xf32>
    %468 = arith.addf %445, %467 : vector<6x6xf32>
    %cst_110 = arith.constant 0.000000e+00 : f32
    %469 = vector.broadcast %cst_110 : f32 to vector<6x6xf32>
    %470 = arith.cmpf ogt, %468, %469 : vector<6x6xf32>
    %471 = vector.broadcast %454 : f32 to vector<6x6xf32>
    %472 = arith.mulf %471, %468 : vector<6x6xf32>
    %473 = arith.select %470, %468, %472 : vector<6x6xi1>, vector<6x6xf32>
    %c1_111 = arith.constant 1 : index
    %c0_112 = arith.constant 0 : index
    %c0_113 = arith.constant 0 : index
    %474 = vector.load %arg10[%c1_111, %c0_112, %c0_113] : memref<4x6x6xf32, #tpu.memory_space<vmem>>, vector<1x6x6xf32>
    %475 = vector.shape_cast %474 : vector<1x6x6xf32> to vector<6x6xf32>
    %476 = vector.shape_cast %473 : vector<6x6xf32> to vector<1x6x6xf32>
    tpu.vector_store %arg10[%c1_111, %c0_112, %c0_113], %476 {strides = array<i32>} : memref<4x6x6xf32, #tpu.memory_space<vmem>>, vector<1x6x6xf32>,
    %c2_114 = arith.constant 2 : index
    %477 = memref.load %arg4[%c2_114] : memref<4xf32, #tpu.memory_space<smem>>
    %478 = vector.broadcast %477 : f32 to vector<6x6xf32>
    %479 = arith.addf %449, %478 : vector<6x6xf32>
    %cst_115 = arith.constant 0.000000e+00 : f32
    %480 = vector.broadcast %cst_115 : f32 to vector<6x6xf32>
    %481 = arith.cmpf ogt, %479, %480 : vector<6x6xf32>
    %482 = vector.broadcast %454 : f32 to vector<6x6xf32>
    %483 = arith.mulf %482, %479 : vector<6x6xf32>
    %484 = arith.select %481, %479, %483 : vector<6x6xi1>, vector<6x6xf32>
    %c2_116 = arith.constant 2 : index
    %c0_117 = arith.constant 0 : index
    %c0_118 = arith.constant 0 : index
    %485 = vector.load %arg10[%c2_116, %c0_117, %c0_118] : memref<4x6x6xf32, #tpu.memory_space<vmem>>, vector<1x6x6xf32>
    %486 = vector.shape_cast %485 : vector<1x6x6xf32> to vector<6x6xf32>
    %487 = vector.shape_cast %484 : vector<6x6xf32> to vector<1x6x6xf32>
    tpu.vector_store %arg10[%c2_116, %c0_117, %c0_118], %487 {strides = array<i32>} : memref<4x6x6xf32, #tpu.memory_space<vmem>>, vector<1x6x6xf32>,
    %c3_119 = arith.constant 3 : index
    %488 = memref.load %arg4[%c3_119] : memref<4xf32, #tpu.memory_space<smem>>
    %489 = vector.broadcast %488 : f32 to vector<6x6xf32>
    %490 = arith.addf %453, %489 : vector<6x6xf32>
    %cst_120 = arith.constant 0.000000e+00 : f32
    %491 = vector.broadcast %cst_120 : f32 to vector<6x6xf32>
    %492 = arith.cmpf ogt, %490, %491 : vector<6x6xf32>
    %493 = vector.broadcast %454 : f32 to vector<6x6xf32>
    %494 = arith.mulf %493, %490 : vector<6x6xf32>
    %495 = arith.select %492, %490, %494 : vector<6x6xi1>, vector<6x6xf32>
    %c3_121 = arith.constant 3 : index
    %c0_122 = arith.constant 0 : index
    %c0_123 = arith.constant 0 : index
    %496 = vector.load %arg10[%c3_121, %c0_122, %c0_123] : memref<4x6x6xf32, #tpu.memory_space<vmem>>, vector<1x6x6xf32>
    %497 = vector.shape_cast %496 : vector<1x6x6xf32> to vector<6x6xf32>
    %498 = vector.shape_cast %495 : vector<6x6xf32> to vector<1x6x6xf32>
    tpu.vector_store %arg10[%c3_121, %c0_122, %c0_123], %498 {strides = array<i32>} : memref<4x6x6xf32, #tpu.memory_space<vmem>>, vector<1x6x6xf32>,
    %cst_124 = arith.constant 0.000000e+00 : f32
    %499 = vector.broadcast %cst_124 : f32 to vector<2x2xf32>
    %cst_125 = arith.constant 0.000000e+00 : f32
    %500 = vector.broadcast %cst_125 : f32 to vector<2x2xf32>
    %cst_126 = arith.constant 0.000000e+00 : f32
    %501 = vector.broadcast %cst_126 : f32 to vector<2x2xf32>
    %cst_127 = arith.constant 0.000000e+00 : f32
    %502 = vector.broadcast %cst_127 : f32 to vector<2x2xf32>
    %c0_128 = arith.constant 0 : index
    %c0_129 = arith.constant 0 : index
    %c0_130 = arith.constant 0 : index
    %503 = vector.load %arg10[%c0_128, %c0_129, %c0_130] : memref<4x6x6xf32, #tpu.memory_space<vmem>>, vector<1x2x2xf32>
    %504 = vector.shape_cast %503 : vector<1x2x2xf32> to vector<2x2xf32>
    %c0_131 = arith.constant 0 : index
    %505 = memref.load %arg6[%c0_131] : memref<400xf32, #tpu.memory_space<smem>>
    %506 = vector.broadcast %505 : f32 to vector<2x2xf32>
    %507 = arith.mulf %506, %504 : vector<2x2xf32>
    %508 = arith.addf %499, %507 : vector<2x2xf32>
    %c100 = arith.constant 100 : index
    %509 = memref.load %arg6[%c100] : memref<400xf32, #tpu.memory_space<smem>>
    %510 = vector.broadcast %509 : f32 to vector<2x2xf32>
    %511 = arith.mulf %510, %504 : vector<2x2xf32>
    %512 = arith.addf %500, %511 : vector<2x2xf32>
    %c200 = arith.constant 200 : index
    %513 = memref.load %arg6[%c200] : memref<400xf32, #tpu.memory_space<smem>>
    %514 = vector.broadcast %513 : f32 to vector<2x2xf32>
    %515 = arith.mulf %514, %504 : vector<2x2xf32>
    %516 = arith.addf %501, %515 : vector<2x2xf32>
    %c300 = arith.constant 300 : index
    %517 = memref.load %arg6[%c300] : memref<400xf32, #tpu.memory_space<smem>>
    %518 = vector.broadcast %517 : f32 to vector<2x2xf32>
    %519 = arith.mulf %518, %504 : vector<2x2xf32>
    %520 = arith.addf %502, %519 : vector<2x2xf32>
    %c0_132 = arith.constant 0 : index
    %c0_133 = arith.constant 0 : index
    %c1_134 = arith.constant 1 : index
    %521 = vector.load %arg10[%c0_132, %c0_133, %c1_134] : memref<4x6x6xf32, #tpu.memory_space<vmem>>, vector<1x2x2xf32>
    %522 = vector.shape_cast %521 : vector<1x2x2xf32> to vector<2x2xf32>
    %c1_135 = arith.constant 1 : index
    %523 = memref.load %arg6[%c1_135] : memref<400xf32, #tpu.memory_space<smem>>
    %524 = vector.broadcast %523 : f32 to vector<2x2xf32>
    %525 = arith.mulf %524, %522 : vector<2x2xf32>
    %526 = arith.addf %508, %525 : vector<2x2xf32>
    %c101 = arith.constant 101 : index
    %527 = memref.load %arg6[%c101] : memref<400xf32, #tpu.memory_space<smem>>
    %528 = vector.broadcast %527 : f32 to vector<2x2xf32>
    %529 = arith.mulf %528, %522 : vector<2x2xf32>
    %530 = arith.addf %512, %529 : vector<2x2xf32>
    %c201 = arith.constant 201 : index
    %531 = memref.load %arg6[%c201] : memref<400xf32, #tpu.memory_space<smem>>
    %532 = vector.broadcast %531 : f32 to vector<2x2xf32>
    %533 = arith.mulf %532, %522 : vector<2x2xf32>
    %534 = arith.addf %516, %533 : vector<2x2xf32>
    %c301 = arith.constant 301 : index
    %535 = memref.load %arg6[%c301] : memref<400xf32, #tpu.memory_space<smem>>
    %536 = vector.broadcast %535 : f32 to vector<2x2xf32>
    %537 = arith.mulf %536, %522 : vector<2x2xf32>
    %538 = arith.addf %520, %537 : vector<2x2xf32>
    %c0_136 = arith.constant 0 : index
    %c0_137 = arith.constant 0 : index
    %c2_138 = arith.constant 2 : index
    %539 = vector.load %arg10[%c0_136, %c0_137, %c2_138] : memref<4x6x6xf32, #tpu.memory_space<vmem>>, vector<1x2x2xf32>
    %540 = vector.shape_cast %539 : vector<1x2x2xf32> to vector<2x2xf32>
    %c2_139 = arith.constant 2 : index
    %541 = memref.load %arg6[%c2_139] : memref<400xf32, #tpu.memory_space<smem>>
    %542 = vector.broadcast %541 : f32 to vector<2x2xf32>
    %543 = arith.mulf %542, %540 : vector<2x2xf32>
    %544 = arith.addf %526, %543 : vector<2x2xf32>
    %c102 = arith.constant 102 : index
    %545 = memref.load %arg6[%c102] : memref<400xf32, #tpu.memory_space<smem>>
    %546 = vector.broadcast %545 : f32 to vector<2x2xf32>
    %547 = arith.mulf %546, %540 : vector<2x2xf32>
    %548 = arith.addf %530, %547 : vector<2x2xf32>
    %c202 = arith.constant 202 : index
    %549 = memref.load %arg6[%c202] : memref<400xf32, #tpu.memory_space<smem>>
    %550 = vector.broadcast %549 : f32 to vector<2x2xf32>
    %551 = arith.mulf %550, %540 : vector<2x2xf32>
    %552 = arith.addf %534, %551 : vector<2x2xf32>
    %c302 = arith.constant 302 : index
    %553 = memref.load %arg6[%c302] : memref<400xf32, #tpu.memory_space<smem>>
    %554 = vector.broadcast %553 : f32 to vector<2x2xf32>
    %555 = arith.mulf %554, %540 : vector<2x2xf32>
    %556 = arith.addf %538, %555 : vector<2x2xf32>
    %c0_140 = arith.constant 0 : index
    %c0_141 = arith.constant 0 : index
    %c3_142 = arith.constant 3 : index
    %557 = vector.load %arg10[%c0_140, %c0_141, %c3_142] : memref<4x6x6xf32, #tpu.memory_space<vmem>>, vector<1x2x2xf32>
    %558 = vector.shape_cast %557 : vector<1x2x2xf32> to vector<2x2xf32>
    %c3_143 = arith.constant 3 : index
    %559 = memref.load %arg6[%c3_143] : memref<400xf32, #tpu.memory_space<smem>>
    %560 = vector.broadcast %559 : f32 to vector<2x2xf32>
    %561 = arith.mulf %560, %558 : vector<2x2xf32>
    %562 = arith.addf %544, %561 : vector<2x2xf32>
    %c103 = arith.constant 103 : index
    %563 = memref.load %arg6[%c103] : memref<400xf32, #tpu.memory_space<smem>>
    %564 = vector.broadcast %563 : f32 to vector<2x2xf32>
    %565 = arith.mulf %564, %558 : vector<2x2xf32>
    %566 = arith.addf %548, %565 : vector<2x2xf32>
    %c203 = arith.constant 203 : index
    %567 = memref.load %arg6[%c203] : memref<400xf32, #tpu.memory_space<smem>>
    %568 = vector.broadcast %567 : f32 to vector<2x2xf32>
    %569 = arith.mulf %568, %558 : vector<2x2xf32>
    %570 = arith.addf %552, %569 : vector<2x2xf32>
    %c303 = arith.constant 303 : index
    %571 = memref.load %arg6[%c303] : memref<400xf32, #tpu.memory_space<smem>>
    %572 = vector.broadcast %571 : f32 to vector<2x2xf32>
    %573 = arith.mulf %572, %558 : vector<2x2xf32>
    %574 = arith.addf %556, %573 : vector<2x2xf32>
    %c0_144 = arith.constant 0 : index
    %c0_145 = arith.constant 0 : index
    %c4_146 = arith.constant 4 : index
    %575 = vector.load %arg10[%c0_144, %c0_145, %c4_146] : memref<4x6x6xf32, #tpu.memory_space<vmem>>, vector<1x2x2xf32>
    %576 = vector.shape_cast %575 : vector<1x2x2xf32> to vector<2x2xf32>
    %c4_147 = arith.constant 4 : index
    %577 = memref.load %arg6[%c4_147] : memref<400xf32, #tpu.memory_space<smem>>
    %578 = vector.broadcast %577 : f32 to vector<2x2xf32>
    %579 = arith.mulf %578, %576 : vector<2x2xf32>
    %580 = arith.addf %562, %579 : vector<2x2xf32>
    %c104 = arith.constant 104 : index
    %581 = memref.load %arg6[%c104] : memref<400xf32, #tpu.memory_space<smem>>
    %582 = vector.broadcast %581 : f32 to vector<2x2xf32>
    %583 = arith.mulf %582, %576 : vector<2x2xf32>
    %584 = arith.addf %566, %583 : vector<2x2xf32>
    %c204 = arith.constant 204 : index
    %585 = memref.load %arg6[%c204] : memref<400xf32, #tpu.memory_space<smem>>
    %586 = vector.broadcast %585 : f32 to vector<2x2xf32>
    %587 = arith.mulf %586, %576 : vector<2x2xf32>
    %588 = arith.addf %570, %587 : vector<2x2xf32>
    %c304 = arith.constant 304 : index
    %589 = memref.load %arg6[%c304] : memref<400xf32, #tpu.memory_space<smem>>
    %590 = vector.broadcast %589 : f32 to vector<2x2xf32>
    %591 = arith.mulf %590, %576 : vector<2x2xf32>
    %592 = arith.addf %574, %591 : vector<2x2xf32>
    %c0_148 = arith.constant 0 : index
    %c1_149 = arith.constant 1 : index
    %c0_150 = arith.constant 0 : index
    %593 = vector.load %arg10[%c0_148, %c1_149, %c0_150] : memref<4x6x6xf32, #tpu.memory_space<vmem>>, vector<1x2x2xf32>
    %594 = vector.shape_cast %593 : vector<1x2x2xf32> to vector<2x2xf32>
    %c5_151 = arith.constant 5 : index
    %595 = memref.load %arg6[%c5_151] : memref<400xf32, #tpu.memory_space<smem>>
    %596 = vector.broadcast %595 : f32 to vector<2x2xf32>
    %597 = arith.mulf %596, %594 : vector<2x2xf32>
    %598 = arith.addf %580, %597 : vector<2x2xf32>
    %c105 = arith.constant 105 : index
    %599 = memref.load %arg6[%c105] : memref<400xf32, #tpu.memory_space<smem>>
    %600 = vector.broadcast %599 : f32 to vector<2x2xf32>
    %601 = arith.mulf %600, %594 : vector<2x2xf32>
    %602 = arith.addf %584, %601 : vector<2x2xf32>
    %c205 = arith.constant 205 : index
    %603 = memref.load %arg6[%c205] : memref<400xf32, #tpu.memory_space<smem>>
    %604 = vector.broadcast %603 : f32 to vector<2x2xf32>
    %605 = arith.mulf %604, %594 : vector<2x2xf32>
    %606 = arith.addf %588, %605 : vector<2x2xf32>
    %c305 = arith.constant 305 : index
    %607 = memref.load %arg6[%c305] : memref<400xf32, #tpu.memory_space<smem>>
    %608 = vector.broadcast %607 : f32 to vector<2x2xf32>
    %609 = arith.mulf %608, %594 : vector<2x2xf32>
    %610 = arith.addf %592, %609 : vector<2x2xf32>
    %c0_152 = arith.constant 0 : index
    %c1_153 = arith.constant 1 : index
    %c1_154 = arith.constant 1 : index
    %611 = vector.load %arg10[%c0_152, %c1_153, %c1_154] : memref<4x6x6xf32, #tpu.memory_space<vmem>>, vector<1x2x2xf32>
    %612 = vector.shape_cast %611 : vector<1x2x2xf32> to vector<2x2xf32>
    %c6_155 = arith.constant 6 : index
    %613 = memref.load %arg6[%c6_155] : memref<400xf32, #tpu.memory_space<smem>>
    %614 = vector.broadcast %613 : f32 to vector<2x2xf32>
    %615 = arith.mulf %614, %612 : vector<2x2xf32>
    %616 = arith.addf %598, %615 : vector<2x2xf32>
    %c106 = arith.constant 106 : index
    %617 = memref.load %arg6[%c106] : memref<400xf32, #tpu.memory_space<smem>>
    %618 = vector.broadcast %617 : f32 to vector<2x2xf32>
    %619 = arith.mulf %618, %612 : vector<2x2xf32>
    %620 = arith.addf %602, %619 : vector<2x2xf32>
    %c206 = arith.constant 206 : index
    %621 = memref.load %arg6[%c206] : memref<400xf32, #tpu.memory_space<smem>>
    %622 = vector.broadcast %621 : f32 to vector<2x2xf32>
    %623 = arith.mulf %622, %612 : vector<2x2xf32>
    %624 = arith.addf %606, %623 : vector<2x2xf32>
    %c306 = arith.constant 306 : index
    %625 = memref.load %arg6[%c306] : memref<400xf32, #tpu.memory_space<smem>>
    %626 = vector.broadcast %625 : f32 to vector<2x2xf32>
    %627 = arith.mulf %626, %612 : vector<2x2xf32>
    %628 = arith.addf %610, %627 : vector<2x2xf32>
    %c0_156 = arith.constant 0 : index
    %c1_157 = arith.constant 1 : index
    %c2_158 = arith.constant 2 : index
    %629 = vector.load %arg10[%c0_156, %c1_157, %c2_158] : memref<4x6x6xf32, #tpu.memory_space<vmem>>, vector<1x2x2xf32>
    %630 = vector.shape_cast %629 : vector<1x2x2xf32> to vector<2x2xf32>
    %c7_159 = arith.constant 7 : index
    %631 = memref.load %arg6[%c7_159] : memref<400xf32, #tpu.memory_space<smem>>
    %632 = vector.broadcast %631 : f32 to vector<2x2xf32>
    %633 = arith.mulf %632, %630 : vector<2x2xf32>
    %634 = arith.addf %616, %633 : vector<2x2xf32>
    %c107 = arith.constant 107 : index
    %635 = memref.load %arg6[%c107] : memref<400xf32, #tpu.memory_space<smem>>
    %636 = vector.broadcast %635 : f32 to vector<2x2xf32>
    %637 = arith.mulf %636, %630 : vector<2x2xf32>
    %638 = arith.addf %620, %637 : vector<2x2xf32>
    %c207 = arith.constant 207 : index
    %639 = memref.load %arg6[%c207] : memref<400xf32, #tpu.memory_space<smem>>
    %640 = vector.broadcast %639 : f32 to vector<2x2xf32>
    %641 = arith.mulf %640, %630 : vector<2x2xf32>
    %642 = arith.addf %624, %641 : vector<2x2xf32>
    %c307 = arith.constant 307 : index
    %643 = memref.load %arg6[%c307] : memref<400xf32, #tpu.memory_space<smem>>
    %644 = vector.broadcast %643 : f32 to vector<2x2xf32>
    %645 = arith.mulf %644, %630 : vector<2x2xf32>
    %646 = arith.addf %628, %645 : vector<2x2xf32>
    %c0_160 = arith.constant 0 : index
    %c1_161 = arith.constant 1 : index
    %c3_162 = arith.constant 3 : index
    %647 = vector.load %arg10[%c0_160, %c1_161, %c3_162] : memref<4x6x6xf32, #tpu.memory_space<vmem>>, vector<1x2x2xf32>
    %648 = vector.shape_cast %647 : vector<1x2x2xf32> to vector<2x2xf32>
    %c8_163 = arith.constant 8 : index
    %649 = memref.load %arg6[%c8_163] : memref<400xf32, #tpu.memory_space<smem>>
    %650 = vector.broadcast %649 : f32 to vector<2x2xf32>
    %651 = arith.mulf %650, %648 : vector<2x2xf32>
    %652 = arith.addf %634, %651 : vector<2x2xf32>
    %c108 = arith.constant 108 : index
    %653 = memref.load %arg6[%c108] : memref<400xf32, #tpu.memory_space<smem>>
    %654 = vector.broadcast %653 : f32 to vector<2x2xf32>
    %655 = arith.mulf %654, %648 : vector<2x2xf32>
    %656 = arith.addf %638, %655 : vector<2x2xf32>
    %c208 = arith.constant 208 : index
    %657 = memref.load %arg6[%c208] : memref<400xf32, #tpu.memory_space<smem>>
    %658 = vector.broadcast %657 : f32 to vector<2x2xf32>
    %659 = arith.mulf %658, %648 : vector<2x2xf32>
    %660 = arith.addf %642, %659 : vector<2x2xf32>
    %c308 = arith.constant 308 : index
    %661 = memref.load %arg6[%c308] : memref<400xf32, #tpu.memory_space<smem>>
    %662 = vector.broadcast %661 : f32 to vector<2x2xf32>
    %663 = arith.mulf %662, %648 : vector<2x2xf32>
    %664 = arith.addf %646, %663 : vector<2x2xf32>
    %c0_164 = arith.constant 0 : index
    %c1_165 = arith.constant 1 : index
    %c4_166 = arith.constant 4 : index
    %665 = vector.load %arg10[%c0_164, %c1_165, %c4_166] : memref<4x6x6xf32, #tpu.memory_space<vmem>>, vector<1x2x2xf32>
    %666 = vector.shape_cast %665 : vector<1x2x2xf32> to vector<2x2xf32>
    %c9_167 = arith.constant 9 : index
    %667 = memref.load %arg6[%c9_167] : memref<400xf32, #tpu.memory_space<smem>>
    %668 = vector.broadcast %667 : f32 to vector<2x2xf32>
    %669 = arith.mulf %668, %666 : vector<2x2xf32>
    %670 = arith.addf %652, %669 : vector<2x2xf32>
    %c109 = arith.constant 109 : index
    %671 = memref.load %arg6[%c109] : memref<400xf32, #tpu.memory_space<smem>>
    %672 = vector.broadcast %671 : f32 to vector<2x2xf32>
    %673 = arith.mulf %672, %666 : vector<2x2xf32>
    %674 = arith.addf %656, %673 : vector<2x2xf32>
    %c209 = arith.constant 209 : index
    %675 = memref.load %arg6[%c209] : memref<400xf32, #tpu.memory_space<smem>>
    %676 = vector.broadcast %675 : f32 to vector<2x2xf32>
    %677 = arith.mulf %676, %666 : vector<2x2xf32>
    %678 = arith.addf %660, %677 : vector<2x2xf32>
    %c309 = arith.constant 309 : index
    %679 = memref.load %arg6[%c309] : memref<400xf32, #tpu.memory_space<smem>>
    %680 = vector.broadcast %679 : f32 to vector<2x2xf32>
    %681 = arith.mulf %680, %666 : vector<2x2xf32>
    %682 = arith.addf %664, %681 : vector<2x2xf32>
    %c0_168 = arith.constant 0 : index
    %c2_169 = arith.constant 2 : index
    %c0_170 = arith.constant 0 : index
    %683 = vector.load %arg10[%c0_168, %c2_169, %c0_170] : memref<4x6x6xf32, #tpu.memory_space<vmem>>, vector<1x2x2xf32>
    %684 = vector.shape_cast %683 : vector<1x2x2xf32> to vector<2x2xf32>
    %c10_171 = arith.constant 10 : index
    %685 = memref.load %arg6[%c10_171] : memref<400xf32, #tpu.memory_space<smem>>
    %686 = vector.broadcast %685 : f32 to vector<2x2xf32>
    %687 = arith.mulf %686, %684 : vector<2x2xf32>
    %688 = arith.addf %670, %687 : vector<2x2xf32>
    %c110 = arith.constant 110 : index
    %689 = memref.load %arg6[%c110] : memref<400xf32, #tpu.memory_space<smem>>
    %690 = vector.broadcast %689 : f32 to vector<2x2xf32>
    %691 = arith.mulf %690, %684 : vector<2x2xf32>
    %692 = arith.addf %674, %691 : vector<2x2xf32>
    %c210 = arith.constant 210 : index
    %693 = memref.load %arg6[%c210] : memref<400xf32, #tpu.memory_space<smem>>
    %694 = vector.broadcast %693 : f32 to vector<2x2xf32>
    %695 = arith.mulf %694, %684 : vector<2x2xf32>
    %696 = arith.addf %678, %695 : vector<2x2xf32>
    %c310 = arith.constant 310 : index
    %697 = memref.load %arg6[%c310] : memref<400xf32, #tpu.memory_space<smem>>
    %698 = vector.broadcast %697 : f32 to vector<2x2xf32>
    %699 = arith.mulf %698, %684 : vector<2x2xf32>
    %700 = arith.addf %682, %699 : vector<2x2xf32>
    %c0_172 = arith.constant 0 : index
    %c2_173 = arith.constant 2 : index
    %c1_174 = arith.constant 1 : index
    %701 = vector.load %arg10[%c0_172, %c2_173, %c1_174] : memref<4x6x6xf32, #tpu.memory_space<vmem>>, vector<1x2x2xf32>
    %702 = vector.shape_cast %701 : vector<1x2x2xf32> to vector<2x2xf32>
    %c11_175 = arith.constant 11 : index
    %703 = memref.load %arg6[%c11_175] : memref<400xf32, #tpu.memory_space<smem>>
    %704 = vector.broadcast %703 : f32 to vector<2x2xf32>
    %705 = arith.mulf %704, %702 : vector<2x2xf32>
    %706 = arith.addf %688, %705 : vector<2x2xf32>
    %c111 = arith.constant 111 : index
    %707 = memref.load %arg6[%c111] : memref<400xf32, #tpu.memory_space<smem>>
    %708 = vector.broadcast %707 : f32 to vector<2x2xf32>
    %709 = arith.mulf %708, %702 : vector<2x2xf32>
    %710 = arith.addf %692, %709 : vector<2x2xf32>
    %c211 = arith.constant 211 : index
    %711 = memref.load %arg6[%c211] : memref<400xf32, #tpu.memory_space<smem>>
    %712 = vector.broadcast %711 : f32 to vector<2x2xf32>
    %713 = arith.mulf %712, %702 : vector<2x2xf32>
    %714 = arith.addf %696, %713 : vector<2x2xf32>
    %c311 = arith.constant 311 : index
    %715 = memref.load %arg6[%c311] : memref<400xf32, #tpu.memory_space<smem>>
    %716 = vector.broadcast %715 : f32 to vector<2x2xf32>
    %717 = arith.mulf %716, %702 : vector<2x2xf32>
    %718 = arith.addf %700, %717 : vector<2x2xf32>
    %c0_176 = arith.constant 0 : index
    %c2_177 = arith.constant 2 : index
    %c2_178 = arith.constant 2 : index
    %719 = vector.load %arg10[%c0_176, %c2_177, %c2_178] : memref<4x6x6xf32, #tpu.memory_space<vmem>>, vector<1x2x2xf32>
    %720 = vector.shape_cast %719 : vector<1x2x2xf32> to vector<2x2xf32>
    %c12_179 = arith.constant 12 : index
    %721 = memref.load %arg6[%c12_179] : memref<400xf32, #tpu.memory_space<smem>>
    %722 = vector.broadcast %721 : f32 to vector<2x2xf32>
    %723 = arith.mulf %722, %720 : vector<2x2xf32>
    %724 = arith.addf %706, %723 : vector<2x2xf32>
    %c112 = arith.constant 112 : index
    %725 = memref.load %arg6[%c112] : memref<400xf32, #tpu.memory_space<smem>>
    %726 = vector.broadcast %725 : f32 to vector<2x2xf32>
    %727 = arith.mulf %726, %720 : vector<2x2xf32>
    %728 = arith.addf %710, %727 : vector<2x2xf32>
    %c212 = arith.constant 212 : index
    %729 = memref.load %arg6[%c212] : memref<400xf32, #tpu.memory_space<smem>>
    %730 = vector.broadcast %729 : f32 to vector<2x2xf32>
    %731 = arith.mulf %730, %720 : vector<2x2xf32>
    %732 = arith.addf %714, %731 : vector<2x2xf32>
    %c312 = arith.constant 312 : index
    %733 = memref.load %arg6[%c312] : memref<400xf32, #tpu.memory_space<smem>>
    %734 = vector.broadcast %733 : f32 to vector<2x2xf32>
    %735 = arith.mulf %734, %720 : vector<2x2xf32>
    %736 = arith.addf %718, %735 : vector<2x2xf32>
    %c0_180 = arith.constant 0 : index
    %c2_181 = arith.constant 2 : index
    %c3_182 = arith.constant 3 : index
    %737 = vector.load %arg10[%c0_180, %c2_181, %c3_182] : memref<4x6x6xf32, #tpu.memory_space<vmem>>, vector<1x2x2xf32>
    %738 = vector.shape_cast %737 : vector<1x2x2xf32> to vector<2x2xf32>
    %c13_183 = arith.constant 13 : index
    %739 = memref.load %arg6[%c13_183] : memref<400xf32, #tpu.memory_space<smem>>
    %740 = vector.broadcast %739 : f32 to vector<2x2xf32>
    %741 = arith.mulf %740, %738 : vector<2x2xf32>
    %742 = arith.addf %724, %741 : vector<2x2xf32>
    %c113 = arith.constant 113 : index
    %743 = memref.load %arg6[%c113] : memref<400xf32, #tpu.memory_space<smem>>
    %744 = vector.broadcast %743 : f32 to vector<2x2xf32>
    %745 = arith.mulf %744, %738 : vector<2x2xf32>
    %746 = arith.addf %728, %745 : vector<2x2xf32>
    %c213 = arith.constant 213 : index
    %747 = memref.load %arg6[%c213] : memref<400xf32, #tpu.memory_space<smem>>
    %748 = vector.broadcast %747 : f32 to vector<2x2xf32>
    %749 = arith.mulf %748, %738 : vector<2x2xf32>
    %750 = arith.addf %732, %749 : vector<2x2xf32>
    %c313 = arith.constant 313 : index
    %751 = memref.load %arg6[%c313] : memref<400xf32, #tpu.memory_space<smem>>
    %752 = vector.broadcast %751 : f32 to vector<2x2xf32>
    %753 = arith.mulf %752, %738 : vector<2x2xf32>
    %754 = arith.addf %736, %753 : vector<2x2xf32>
    %c0_184 = arith.constant 0 : index
    %c2_185 = arith.constant 2 : index
    %c4_186 = arith.constant 4 : index
    %755 = vector.load %arg10[%c0_184, %c2_185, %c4_186] : memref<4x6x6xf32, #tpu.memory_space<vmem>>, vector<1x2x2xf32>
    %756 = vector.shape_cast %755 : vector<1x2x2xf32> to vector<2x2xf32>
    %c14_187 = arith.constant 14 : index
    %757 = memref.load %arg6[%c14_187] : memref<400xf32, #tpu.memory_space<smem>>
    %758 = vector.broadcast %757 : f32 to vector<2x2xf32>
    %759 = arith.mulf %758, %756 : vector<2x2xf32>
    %760 = arith.addf %742, %759 : vector<2x2xf32>
    %c114 = arith.constant 114 : index
    %761 = memref.load %arg6[%c114] : memref<400xf32, #tpu.memory_space<smem>>
    %762 = vector.broadcast %761 : f32 to vector<2x2xf32>
    %763 = arith.mulf %762, %756 : vector<2x2xf32>
    %764 = arith.addf %746, %763 : vector<2x2xf32>
    %c214 = arith.constant 214 : index
    %765 = memref.load %arg6[%c214] : memref<400xf32, #tpu.memory_space<smem>>
    %766 = vector.broadcast %765 : f32 to vector<2x2xf32>
    %767 = arith.mulf %766, %756 : vector<2x2xf32>
    %768 = arith.addf %750, %767 : vector<2x2xf32>
    %c314 = arith.constant 314 : index
    %769 = memref.load %arg6[%c314] : memref<400xf32, #tpu.memory_space<smem>>
    %770 = vector.broadcast %769 : f32 to vector<2x2xf32>
    %771 = arith.mulf %770, %756 : vector<2x2xf32>
    %772 = arith.addf %754, %771 : vector<2x2xf32>
    %c0_188 = arith.constant 0 : index
    %c3_189 = arith.constant 3 : index
    %c0_190 = arith.constant 0 : index
    %773 = vector.load %arg10[%c0_188, %c3_189, %c0_190] : memref<4x6x6xf32, #tpu.memory_space<vmem>>, vector<1x2x2xf32>
    %774 = vector.shape_cast %773 : vector<1x2x2xf32> to vector<2x2xf32>
    %c15_191 = arith.constant 15 : index
    %775 = memref.load %arg6[%c15_191] : memref<400xf32, #tpu.memory_space<smem>>
    %776 = vector.broadcast %775 : f32 to vector<2x2xf32>
    %777 = arith.mulf %776, %774 : vector<2x2xf32>
    %778 = arith.addf %760, %777 : vector<2x2xf32>
    %c115 = arith.constant 115 : index
    %779 = memref.load %arg6[%c115] : memref<400xf32, #tpu.memory_space<smem>>
    %780 = vector.broadcast %779 : f32 to vector<2x2xf32>
    %781 = arith.mulf %780, %774 : vector<2x2xf32>
    %782 = arith.addf %764, %781 : vector<2x2xf32>
    %c215 = arith.constant 215 : index
    %783 = memref.load %arg6[%c215] : memref<400xf32, #tpu.memory_space<smem>>
    %784 = vector.broadcast %783 : f32 to vector<2x2xf32>
    %785 = arith.mulf %784, %774 : vector<2x2xf32>
    %786 = arith.addf %768, %785 : vector<2x2xf32>
    %c315 = arith.constant 315 : index
    %787 = memref.load %arg6[%c315] : memref<400xf32, #tpu.memory_space<smem>>
    %788 = vector.broadcast %787 : f32 to vector<2x2xf32>
    %789 = arith.mulf %788, %774 : vector<2x2xf32>
    %790 = arith.addf %772, %789 : vector<2x2xf32>
    %c0_192 = arith.constant 0 : index
    %c3_193 = arith.constant 3 : index
    %c1_194 = arith.constant 1 : index
    %791 = vector.load %arg10[%c0_192, %c3_193, %c1_194] : memref<4x6x6xf32, #tpu.memory_space<vmem>>, vector<1x2x2xf32>
    %792 = vector.shape_cast %791 : vector<1x2x2xf32> to vector<2x2xf32>
    %c16_195 = arith.constant 16 : index
    %793 = memref.load %arg6[%c16_195] : memref<400xf32, #tpu.memory_space<smem>>
    %794 = vector.broadcast %793 : f32 to vector<2x2xf32>
    %795 = arith.mulf %794, %792 : vector<2x2xf32>
    %796 = arith.addf %778, %795 : vector<2x2xf32>
    %c116 = arith.constant 116 : index
    %797 = memref.load %arg6[%c116] : memref<400xf32, #tpu.memory_space<smem>>
    %798 = vector.broadcast %797 : f32 to vector<2x2xf32>
    %799 = arith.mulf %798, %792 : vector<2x2xf32>
    %800 = arith.addf %782, %799 : vector<2x2xf32>
    %c216 = arith.constant 216 : index
    %801 = memref.load %arg6[%c216] : memref<400xf32, #tpu.memory_space<smem>>
    %802 = vector.broadcast %801 : f32 to vector<2x2xf32>
    %803 = arith.mulf %802, %792 : vector<2x2xf32>
    %804 = arith.addf %786, %803 : vector<2x2xf32>
    %c316 = arith.constant 316 : index
    %805 = memref.load %arg6[%c316] : memref<400xf32, #tpu.memory_space<smem>>
    %806 = vector.broadcast %805 : f32 to vector<2x2xf32>
    %807 = arith.mulf %806, %792 : vector<2x2xf32>
    %808 = arith.addf %790, %807 : vector<2x2xf32>
    %c0_196 = arith.constant 0 : index
    %c3_197 = arith.constant 3 : index
    %c2_198 = arith.constant 2 : index
    %809 = vector.load %arg10[%c0_196, %c3_197, %c2_198] : memref<4x6x6xf32, #tpu.memory_space<vmem>>, vector<1x2x2xf32>
    %810 = vector.shape_cast %809 : vector<1x2x2xf32> to vector<2x2xf32>
    %c17_199 = arith.constant 17 : index
    %811 = memref.load %arg6[%c17_199] : memref<400xf32, #tpu.memory_space<smem>>
    %812 = vector.broadcast %811 : f32 to vector<2x2xf32>
    %813 = arith.mulf %812, %810 : vector<2x2xf32>
    %814 = arith.addf %796, %813 : vector<2x2xf32>
    %c117 = arith.constant 117 : index
    %815 = memref.load %arg6[%c117] : memref<400xf32, #tpu.memory_space<smem>>
    %816 = vector.broadcast %815 : f32 to vector<2x2xf32>
    %817 = arith.mulf %816, %810 : vector<2x2xf32>
    %818 = arith.addf %800, %817 : vector<2x2xf32>
    %c217 = arith.constant 217 : index
    %819 = memref.load %arg6[%c217] : memref<400xf32, #tpu.memory_space<smem>>
    %820 = vector.broadcast %819 : f32 to vector<2x2xf32>
    %821 = arith.mulf %820, %810 : vector<2x2xf32>
    %822 = arith.addf %804, %821 : vector<2x2xf32>
    %c317 = arith.constant 317 : index
    %823 = memref.load %arg6[%c317] : memref<400xf32, #tpu.memory_space<smem>>
    %824 = vector.broadcast %823 : f32 to vector<2x2xf32>
    %825 = arith.mulf %824, %810 : vector<2x2xf32>
    %826 = arith.addf %808, %825 : vector<2x2xf32>
    %c0_200 = arith.constant 0 : index
    %c3_201 = arith.constant 3 : index
    %c3_202 = arith.constant 3 : index
    %827 = vector.load %arg10[%c0_200, %c3_201, %c3_202] : memref<4x6x6xf32, #tpu.memory_space<vmem>>, vector<1x2x2xf32>
    %828 = vector.shape_cast %827 : vector<1x2x2xf32> to vector<2x2xf32>
    %c18_203 = arith.constant 18 : index
    %829 = memref.load %arg6[%c18_203] : memref<400xf32, #tpu.memory_space<smem>>
    %830 = vector.broadcast %829 : f32 to vector<2x2xf32>
    %831 = arith.mulf %830, %828 : vector<2x2xf32>
    %832 = arith.addf %814, %831 : vector<2x2xf32>
    %c118 = arith.constant 118 : index
    %833 = memref.load %arg6[%c118] : memref<400xf32, #tpu.memory_space<smem>>
    %834 = vector.broadcast %833 : f32 to vector<2x2xf32>
    %835 = arith.mulf %834, %828 : vector<2x2xf32>
    %836 = arith.addf %818, %835 : vector<2x2xf32>
    %c218 = arith.constant 218 : index
    %837 = memref.load %arg6[%c218] : memref<400xf32, #tpu.memory_space<smem>>
    %838 = vector.broadcast %837 : f32 to vector<2x2xf32>
    %839 = arith.mulf %838, %828 : vector<2x2xf32>
    %840 = arith.addf %822, %839 : vector<2x2xf32>
    %c318 = arith.constant 318 : index
    %841 = memref.load %arg6[%c318] : memref<400xf32, #tpu.memory_space<smem>>
    %842 = vector.broadcast %841 : f32 to vector<2x2xf32>
    %843 = arith.mulf %842, %828 : vector<2x2xf32>
    %844 = arith.addf %826, %843 : vector<2x2xf32>
    %c0_204 = arith.constant 0 : index
    %c3_205 = arith.constant 3 : index
    %c4_206 = arith.constant 4 : index
    %845 = vector.load %arg10[%c0_204, %c3_205, %c4_206] : memref<4x6x6xf32, #tpu.memory_space<vmem>>, vector<1x2x2xf32>
    %846 = vector.shape_cast %845 : vector<1x2x2xf32> to vector<2x2xf32>
    %c19_207 = arith.constant 19 : index
    %847 = memref.load %arg6[%c19_207] : memref<400xf32, #tpu.memory_space<smem>>
    %848 = vector.broadcast %847 : f32 to vector<2x2xf32>
    %849 = arith.mulf %848, %846 : vector<2x2xf32>
    %850 = arith.addf %832, %849 : vector<2x2xf32>
    %c119 = arith.constant 119 : index
    %851 = memref.load %arg6[%c119] : memref<400xf32, #tpu.memory_space<smem>>
    %852 = vector.broadcast %851 : f32 to vector<2x2xf32>
    %853 = arith.mulf %852, %846 : vector<2x2xf32>
    %854 = arith.addf %836, %853 : vector<2x2xf32>
    %c219 = arith.constant 219 : index
    %855 = memref.load %arg6[%c219] : memref<400xf32, #tpu.memory_space<smem>>
    %856 = vector.broadcast %855 : f32 to vector<2x2xf32>
    %857 = arith.mulf %856, %846 : vector<2x2xf32>
    %858 = arith.addf %840, %857 : vector<2x2xf32>
    %c319 = arith.constant 319 : index
    %859 = memref.load %arg6[%c319] : memref<400xf32, #tpu.memory_space<smem>>
    %860 = vector.broadcast %859 : f32 to vector<2x2xf32>
    %861 = arith.mulf %860, %846 : vector<2x2xf32>
    %862 = arith.addf %844, %861 : vector<2x2xf32>
    %c0_208 = arith.constant 0 : index
    %c4_209 = arith.constant 4 : index
    %c0_210 = arith.constant 0 : index
    %863 = vector.load %arg10[%c0_208, %c4_209, %c0_210] : memref<4x6x6xf32, #tpu.memory_space<vmem>>, vector<1x2x2xf32>
    %864 = vector.shape_cast %863 : vector<1x2x2xf32> to vector<2x2xf32>
    %c20_211 = arith.constant 20 : index
    %865 = memref.load %arg6[%c20_211] : memref<400xf32, #tpu.memory_space<smem>>
    %866 = vector.broadcast %865 : f32 to vector<2x2xf32>
    %867 = arith.mulf %866, %864 : vector<2x2xf32>
    %868 = arith.addf %850, %867 : vector<2x2xf32>
    %c120 = arith.constant 120 : index
    %869 = memref.load %arg6[%c120] : memref<400xf32, #tpu.memory_space<smem>>
    %870 = vector.broadcast %869 : f32 to vector<2x2xf32>
    %871 = arith.mulf %870, %864 : vector<2x2xf32>
    %872 = arith.addf %854, %871 : vector<2x2xf32>
    %c220 = arith.constant 220 : index
    %873 = memref.load %arg6[%c220] : memref<400xf32, #tpu.memory_space<smem>>
    %874 = vector.broadcast %873 : f32 to vector<2x2xf32>
    %875 = arith.mulf %874, %864 : vector<2x2xf32>
    %876 = arith.addf %858, %875 : vector<2x2xf32>
    %c320 = arith.constant 320 : index
    %877 = memref.load %arg6[%c320] : memref<400xf32, #tpu.memory_space<smem>>
    %878 = vector.broadcast %877 : f32 to vector<2x2xf32>
    %879 = arith.mulf %878, %864 : vector<2x2xf32>
    %880 = arith.addf %862, %879 : vector<2x2xf32>
    %c0_212 = arith.constant 0 : index
    %c4_213 = arith.constant 4 : index
    %c1_214 = arith.constant 1 : index
    %881 = vector.load %arg10[%c0_212, %c4_213, %c1_214] : memref<4x6x6xf32, #tpu.memory_space<vmem>>, vector<1x2x2xf32>
    %882 = vector.shape_cast %881 : vector<1x2x2xf32> to vector<2x2xf32>
    %c21_215 = arith.constant 21 : index
    %883 = memref.load %arg6[%c21_215] : memref<400xf32, #tpu.memory_space<smem>>
    %884 = vector.broadcast %883 : f32 to vector<2x2xf32>
    %885 = arith.mulf %884, %882 : vector<2x2xf32>
    %886 = arith.addf %868, %885 : vector<2x2xf32>
    %c121 = arith.constant 121 : index
    %887 = memref.load %arg6[%c121] : memref<400xf32, #tpu.memory_space<smem>>
    %888 = vector.broadcast %887 : f32 to vector<2x2xf32>
    %889 = arith.mulf %888, %882 : vector<2x2xf32>
    %890 = arith.addf %872, %889 : vector<2x2xf32>
    %c221 = arith.constant 221 : index
    %891 = memref.load %arg6[%c221] : memref<400xf32, #tpu.memory_space<smem>>
    %892 = vector.broadcast %891 : f32 to vector<2x2xf32>
    %893 = arith.mulf %892, %882 : vector<2x2xf32>
    %894 = arith.addf %876, %893 : vector<2x2xf32>
    %c321 = arith.constant 321 : index
    %895 = memref.load %arg6[%c321] : memref<400xf32, #tpu.memory_space<smem>>
    %896 = vector.broadcast %895 : f32 to vector<2x2xf32>
    %897 = arith.mulf %896, %882 : vector<2x2xf32>
    %898 = arith.addf %880, %897 : vector<2x2xf32>
    %c0_216 = arith.constant 0 : index
    %c4_217 = arith.constant 4 : index
    %c2_218 = arith.constant 2 : index
    %899 = vector.load %arg10[%c0_216, %c4_217, %c2_218] : memref<4x6x6xf32, #tpu.memory_space<vmem>>, vector<1x2x2xf32>
    %900 = vector.shape_cast %899 : vector<1x2x2xf32> to vector<2x2xf32>
    %c22_219 = arith.constant 22 : index
    %901 = memref.load %arg6[%c22_219] : memref<400xf32, #tpu.memory_space<smem>>
    %902 = vector.broadcast %901 : f32 to vector<2x2xf32>
    %903 = arith.mulf %902, %900 : vector<2x2xf32>
    %904 = arith.addf %886, %903 : vector<2x2xf32>
    %c122 = arith.constant 122 : index
    %905 = memref.load %arg6[%c122] : memref<400xf32, #tpu.memory_space<smem>>
    %906 = vector.broadcast %905 : f32 to vector<2x2xf32>
    %907 = arith.mulf %906, %900 : vector<2x2xf32>
    %908 = arith.addf %890, %907 : vector<2x2xf32>
    %c222 = arith.constant 222 : index
    %909 = memref.load %arg6[%c222] : memref<400xf32, #tpu.memory_space<smem>>
    %910 = vector.broadcast %909 : f32 to vector<2x2xf32>
    %911 = arith.mulf %910, %900 : vector<2x2xf32>
    %912 = arith.addf %894, %911 : vector<2x2xf32>
    %c322 = arith.constant 322 : index
    %913 = memref.load %arg6[%c322] : memref<400xf32, #tpu.memory_space<smem>>
    %914 = vector.broadcast %913 : f32 to vector<2x2xf32>
    %915 = arith.mulf %914, %900 : vector<2x2xf32>
    %916 = arith.addf %898, %915 : vector<2x2xf32>
    %c0_220 = arith.constant 0 : index
    %c4_221 = arith.constant 4 : index
    %c3_222 = arith.constant 3 : index
    %917 = vector.load %arg10[%c0_220, %c4_221, %c3_222] : memref<4x6x6xf32, #tpu.memory_space<vmem>>, vector<1x2x2xf32>
    %918 = vector.shape_cast %917 : vector<1x2x2xf32> to vector<2x2xf32>
    %c23_223 = arith.constant 23 : index
    %919 = memref.load %arg6[%c23_223] : memref<400xf32, #tpu.memory_space<smem>>
    %920 = vector.broadcast %919 : f32 to vector<2x2xf32>
    %921 = arith.mulf %920, %918 : vector<2x2xf32>
    %922 = arith.addf %904, %921 : vector<2x2xf32>
    %c123 = arith.constant 123 : index
    %923 = memref.load %arg6[%c123] : memref<400xf32, #tpu.memory_space<smem>>
    %924 = vector.broadcast %923 : f32 to vector<2x2xf32>
    %925 = arith.mulf %924, %918 : vector<2x2xf32>
    %926 = arith.addf %908, %925 : vector<2x2xf32>
    %c223 = arith.constant 223 : index
    %927 = memref.load %arg6[%c223] : memref<400xf32, #tpu.memory_space<smem>>
    %928 = vector.broadcast %927 : f32 to vector<2x2xf32>
    %929 = arith.mulf %928, %918 : vector<2x2xf32>
    %930 = arith.addf %912, %929 : vector<2x2xf32>
    %c323 = arith.constant 323 : index
    %931 = memref.load %arg6[%c323] : memref<400xf32, #tpu.memory_space<smem>>
    %932 = vector.broadcast %931 : f32 to vector<2x2xf32>
    %933 = arith.mulf %932, %918 : vector<2x2xf32>
    %934 = arith.addf %916, %933 : vector<2x2xf32>
    %c0_224 = arith.constant 0 : index
    %c4_225 = arith.constant 4 : index
    %c4_226 = arith.constant 4 : index
    %935 = vector.load %arg10[%c0_224, %c4_225, %c4_226] : memref<4x6x6xf32, #tpu.memory_space<vmem>>, vector<1x2x2xf32>
    %936 = vector.shape_cast %935 : vector<1x2x2xf32> to vector<2x2xf32>
    %c24_227 = arith.constant 24 : index
    %937 = memref.load %arg6[%c24_227] : memref<400xf32, #tpu.memory_space<smem>>
    %938 = vector.broadcast %937 : f32 to vector<2x2xf32>
    %939 = arith.mulf %938, %936 : vector<2x2xf32>
    %940 = arith.addf %922, %939 : vector<2x2xf32>
    %c124 = arith.constant 124 : index
    %941 = memref.load %arg6[%c124] : memref<400xf32, #tpu.memory_space<smem>>
    %942 = vector.broadcast %941 : f32 to vector<2x2xf32>
    %943 = arith.mulf %942, %936 : vector<2x2xf32>
    %944 = arith.addf %926, %943 : vector<2x2xf32>
    %c224 = arith.constant 224 : index
    %945 = memref.load %arg6[%c224] : memref<400xf32, #tpu.memory_space<smem>>
    %946 = vector.broadcast %945 : f32 to vector<2x2xf32>
    %947 = arith.mulf %946, %936 : vector<2x2xf32>
    %948 = arith.addf %930, %947 : vector<2x2xf32>
    %c324 = arith.constant 324 : index
    %949 = memref.load %arg6[%c324] : memref<400xf32, #tpu.memory_space<smem>>
    %950 = vector.broadcast %949 : f32 to vector<2x2xf32>
    %951 = arith.mulf %950, %936 : vector<2x2xf32>
    %952 = arith.addf %934, %951 : vector<2x2xf32>
    %c1_228 = arith.constant 1 : index
    %c0_229 = arith.constant 0 : index
    %c0_230 = arith.constant 0 : index
    %953 = vector.load %arg10[%c1_228, %c0_229, %c0_230] : memref<4x6x6xf32, #tpu.memory_space<vmem>>, vector<1x2x2xf32>
    %954 = vector.shape_cast %953 : vector<1x2x2xf32> to vector<2x2xf32>
    %c25_231 = arith.constant 25 : index
    %955 = memref.load %arg6[%c25_231] : memref<400xf32, #tpu.memory_space<smem>>
    %956 = vector.broadcast %955 : f32 to vector<2x2xf32>
    %957 = arith.mulf %956, %954 : vector<2x2xf32>
    %958 = arith.addf %940, %957 : vector<2x2xf32>
    %c125 = arith.constant 125 : index
    %959 = memref.load %arg6[%c125] : memref<400xf32, #tpu.memory_space<smem>>
    %960 = vector.broadcast %959 : f32 to vector<2x2xf32>
    %961 = arith.mulf %960, %954 : vector<2x2xf32>
    %962 = arith.addf %944, %961 : vector<2x2xf32>
    %c225 = arith.constant 225 : index
    %963 = memref.load %arg6[%c225] : memref<400xf32, #tpu.memory_space<smem>>
    %964 = vector.broadcast %963 : f32 to vector<2x2xf32>
    %965 = arith.mulf %964, %954 : vector<2x2xf32>
    %966 = arith.addf %948, %965 : vector<2x2xf32>
    %c325 = arith.constant 325 : index
    %967 = memref.load %arg6[%c325] : memref<400xf32, #tpu.memory_space<smem>>
    %968 = vector.broadcast %967 : f32 to vector<2x2xf32>
    %969 = arith.mulf %968, %954 : vector<2x2xf32>
    %970 = arith.addf %952, %969 : vector<2x2xf32>
    %c1_232 = arith.constant 1 : index
    %c0_233 = arith.constant 0 : index
    %c1_234 = arith.constant 1 : index
    %971 = vector.load %arg10[%c1_232, %c0_233, %c1_234] : memref<4x6x6xf32, #tpu.memory_space<vmem>>, vector<1x2x2xf32>
    %972 = vector.shape_cast %971 : vector<1x2x2xf32> to vector<2x2xf32>
    %c26_235 = arith.constant 26 : index
    %973 = memref.load %arg6[%c26_235] : memref<400xf32, #tpu.memory_space<smem>>
    %974 = vector.broadcast %973 : f32 to vector<2x2xf32>
    %975 = arith.mulf %974, %972 : vector<2x2xf32>
    %976 = arith.addf %958, %975 : vector<2x2xf32>
    %c126 = arith.constant 126 : index
    %977 = memref.load %arg6[%c126] : memref<400xf32, #tpu.memory_space<smem>>
    %978 = vector.broadcast %977 : f32 to vector<2x2xf32>
    %979 = arith.mulf %978, %972 : vector<2x2xf32>
    %980 = arith.addf %962, %979 : vector<2x2xf32>
    %c226 = arith.constant 226 : index
    %981 = memref.load %arg6[%c226] : memref<400xf32, #tpu.memory_space<smem>>
    %982 = vector.broadcast %981 : f32 to vector<2x2xf32>
    %983 = arith.mulf %982, %972 : vector<2x2xf32>
    %984 = arith.addf %966, %983 : vector<2x2xf32>
    %c326 = arith.constant 326 : index
    %985 = memref.load %arg6[%c326] : memref<400xf32, #tpu.memory_space<smem>>
    %986 = vector.broadcast %985 : f32 to vector<2x2xf32>
    %987 = arith.mulf %986, %972 : vector<2x2xf32>
    %988 = arith.addf %970, %987 : vector<2x2xf32>
    %c1_236 = arith.constant 1 : index
    %c0_237 = arith.constant 0 : index
    %c2_238 = arith.constant 2 : index
    %989 = vector.load %arg10[%c1_236, %c0_237, %c2_238] : memref<4x6x6xf32, #tpu.memory_space<vmem>>, vector<1x2x2xf32>
    %990 = vector.shape_cast %989 : vector<1x2x2xf32> to vector<2x2xf32>
    %c27_239 = arith.constant 27 : index
    %991 = memref.load %arg6[%c27_239] : memref<400xf32, #tpu.memory_space<smem>>
    %992 = vector.broadcast %991 : f32 to vector<2x2xf32>
    %993 = arith.mulf %992, %990 : vector<2x2xf32>
    %994 = arith.addf %976, %993 : vector<2x2xf32>
    %c127 = arith.constant 127 : index
    %995 = memref.load %arg6[%c127] : memref<400xf32, #tpu.memory_space<smem>>
    %996 = vector.broadcast %995 : f32 to vector<2x2xf32>
    %997 = arith.mulf %996, %990 : vector<2x2xf32>
    %998 = arith.addf %980, %997 : vector<2x2xf32>
    %c227 = arith.constant 227 : index
    %999 = memref.load %arg6[%c227] : memref<400xf32, #tpu.memory_space<smem>>
    %1000 = vector.broadcast %999 : f32 to vector<2x2xf32>
    %1001 = arith.mulf %1000, %990 : vector<2x2xf32>
    %1002 = arith.addf %984, %1001 : vector<2x2xf32>
    %c327 = arith.constant 327 : index
    %1003 = memref.load %arg6[%c327] : memref<400xf32, #tpu.memory_space<smem>>
    %1004 = vector.broadcast %1003 : f32 to vector<2x2xf32>
    %1005 = arith.mulf %1004, %990 : vector<2x2xf32>
    %1006 = arith.addf %988, %1005 : vector<2x2xf32>
    %c1_240 = arith.constant 1 : index
    %c0_241 = arith.constant 0 : index
    %c3_242 = arith.constant 3 : index
    %1007 = vector.load %arg10[%c1_240, %c0_241, %c3_242] : memref<4x6x6xf32, #tpu.memory_space<vmem>>, vector<1x2x2xf32>
    %1008 = vector.shape_cast %1007 : vector<1x2x2xf32> to vector<2x2xf32>
    %c28_243 = arith.constant 28 : index
    %1009 = memref.load %arg6[%c28_243] : memref<400xf32, #tpu.memory_space<smem>>
    %1010 = vector.broadcast %1009 : f32 to vector<2x2xf32>
    %1011 = arith.mulf %1010, %1008 : vector<2x2xf32>
    %1012 = arith.addf %994, %1011 : vector<2x2xf32>
    %c128 = arith.constant 128 : index
    %1013 = memref.load %arg6[%c128] : memref<400xf32, #tpu.memory_space<smem>>
    %1014 = vector.broadcast %1013 : f32 to vector<2x2xf32>
    %1015 = arith.mulf %1014, %1008 : vector<2x2xf32>
    %1016 = arith.addf %998, %1015 : vector<2x2xf32>
    %c228 = arith.constant 228 : index
    %1017 = memref.load %arg6[%c228] : memref<400xf32, #tpu.memory_space<smem>>
    %1018 = vector.broadcast %1017 : f32 to vector<2x2xf32>
    %1019 = arith.mulf %1018, %1008 : vector<2x2xf32>
    %1020 = arith.addf %1002, %1019 : vector<2x2xf32>
    %c328 = arith.constant 328 : index
    %1021 = memref.load %arg6[%c328] : memref<400xf32, #tpu.memory_space<smem>>
    %1022 = vector.broadcast %1021 : f32 to vector<2x2xf32>
    %1023 = arith.mulf %1022, %1008 : vector<2x2xf32>
    %1024 = arith.addf %1006, %1023 : vector<2x2xf32>
    %c1_244 = arith.constant 1 : index
    %c0_245 = arith.constant 0 : index
    %c4_246 = arith.constant 4 : index
    %1025 = vector.load %arg10[%c1_244, %c0_245, %c4_246] : memref<4x6x6xf32, #tpu.memory_space<vmem>>, vector<1x2x2xf32>
    %1026 = vector.shape_cast %1025 : vector<1x2x2xf32> to vector<2x2xf32>
    %c29_247 = arith.constant 29 : index
    %1027 = memref.load %arg6[%c29_247] : memref<400xf32, #tpu.memory_space<smem>>
    %1028 = vector.broadcast %1027 : f32 to vector<2x2xf32>
    %1029 = arith.mulf %1028, %1026 : vector<2x2xf32>
    %1030 = arith.addf %1012, %1029 : vector<2x2xf32>
    %c129 = arith.constant 129 : index
    %1031 = memref.load %arg6[%c129] : memref<400xf32, #tpu.memory_space<smem>>
    %1032 = vector.broadcast %1031 : f32 to vector<2x2xf32>
    %1033 = arith.mulf %1032, %1026 : vector<2x2xf32>
    %1034 = arith.addf %1016, %1033 : vector<2x2xf32>
    %c229 = arith.constant 229 : index
    %1035 = memref.load %arg6[%c229] : memref<400xf32, #tpu.memory_space<smem>>
    %1036 = vector.broadcast %1035 : f32 to vector<2x2xf32>
    %1037 = arith.mulf %1036, %1026 : vector<2x2xf32>
    %1038 = arith.addf %1020, %1037 : vector<2x2xf32>
    %c329 = arith.constant 329 : index
    %1039 = memref.load %arg6[%c329] : memref<400xf32, #tpu.memory_space<smem>>
    %1040 = vector.broadcast %1039 : f32 to vector<2x2xf32>
    %1041 = arith.mulf %1040, %1026 : vector<2x2xf32>
    %1042 = arith.addf %1024, %1041 : vector<2x2xf32>
    %c1_248 = arith.constant 1 : index
    %c1_249 = arith.constant 1 : index
    %c0_250 = arith.constant 0 : index
    %1043 = vector.load %arg10[%c1_248, %c1_249, %c0_250] : memref<4x6x6xf32, #tpu.memory_space<vmem>>, vector<1x2x2xf32>
    %1044 = vector.shape_cast %1043 : vector<1x2x2xf32> to vector<2x2xf32>
    %c30_251 = arith.constant 30 : index
    %1045 = memref.load %arg6[%c30_251] : memref<400xf32, #tpu.memory_space<smem>>
    %1046 = vector.broadcast %1045 : f32 to vector<2x2xf32>
    %1047 = arith.mulf %1046, %1044 : vector<2x2xf32>
    %1048 = arith.addf %1030, %1047 : vector<2x2xf32>
    %c130 = arith.constant 130 : index
    %1049 = memref.load %arg6[%c130] : memref<400xf32, #tpu.memory_space<smem>>
    %1050 = vector.broadcast %1049 : f32 to vector<2x2xf32>
    %1051 = arith.mulf %1050, %1044 : vector<2x2xf32>
    %1052 = arith.addf %1034, %1051 : vector<2x2xf32>
    %c230 = arith.constant 230 : index
    %1053 = memref.load %arg6[%c230] : memref<400xf32, #tpu.memory_space<smem>>
    %1054 = vector.broadcast %1053 : f32 to vector<2x2xf32>
    %1055 = arith.mulf %1054, %1044 : vector<2x2xf32>
    %1056 = arith.addf %1038, %1055 : vector<2x2xf32>
    %c330 = arith.constant 330 : index
    %1057 = memref.load %arg6[%c330] : memref<400xf32, #tpu.memory_space<smem>>
    %1058 = vector.broadcast %1057 : f32 to vector<2x2xf32>
    %1059 = arith.mulf %1058, %1044 : vector<2x2xf32>
    %1060 = arith.addf %1042, %1059 : vector<2x2xf32>
    %c1_252 = arith.constant 1 : index
    %c1_253 = arith.constant 1 : index
    %c1_254 = arith.constant 1 : index
    %1061 = vector.load %arg10[%c1_252, %c1_253, %c1_254] : memref<4x6x6xf32, #tpu.memory_space<vmem>>, vector<1x2x2xf32>
    %1062 = vector.shape_cast %1061 : vector<1x2x2xf32> to vector<2x2xf32>
    %c31_255 = arith.constant 31 : index
    %1063 = memref.load %arg6[%c31_255] : memref<400xf32, #tpu.memory_space<smem>>
    %1064 = vector.broadcast %1063 : f32 to vector<2x2xf32>
    %1065 = arith.mulf %1064, %1062 : vector<2x2xf32>
    %1066 = arith.addf %1048, %1065 : vector<2x2xf32>
    %c131 = arith.constant 131 : index
    %1067 = memref.load %arg6[%c131] : memref<400xf32, #tpu.memory_space<smem>>
    %1068 = vector.broadcast %1067 : f32 to vector<2x2xf32>
    %1069 = arith.mulf %1068, %1062 : vector<2x2xf32>
    %1070 = arith.addf %1052, %1069 : vector<2x2xf32>
    %c231 = arith.constant 231 : index
    %1071 = memref.load %arg6[%c231] : memref<400xf32, #tpu.memory_space<smem>>
    %1072 = vector.broadcast %1071 : f32 to vector<2x2xf32>
    %1073 = arith.mulf %1072, %1062 : vector<2x2xf32>
    %1074 = arith.addf %1056, %1073 : vector<2x2xf32>
    %c331 = arith.constant 331 : index
    %1075 = memref.load %arg6[%c331] : memref<400xf32, #tpu.memory_space<smem>>
    %1076 = vector.broadcast %1075 : f32 to vector<2x2xf32>
    %1077 = arith.mulf %1076, %1062 : vector<2x2xf32>
    %1078 = arith.addf %1060, %1077 : vector<2x2xf32>
    %c1_256 = arith.constant 1 : index
    %c1_257 = arith.constant 1 : index
    %c2_258 = arith.constant 2 : index
    %1079 = vector.load %arg10[%c1_256, %c1_257, %c2_258] : memref<4x6x6xf32, #tpu.memory_space<vmem>>, vector<1x2x2xf32>
    %1080 = vector.shape_cast %1079 : vector<1x2x2xf32> to vector<2x2xf32>
    %c32_259 = arith.constant 32 : index
    %1081 = memref.load %arg6[%c32_259] : memref<400xf32, #tpu.memory_space<smem>>
    %1082 = vector.broadcast %1081 : f32 to vector<2x2xf32>
    %1083 = arith.mulf %1082, %1080 : vector<2x2xf32>
    %1084 = arith.addf %1066, %1083 : vector<2x2xf32>
    %c132 = arith.constant 132 : index
    %1085 = memref.load %arg6[%c132] : memref<400xf32, #tpu.memory_space<smem>>
    %1086 = vector.broadcast %1085 : f32 to vector<2x2xf32>
    %1087 = arith.mulf %1086, %1080 : vector<2x2xf32>
    %1088 = arith.addf %1070, %1087 : vector<2x2xf32>
    %c232 = arith.constant 232 : index
    %1089 = memref.load %arg6[%c232] : memref<400xf32, #tpu.memory_space<smem>>
    %1090 = vector.broadcast %1089 : f32 to vector<2x2xf32>
    %1091 = arith.mulf %1090, %1080 : vector<2x2xf32>
    %1092 = arith.addf %1074, %1091 : vector<2x2xf32>
    %c332 = arith.constant 332 : index
    %1093 = memref.load %arg6[%c332] : memref<400xf32, #tpu.memory_space<smem>>
    %1094 = vector.broadcast %1093 : f32 to vector<2x2xf32>
    %1095 = arith.mulf %1094, %1080 : vector<2x2xf32>
    %1096 = arith.addf %1078, %1095 : vector<2x2xf32>
    %c1_260 = arith.constant 1 : index
    %c1_261 = arith.constant 1 : index
    %c3_262 = arith.constant 3 : index
    %1097 = vector.load %arg10[%c1_260, %c1_261, %c3_262] : memref<4x6x6xf32, #tpu.memory_space<vmem>>, vector<1x2x2xf32>
    %1098 = vector.shape_cast %1097 : vector<1x2x2xf32> to vector<2x2xf32>
    %c33_263 = arith.constant 33 : index
    %1099 = memref.load %arg6[%c33_263] : memref<400xf32, #tpu.memory_space<smem>>
    %1100 = vector.broadcast %1099 : f32 to vector<2x2xf32>
    %1101 = arith.mulf %1100, %1098 : vector<2x2xf32>
    %1102 = arith.addf %1084, %1101 : vector<2x2xf32>
    %c133 = arith.constant 133 : index
    %1103 = memref.load %arg6[%c133] : memref<400xf32, #tpu.memory_space<smem>>
    %1104 = vector.broadcast %1103 : f32 to vector<2x2xf32>
    %1105 = arith.mulf %1104, %1098 : vector<2x2xf32>
    %1106 = arith.addf %1088, %1105 : vector<2x2xf32>
    %c233 = arith.constant 233 : index
    %1107 = memref.load %arg6[%c233] : memref<400xf32, #tpu.memory_space<smem>>
    %1108 = vector.broadcast %1107 : f32 to vector<2x2xf32>
    %1109 = arith.mulf %1108, %1098 : vector<2x2xf32>
    %1110 = arith.addf %1092, %1109 : vector<2x2xf32>
    %c333 = arith.constant 333 : index
    %1111 = memref.load %arg6[%c333] : memref<400xf32, #tpu.memory_space<smem>>
    %1112 = vector.broadcast %1111 : f32 to vector<2x2xf32>
    %1113 = arith.mulf %1112, %1098 : vector<2x2xf32>
    %1114 = arith.addf %1096, %1113 : vector<2x2xf32>
    %c1_264 = arith.constant 1 : index
    %c1_265 = arith.constant 1 : index
    %c4_266 = arith.constant 4 : index
    %1115 = vector.load %arg10[%c1_264, %c1_265, %c4_266] : memref<4x6x6xf32, #tpu.memory_space<vmem>>, vector<1x2x2xf32>
    %1116 = vector.shape_cast %1115 : vector<1x2x2xf32> to vector<2x2xf32>
    %c34_267 = arith.constant 34 : index
    %1117 = memref.load %arg6[%c34_267] : memref<400xf32, #tpu.memory_space<smem>>
    %1118 = vector.broadcast %1117 : f32 to vector<2x2xf32>
    %1119 = arith.mulf %1118, %1116 : vector<2x2xf32>
    %1120 = arith.addf %1102, %1119 : vector<2x2xf32>
    %c134 = arith.constant 134 : index
    %1121 = memref.load %arg6[%c134] : memref<400xf32, #tpu.memory_space<smem>>
    %1122 = vector.broadcast %1121 : f32 to vector<2x2xf32>
    %1123 = arith.mulf %1122, %1116 : vector<2x2xf32>
    %1124 = arith.addf %1106, %1123 : vector<2x2xf32>
    %c234 = arith.constant 234 : index
    %1125 = memref.load %arg6[%c234] : memref<400xf32, #tpu.memory_space<smem>>
    %1126 = vector.broadcast %1125 : f32 to vector<2x2xf32>
    %1127 = arith.mulf %1126, %1116 : vector<2x2xf32>
    %1128 = arith.addf %1110, %1127 : vector<2x2xf32>
    %c334 = arith.constant 334 : index
    %1129 = memref.load %arg6[%c334] : memref<400xf32, #tpu.memory_space<smem>>
    %1130 = vector.broadcast %1129 : f32 to vector<2x2xf32>
    %1131 = arith.mulf %1130, %1116 : vector<2x2xf32>
    %1132 = arith.addf %1114, %1131 : vector<2x2xf32>
    %c1_268 = arith.constant 1 : index
    %c2_269 = arith.constant 2 : index
    %c0_270 = arith.constant 0 : index
    %1133 = vector.load %arg10[%c1_268, %c2_269, %c0_270] : memref<4x6x6xf32, #tpu.memory_space<vmem>>, vector<1x2x2xf32>
    %1134 = vector.shape_cast %1133 : vector<1x2x2xf32> to vector<2x2xf32>
    %c35_271 = arith.constant 35 : index
    %1135 = memref.load %arg6[%c35_271] : memref<400xf32, #tpu.memory_space<smem>>
    %1136 = vector.broadcast %1135 : f32 to vector<2x2xf32>
    %1137 = arith.mulf %1136, %1134 : vector<2x2xf32>
    %1138 = arith.addf %1120, %1137 : vector<2x2xf32>
    %c135 = arith.constant 135 : index
    %1139 = memref.load %arg6[%c135] : memref<400xf32, #tpu.memory_space<smem>>
    %1140 = vector.broadcast %1139 : f32 to vector<2x2xf32>
    %1141 = arith.mulf %1140, %1134 : vector<2x2xf32>
    %1142 = arith.addf %1124, %1141 : vector<2x2xf32>
    %c235 = arith.constant 235 : index
    %1143 = memref.load %arg6[%c235] : memref<400xf32, #tpu.memory_space<smem>>
    %1144 = vector.broadcast %1143 : f32 to vector<2x2xf32>
    %1145 = arith.mulf %1144, %1134 : vector<2x2xf32>
    %1146 = arith.addf %1128, %1145 : vector<2x2xf32>
    %c335 = arith.constant 335 : index
    %1147 = memref.load %arg6[%c335] : memref<400xf32, #tpu.memory_space<smem>>
    %1148 = vector.broadcast %1147 : f32 to vector<2x2xf32>
    %1149 = arith.mulf %1148, %1134 : vector<2x2xf32>
    %1150 = arith.addf %1132, %1149 : vector<2x2xf32>
    %c1_272 = arith.constant 1 : index
    %c2_273 = arith.constant 2 : index
    %c1_274 = arith.constant 1 : index
    %1151 = vector.load %arg10[%c1_272, %c2_273, %c1_274] : memref<4x6x6xf32, #tpu.memory_space<vmem>>, vector<1x2x2xf32>
    %1152 = vector.shape_cast %1151 : vector<1x2x2xf32> to vector<2x2xf32>
    %c36_275 = arith.constant 36 : index
    %1153 = memref.load %arg6[%c36_275] : memref<400xf32, #tpu.memory_space<smem>>
    %1154 = vector.broadcast %1153 : f32 to vector<2x2xf32>
    %1155 = arith.mulf %1154, %1152 : vector<2x2xf32>
    %1156 = arith.addf %1138, %1155 : vector<2x2xf32>
    %c136 = arith.constant 136 : index
    %1157 = memref.load %arg6[%c136] : memref<400xf32, #tpu.memory_space<smem>>
    %1158 = vector.broadcast %1157 : f32 to vector<2x2xf32>
    %1159 = arith.mulf %1158, %1152 : vector<2x2xf32>
    %1160 = arith.addf %1142, %1159 : vector<2x2xf32>
    %c236 = arith.constant 236 : index
    %1161 = memref.load %arg6[%c236] : memref<400xf32, #tpu.memory_space<smem>>
    %1162 = vector.broadcast %1161 : f32 to vector<2x2xf32>
    %1163 = arith.mulf %1162, %1152 : vector<2x2xf32>
    %1164 = arith.addf %1146, %1163 : vector<2x2xf32>
    %c336 = arith.constant 336 : index
    %1165 = memref.load %arg6[%c336] : memref<400xf32, #tpu.memory_space<smem>>
    %1166 = vector.broadcast %1165 : f32 to vector<2x2xf32>
    %1167 = arith.mulf %1166, %1152 : vector<2x2xf32>
    %1168 = arith.addf %1150, %1167 : vector<2x2xf32>
    %c1_276 = arith.constant 1 : index
    %c2_277 = arith.constant 2 : index
    %c2_278 = arith.constant 2 : index
    %1169 = vector.load %arg10[%c1_276, %c2_277, %c2_278] : memref<4x6x6xf32, #tpu.memory_space<vmem>>, vector<1x2x2xf32>
    %1170 = vector.shape_cast %1169 : vector<1x2x2xf32> to vector<2x2xf32>
    %c37_279 = arith.constant 37 : index
    %1171 = memref.load %arg6[%c37_279] : memref<400xf32, #tpu.memory_space<smem>>
    %1172 = vector.broadcast %1171 : f32 to vector<2x2xf32>
    %1173 = arith.mulf %1172, %1170 : vector<2x2xf32>
    %1174 = arith.addf %1156, %1173 : vector<2x2xf32>
    %c137 = arith.constant 137 : index
    %1175 = memref.load %arg6[%c137] : memref<400xf32, #tpu.memory_space<smem>>
    %1176 = vector.broadcast %1175 : f32 to vector<2x2xf32>
    %1177 = arith.mulf %1176, %1170 : vector<2x2xf32>
    %1178 = arith.addf %1160, %1177 : vector<2x2xf32>
    %c237 = arith.constant 237 : index
    %1179 = memref.load %arg6[%c237] : memref<400xf32, #tpu.memory_space<smem>>
    %1180 = vector.broadcast %1179 : f32 to vector<2x2xf32>
    %1181 = arith.mulf %1180, %1170 : vector<2x2xf32>
    %1182 = arith.addf %1164, %1181 : vector<2x2xf32>
    %c337 = arith.constant 337 : index
    %1183 = memref.load %arg6[%c337] : memref<400xf32, #tpu.memory_space<smem>>
    %1184 = vector.broadcast %1183 : f32 to vector<2x2xf32>
    %1185 = arith.mulf %1184, %1170 : vector<2x2xf32>
    %1186 = arith.addf %1168, %1185 : vector<2x2xf32>
    %c1_280 = arith.constant 1 : index
    %c2_281 = arith.constant 2 : index
    %c3_282 = arith.constant 3 : index
    %1187 = vector.load %arg10[%c1_280, %c2_281, %c3_282] : memref<4x6x6xf32, #tpu.memory_space<vmem>>, vector<1x2x2xf32>
    %1188 = vector.shape_cast %1187 : vector<1x2x2xf32> to vector<2x2xf32>
    %c38_283 = arith.constant 38 : index
    %1189 = memref.load %arg6[%c38_283] : memref<400xf32, #tpu.memory_space<smem>>
    %1190 = vector.broadcast %1189 : f32 to vector<2x2xf32>
    %1191 = arith.mulf %1190, %1188 : vector<2x2xf32>
    %1192 = arith.addf %1174, %1191 : vector<2x2xf32>
    %c138 = arith.constant 138 : index
    %1193 = memref.load %arg6[%c138] : memref<400xf32, #tpu.memory_space<smem>>
    %1194 = vector.broadcast %1193 : f32 to vector<2x2xf32>
    %1195 = arith.mulf %1194, %1188 : vector<2x2xf32>
    %1196 = arith.addf %1178, %1195 : vector<2x2xf32>
    %c238 = arith.constant 238 : index
    %1197 = memref.load %arg6[%c238] : memref<400xf32, #tpu.memory_space<smem>>
    %1198 = vector.broadcast %1197 : f32 to vector<2x2xf32>
    %1199 = arith.mulf %1198, %1188 : vector<2x2xf32>
    %1200 = arith.addf %1182, %1199 : vector<2x2xf32>
    %c338 = arith.constant 338 : index
    %1201 = memref.load %arg6[%c338] : memref<400xf32, #tpu.memory_space<smem>>
    %1202 = vector.broadcast %1201 : f32 to vector<2x2xf32>
    %1203 = arith.mulf %1202, %1188 : vector<2x2xf32>
    %1204 = arith.addf %1186, %1203 : vector<2x2xf32>
    %c1_284 = arith.constant 1 : index
    %c2_285 = arith.constant 2 : index
    %c4_286 = arith.constant 4 : index
    %1205 = vector.load %arg10[%c1_284, %c2_285, %c4_286] : memref<4x6x6xf32, #tpu.memory_space<vmem>>, vector<1x2x2xf32>
    %1206 = vector.shape_cast %1205 : vector<1x2x2xf32> to vector<2x2xf32>
    %c39_287 = arith.constant 39 : index
    %1207 = memref.load %arg6[%c39_287] : memref<400xf32, #tpu.memory_space<smem>>
    %1208 = vector.broadcast %1207 : f32 to vector<2x2xf32>
    %1209 = arith.mulf %1208, %1206 : vector<2x2xf32>
    %1210 = arith.addf %1192, %1209 : vector<2x2xf32>
    %c139 = arith.constant 139 : index
    %1211 = memref.load %arg6[%c139] : memref<400xf32, #tpu.memory_space<smem>>
    %1212 = vector.broadcast %1211 : f32 to vector<2x2xf32>
    %1213 = arith.mulf %1212, %1206 : vector<2x2xf32>
    %1214 = arith.addf %1196, %1213 : vector<2x2xf32>
    %c239 = arith.constant 239 : index
    %1215 = memref.load %arg6[%c239] : memref<400xf32, #tpu.memory_space<smem>>
    %1216 = vector.broadcast %1215 : f32 to vector<2x2xf32>
    %1217 = arith.mulf %1216, %1206 : vector<2x2xf32>
    %1218 = arith.addf %1200, %1217 : vector<2x2xf32>
    %c339 = arith.constant 339 : index
    %1219 = memref.load %arg6[%c339] : memref<400xf32, #tpu.memory_space<smem>>
    %1220 = vector.broadcast %1219 : f32 to vector<2x2xf32>
    %1221 = arith.mulf %1220, %1206 : vector<2x2xf32>
    %1222 = arith.addf %1204, %1221 : vector<2x2xf32>
    %c1_288 = arith.constant 1 : index
    %c3_289 = arith.constant 3 : index
    %c0_290 = arith.constant 0 : index
    %1223 = vector.load %arg10[%c1_288, %c3_289, %c0_290] : memref<4x6x6xf32, #tpu.memory_space<vmem>>, vector<1x2x2xf32>
    %1224 = vector.shape_cast %1223 : vector<1x2x2xf32> to vector<2x2xf32>
    %c40_291 = arith.constant 40 : index
    %1225 = memref.load %arg6[%c40_291] : memref<400xf32, #tpu.memory_space<smem>>
    %1226 = vector.broadcast %1225 : f32 to vector<2x2xf32>
    %1227 = arith.mulf %1226, %1224 : vector<2x2xf32>
    %1228 = arith.addf %1210, %1227 : vector<2x2xf32>
    %c140 = arith.constant 140 : index
    %1229 = memref.load %arg6[%c140] : memref<400xf32, #tpu.memory_space<smem>>
    %1230 = vector.broadcast %1229 : f32 to vector<2x2xf32>
    %1231 = arith.mulf %1230, %1224 : vector<2x2xf32>
    %1232 = arith.addf %1214, %1231 : vector<2x2xf32>
    %c240 = arith.constant 240 : index
    %1233 = memref.load %arg6[%c240] : memref<400xf32, #tpu.memory_space<smem>>
    %1234 = vector.broadcast %1233 : f32 to vector<2x2xf32>
    %1235 = arith.mulf %1234, %1224 : vector<2x2xf32>
    %1236 = arith.addf %1218, %1235 : vector<2x2xf32>
    %c340 = arith.constant 340 : index
    %1237 = memref.load %arg6[%c340] : memref<400xf32, #tpu.memory_space<smem>>
    %1238 = vector.broadcast %1237 : f32 to vector<2x2xf32>
    %1239 = arith.mulf %1238, %1224 : vector<2x2xf32>
    %1240 = arith.addf %1222, %1239 : vector<2x2xf32>
    %c1_292 = arith.constant 1 : index
    %c3_293 = arith.constant 3 : index
    %c1_294 = arith.constant 1 : index
    %1241 = vector.load %arg10[%c1_292, %c3_293, %c1_294] : memref<4x6x6xf32, #tpu.memory_space<vmem>>, vector<1x2x2xf32>
    %1242 = vector.shape_cast %1241 : vector<1x2x2xf32> to vector<2x2xf32>
    %c41_295 = arith.constant 41 : index
    %1243 = memref.load %arg6[%c41_295] : memref<400xf32, #tpu.memory_space<smem>>
    %1244 = vector.broadcast %1243 : f32 to vector<2x2xf32>
    %1245 = arith.mulf %1244, %1242 : vector<2x2xf32>
    %1246 = arith.addf %1228, %1245 : vector<2x2xf32>
    %c141 = arith.constant 141 : index
    %1247 = memref.load %arg6[%c141] : memref<400xf32, #tpu.memory_space<smem>>
    %1248 = vector.broadcast %1247 : f32 to vector<2x2xf32>
    %1249 = arith.mulf %1248, %1242 : vector<2x2xf32>
    %1250 = arith.addf %1232, %1249 : vector<2x2xf32>
    %c241 = arith.constant 241 : index
    %1251 = memref.load %arg6[%c241] : memref<400xf32, #tpu.memory_space<smem>>
    %1252 = vector.broadcast %1251 : f32 to vector<2x2xf32>
    %1253 = arith.mulf %1252, %1242 : vector<2x2xf32>
    %1254 = arith.addf %1236, %1253 : vector<2x2xf32>
    %c341 = arith.constant 341 : index
    %1255 = memref.load %arg6[%c341] : memref<400xf32, #tpu.memory_space<smem>>
    %1256 = vector.broadcast %1255 : f32 to vector<2x2xf32>
    %1257 = arith.mulf %1256, %1242 : vector<2x2xf32>
    %1258 = arith.addf %1240, %1257 : vector<2x2xf32>
    %c1_296 = arith.constant 1 : index
    %c3_297 = arith.constant 3 : index
    %c2_298 = arith.constant 2 : index
    %1259 = vector.load %arg10[%c1_296, %c3_297, %c2_298] : memref<4x6x6xf32, #tpu.memory_space<vmem>>, vector<1x2x2xf32>
    %1260 = vector.shape_cast %1259 : vector<1x2x2xf32> to vector<2x2xf32>
    %c42_299 = arith.constant 42 : index
    %1261 = memref.load %arg6[%c42_299] : memref<400xf32, #tpu.memory_space<smem>>
    %1262 = vector.broadcast %1261 : f32 to vector<2x2xf32>
    %1263 = arith.mulf %1262, %1260 : vector<2x2xf32>
    %1264 = arith.addf %1246, %1263 : vector<2x2xf32>
    %c142 = arith.constant 142 : index
    %1265 = memref.load %arg6[%c142] : memref<400xf32, #tpu.memory_space<smem>>
    %1266 = vector.broadcast %1265 : f32 to vector<2x2xf32>
    %1267 = arith.mulf %1266, %1260 : vector<2x2xf32>
    %1268 = arith.addf %1250, %1267 : vector<2x2xf32>
    %c242 = arith.constant 242 : index
    %1269 = memref.load %arg6[%c242] : memref<400xf32, #tpu.memory_space<smem>>
    %1270 = vector.broadcast %1269 : f32 to vector<2x2xf32>
    %1271 = arith.mulf %1270, %1260 : vector<2x2xf32>
    %1272 = arith.addf %1254, %1271 : vector<2x2xf32>
    %c342 = arith.constant 342 : index
    %1273 = memref.load %arg6[%c342] : memref<400xf32, #tpu.memory_space<smem>>
    %1274 = vector.broadcast %1273 : f32 to vector<2x2xf32>
    %1275 = arith.mulf %1274, %1260 : vector<2x2xf32>
    %1276 = arith.addf %1258, %1275 : vector<2x2xf32>
    %c1_300 = arith.constant 1 : index
    %c3_301 = arith.constant 3 : index
    %c3_302 = arith.constant 3 : index
    %1277 = vector.load %arg10[%c1_300, %c3_301, %c3_302] : memref<4x6x6xf32, #tpu.memory_space<vmem>>, vector<1x2x2xf32>
    %1278 = vector.shape_cast %1277 : vector<1x2x2xf32> to vector<2x2xf32>
    %c43_303 = arith.constant 43 : index
    %1279 = memref.load %arg6[%c43_303] : memref<400xf32, #tpu.memory_space<smem>>
    %1280 = vector.broadcast %1279 : f32 to vector<2x2xf32>
    %1281 = arith.mulf %1280, %1278 : vector<2x2xf32>
    %1282 = arith.addf %1264, %1281 : vector<2x2xf32>
    %c143 = arith.constant 143 : index
    %1283 = memref.load %arg6[%c143] : memref<400xf32, #tpu.memory_space<smem>>
    %1284 = vector.broadcast %1283 : f32 to vector<2x2xf32>
    %1285 = arith.mulf %1284, %1278 : vector<2x2xf32>
    %1286 = arith.addf %1268, %1285 : vector<2x2xf32>
    %c243 = arith.constant 243 : index
    %1287 = memref.load %arg6[%c243] : memref<400xf32, #tpu.memory_space<smem>>
    %1288 = vector.broadcast %1287 : f32 to vector<2x2xf32>
    %1289 = arith.mulf %1288, %1278 : vector<2x2xf32>
    %1290 = arith.addf %1272, %1289 : vector<2x2xf32>
    %c343 = arith.constant 343 : index
    %1291 = memref.load %arg6[%c343] : memref<400xf32, #tpu.memory_space<smem>>
    %1292 = vector.broadcast %1291 : f32 to vector<2x2xf32>
    %1293 = arith.mulf %1292, %1278 : vector<2x2xf32>
    %1294 = arith.addf %1276, %1293 : vector<2x2xf32>
    %c1_304 = arith.constant 1 : index
    %c3_305 = arith.constant 3 : index
    %c4_306 = arith.constant 4 : index
    %1295 = vector.load %arg10[%c1_304, %c3_305, %c4_306] : memref<4x6x6xf32, #tpu.memory_space<vmem>>, vector<1x2x2xf32>
    %1296 = vector.shape_cast %1295 : vector<1x2x2xf32> to vector<2x2xf32>
    %c44_307 = arith.constant 44 : index
    %1297 = memref.load %arg6[%c44_307] : memref<400xf32, #tpu.memory_space<smem>>
    %1298 = vector.broadcast %1297 : f32 to vector<2x2xf32>
    %1299 = arith.mulf %1298, %1296 : vector<2x2xf32>
    %1300 = arith.addf %1282, %1299 : vector<2x2xf32>
    %c144 = arith.constant 144 : index
    %1301 = memref.load %arg6[%c144] : memref<400xf32, #tpu.memory_space<smem>>
    %1302 = vector.broadcast %1301 : f32 to vector<2x2xf32>
    %1303 = arith.mulf %1302, %1296 : vector<2x2xf32>
    %1304 = arith.addf %1286, %1303 : vector<2x2xf32>
    %c244 = arith.constant 244 : index
    %1305 = memref.load %arg6[%c244] : memref<400xf32, #tpu.memory_space<smem>>
    %1306 = vector.broadcast %1305 : f32 to vector<2x2xf32>
    %1307 = arith.mulf %1306, %1296 : vector<2x2xf32>
    %1308 = arith.addf %1290, %1307 : vector<2x2xf32>
    %c344 = arith.constant 344 : index
    %1309 = memref.load %arg6[%c344] : memref<400xf32, #tpu.memory_space<smem>>
    %1310 = vector.broadcast %1309 : f32 to vector<2x2xf32>
    %1311 = arith.mulf %1310, %1296 : vector<2x2xf32>
    %1312 = arith.addf %1294, %1311 : vector<2x2xf32>
    %c1_308 = arith.constant 1 : index
    %c4_309 = arith.constant 4 : index
    %c0_310 = arith.constant 0 : index
    %1313 = vector.load %arg10[%c1_308, %c4_309, %c0_310] : memref<4x6x6xf32, #tpu.memory_space<vmem>>, vector<1x2x2xf32>
    %1314 = vector.shape_cast %1313 : vector<1x2x2xf32> to vector<2x2xf32>
    %c45_311 = arith.constant 45 : index
    %1315 = memref.load %arg6[%c45_311] : memref<400xf32, #tpu.memory_space<smem>>
    %1316 = vector.broadcast %1315 : f32 to vector<2x2xf32>
    %1317 = arith.mulf %1316, %1314 : vector<2x2xf32>
    %1318 = arith.addf %1300, %1317 : vector<2x2xf32>
    %c145 = arith.constant 145 : index
    %1319 = memref.load %arg6[%c145] : memref<400xf32, #tpu.memory_space<smem>>
    %1320 = vector.broadcast %1319 : f32 to vector<2x2xf32>
    %1321 = arith.mulf %1320, %1314 : vector<2x2xf32>
    %1322 = arith.addf %1304, %1321 : vector<2x2xf32>
    %c245 = arith.constant 245 : index
    %1323 = memref.load %arg6[%c245] : memref<400xf32, #tpu.memory_space<smem>>
    %1324 = vector.broadcast %1323 : f32 to vector<2x2xf32>
    %1325 = arith.mulf %1324, %1314 : vector<2x2xf32>
    %1326 = arith.addf %1308, %1325 : vector<2x2xf32>
    %c345 = arith.constant 345 : index
    %1327 = memref.load %arg6[%c345] : memref<400xf32, #tpu.memory_space<smem>>
    %1328 = vector.broadcast %1327 : f32 to vector<2x2xf32>
    %1329 = arith.mulf %1328, %1314 : vector<2x2xf32>
    %1330 = arith.addf %1312, %1329 : vector<2x2xf32>
    %c1_312 = arith.constant 1 : index
    %c4_313 = arith.constant 4 : index
    %c1_314 = arith.constant 1 : index
    %1331 = vector.load %arg10[%c1_312, %c4_313, %c1_314] : memref<4x6x6xf32, #tpu.memory_space<vmem>>, vector<1x2x2xf32>
    %1332 = vector.shape_cast %1331 : vector<1x2x2xf32> to vector<2x2xf32>
    %c46_315 = arith.constant 46 : index
    %1333 = memref.load %arg6[%c46_315] : memref<400xf32, #tpu.memory_space<smem>>
    %1334 = vector.broadcast %1333 : f32 to vector<2x2xf32>
    %1335 = arith.mulf %1334, %1332 : vector<2x2xf32>
    %1336 = arith.addf %1318, %1335 : vector<2x2xf32>
    %c146 = arith.constant 146 : index
    %1337 = memref.load %arg6[%c146] : memref<400xf32, #tpu.memory_space<smem>>
    %1338 = vector.broadcast %1337 : f32 to vector<2x2xf32>
    %1339 = arith.mulf %1338, %1332 : vector<2x2xf32>
    %1340 = arith.addf %1322, %1339 : vector<2x2xf32>
    %c246 = arith.constant 246 : index
    %1341 = memref.load %arg6[%c246] : memref<400xf32, #tpu.memory_space<smem>>
    %1342 = vector.broadcast %1341 : f32 to vector<2x2xf32>
    %1343 = arith.mulf %1342, %1332 : vector<2x2xf32>
    %1344 = arith.addf %1326, %1343 : vector<2x2xf32>
    %c346 = arith.constant 346 : index
    %1345 = memref.load %arg6[%c346] : memref<400xf32, #tpu.memory_space<smem>>
    %1346 = vector.broadcast %1345 : f32 to vector<2x2xf32>
    %1347 = arith.mulf %1346, %1332 : vector<2x2xf32>
    %1348 = arith.addf %1330, %1347 : vector<2x2xf32>
    %c1_316 = arith.constant 1 : index
    %c4_317 = arith.constant 4 : index
    %c2_318 = arith.constant 2 : index
    %1349 = vector.load %arg10[%c1_316, %c4_317, %c2_318] : memref<4x6x6xf32, #tpu.memory_space<vmem>>, vector<1x2x2xf32>
    %1350 = vector.shape_cast %1349 : vector<1x2x2xf32> to vector<2x2xf32>
    %c47_319 = arith.constant 47 : index
    %1351 = memref.load %arg6[%c47_319] : memref<400xf32, #tpu.memory_space<smem>>
    %1352 = vector.broadcast %1351 : f32 to vector<2x2xf32>
    %1353 = arith.mulf %1352, %1350 : vector<2x2xf32>
    %1354 = arith.addf %1336, %1353 : vector<2x2xf32>
    %c147 = arith.constant 147 : index
    %1355 = memref.load %arg6[%c147] : memref<400xf32, #tpu.memory_space<smem>>
    %1356 = vector.broadcast %1355 : f32 to vector<2x2xf32>
    %1357 = arith.mulf %1356, %1350 : vector<2x2xf32>
    %1358 = arith.addf %1340, %1357 : vector<2x2xf32>
    %c247 = arith.constant 247 : index
    %1359 = memref.load %arg6[%c247] : memref<400xf32, #tpu.memory_space<smem>>
    %1360 = vector.broadcast %1359 : f32 to vector<2x2xf32>
    %1361 = arith.mulf %1360, %1350 : vector<2x2xf32>
    %1362 = arith.addf %1344, %1361 : vector<2x2xf32>
    %c347 = arith.constant 347 : index
    %1363 = memref.load %arg6[%c347] : memref<400xf32, #tpu.memory_space<smem>>
    %1364 = vector.broadcast %1363 : f32 to vector<2x2xf32>
    %1365 = arith.mulf %1364, %1350 : vector<2x2xf32>
    %1366 = arith.addf %1348, %1365 : vector<2x2xf32>
    %c1_320 = arith.constant 1 : index
    %c4_321 = arith.constant 4 : index
    %c3_322 = arith.constant 3 : index
    %1367 = vector.load %arg10[%c1_320, %c4_321, %c3_322] : memref<4x6x6xf32, #tpu.memory_space<vmem>>, vector<1x2x2xf32>
    %1368 = vector.shape_cast %1367 : vector<1x2x2xf32> to vector<2x2xf32>
    %c48_323 = arith.constant 48 : index
    %1369 = memref.load %arg6[%c48_323] : memref<400xf32, #tpu.memory_space<smem>>
    %1370 = vector.broadcast %1369 : f32 to vector<2x2xf32>
    %1371 = arith.mulf %1370, %1368 : vector<2x2xf32>
    %1372 = arith.addf %1354, %1371 : vector<2x2xf32>
    %c148 = arith.constant 148 : index
    %1373 = memref.load %arg6[%c148] : memref<400xf32, #tpu.memory_space<smem>>
    %1374 = vector.broadcast %1373 : f32 to vector<2x2xf32>
    %1375 = arith.mulf %1374, %1368 : vector<2x2xf32>
    %1376 = arith.addf %1358, %1375 : vector<2x2xf32>
    %c248 = arith.constant 248 : index
    %1377 = memref.load %arg6[%c248] : memref<400xf32, #tpu.memory_space<smem>>
    %1378 = vector.broadcast %1377 : f32 to vector<2x2xf32>
    %1379 = arith.mulf %1378, %1368 : vector<2x2xf32>
    %1380 = arith.addf %1362, %1379 : vector<2x2xf32>
    %c348 = arith.constant 348 : index
    %1381 = memref.load %arg6[%c348] : memref<400xf32, #tpu.memory_space<smem>>
    %1382 = vector.broadcast %1381 : f32 to vector<2x2xf32>
    %1383 = arith.mulf %1382, %1368 : vector<2x2xf32>
    %1384 = arith.addf %1366, %1383 : vector<2x2xf32>
    %c1_324 = arith.constant 1 : index
    %c4_325 = arith.constant 4 : index
    %c4_326 = arith.constant 4 : index
    %1385 = vector.load %arg10[%c1_324, %c4_325, %c4_326] : memref<4x6x6xf32, #tpu.memory_space<vmem>>, vector<1x2x2xf32>
    %1386 = vector.shape_cast %1385 : vector<1x2x2xf32> to vector<2x2xf32>
    %c49_327 = arith.constant 49 : index
    %1387 = memref.load %arg6[%c49_327] : memref<400xf32, #tpu.memory_space<smem>>
    %1388 = vector.broadcast %1387 : f32 to vector<2x2xf32>
    %1389 = arith.mulf %1388, %1386 : vector<2x2xf32>
    %1390 = arith.addf %1372, %1389 : vector<2x2xf32>
    %c149 = arith.constant 149 : index
    %1391 = memref.load %arg6[%c149] : memref<400xf32, #tpu.memory_space<smem>>
    %1392 = vector.broadcast %1391 : f32 to vector<2x2xf32>
    %1393 = arith.mulf %1392, %1386 : vector<2x2xf32>
    %1394 = arith.addf %1376, %1393 : vector<2x2xf32>
    %c249 = arith.constant 249 : index
    %1395 = memref.load %arg6[%c249] : memref<400xf32, #tpu.memory_space<smem>>
    %1396 = vector.broadcast %1395 : f32 to vector<2x2xf32>
    %1397 = arith.mulf %1396, %1386 : vector<2x2xf32>
    %1398 = arith.addf %1380, %1397 : vector<2x2xf32>
    %c349 = arith.constant 349 : index
    %1399 = memref.load %arg6[%c349] : memref<400xf32, #tpu.memory_space<smem>>
    %1400 = vector.broadcast %1399 : f32 to vector<2x2xf32>
    %1401 = arith.mulf %1400, %1386 : vector<2x2xf32>
    %1402 = arith.addf %1384, %1401 : vector<2x2xf32>
    %c2_328 = arith.constant 2 : index
    %c0_329 = arith.constant 0 : index
    %c0_330 = arith.constant 0 : index
    %1403 = vector.load %arg10[%c2_328, %c0_329, %c0_330] : memref<4x6x6xf32, #tpu.memory_space<vmem>>, vector<1x2x2xf32>
    %1404 = vector.shape_cast %1403 : vector<1x2x2xf32> to vector<2x2xf32>
    %c50_331 = arith.constant 50 : index
    %1405 = memref.load %arg6[%c50_331] : memref<400xf32, #tpu.memory_space<smem>>
    %1406 = vector.broadcast %1405 : f32 to vector<2x2xf32>
    %1407 = arith.mulf %1406, %1404 : vector<2x2xf32>
    %1408 = arith.addf %1390, %1407 : vector<2x2xf32>
    %c150 = arith.constant 150 : index
    %1409 = memref.load %arg6[%c150] : memref<400xf32, #tpu.memory_space<smem>>
    %1410 = vector.broadcast %1409 : f32 to vector<2x2xf32>
    %1411 = arith.mulf %1410, %1404 : vector<2x2xf32>
    %1412 = arith.addf %1394, %1411 : vector<2x2xf32>
    %c250 = arith.constant 250 : index
    %1413 = memref.load %arg6[%c250] : memref<400xf32, #tpu.memory_space<smem>>
    %1414 = vector.broadcast %1413 : f32 to vector<2x2xf32>
    %1415 = arith.mulf %1414, %1404 : vector<2x2xf32>
    %1416 = arith.addf %1398, %1415 : vector<2x2xf32>
    %c350 = arith.constant 350 : index
    %1417 = memref.load %arg6[%c350] : memref<400xf32, #tpu.memory_space<smem>>
    %1418 = vector.broadcast %1417 : f32 to vector<2x2xf32>
    %1419 = arith.mulf %1418, %1404 : vector<2x2xf32>
    %1420 = arith.addf %1402, %1419 : vector<2x2xf32>
    %c2_332 = arith.constant 2 : index
    %c0_333 = arith.constant 0 : index
    %c1_334 = arith.constant 1 : index
    %1421 = vector.load %arg10[%c2_332, %c0_333, %c1_334] : memref<4x6x6xf32, #tpu.memory_space<vmem>>, vector<1x2x2xf32>
    %1422 = vector.shape_cast %1421 : vector<1x2x2xf32> to vector<2x2xf32>
    %c51_335 = arith.constant 51 : index
    %1423 = memref.load %arg6[%c51_335] : memref<400xf32, #tpu.memory_space<smem>>
    %1424 = vector.broadcast %1423 : f32 to vector<2x2xf32>
    %1425 = arith.mulf %1424, %1422 : vector<2x2xf32>
    %1426 = arith.addf %1408, %1425 : vector<2x2xf32>
    %c151 = arith.constant 151 : index
    %1427 = memref.load %arg6[%c151] : memref<400xf32, #tpu.memory_space<smem>>
    %1428 = vector.broadcast %1427 : f32 to vector<2x2xf32>
    %1429 = arith.mulf %1428, %1422 : vector<2x2xf32>
    %1430 = arith.addf %1412, %1429 : vector<2x2xf32>
    %c251 = arith.constant 251 : index
    %1431 = memref.load %arg6[%c251] : memref<400xf32, #tpu.memory_space<smem>>
    %1432 = vector.broadcast %1431 : f32 to vector<2x2xf32>
    %1433 = arith.mulf %1432, %1422 : vector<2x2xf32>
    %1434 = arith.addf %1416, %1433 : vector<2x2xf32>
    %c351 = arith.constant 351 : index
    %1435 = memref.load %arg6[%c351] : memref<400xf32, #tpu.memory_space<smem>>
    %1436 = vector.broadcast %1435 : f32 to vector<2x2xf32>
    %1437 = arith.mulf %1436, %1422 : vector<2x2xf32>
    %1438 = arith.addf %1420, %1437 : vector<2x2xf32>
    %c2_336 = arith.constant 2 : index
    %c0_337 = arith.constant 0 : index
    %c2_338 = arith.constant 2 : index
    %1439 = vector.load %arg10[%c2_336, %c0_337, %c2_338] : memref<4x6x6xf32, #tpu.memory_space<vmem>>, vector<1x2x2xf32>
    %1440 = vector.shape_cast %1439 : vector<1x2x2xf32> to vector<2x2xf32>
    %c52_339 = arith.constant 52 : index
    %1441 = memref.load %arg6[%c52_339] : memref<400xf32, #tpu.memory_space<smem>>
    %1442 = vector.broadcast %1441 : f32 to vector<2x2xf32>
    %1443 = arith.mulf %1442, %1440 : vector<2x2xf32>
    %1444 = arith.addf %1426, %1443 : vector<2x2xf32>
    %c152 = arith.constant 152 : index
    %1445 = memref.load %arg6[%c152] : memref<400xf32, #tpu.memory_space<smem>>
    %1446 = vector.broadcast %1445 : f32 to vector<2x2xf32>
    %1447 = arith.mulf %1446, %1440 : vector<2x2xf32>
    %1448 = arith.addf %1430, %1447 : vector<2x2xf32>
    %c252 = arith.constant 252 : index
    %1449 = memref.load %arg6[%c252] : memref<400xf32, #tpu.memory_space<smem>>
    %1450 = vector.broadcast %1449 : f32 to vector<2x2xf32>
    %1451 = arith.mulf %1450, %1440 : vector<2x2xf32>
    %1452 = arith.addf %1434, %1451 : vector<2x2xf32>
    %c352 = arith.constant 352 : index
    %1453 = memref.load %arg6[%c352] : memref<400xf32, #tpu.memory_space<smem>>
    %1454 = vector.broadcast %1453 : f32 to vector<2x2xf32>
    %1455 = arith.mulf %1454, %1440 : vector<2x2xf32>
    %1456 = arith.addf %1438, %1455 : vector<2x2xf32>
    %c2_340 = arith.constant 2 : index
    %c0_341 = arith.constant 0 : index
    %c3_342 = arith.constant 3 : index
    %1457 = vector.load %arg10[%c2_340, %c0_341, %c3_342] : memref<4x6x6xf32, #tpu.memory_space<vmem>>, vector<1x2x2xf32>
    %1458 = vector.shape_cast %1457 : vector<1x2x2xf32> to vector<2x2xf32>
    %c53_343 = arith.constant 53 : index
    %1459 = memref.load %arg6[%c53_343] : memref<400xf32, #tpu.memory_space<smem>>
    %1460 = vector.broadcast %1459 : f32 to vector<2x2xf32>
    %1461 = arith.mulf %1460, %1458 : vector<2x2xf32>
    %1462 = arith.addf %1444, %1461 : vector<2x2xf32>
    %c153 = arith.constant 153 : index
    %1463 = memref.load %arg6[%c153] : memref<400xf32, #tpu.memory_space<smem>>
    %1464 = vector.broadcast %1463 : f32 to vector<2x2xf32>
    %1465 = arith.mulf %1464, %1458 : vector<2x2xf32>
    %1466 = arith.addf %1448, %1465 : vector<2x2xf32>
    %c253 = arith.constant 253 : index
    %1467 = memref.load %arg6[%c253] : memref<400xf32, #tpu.memory_space<smem>>
    %1468 = vector.broadcast %1467 : f32 to vector<2x2xf32>
    %1469 = arith.mulf %1468, %1458 : vector<2x2xf32>
    %1470 = arith.addf %1452, %1469 : vector<2x2xf32>
    %c353 = arith.constant 353 : index
    %1471 = memref.load %arg6[%c353] : memref<400xf32, #tpu.memory_space<smem>>
    %1472 = vector.broadcast %1471 : f32 to vector<2x2xf32>
    %1473 = arith.mulf %1472, %1458 : vector<2x2xf32>
    %1474 = arith.addf %1456, %1473 : vector<2x2xf32>
    %c2_344 = arith.constant 2 : index
    %c0_345 = arith.constant 0 : index
    %c4_346 = arith.constant 4 : index
    %1475 = vector.load %arg10[%c2_344, %c0_345, %c4_346] : memref<4x6x6xf32, #tpu.memory_space<vmem>>, vector<1x2x2xf32>
    %1476 = vector.shape_cast %1475 : vector<1x2x2xf32> to vector<2x2xf32>
    %c54_347 = arith.constant 54 : index
    %1477 = memref.load %arg6[%c54_347] : memref<400xf32, #tpu.memory_space<smem>>
    %1478 = vector.broadcast %1477 : f32 to vector<2x2xf32>
    %1479 = arith.mulf %1478, %1476 : vector<2x2xf32>
    %1480 = arith.addf %1462, %1479 : vector<2x2xf32>
    %c154 = arith.constant 154 : index
    %1481 = memref.load %arg6[%c154] : memref<400xf32, #tpu.memory_space<smem>>
    %1482 = vector.broadcast %1481 : f32 to vector<2x2xf32>
    %1483 = arith.mulf %1482, %1476 : vector<2x2xf32>
    %1484 = arith.addf %1466, %1483 : vector<2x2xf32>
    %c254 = arith.constant 254 : index
    %1485 = memref.load %arg6[%c254] : memref<400xf32, #tpu.memory_space<smem>>
    %1486 = vector.broadcast %1485 : f32 to vector<2x2xf32>
    %1487 = arith.mulf %1486, %1476 : vector<2x2xf32>
    %1488 = arith.addf %1470, %1487 : vector<2x2xf32>
    %c354 = arith.constant 354 : index
    %1489 = memref.load %arg6[%c354] : memref<400xf32, #tpu.memory_space<smem>>
    %1490 = vector.broadcast %1489 : f32 to vector<2x2xf32>
    %1491 = arith.mulf %1490, %1476 : vector<2x2xf32>
    %1492 = arith.addf %1474, %1491 : vector<2x2xf32>
    %c2_348 = arith.constant 2 : index
    %c1_349 = arith.constant 1 : index
    %c0_350 = arith.constant 0 : index
    %1493 = vector.load %arg10[%c2_348, %c1_349, %c0_350] : memref<4x6x6xf32, #tpu.memory_space<vmem>>, vector<1x2x2xf32>
    %1494 = vector.shape_cast %1493 : vector<1x2x2xf32> to vector<2x2xf32>
    %c55_351 = arith.constant 55 : index
    %1495 = memref.load %arg6[%c55_351] : memref<400xf32, #tpu.memory_space<smem>>
    %1496 = vector.broadcast %1495 : f32 to vector<2x2xf32>
    %1497 = arith.mulf %1496, %1494 : vector<2x2xf32>
    %1498 = arith.addf %1480, %1497 : vector<2x2xf32>
    %c155 = arith.constant 155 : index
    %1499 = memref.load %arg6[%c155] : memref<400xf32, #tpu.memory_space<smem>>
    %1500 = vector.broadcast %1499 : f32 to vector<2x2xf32>
    %1501 = arith.mulf %1500, %1494 : vector<2x2xf32>
    %1502 = arith.addf %1484, %1501 : vector<2x2xf32>
    %c255 = arith.constant 255 : index
    %1503 = memref.load %arg6[%c255] : memref<400xf32, #tpu.memory_space<smem>>
    %1504 = vector.broadcast %1503 : f32 to vector<2x2xf32>
    %1505 = arith.mulf %1504, %1494 : vector<2x2xf32>
    %1506 = arith.addf %1488, %1505 : vector<2x2xf32>
    %c355 = arith.constant 355 : index
    %1507 = memref.load %arg6[%c355] : memref<400xf32, #tpu.memory_space<smem>>
    %1508 = vector.broadcast %1507 : f32 to vector<2x2xf32>
    %1509 = arith.mulf %1508, %1494 : vector<2x2xf32>
    %1510 = arith.addf %1492, %1509 : vector<2x2xf32>
    %c2_352 = arith.constant 2 : index
    %c1_353 = arith.constant 1 : index
    %c1_354 = arith.constant 1 : index
    %1511 = vector.load %arg10[%c2_352, %c1_353, %c1_354] : memref<4x6x6xf32, #tpu.memory_space<vmem>>, vector<1x2x2xf32>
    %1512 = vector.shape_cast %1511 : vector<1x2x2xf32> to vector<2x2xf32>
    %c56_355 = arith.constant 56 : index
    %1513 = memref.load %arg6[%c56_355] : memref<400xf32, #tpu.memory_space<smem>>
    %1514 = vector.broadcast %1513 : f32 to vector<2x2xf32>
    %1515 = arith.mulf %1514, %1512 : vector<2x2xf32>
    %1516 = arith.addf %1498, %1515 : vector<2x2xf32>
    %c156 = arith.constant 156 : index
    %1517 = memref.load %arg6[%c156] : memref<400xf32, #tpu.memory_space<smem>>
    %1518 = vector.broadcast %1517 : f32 to vector<2x2xf32>
    %1519 = arith.mulf %1518, %1512 : vector<2x2xf32>
    %1520 = arith.addf %1502, %1519 : vector<2x2xf32>
    %c256 = arith.constant 256 : index
    %1521 = memref.load %arg6[%c256] : memref<400xf32, #tpu.memory_space<smem>>
    %1522 = vector.broadcast %1521 : f32 to vector<2x2xf32>
    %1523 = arith.mulf %1522, %1512 : vector<2x2xf32>
    %1524 = arith.addf %1506, %1523 : vector<2x2xf32>
    %c356 = arith.constant 356 : index
    %1525 = memref.load %arg6[%c356] : memref<400xf32, #tpu.memory_space<smem>>
    %1526 = vector.broadcast %1525 : f32 to vector<2x2xf32>
    %1527 = arith.mulf %1526, %1512 : vector<2x2xf32>
    %1528 = arith.addf %1510, %1527 : vector<2x2xf32>
    %c2_356 = arith.constant 2 : index
    %c1_357 = arith.constant 1 : index
    %c2_358 = arith.constant 2 : index
    %1529 = vector.load %arg10[%c2_356, %c1_357, %c2_358] : memref<4x6x6xf32, #tpu.memory_space<vmem>>, vector<1x2x2xf32>
    %1530 = vector.shape_cast %1529 : vector<1x2x2xf32> to vector<2x2xf32>
    %c57_359 = arith.constant 57 : index
    %1531 = memref.load %arg6[%c57_359] : memref<400xf32, #tpu.memory_space<smem>>
    %1532 = vector.broadcast %1531 : f32 to vector<2x2xf32>
    %1533 = arith.mulf %1532, %1530 : vector<2x2xf32>
    %1534 = arith.addf %1516, %1533 : vector<2x2xf32>
    %c157 = arith.constant 157 : index
    %1535 = memref.load %arg6[%c157] : memref<400xf32, #tpu.memory_space<smem>>
    %1536 = vector.broadcast %1535 : f32 to vector<2x2xf32>
    %1537 = arith.mulf %1536, %1530 : vector<2x2xf32>
    %1538 = arith.addf %1520, %1537 : vector<2x2xf32>
    %c257 = arith.constant 257 : index
    %1539 = memref.load %arg6[%c257] : memref<400xf32, #tpu.memory_space<smem>>
    %1540 = vector.broadcast %1539 : f32 to vector<2x2xf32>
    %1541 = arith.mulf %1540, %1530 : vector<2x2xf32>
    %1542 = arith.addf %1524, %1541 : vector<2x2xf32>
    %c357 = arith.constant 357 : index
    %1543 = memref.load %arg6[%c357] : memref<400xf32, #tpu.memory_space<smem>>
    %1544 = vector.broadcast %1543 : f32 to vector<2x2xf32>
    %1545 = arith.mulf %1544, %1530 : vector<2x2xf32>
    %1546 = arith.addf %1528, %1545 : vector<2x2xf32>
    %c2_360 = arith.constant 2 : index
    %c1_361 = arith.constant 1 : index
    %c3_362 = arith.constant 3 : index
    %1547 = vector.load %arg10[%c2_360, %c1_361, %c3_362] : memref<4x6x6xf32, #tpu.memory_space<vmem>>, vector<1x2x2xf32>
    %1548 = vector.shape_cast %1547 : vector<1x2x2xf32> to vector<2x2xf32>
    %c58_363 = arith.constant 58 : index
    %1549 = memref.load %arg6[%c58_363] : memref<400xf32, #tpu.memory_space<smem>>
    %1550 = vector.broadcast %1549 : f32 to vector<2x2xf32>
    %1551 = arith.mulf %1550, %1548 : vector<2x2xf32>
    %1552 = arith.addf %1534, %1551 : vector<2x2xf32>
    %c158 = arith.constant 158 : index
    %1553 = memref.load %arg6[%c158] : memref<400xf32, #tpu.memory_space<smem>>
    %1554 = vector.broadcast %1553 : f32 to vector<2x2xf32>
    %1555 = arith.mulf %1554, %1548 : vector<2x2xf32>
    %1556 = arith.addf %1538, %1555 : vector<2x2xf32>
    %c258 = arith.constant 258 : index
    %1557 = memref.load %arg6[%c258] : memref<400xf32, #tpu.memory_space<smem>>
    %1558 = vector.broadcast %1557 : f32 to vector<2x2xf32>
    %1559 = arith.mulf %1558, %1548 : vector<2x2xf32>
    %1560 = arith.addf %1542, %1559 : vector<2x2xf32>
    %c358 = arith.constant 358 : index
    %1561 = memref.load %arg6[%c358] : memref<400xf32, #tpu.memory_space<smem>>
    %1562 = vector.broadcast %1561 : f32 to vector<2x2xf32>
    %1563 = arith.mulf %1562, %1548 : vector<2x2xf32>
    %1564 = arith.addf %1546, %1563 : vector<2x2xf32>
    %c2_364 = arith.constant 2 : index
    %c1_365 = arith.constant 1 : index
    %c4_366 = arith.constant 4 : index
    %1565 = vector.load %arg10[%c2_364, %c1_365, %c4_366] : memref<4x6x6xf32, #tpu.memory_space<vmem>>, vector<1x2x2xf32>
    %1566 = vector.shape_cast %1565 : vector<1x2x2xf32> to vector<2x2xf32>
    %c59_367 = arith.constant 59 : index
    %1567 = memref.load %arg6[%c59_367] : memref<400xf32, #tpu.memory_space<smem>>
    %1568 = vector.broadcast %1567 : f32 to vector<2x2xf32>
    %1569 = arith.mulf %1568, %1566 : vector<2x2xf32>
    %1570 = arith.addf %1552, %1569 : vector<2x2xf32>
    %c159 = arith.constant 159 : index
    %1571 = memref.load %arg6[%c159] : memref<400xf32, #tpu.memory_space<smem>>
    %1572 = vector.broadcast %1571 : f32 to vector<2x2xf32>
    %1573 = arith.mulf %1572, %1566 : vector<2x2xf32>
    %1574 = arith.addf %1556, %1573 : vector<2x2xf32>
    %c259 = arith.constant 259 : index
    %1575 = memref.load %arg6[%c259] : memref<400xf32, #tpu.memory_space<smem>>
    %1576 = vector.broadcast %1575 : f32 to vector<2x2xf32>
    %1577 = arith.mulf %1576, %1566 : vector<2x2xf32>
    %1578 = arith.addf %1560, %1577 : vector<2x2xf32>
    %c359 = arith.constant 359 : index
    %1579 = memref.load %arg6[%c359] : memref<400xf32, #tpu.memory_space<smem>>
    %1580 = vector.broadcast %1579 : f32 to vector<2x2xf32>
    %1581 = arith.mulf %1580, %1566 : vector<2x2xf32>
    %1582 = arith.addf %1564, %1581 : vector<2x2xf32>
    %c2_368 = arith.constant 2 : index
    %c2_369 = arith.constant 2 : index
    %c0_370 = arith.constant 0 : index
    %1583 = vector.load %arg10[%c2_368, %c2_369, %c0_370] : memref<4x6x6xf32, #tpu.memory_space<vmem>>, vector<1x2x2xf32>
    %1584 = vector.shape_cast %1583 : vector<1x2x2xf32> to vector<2x2xf32>
    %c60_371 = arith.constant 60 : index
    %1585 = memref.load %arg6[%c60_371] : memref<400xf32, #tpu.memory_space<smem>>
    %1586 = vector.broadcast %1585 : f32 to vector<2x2xf32>
    %1587 = arith.mulf %1586, %1584 : vector<2x2xf32>
    %1588 = arith.addf %1570, %1587 : vector<2x2xf32>
    %c160 = arith.constant 160 : index
    %1589 = memref.load %arg6[%c160] : memref<400xf32, #tpu.memory_space<smem>>
    %1590 = vector.broadcast %1589 : f32 to vector<2x2xf32>
    %1591 = arith.mulf %1590, %1584 : vector<2x2xf32>
    %1592 = arith.addf %1574, %1591 : vector<2x2xf32>
    %c260 = arith.constant 260 : index
    %1593 = memref.load %arg6[%c260] : memref<400xf32, #tpu.memory_space<smem>>
    %1594 = vector.broadcast %1593 : f32 to vector<2x2xf32>
    %1595 = arith.mulf %1594, %1584 : vector<2x2xf32>
    %1596 = arith.addf %1578, %1595 : vector<2x2xf32>
    %c360 = arith.constant 360 : index
    %1597 = memref.load %arg6[%c360] : memref<400xf32, #tpu.memory_space<smem>>
    %1598 = vector.broadcast %1597 : f32 to vector<2x2xf32>
    %1599 = arith.mulf %1598, %1584 : vector<2x2xf32>
    %1600 = arith.addf %1582, %1599 : vector<2x2xf32>
    %c2_372 = arith.constant 2 : index
    %c2_373 = arith.constant 2 : index
    %c1_374 = arith.constant 1 : index
    %1601 = vector.load %arg10[%c2_372, %c2_373, %c1_374] : memref<4x6x6xf32, #tpu.memory_space<vmem>>, vector<1x2x2xf32>
    %1602 = vector.shape_cast %1601 : vector<1x2x2xf32> to vector<2x2xf32>
    %c61_375 = arith.constant 61 : index
    %1603 = memref.load %arg6[%c61_375] : memref<400xf32, #tpu.memory_space<smem>>
    %1604 = vector.broadcast %1603 : f32 to vector<2x2xf32>
    %1605 = arith.mulf %1604, %1602 : vector<2x2xf32>
    %1606 = arith.addf %1588, %1605 : vector<2x2xf32>
    %c161 = arith.constant 161 : index
    %1607 = memref.load %arg6[%c161] : memref<400xf32, #tpu.memory_space<smem>>
    %1608 = vector.broadcast %1607 : f32 to vector<2x2xf32>
    %1609 = arith.mulf %1608, %1602 : vector<2x2xf32>
    %1610 = arith.addf %1592, %1609 : vector<2x2xf32>
    %c261 = arith.constant 261 : index
    %1611 = memref.load %arg6[%c261] : memref<400xf32, #tpu.memory_space<smem>>
    %1612 = vector.broadcast %1611 : f32 to vector<2x2xf32>
    %1613 = arith.mulf %1612, %1602 : vector<2x2xf32>
    %1614 = arith.addf %1596, %1613 : vector<2x2xf32>
    %c361 = arith.constant 361 : index
    %1615 = memref.load %arg6[%c361] : memref<400xf32, #tpu.memory_space<smem>>
    %1616 = vector.broadcast %1615 : f32 to vector<2x2xf32>
    %1617 = arith.mulf %1616, %1602 : vector<2x2xf32>
    %1618 = arith.addf %1600, %1617 : vector<2x2xf32>
    %c2_376 = arith.constant 2 : index
    %c2_377 = arith.constant 2 : index
    %c2_378 = arith.constant 2 : index
    %1619 = vector.load %arg10[%c2_376, %c2_377, %c2_378] : memref<4x6x6xf32, #tpu.memory_space<vmem>>, vector<1x2x2xf32>
    %1620 = vector.shape_cast %1619 : vector<1x2x2xf32> to vector<2x2xf32>
    %c62_379 = arith.constant 62 : index
    %1621 = memref.load %arg6[%c62_379] : memref<400xf32, #tpu.memory_space<smem>>
    %1622 = vector.broadcast %1621 : f32 to vector<2x2xf32>
    %1623 = arith.mulf %1622, %1620 : vector<2x2xf32>
    %1624 = arith.addf %1606, %1623 : vector<2x2xf32>
    %c162 = arith.constant 162 : index
    %1625 = memref.load %arg6[%c162] : memref<400xf32, #tpu.memory_space<smem>>
    %1626 = vector.broadcast %1625 : f32 to vector<2x2xf32>
    %1627 = arith.mulf %1626, %1620 : vector<2x2xf32>
    %1628 = arith.addf %1610, %1627 : vector<2x2xf32>
    %c262 = arith.constant 262 : index
    %1629 = memref.load %arg6[%c262] : memref<400xf32, #tpu.memory_space<smem>>
    %1630 = vector.broadcast %1629 : f32 to vector<2x2xf32>
    %1631 = arith.mulf %1630, %1620 : vector<2x2xf32>
    %1632 = arith.addf %1614, %1631 : vector<2x2xf32>
    %c362 = arith.constant 362 : index
    %1633 = memref.load %arg6[%c362] : memref<400xf32, #tpu.memory_space<smem>>
    %1634 = vector.broadcast %1633 : f32 to vector<2x2xf32>
    %1635 = arith.mulf %1634, %1620 : vector<2x2xf32>
    %1636 = arith.addf %1618, %1635 : vector<2x2xf32>
    %c2_380 = arith.constant 2 : index
    %c2_381 = arith.constant 2 : index
    %c3_382 = arith.constant 3 : index
    %1637 = vector.load %arg10[%c2_380, %c2_381, %c3_382] : memref<4x6x6xf32, #tpu.memory_space<vmem>>, vector<1x2x2xf32>
    %1638 = vector.shape_cast %1637 : vector<1x2x2xf32> to vector<2x2xf32>
    %c63_383 = arith.constant 63 : index
    %1639 = memref.load %arg6[%c63_383] : memref<400xf32, #tpu.memory_space<smem>>
    %1640 = vector.broadcast %1639 : f32 to vector<2x2xf32>
    %1641 = arith.mulf %1640, %1638 : vector<2x2xf32>
    %1642 = arith.addf %1624, %1641 : vector<2x2xf32>
    %c163 = arith.constant 163 : index
    %1643 = memref.load %arg6[%c163] : memref<400xf32, #tpu.memory_space<smem>>
    %1644 = vector.broadcast %1643 : f32 to vector<2x2xf32>
    %1645 = arith.mulf %1644, %1638 : vector<2x2xf32>
    %1646 = arith.addf %1628, %1645 : vector<2x2xf32>
    %c263 = arith.constant 263 : index
    %1647 = memref.load %arg6[%c263] : memref<400xf32, #tpu.memory_space<smem>>
    %1648 = vector.broadcast %1647 : f32 to vector<2x2xf32>
    %1649 = arith.mulf %1648, %1638 : vector<2x2xf32>
    %1650 = arith.addf %1632, %1649 : vector<2x2xf32>
    %c363 = arith.constant 363 : index
    %1651 = memref.load %arg6[%c363] : memref<400xf32, #tpu.memory_space<smem>>
    %1652 = vector.broadcast %1651 : f32 to vector<2x2xf32>
    %1653 = arith.mulf %1652, %1638 : vector<2x2xf32>
    %1654 = arith.addf %1636, %1653 : vector<2x2xf32>
    %c2_384 = arith.constant 2 : index
    %c2_385 = arith.constant 2 : index
    %c4_386 = arith.constant 4 : index
    %1655 = vector.load %arg10[%c2_384, %c2_385, %c4_386] : memref<4x6x6xf32, #tpu.memory_space<vmem>>, vector<1x2x2xf32>
    %1656 = vector.shape_cast %1655 : vector<1x2x2xf32> to vector<2x2xf32>
    %c64_387 = arith.constant 64 : index
    %1657 = memref.load %arg6[%c64_387] : memref<400xf32, #tpu.memory_space<smem>>
    %1658 = vector.broadcast %1657 : f32 to vector<2x2xf32>
    %1659 = arith.mulf %1658, %1656 : vector<2x2xf32>
    %1660 = arith.addf %1642, %1659 : vector<2x2xf32>
    %c164 = arith.constant 164 : index
    %1661 = memref.load %arg6[%c164] : memref<400xf32, #tpu.memory_space<smem>>
    %1662 = vector.broadcast %1661 : f32 to vector<2x2xf32>
    %1663 = arith.mulf %1662, %1656 : vector<2x2xf32>
    %1664 = arith.addf %1646, %1663 : vector<2x2xf32>
    %c264 = arith.constant 264 : index
    %1665 = memref.load %arg6[%c264] : memref<400xf32, #tpu.memory_space<smem>>
    %1666 = vector.broadcast %1665 : f32 to vector<2x2xf32>
    %1667 = arith.mulf %1666, %1656 : vector<2x2xf32>
    %1668 = arith.addf %1650, %1667 : vector<2x2xf32>
    %c364 = arith.constant 364 : index
    %1669 = memref.load %arg6[%c364] : memref<400xf32, #tpu.memory_space<smem>>
    %1670 = vector.broadcast %1669 : f32 to vector<2x2xf32>
    %1671 = arith.mulf %1670, %1656 : vector<2x2xf32>
    %1672 = arith.addf %1654, %1671 : vector<2x2xf32>
    %c2_388 = arith.constant 2 : index
    %c3_389 = arith.constant 3 : index
    %c0_390 = arith.constant 0 : index
    %1673 = vector.load %arg10[%c2_388, %c3_389, %c0_390] : memref<4x6x6xf32, #tpu.memory_space<vmem>>, vector<1x2x2xf32>
    %1674 = vector.shape_cast %1673 : vector<1x2x2xf32> to vector<2x2xf32>
    %c65_391 = arith.constant 65 : index
    %1675 = memref.load %arg6[%c65_391] : memref<400xf32, #tpu.memory_space<smem>>
    %1676 = vector.broadcast %1675 : f32 to vector<2x2xf32>
    %1677 = arith.mulf %1676, %1674 : vector<2x2xf32>
    %1678 = arith.addf %1660, %1677 : vector<2x2xf32>
    %c165 = arith.constant 165 : index
    %1679 = memref.load %arg6[%c165] : memref<400xf32, #tpu.memory_space<smem>>
    %1680 = vector.broadcast %1679 : f32 to vector<2x2xf32>
    %1681 = arith.mulf %1680, %1674 : vector<2x2xf32>
    %1682 = arith.addf %1664, %1681 : vector<2x2xf32>
    %c265 = arith.constant 265 : index
    %1683 = memref.load %arg6[%c265] : memref<400xf32, #tpu.memory_space<smem>>
    %1684 = vector.broadcast %1683 : f32 to vector<2x2xf32>
    %1685 = arith.mulf %1684, %1674 : vector<2x2xf32>
    %1686 = arith.addf %1668, %1685 : vector<2x2xf32>
    %c365 = arith.constant 365 : index
    %1687 = memref.load %arg6[%c365] : memref<400xf32, #tpu.memory_space<smem>>
    %1688 = vector.broadcast %1687 : f32 to vector<2x2xf32>
    %1689 = arith.mulf %1688, %1674 : vector<2x2xf32>
    %1690 = arith.addf %1672, %1689 : vector<2x2xf32>
    %c2_392 = arith.constant 2 : index
    %c3_393 = arith.constant 3 : index
    %c1_394 = arith.constant 1 : index
    %1691 = vector.load %arg10[%c2_392, %c3_393, %c1_394] : memref<4x6x6xf32, #tpu.memory_space<vmem>>, vector<1x2x2xf32>
    %1692 = vector.shape_cast %1691 : vector<1x2x2xf32> to vector<2x2xf32>
    %c66_395 = arith.constant 66 : index
    %1693 = memref.load %arg6[%c66_395] : memref<400xf32, #tpu.memory_space<smem>>
    %1694 = vector.broadcast %1693 : f32 to vector<2x2xf32>
    %1695 = arith.mulf %1694, %1692 : vector<2x2xf32>
    %1696 = arith.addf %1678, %1695 : vector<2x2xf32>
    %c166 = arith.constant 166 : index
    %1697 = memref.load %arg6[%c166] : memref<400xf32, #tpu.memory_space<smem>>
    %1698 = vector.broadcast %1697 : f32 to vector<2x2xf32>
    %1699 = arith.mulf %1698, %1692 : vector<2x2xf32>
    %1700 = arith.addf %1682, %1699 : vector<2x2xf32>
    %c266 = arith.constant 266 : index
    %1701 = memref.load %arg6[%c266] : memref<400xf32, #tpu.memory_space<smem>>
    %1702 = vector.broadcast %1701 : f32 to vector<2x2xf32>
    %1703 = arith.mulf %1702, %1692 : vector<2x2xf32>
    %1704 = arith.addf %1686, %1703 : vector<2x2xf32>
    %c366 = arith.constant 366 : index
    %1705 = memref.load %arg6[%c366] : memref<400xf32, #tpu.memory_space<smem>>
    %1706 = vector.broadcast %1705 : f32 to vector<2x2xf32>
    %1707 = arith.mulf %1706, %1692 : vector<2x2xf32>
    %1708 = arith.addf %1690, %1707 : vector<2x2xf32>
    %c2_396 = arith.constant 2 : index
    %c3_397 = arith.constant 3 : index
    %c2_398 = arith.constant 2 : index
    %1709 = vector.load %arg10[%c2_396, %c3_397, %c2_398] : memref<4x6x6xf32, #tpu.memory_space<vmem>>, vector<1x2x2xf32>
    %1710 = vector.shape_cast %1709 : vector<1x2x2xf32> to vector<2x2xf32>
    %c67_399 = arith.constant 67 : index
    %1711 = memref.load %arg6[%c67_399] : memref<400xf32, #tpu.memory_space<smem>>
    %1712 = vector.broadcast %1711 : f32 to vector<2x2xf32>
    %1713 = arith.mulf %1712, %1710 : vector<2x2xf32>
    %1714 = arith.addf %1696, %1713 : vector<2x2xf32>
    %c167 = arith.constant 167 : index
    %1715 = memref.load %arg6[%c167] : memref<400xf32, #tpu.memory_space<smem>>
    %1716 = vector.broadcast %1715 : f32 to vector<2x2xf32>
    %1717 = arith.mulf %1716, %1710 : vector<2x2xf32>
    %1718 = arith.addf %1700, %1717 : vector<2x2xf32>
    %c267 = arith.constant 267 : index
    %1719 = memref.load %arg6[%c267] : memref<400xf32, #tpu.memory_space<smem>>
    %1720 = vector.broadcast %1719 : f32 to vector<2x2xf32>
    %1721 = arith.mulf %1720, %1710 : vector<2x2xf32>
    %1722 = arith.addf %1704, %1721 : vector<2x2xf32>
    %c367 = arith.constant 367 : index
    %1723 = memref.load %arg6[%c367] : memref<400xf32, #tpu.memory_space<smem>>
    %1724 = vector.broadcast %1723 : f32 to vector<2x2xf32>
    %1725 = arith.mulf %1724, %1710 : vector<2x2xf32>
    %1726 = arith.addf %1708, %1725 : vector<2x2xf32>
    %c2_400 = arith.constant 2 : index
    %c3_401 = arith.constant 3 : index
    %c3_402 = arith.constant 3 : index
    %1727 = vector.load %arg10[%c2_400, %c3_401, %c3_402] : memref<4x6x6xf32, #tpu.memory_space<vmem>>, vector<1x2x2xf32>
    %1728 = vector.shape_cast %1727 : vector<1x2x2xf32> to vector<2x2xf32>
    %c68_403 = arith.constant 68 : index
    %1729 = memref.load %arg6[%c68_403] : memref<400xf32, #tpu.memory_space<smem>>
    %1730 = vector.broadcast %1729 : f32 to vector<2x2xf32>
    %1731 = arith.mulf %1730, %1728 : vector<2x2xf32>
    %1732 = arith.addf %1714, %1731 : vector<2x2xf32>
    %c168 = arith.constant 168 : index
    %1733 = memref.load %arg6[%c168] : memref<400xf32, #tpu.memory_space<smem>>
    %1734 = vector.broadcast %1733 : f32 to vector<2x2xf32>
    %1735 = arith.mulf %1734, %1728 : vector<2x2xf32>
    %1736 = arith.addf %1718, %1735 : vector<2x2xf32>
    %c268 = arith.constant 268 : index
    %1737 = memref.load %arg6[%c268] : memref<400xf32, #tpu.memory_space<smem>>
    %1738 = vector.broadcast %1737 : f32 to vector<2x2xf32>
    %1739 = arith.mulf %1738, %1728 : vector<2x2xf32>
    %1740 = arith.addf %1722, %1739 : vector<2x2xf32>
    %c368 = arith.constant 368 : index
    %1741 = memref.load %arg6[%c368] : memref<400xf32, #tpu.memory_space<smem>>
    %1742 = vector.broadcast %1741 : f32 to vector<2x2xf32>
    %1743 = arith.mulf %1742, %1728 : vector<2x2xf32>
    %1744 = arith.addf %1726, %1743 : vector<2x2xf32>
    %c2_404 = arith.constant 2 : index
    %c3_405 = arith.constant 3 : index
    %c4_406 = arith.constant 4 : index
    %1745 = vector.load %arg10[%c2_404, %c3_405, %c4_406] : memref<4x6x6xf32, #tpu.memory_space<vmem>>, vector<1x2x2xf32>
    %1746 = vector.shape_cast %1745 : vector<1x2x2xf32> to vector<2x2xf32>
    %c69_407 = arith.constant 69 : index
    %1747 = memref.load %arg6[%c69_407] : memref<400xf32, #tpu.memory_space<smem>>
    %1748 = vector.broadcast %1747 : f32 to vector<2x2xf32>
    %1749 = arith.mulf %1748, %1746 : vector<2x2xf32>
    %1750 = arith.addf %1732, %1749 : vector<2x2xf32>
    %c169 = arith.constant 169 : index
    %1751 = memref.load %arg6[%c169] : memref<400xf32, #tpu.memory_space<smem>>
    %1752 = vector.broadcast %1751 : f32 to vector<2x2xf32>
    %1753 = arith.mulf %1752, %1746 : vector<2x2xf32>
    %1754 = arith.addf %1736, %1753 : vector<2x2xf32>
    %c269 = arith.constant 269 : index
    %1755 = memref.load %arg6[%c269] : memref<400xf32, #tpu.memory_space<smem>>
    %1756 = vector.broadcast %1755 : f32 to vector<2x2xf32>
    %1757 = arith.mulf %1756, %1746 : vector<2x2xf32>
    %1758 = arith.addf %1740, %1757 : vector<2x2xf32>
    %c369 = arith.constant 369 : index
    %1759 = memref.load %arg6[%c369] : memref<400xf32, #tpu.memory_space<smem>>
    %1760 = vector.broadcast %1759 : f32 to vector<2x2xf32>
    %1761 = arith.mulf %1760, %1746 : vector<2x2xf32>
    %1762 = arith.addf %1744, %1761 : vector<2x2xf32>
    %c2_408 = arith.constant 2 : index
    %c4_409 = arith.constant 4 : index
    %c0_410 = arith.constant 0 : index
    %1763 = vector.load %arg10[%c2_408, %c4_409, %c0_410] : memref<4x6x6xf32, #tpu.memory_space<vmem>>, vector<1x2x2xf32>
    %1764 = vector.shape_cast %1763 : vector<1x2x2xf32> to vector<2x2xf32>
    %c70_411 = arith.constant 70 : index
    %1765 = memref.load %arg6[%c70_411] : memref<400xf32, #tpu.memory_space<smem>>
    %1766 = vector.broadcast %1765 : f32 to vector<2x2xf32>
    %1767 = arith.mulf %1766, %1764 : vector<2x2xf32>
    %1768 = arith.addf %1750, %1767 : vector<2x2xf32>
    %c170 = arith.constant 170 : index
    %1769 = memref.load %arg6[%c170] : memref<400xf32, #tpu.memory_space<smem>>
    %1770 = vector.broadcast %1769 : f32 to vector<2x2xf32>
    %1771 = arith.mulf %1770, %1764 : vector<2x2xf32>
    %1772 = arith.addf %1754, %1771 : vector<2x2xf32>
    %c270 = arith.constant 270 : index
    %1773 = memref.load %arg6[%c270] : memref<400xf32, #tpu.memory_space<smem>>
    %1774 = vector.broadcast %1773 : f32 to vector<2x2xf32>
    %1775 = arith.mulf %1774, %1764 : vector<2x2xf32>
    %1776 = arith.addf %1758, %1775 : vector<2x2xf32>
    %c370 = arith.constant 370 : index
    %1777 = memref.load %arg6[%c370] : memref<400xf32, #tpu.memory_space<smem>>
    %1778 = vector.broadcast %1777 : f32 to vector<2x2xf32>
    %1779 = arith.mulf %1778, %1764 : vector<2x2xf32>
    %1780 = arith.addf %1762, %1779 : vector<2x2xf32>
    %c2_412 = arith.constant 2 : index
    %c4_413 = arith.constant 4 : index
    %c1_414 = arith.constant 1 : index
    %1781 = vector.load %arg10[%c2_412, %c4_413, %c1_414] : memref<4x6x6xf32, #tpu.memory_space<vmem>>, vector<1x2x2xf32>
    %1782 = vector.shape_cast %1781 : vector<1x2x2xf32> to vector<2x2xf32>
    %c71_415 = arith.constant 71 : index
    %1783 = memref.load %arg6[%c71_415] : memref<400xf32, #tpu.memory_space<smem>>
    %1784 = vector.broadcast %1783 : f32 to vector<2x2xf32>
    %1785 = arith.mulf %1784, %1782 : vector<2x2xf32>
    %1786 = arith.addf %1768, %1785 : vector<2x2xf32>
    %c171 = arith.constant 171 : index
    %1787 = memref.load %arg6[%c171] : memref<400xf32, #tpu.memory_space<smem>>
    %1788 = vector.broadcast %1787 : f32 to vector<2x2xf32>
    %1789 = arith.mulf %1788, %1782 : vector<2x2xf32>
    %1790 = arith.addf %1772, %1789 : vector<2x2xf32>
    %c271 = arith.constant 271 : index
    %1791 = memref.load %arg6[%c271] : memref<400xf32, #tpu.memory_space<smem>>
    %1792 = vector.broadcast %1791 : f32 to vector<2x2xf32>
    %1793 = arith.mulf %1792, %1782 : vector<2x2xf32>
    %1794 = arith.addf %1776, %1793 : vector<2x2xf32>
    %c371 = arith.constant 371 : index
    %1795 = memref.load %arg6[%c371] : memref<400xf32, #tpu.memory_space<smem>>
    %1796 = vector.broadcast %1795 : f32 to vector<2x2xf32>
    %1797 = arith.mulf %1796, %1782 : vector<2x2xf32>
    %1798 = arith.addf %1780, %1797 : vector<2x2xf32>
    %c2_416 = arith.constant 2 : index
    %c4_417 = arith.constant 4 : index
    %c2_418 = arith.constant 2 : index
    %1799 = vector.load %arg10[%c2_416, %c4_417, %c2_418] : memref<4x6x6xf32, #tpu.memory_space<vmem>>, vector<1x2x2xf32>
    %1800 = vector.shape_cast %1799 : vector<1x2x2xf32> to vector<2x2xf32>
    %c72_419 = arith.constant 72 : index
    %1801 = memref.load %arg6[%c72_419] : memref<400xf32, #tpu.memory_space<smem>>
    %1802 = vector.broadcast %1801 : f32 to vector<2x2xf32>
    %1803 = arith.mulf %1802, %1800 : vector<2x2xf32>
    %1804 = arith.addf %1786, %1803 : vector<2x2xf32>
    %c172 = arith.constant 172 : index
    %1805 = memref.load %arg6[%c172] : memref<400xf32, #tpu.memory_space<smem>>
    %1806 = vector.broadcast %1805 : f32 to vector<2x2xf32>
    %1807 = arith.mulf %1806, %1800 : vector<2x2xf32>
    %1808 = arith.addf %1790, %1807 : vector<2x2xf32>
    %c272 = arith.constant 272 : index
    %1809 = memref.load %arg6[%c272] : memref<400xf32, #tpu.memory_space<smem>>
    %1810 = vector.broadcast %1809 : f32 to vector<2x2xf32>
    %1811 = arith.mulf %1810, %1800 : vector<2x2xf32>
    %1812 = arith.addf %1794, %1811 : vector<2x2xf32>
    %c372 = arith.constant 372 : index
    %1813 = memref.load %arg6[%c372] : memref<400xf32, #tpu.memory_space<smem>>
    %1814 = vector.broadcast %1813 : f32 to vector<2x2xf32>
    %1815 = arith.mulf %1814, %1800 : vector<2x2xf32>
    %1816 = arith.addf %1798, %1815 : vector<2x2xf32>
    %c2_420 = arith.constant 2 : index
    %c4_421 = arith.constant 4 : index
    %c3_422 = arith.constant 3 : index
    %1817 = vector.load %arg10[%c2_420, %c4_421, %c3_422] : memref<4x6x6xf32, #tpu.memory_space<vmem>>, vector<1x2x2xf32>
    %1818 = vector.shape_cast %1817 : vector<1x2x2xf32> to vector<2x2xf32>
    %c73_423 = arith.constant 73 : index
    %1819 = memref.load %arg6[%c73_423] : memref<400xf32, #tpu.memory_space<smem>>
    %1820 = vector.broadcast %1819 : f32 to vector<2x2xf32>
    %1821 = arith.mulf %1820, %1818 : vector<2x2xf32>
    %1822 = arith.addf %1804, %1821 : vector<2x2xf32>
    %c173 = arith.constant 173 : index
    %1823 = memref.load %arg6[%c173] : memref<400xf32, #tpu.memory_space<smem>>
    %1824 = vector.broadcast %1823 : f32 to vector<2x2xf32>
    %1825 = arith.mulf %1824, %1818 : vector<2x2xf32>
    %1826 = arith.addf %1808, %1825 : vector<2x2xf32>
    %c273 = arith.constant 273 : index
    %1827 = memref.load %arg6[%c273] : memref<400xf32, #tpu.memory_space<smem>>
    %1828 = vector.broadcast %1827 : f32 to vector<2x2xf32>
    %1829 = arith.mulf %1828, %1818 : vector<2x2xf32>
    %1830 = arith.addf %1812, %1829 : vector<2x2xf32>
    %c373 = arith.constant 373 : index
    %1831 = memref.load %arg6[%c373] : memref<400xf32, #tpu.memory_space<smem>>
    %1832 = vector.broadcast %1831 : f32 to vector<2x2xf32>
    %1833 = arith.mulf %1832, %1818 : vector<2x2xf32>
    %1834 = arith.addf %1816, %1833 : vector<2x2xf32>
    %c2_424 = arith.constant 2 : index
    %c4_425 = arith.constant 4 : index
    %c4_426 = arith.constant 4 : index
    %1835 = vector.load %arg10[%c2_424, %c4_425, %c4_426] : memref<4x6x6xf32, #tpu.memory_space<vmem>>, vector<1x2x2xf32>
    %1836 = vector.shape_cast %1835 : vector<1x2x2xf32> to vector<2x2xf32>
    %c74_427 = arith.constant 74 : index
    %1837 = memref.load %arg6[%c74_427] : memref<400xf32, #tpu.memory_space<smem>>
    %1838 = vector.broadcast %1837 : f32 to vector<2x2xf32>
    %1839 = arith.mulf %1838, %1836 : vector<2x2xf32>
    %1840 = arith.addf %1822, %1839 : vector<2x2xf32>
    %c174 = arith.constant 174 : index
    %1841 = memref.load %arg6[%c174] : memref<400xf32, #tpu.memory_space<smem>>
    %1842 = vector.broadcast %1841 : f32 to vector<2x2xf32>
    %1843 = arith.mulf %1842, %1836 : vector<2x2xf32>
    %1844 = arith.addf %1826, %1843 : vector<2x2xf32>
    %c274 = arith.constant 274 : index
    %1845 = memref.load %arg6[%c274] : memref<400xf32, #tpu.memory_space<smem>>
    %1846 = vector.broadcast %1845 : f32 to vector<2x2xf32>
    %1847 = arith.mulf %1846, %1836 : vector<2x2xf32>
    %1848 = arith.addf %1830, %1847 : vector<2x2xf32>
    %c374 = arith.constant 374 : index
    %1849 = memref.load %arg6[%c374] : memref<400xf32, #tpu.memory_space<smem>>
    %1850 = vector.broadcast %1849 : f32 to vector<2x2xf32>
    %1851 = arith.mulf %1850, %1836 : vector<2x2xf32>
    %1852 = arith.addf %1834, %1851 : vector<2x2xf32>
    %c3_428 = arith.constant 3 : index
    %c0_429 = arith.constant 0 : index
    %c0_430 = arith.constant 0 : index
    %1853 = vector.load %arg10[%c3_428, %c0_429, %c0_430] : memref<4x6x6xf32, #tpu.memory_space<vmem>>, vector<1x2x2xf32>
    %1854 = vector.shape_cast %1853 : vector<1x2x2xf32> to vector<2x2xf32>
    %c75_431 = arith.constant 75 : index
    %1855 = memref.load %arg6[%c75_431] : memref<400xf32, #tpu.memory_space<smem>>
    %1856 = vector.broadcast %1855 : f32 to vector<2x2xf32>
    %1857 = arith.mulf %1856, %1854 : vector<2x2xf32>
    %1858 = arith.addf %1840, %1857 : vector<2x2xf32>
    %c175 = arith.constant 175 : index
    %1859 = memref.load %arg6[%c175] : memref<400xf32, #tpu.memory_space<smem>>
    %1860 = vector.broadcast %1859 : f32 to vector<2x2xf32>
    %1861 = arith.mulf %1860, %1854 : vector<2x2xf32>
    %1862 = arith.addf %1844, %1861 : vector<2x2xf32>
    %c275 = arith.constant 275 : index
    %1863 = memref.load %arg6[%c275] : memref<400xf32, #tpu.memory_space<smem>>
    %1864 = vector.broadcast %1863 : f32 to vector<2x2xf32>
    %1865 = arith.mulf %1864, %1854 : vector<2x2xf32>
    %1866 = arith.addf %1848, %1865 : vector<2x2xf32>
    %c375 = arith.constant 375 : index
    %1867 = memref.load %arg6[%c375] : memref<400xf32, #tpu.memory_space<smem>>
    %1868 = vector.broadcast %1867 : f32 to vector<2x2xf32>
    %1869 = arith.mulf %1868, %1854 : vector<2x2xf32>
    %1870 = arith.addf %1852, %1869 : vector<2x2xf32>
    %c3_432 = arith.constant 3 : index
    %c0_433 = arith.constant 0 : index
    %c1_434 = arith.constant 1 : index
    %1871 = vector.load %arg10[%c3_432, %c0_433, %c1_434] : memref<4x6x6xf32, #tpu.memory_space<vmem>>, vector<1x2x2xf32>
    %1872 = vector.shape_cast %1871 : vector<1x2x2xf32> to vector<2x2xf32>
    %c76_435 = arith.constant 76 : index
    %1873 = memref.load %arg6[%c76_435] : memref<400xf32, #tpu.memory_space<smem>>
    %1874 = vector.broadcast %1873 : f32 to vector<2x2xf32>
    %1875 = arith.mulf %1874, %1872 : vector<2x2xf32>
    %1876 = arith.addf %1858, %1875 : vector<2x2xf32>
    %c176 = arith.constant 176 : index
    %1877 = memref.load %arg6[%c176] : memref<400xf32, #tpu.memory_space<smem>>
    %1878 = vector.broadcast %1877 : f32 to vector<2x2xf32>
    %1879 = arith.mulf %1878, %1872 : vector<2x2xf32>
    %1880 = arith.addf %1862, %1879 : vector<2x2xf32>
    %c276 = arith.constant 276 : index
    %1881 = memref.load %arg6[%c276] : memref<400xf32, #tpu.memory_space<smem>>
    %1882 = vector.broadcast %1881 : f32 to vector<2x2xf32>
    %1883 = arith.mulf %1882, %1872 : vector<2x2xf32>
    %1884 = arith.addf %1866, %1883 : vector<2x2xf32>
    %c376 = arith.constant 376 : index
    %1885 = memref.load %arg6[%c376] : memref<400xf32, #tpu.memory_space<smem>>
    %1886 = vector.broadcast %1885 : f32 to vector<2x2xf32>
    %1887 = arith.mulf %1886, %1872 : vector<2x2xf32>
    %1888 = arith.addf %1870, %1887 : vector<2x2xf32>
    %c3_436 = arith.constant 3 : index
    %c0_437 = arith.constant 0 : index
    %c2_438 = arith.constant 2 : index
    %1889 = vector.load %arg10[%c3_436, %c0_437, %c2_438] : memref<4x6x6xf32, #tpu.memory_space<vmem>>, vector<1x2x2xf32>
    %1890 = vector.shape_cast %1889 : vector<1x2x2xf32> to vector<2x2xf32>
    %c77_439 = arith.constant 77 : index
    %1891 = memref.load %arg6[%c77_439] : memref<400xf32, #tpu.memory_space<smem>>
    %1892 = vector.broadcast %1891 : f32 to vector<2x2xf32>
    %1893 = arith.mulf %1892, %1890 : vector<2x2xf32>
    %1894 = arith.addf %1876, %1893 : vector<2x2xf32>
    %c177 = arith.constant 177 : index
    %1895 = memref.load %arg6[%c177] : memref<400xf32, #tpu.memory_space<smem>>
    %1896 = vector.broadcast %1895 : f32 to vector<2x2xf32>
    %1897 = arith.mulf %1896, %1890 : vector<2x2xf32>
    %1898 = arith.addf %1880, %1897 : vector<2x2xf32>
    %c277 = arith.constant 277 : index
    %1899 = memref.load %arg6[%c277] : memref<400xf32, #tpu.memory_space<smem>>
    %1900 = vector.broadcast %1899 : f32 to vector<2x2xf32>
    %1901 = arith.mulf %1900, %1890 : vector<2x2xf32>
    %1902 = arith.addf %1884, %1901 : vector<2x2xf32>
    %c377 = arith.constant 377 : index
    %1903 = memref.load %arg6[%c377] : memref<400xf32, #tpu.memory_space<smem>>
    %1904 = vector.broadcast %1903 : f32 to vector<2x2xf32>
    %1905 = arith.mulf %1904, %1890 : vector<2x2xf32>
    %1906 = arith.addf %1888, %1905 : vector<2x2xf32>
    %c3_440 = arith.constant 3 : index
    %c0_441 = arith.constant 0 : index
    %c3_442 = arith.constant 3 : index
    %1907 = vector.load %arg10[%c3_440, %c0_441, %c3_442] : memref<4x6x6xf32, #tpu.memory_space<vmem>>, vector<1x2x2xf32>
    %1908 = vector.shape_cast %1907 : vector<1x2x2xf32> to vector<2x2xf32>
    %c78_443 = arith.constant 78 : index
    %1909 = memref.load %arg6[%c78_443] : memref<400xf32, #tpu.memory_space<smem>>
    %1910 = vector.broadcast %1909 : f32 to vector<2x2xf32>
    %1911 = arith.mulf %1910, %1908 : vector<2x2xf32>
    %1912 = arith.addf %1894, %1911 : vector<2x2xf32>
    %c178 = arith.constant 178 : index
    %1913 = memref.load %arg6[%c178] : memref<400xf32, #tpu.memory_space<smem>>
    %1914 = vector.broadcast %1913 : f32 to vector<2x2xf32>
    %1915 = arith.mulf %1914, %1908 : vector<2x2xf32>
    %1916 = arith.addf %1898, %1915 : vector<2x2xf32>
    %c278 = arith.constant 278 : index
    %1917 = memref.load %arg6[%c278] : memref<400xf32, #tpu.memory_space<smem>>
    %1918 = vector.broadcast %1917 : f32 to vector<2x2xf32>
    %1919 = arith.mulf %1918, %1908 : vector<2x2xf32>
    %1920 = arith.addf %1902, %1919 : vector<2x2xf32>
    %c378 = arith.constant 378 : index
    %1921 = memref.load %arg6[%c378] : memref<400xf32, #tpu.memory_space<smem>>
    %1922 = vector.broadcast %1921 : f32 to vector<2x2xf32>
    %1923 = arith.mulf %1922, %1908 : vector<2x2xf32>
    %1924 = arith.addf %1906, %1923 : vector<2x2xf32>
    %c3_444 = arith.constant 3 : index
    %c0_445 = arith.constant 0 : index
    %c4_446 = arith.constant 4 : index
    %1925 = vector.load %arg10[%c3_444, %c0_445, %c4_446] : memref<4x6x6xf32, #tpu.memory_space<vmem>>, vector<1x2x2xf32>
    %1926 = vector.shape_cast %1925 : vector<1x2x2xf32> to vector<2x2xf32>
    %c79_447 = arith.constant 79 : index
    %1927 = memref.load %arg6[%c79_447] : memref<400xf32, #tpu.memory_space<smem>>
    %1928 = vector.broadcast %1927 : f32 to vector<2x2xf32>
    %1929 = arith.mulf %1928, %1926 : vector<2x2xf32>
    %1930 = arith.addf %1912, %1929 : vector<2x2xf32>
    %c179 = arith.constant 179 : index
    %1931 = memref.load %arg6[%c179] : memref<400xf32, #tpu.memory_space<smem>>
    %1932 = vector.broadcast %1931 : f32 to vector<2x2xf32>
    %1933 = arith.mulf %1932, %1926 : vector<2x2xf32>
    %1934 = arith.addf %1916, %1933 : vector<2x2xf32>
    %c279 = arith.constant 279 : index
    %1935 = memref.load %arg6[%c279] : memref<400xf32, #tpu.memory_space<smem>>
    %1936 = vector.broadcast %1935 : f32 to vector<2x2xf32>
    %1937 = arith.mulf %1936, %1926 : vector<2x2xf32>
    %1938 = arith.addf %1920, %1937 : vector<2x2xf32>
    %c379 = arith.constant 379 : index
    %1939 = memref.load %arg6[%c379] : memref<400xf32, #tpu.memory_space<smem>>
    %1940 = vector.broadcast %1939 : f32 to vector<2x2xf32>
    %1941 = arith.mulf %1940, %1926 : vector<2x2xf32>
    %1942 = arith.addf %1924, %1941 : vector<2x2xf32>
    %c3_448 = arith.constant 3 : index
    %c1_449 = arith.constant 1 : index
    %c0_450 = arith.constant 0 : index
    %1943 = vector.load %arg10[%c3_448, %c1_449, %c0_450] : memref<4x6x6xf32, #tpu.memory_space<vmem>>, vector<1x2x2xf32>
    %1944 = vector.shape_cast %1943 : vector<1x2x2xf32> to vector<2x2xf32>
    %c80_451 = arith.constant 80 : index
    %1945 = memref.load %arg6[%c80_451] : memref<400xf32, #tpu.memory_space<smem>>
    %1946 = vector.broadcast %1945 : f32 to vector<2x2xf32>
    %1947 = arith.mulf %1946, %1944 : vector<2x2xf32>
    %1948 = arith.addf %1930, %1947 : vector<2x2xf32>
    %c180 = arith.constant 180 : index
    %1949 = memref.load %arg6[%c180] : memref<400xf32, #tpu.memory_space<smem>>
    %1950 = vector.broadcast %1949 : f32 to vector<2x2xf32>
    %1951 = arith.mulf %1950, %1944 : vector<2x2xf32>
    %1952 = arith.addf %1934, %1951 : vector<2x2xf32>
    %c280 = arith.constant 280 : index
    %1953 = memref.load %arg6[%c280] : memref<400xf32, #tpu.memory_space<smem>>
    %1954 = vector.broadcast %1953 : f32 to vector<2x2xf32>
    %1955 = arith.mulf %1954, %1944 : vector<2x2xf32>
    %1956 = arith.addf %1938, %1955 : vector<2x2xf32>
    %c380 = arith.constant 380 : index
    %1957 = memref.load %arg6[%c380] : memref<400xf32, #tpu.memory_space<smem>>
    %1958 = vector.broadcast %1957 : f32 to vector<2x2xf32>
    %1959 = arith.mulf %1958, %1944 : vector<2x2xf32>
    %1960 = arith.addf %1942, %1959 : vector<2x2xf32>
    %c3_452 = arith.constant 3 : index
    %c1_453 = arith.constant 1 : index
    %c1_454 = arith.constant 1 : index
    %1961 = vector.load %arg10[%c3_452, %c1_453, %c1_454] : memref<4x6x6xf32, #tpu.memory_space<vmem>>, vector<1x2x2xf32>
    %1962 = vector.shape_cast %1961 : vector<1x2x2xf32> to vector<2x2xf32>
    %c81_455 = arith.constant 81 : index
    %1963 = memref.load %arg6[%c81_455] : memref<400xf32, #tpu.memory_space<smem>>
    %1964 = vector.broadcast %1963 : f32 to vector<2x2xf32>
    %1965 = arith.mulf %1964, %1962 : vector<2x2xf32>
    %1966 = arith.addf %1948, %1965 : vector<2x2xf32>
    %c181 = arith.constant 181 : index
    %1967 = memref.load %arg6[%c181] : memref<400xf32, #tpu.memory_space<smem>>
    %1968 = vector.broadcast %1967 : f32 to vector<2x2xf32>
    %1969 = arith.mulf %1968, %1962 : vector<2x2xf32>
    %1970 = arith.addf %1952, %1969 : vector<2x2xf32>
    %c281 = arith.constant 281 : index
    %1971 = memref.load %arg6[%c281] : memref<400xf32, #tpu.memory_space<smem>>
    %1972 = vector.broadcast %1971 : f32 to vector<2x2xf32>
    %1973 = arith.mulf %1972, %1962 : vector<2x2xf32>
    %1974 = arith.addf %1956, %1973 : vector<2x2xf32>
    %c381 = arith.constant 381 : index
    %1975 = memref.load %arg6[%c381] : memref<400xf32, #tpu.memory_space<smem>>
    %1976 = vector.broadcast %1975 : f32 to vector<2x2xf32>
    %1977 = arith.mulf %1976, %1962 : vector<2x2xf32>
    %1978 = arith.addf %1960, %1977 : vector<2x2xf32>
    %c3_456 = arith.constant 3 : index
    %c1_457 = arith.constant 1 : index
    %c2_458 = arith.constant 2 : index
    %1979 = vector.load %arg10[%c3_456, %c1_457, %c2_458] : memref<4x6x6xf32, #tpu.memory_space<vmem>>, vector<1x2x2xf32>
    %1980 = vector.shape_cast %1979 : vector<1x2x2xf32> to vector<2x2xf32>
    %c82_459 = arith.constant 82 : index
    %1981 = memref.load %arg6[%c82_459] : memref<400xf32, #tpu.memory_space<smem>>
    %1982 = vector.broadcast %1981 : f32 to vector<2x2xf32>
    %1983 = arith.mulf %1982, %1980 : vector<2x2xf32>
    %1984 = arith.addf %1966, %1983 : vector<2x2xf32>
    %c182 = arith.constant 182 : index
    %1985 = memref.load %arg6[%c182] : memref<400xf32, #tpu.memory_space<smem>>
    %1986 = vector.broadcast %1985 : f32 to vector<2x2xf32>
    %1987 = arith.mulf %1986, %1980 : vector<2x2xf32>
    %1988 = arith.addf %1970, %1987 : vector<2x2xf32>
    %c282 = arith.constant 282 : index
    %1989 = memref.load %arg6[%c282] : memref<400xf32, #tpu.memory_space<smem>>
    %1990 = vector.broadcast %1989 : f32 to vector<2x2xf32>
    %1991 = arith.mulf %1990, %1980 : vector<2x2xf32>
    %1992 = arith.addf %1974, %1991 : vector<2x2xf32>
    %c382 = arith.constant 382 : index
    %1993 = memref.load %arg6[%c382] : memref<400xf32, #tpu.memory_space<smem>>
    %1994 = vector.broadcast %1993 : f32 to vector<2x2xf32>
    %1995 = arith.mulf %1994, %1980 : vector<2x2xf32>
    %1996 = arith.addf %1978, %1995 : vector<2x2xf32>
    %c3_460 = arith.constant 3 : index
    %c1_461 = arith.constant 1 : index
    %c3_462 = arith.constant 3 : index
    %1997 = vector.load %arg10[%c3_460, %c1_461, %c3_462] : memref<4x6x6xf32, #tpu.memory_space<vmem>>, vector<1x2x2xf32>
    %1998 = vector.shape_cast %1997 : vector<1x2x2xf32> to vector<2x2xf32>
    %c83_463 = arith.constant 83 : index
    %1999 = memref.load %arg6[%c83_463] : memref<400xf32, #tpu.memory_space<smem>>
    %2000 = vector.broadcast %1999 : f32 to vector<2x2xf32>
    %2001 = arith.mulf %2000, %1998 : vector<2x2xf32>
    %2002 = arith.addf %1984, %2001 : vector<2x2xf32>
    %c183 = arith.constant 183 : index
    %2003 = memref.load %arg6[%c183] : memref<400xf32, #tpu.memory_space<smem>>
    %2004 = vector.broadcast %2003 : f32 to vector<2x2xf32>
    %2005 = arith.mulf %2004, %1998 : vector<2x2xf32>
    %2006 = arith.addf %1988, %2005 : vector<2x2xf32>
    %c283 = arith.constant 283 : index
    %2007 = memref.load %arg6[%c283] : memref<400xf32, #tpu.memory_space<smem>>
    %2008 = vector.broadcast %2007 : f32 to vector<2x2xf32>
    %2009 = arith.mulf %2008, %1998 : vector<2x2xf32>
    %2010 = arith.addf %1992, %2009 : vector<2x2xf32>
    %c383 = arith.constant 383 : index
    %2011 = memref.load %arg6[%c383] : memref<400xf32, #tpu.memory_space<smem>>
    %2012 = vector.broadcast %2011 : f32 to vector<2x2xf32>
    %2013 = arith.mulf %2012, %1998 : vector<2x2xf32>
    %2014 = arith.addf %1996, %2013 : vector<2x2xf32>
    %c3_464 = arith.constant 3 : index
    %c1_465 = arith.constant 1 : index
    %c4_466 = arith.constant 4 : index
    %2015 = vector.load %arg10[%c3_464, %c1_465, %c4_466] : memref<4x6x6xf32, #tpu.memory_space<vmem>>, vector<1x2x2xf32>
    %2016 = vector.shape_cast %2015 : vector<1x2x2xf32> to vector<2x2xf32>
    %c84_467 = arith.constant 84 : index
    %2017 = memref.load %arg6[%c84_467] : memref<400xf32, #tpu.memory_space<smem>>
    %2018 = vector.broadcast %2017 : f32 to vector<2x2xf32>
    %2019 = arith.mulf %2018, %2016 : vector<2x2xf32>
    %2020 = arith.addf %2002, %2019 : vector<2x2xf32>
    %c184 = arith.constant 184 : index
    %2021 = memref.load %arg6[%c184] : memref<400xf32, #tpu.memory_space<smem>>
    %2022 = vector.broadcast %2021 : f32 to vector<2x2xf32>
    %2023 = arith.mulf %2022, %2016 : vector<2x2xf32>
    %2024 = arith.addf %2006, %2023 : vector<2x2xf32>
    %c284 = arith.constant 284 : index
    %2025 = memref.load %arg6[%c284] : memref<400xf32, #tpu.memory_space<smem>>
    %2026 = vector.broadcast %2025 : f32 to vector<2x2xf32>
    %2027 = arith.mulf %2026, %2016 : vector<2x2xf32>
    %2028 = arith.addf %2010, %2027 : vector<2x2xf32>
    %c384 = arith.constant 384 : index
    %2029 = memref.load %arg6[%c384] : memref<400xf32, #tpu.memory_space<smem>>
    %2030 = vector.broadcast %2029 : f32 to vector<2x2xf32>
    %2031 = arith.mulf %2030, %2016 : vector<2x2xf32>
    %2032 = arith.addf %2014, %2031 : vector<2x2xf32>
    %c3_468 = arith.constant 3 : index
    %c2_469 = arith.constant 2 : index
    %c0_470 = arith.constant 0 : index
    %2033 = vector.load %arg10[%c3_468, %c2_469, %c0_470] : memref<4x6x6xf32, #tpu.memory_space<vmem>>, vector<1x2x2xf32>
    %2034 = vector.shape_cast %2033 : vector<1x2x2xf32> to vector<2x2xf32>
    %c85_471 = arith.constant 85 : index
    %2035 = memref.load %arg6[%c85_471] : memref<400xf32, #tpu.memory_space<smem>>
    %2036 = vector.broadcast %2035 : f32 to vector<2x2xf32>
    %2037 = arith.mulf %2036, %2034 : vector<2x2xf32>
    %2038 = arith.addf %2020, %2037 : vector<2x2xf32>
    %c185 = arith.constant 185 : index
    %2039 = memref.load %arg6[%c185] : memref<400xf32, #tpu.memory_space<smem>>
    %2040 = vector.broadcast %2039 : f32 to vector<2x2xf32>
    %2041 = arith.mulf %2040, %2034 : vector<2x2xf32>
    %2042 = arith.addf %2024, %2041 : vector<2x2xf32>
    %c285 = arith.constant 285 : index
    %2043 = memref.load %arg6[%c285] : memref<400xf32, #tpu.memory_space<smem>>
    %2044 = vector.broadcast %2043 : f32 to vector<2x2xf32>
    %2045 = arith.mulf %2044, %2034 : vector<2x2xf32>
    %2046 = arith.addf %2028, %2045 : vector<2x2xf32>
    %c385 = arith.constant 385 : index
    %2047 = memref.load %arg6[%c385] : memref<400xf32, #tpu.memory_space<smem>>
    %2048 = vector.broadcast %2047 : f32 to vector<2x2xf32>
    %2049 = arith.mulf %2048, %2034 : vector<2x2xf32>
    %2050 = arith.addf %2032, %2049 : vector<2x2xf32>
    %c3_472 = arith.constant 3 : index
    %c2_473 = arith.constant 2 : index
    %c1_474 = arith.constant 1 : index
    %2051 = vector.load %arg10[%c3_472, %c2_473, %c1_474] : memref<4x6x6xf32, #tpu.memory_space<vmem>>, vector<1x2x2xf32>
    %2052 = vector.shape_cast %2051 : vector<1x2x2xf32> to vector<2x2xf32>
    %c86_475 = arith.constant 86 : index
    %2053 = memref.load %arg6[%c86_475] : memref<400xf32, #tpu.memory_space<smem>>
    %2054 = vector.broadcast %2053 : f32 to vector<2x2xf32>
    %2055 = arith.mulf %2054, %2052 : vector<2x2xf32>
    %2056 = arith.addf %2038, %2055 : vector<2x2xf32>
    %c186 = arith.constant 186 : index
    %2057 = memref.load %arg6[%c186] : memref<400xf32, #tpu.memory_space<smem>>
    %2058 = vector.broadcast %2057 : f32 to vector<2x2xf32>
    %2059 = arith.mulf %2058, %2052 : vector<2x2xf32>
    %2060 = arith.addf %2042, %2059 : vector<2x2xf32>
    %c286 = arith.constant 286 : index
    %2061 = memref.load %arg6[%c286] : memref<400xf32, #tpu.memory_space<smem>>
    %2062 = vector.broadcast %2061 : f32 to vector<2x2xf32>
    %2063 = arith.mulf %2062, %2052 : vector<2x2xf32>
    %2064 = arith.addf %2046, %2063 : vector<2x2xf32>
    %c386 = arith.constant 386 : index
    %2065 = memref.load %arg6[%c386] : memref<400xf32, #tpu.memory_space<smem>>
    %2066 = vector.broadcast %2065 : f32 to vector<2x2xf32>
    %2067 = arith.mulf %2066, %2052 : vector<2x2xf32>
    %2068 = arith.addf %2050, %2067 : vector<2x2xf32>
    %c3_476 = arith.constant 3 : index
    %c2_477 = arith.constant 2 : index
    %c2_478 = arith.constant 2 : index
    %2069 = vector.load %arg10[%c3_476, %c2_477, %c2_478] : memref<4x6x6xf32, #tpu.memory_space<vmem>>, vector<1x2x2xf32>
    %2070 = vector.shape_cast %2069 : vector<1x2x2xf32> to vector<2x2xf32>
    %c87_479 = arith.constant 87 : index
    %2071 = memref.load %arg6[%c87_479] : memref<400xf32, #tpu.memory_space<smem>>
    %2072 = vector.broadcast %2071 : f32 to vector<2x2xf32>
    %2073 = arith.mulf %2072, %2070 : vector<2x2xf32>
    %2074 = arith.addf %2056, %2073 : vector<2x2xf32>
    %c187 = arith.constant 187 : index
    %2075 = memref.load %arg6[%c187] : memref<400xf32, #tpu.memory_space<smem>>
    %2076 = vector.broadcast %2075 : f32 to vector<2x2xf32>
    %2077 = arith.mulf %2076, %2070 : vector<2x2xf32>
    %2078 = arith.addf %2060, %2077 : vector<2x2xf32>
    %c287 = arith.constant 287 : index
    %2079 = memref.load %arg6[%c287] : memref<400xf32, #tpu.memory_space<smem>>
    %2080 = vector.broadcast %2079 : f32 to vector<2x2xf32>
    %2081 = arith.mulf %2080, %2070 : vector<2x2xf32>
    %2082 = arith.addf %2064, %2081 : vector<2x2xf32>
    %c387 = arith.constant 387 : index
    %2083 = memref.load %arg6[%c387] : memref<400xf32, #tpu.memory_space<smem>>
    %2084 = vector.broadcast %2083 : f32 to vector<2x2xf32>
    %2085 = arith.mulf %2084, %2070 : vector<2x2xf32>
    %2086 = arith.addf %2068, %2085 : vector<2x2xf32>
    %c3_480 = arith.constant 3 : index
    %c2_481 = arith.constant 2 : index
    %c3_482 = arith.constant 3 : index
    %2087 = vector.load %arg10[%c3_480, %c2_481, %c3_482] : memref<4x6x6xf32, #tpu.memory_space<vmem>>, vector<1x2x2xf32>
    %2088 = vector.shape_cast %2087 : vector<1x2x2xf32> to vector<2x2xf32>
    %c88_483 = arith.constant 88 : index
    %2089 = memref.load %arg6[%c88_483] : memref<400xf32, #tpu.memory_space<smem>>
    %2090 = vector.broadcast %2089 : f32 to vector<2x2xf32>
    %2091 = arith.mulf %2090, %2088 : vector<2x2xf32>
    %2092 = arith.addf %2074, %2091 : vector<2x2xf32>
    %c188 = arith.constant 188 : index
    %2093 = memref.load %arg6[%c188] : memref<400xf32, #tpu.memory_space<smem>>
    %2094 = vector.broadcast %2093 : f32 to vector<2x2xf32>
    %2095 = arith.mulf %2094, %2088 : vector<2x2xf32>
    %2096 = arith.addf %2078, %2095 : vector<2x2xf32>
    %c288 = arith.constant 288 : index
    %2097 = memref.load %arg6[%c288] : memref<400xf32, #tpu.memory_space<smem>>
    %2098 = vector.broadcast %2097 : f32 to vector<2x2xf32>
    %2099 = arith.mulf %2098, %2088 : vector<2x2xf32>
    %2100 = arith.addf %2082, %2099 : vector<2x2xf32>
    %c388 = arith.constant 388 : index
    %2101 = memref.load %arg6[%c388] : memref<400xf32, #tpu.memory_space<smem>>
    %2102 = vector.broadcast %2101 : f32 to vector<2x2xf32>
    %2103 = arith.mulf %2102, %2088 : vector<2x2xf32>
    %2104 = arith.addf %2086, %2103 : vector<2x2xf32>
    %c3_484 = arith.constant 3 : index
    %c2_485 = arith.constant 2 : index
    %c4_486 = arith.constant 4 : index
    %2105 = vector.load %arg10[%c3_484, %c2_485, %c4_486] : memref<4x6x6xf32, #tpu.memory_space<vmem>>, vector<1x2x2xf32>
    %2106 = vector.shape_cast %2105 : vector<1x2x2xf32> to vector<2x2xf32>
    %c89_487 = arith.constant 89 : index
    %2107 = memref.load %arg6[%c89_487] : memref<400xf32, #tpu.memory_space<smem>>
    %2108 = vector.broadcast %2107 : f32 to vector<2x2xf32>
    %2109 = arith.mulf %2108, %2106 : vector<2x2xf32>
    %2110 = arith.addf %2092, %2109 : vector<2x2xf32>
    %c189 = arith.constant 189 : index
    %2111 = memref.load %arg6[%c189] : memref<400xf32, #tpu.memory_space<smem>>
    %2112 = vector.broadcast %2111 : f32 to vector<2x2xf32>
    %2113 = arith.mulf %2112, %2106 : vector<2x2xf32>
    %2114 = arith.addf %2096, %2113 : vector<2x2xf32>
    %c289 = arith.constant 289 : index
    %2115 = memref.load %arg6[%c289] : memref<400xf32, #tpu.memory_space<smem>>
    %2116 = vector.broadcast %2115 : f32 to vector<2x2xf32>
    %2117 = arith.mulf %2116, %2106 : vector<2x2xf32>
    %2118 = arith.addf %2100, %2117 : vector<2x2xf32>
    %c389 = arith.constant 389 : index
    %2119 = memref.load %arg6[%c389] : memref<400xf32, #tpu.memory_space<smem>>
    %2120 = vector.broadcast %2119 : f32 to vector<2x2xf32>
    %2121 = arith.mulf %2120, %2106 : vector<2x2xf32>
    %2122 = arith.addf %2104, %2121 : vector<2x2xf32>
    %c3_488 = arith.constant 3 : index
    %c3_489 = arith.constant 3 : index
    %c0_490 = arith.constant 0 : index
    %2123 = vector.load %arg10[%c3_488, %c3_489, %c0_490] : memref<4x6x6xf32, #tpu.memory_space<vmem>>, vector<1x2x2xf32>
    %2124 = vector.shape_cast %2123 : vector<1x2x2xf32> to vector<2x2xf32>
    %c90_491 = arith.constant 90 : index
    %2125 = memref.load %arg6[%c90_491] : memref<400xf32, #tpu.memory_space<smem>>
    %2126 = vector.broadcast %2125 : f32 to vector<2x2xf32>
    %2127 = arith.mulf %2126, %2124 : vector<2x2xf32>
    %2128 = arith.addf %2110, %2127 : vector<2x2xf32>
    %c190 = arith.constant 190 : index
    %2129 = memref.load %arg6[%c190] : memref<400xf32, #tpu.memory_space<smem>>
    %2130 = vector.broadcast %2129 : f32 to vector<2x2xf32>
    %2131 = arith.mulf %2130, %2124 : vector<2x2xf32>
    %2132 = arith.addf %2114, %2131 : vector<2x2xf32>
    %c290 = arith.constant 290 : index
    %2133 = memref.load %arg6[%c290] : memref<400xf32, #tpu.memory_space<smem>>
    %2134 = vector.broadcast %2133 : f32 to vector<2x2xf32>
    %2135 = arith.mulf %2134, %2124 : vector<2x2xf32>
    %2136 = arith.addf %2118, %2135 : vector<2x2xf32>
    %c390 = arith.constant 390 : index
    %2137 = memref.load %arg6[%c390] : memref<400xf32, #tpu.memory_space<smem>>
    %2138 = vector.broadcast %2137 : f32 to vector<2x2xf32>
    %2139 = arith.mulf %2138, %2124 : vector<2x2xf32>
    %2140 = arith.addf %2122, %2139 : vector<2x2xf32>
    %c3_492 = arith.constant 3 : index
    %c3_493 = arith.constant 3 : index
    %c1_494 = arith.constant 1 : index
    %2141 = vector.load %arg10[%c3_492, %c3_493, %c1_494] : memref<4x6x6xf32, #tpu.memory_space<vmem>>, vector<1x2x2xf32>
    %2142 = vector.shape_cast %2141 : vector<1x2x2xf32> to vector<2x2xf32>
    %c91_495 = arith.constant 91 : index
    %2143 = memref.load %arg6[%c91_495] : memref<400xf32, #tpu.memory_space<smem>>
    %2144 = vector.broadcast %2143 : f32 to vector<2x2xf32>
    %2145 = arith.mulf %2144, %2142 : vector<2x2xf32>
    %2146 = arith.addf %2128, %2145 : vector<2x2xf32>
    %c191 = arith.constant 191 : index
    %2147 = memref.load %arg6[%c191] : memref<400xf32, #tpu.memory_space<smem>>
    %2148 = vector.broadcast %2147 : f32 to vector<2x2xf32>
    %2149 = arith.mulf %2148, %2142 : vector<2x2xf32>
    %2150 = arith.addf %2132, %2149 : vector<2x2xf32>
    %c291 = arith.constant 291 : index
    %2151 = memref.load %arg6[%c291] : memref<400xf32, #tpu.memory_space<smem>>
    %2152 = vector.broadcast %2151 : f32 to vector<2x2xf32>
    %2153 = arith.mulf %2152, %2142 : vector<2x2xf32>
    %2154 = arith.addf %2136, %2153 : vector<2x2xf32>
    %c391 = arith.constant 391 : index
    %2155 = memref.load %arg6[%c391] : memref<400xf32, #tpu.memory_space<smem>>
    %2156 = vector.broadcast %2155 : f32 to vector<2x2xf32>
    %2157 = arith.mulf %2156, %2142 : vector<2x2xf32>
    %2158 = arith.addf %2140, %2157 : vector<2x2xf32>
    %c3_496 = arith.constant 3 : index
    %c3_497 = arith.constant 3 : index
    %c2_498 = arith.constant 2 : index
    %2159 = vector.load %arg10[%c3_496, %c3_497, %c2_498] : memref<4x6x6xf32, #tpu.memory_space<vmem>>, vector<1x2x2xf32>
    %2160 = vector.shape_cast %2159 : vector<1x2x2xf32> to vector<2x2xf32>
    %c92_499 = arith.constant 92 : index
    %2161 = memref.load %arg6[%c92_499] : memref<400xf32, #tpu.memory_space<smem>>
    %2162 = vector.broadcast %2161 : f32 to vector<2x2xf32>
    %2163 = arith.mulf %2162, %2160 : vector<2x2xf32>
    %2164 = arith.addf %2146, %2163 : vector<2x2xf32>
    %c192 = arith.constant 192 : index
    %2165 = memref.load %arg6[%c192] : memref<400xf32, #tpu.memory_space<smem>>
    %2166 = vector.broadcast %2165 : f32 to vector<2x2xf32>
    %2167 = arith.mulf %2166, %2160 : vector<2x2xf32>
    %2168 = arith.addf %2150, %2167 : vector<2x2xf32>
    %c292 = arith.constant 292 : index
    %2169 = memref.load %arg6[%c292] : memref<400xf32, #tpu.memory_space<smem>>
    %2170 = vector.broadcast %2169 : f32 to vector<2x2xf32>
    %2171 = arith.mulf %2170, %2160 : vector<2x2xf32>
    %2172 = arith.addf %2154, %2171 : vector<2x2xf32>
    %c392 = arith.constant 392 : index
    %2173 = memref.load %arg6[%c392] : memref<400xf32, #tpu.memory_space<smem>>
    %2174 = vector.broadcast %2173 : f32 to vector<2x2xf32>
    %2175 = arith.mulf %2174, %2160 : vector<2x2xf32>
    %2176 = arith.addf %2158, %2175 : vector<2x2xf32>
    %c3_500 = arith.constant 3 : index
    %c3_501 = arith.constant 3 : index
    %c3_502 = arith.constant 3 : index
    %2177 = vector.load %arg10[%c3_500, %c3_501, %c3_502] : memref<4x6x6xf32, #tpu.memory_space<vmem>>, vector<1x2x2xf32>
    %2178 = vector.shape_cast %2177 : vector<1x2x2xf32> to vector<2x2xf32>
    %c93_503 = arith.constant 93 : index
    %2179 = memref.load %arg6[%c93_503] : memref<400xf32, #tpu.memory_space<smem>>
    %2180 = vector.broadcast %2179 : f32 to vector<2x2xf32>
    %2181 = arith.mulf %2180, %2178 : vector<2x2xf32>
    %2182 = arith.addf %2164, %2181 : vector<2x2xf32>
    %c193 = arith.constant 193 : index
    %2183 = memref.load %arg6[%c193] : memref<400xf32, #tpu.memory_space<smem>>
    %2184 = vector.broadcast %2183 : f32 to vector<2x2xf32>
    %2185 = arith.mulf %2184, %2178 : vector<2x2xf32>
    %2186 = arith.addf %2168, %2185 : vector<2x2xf32>
    %c293 = arith.constant 293 : index
    %2187 = memref.load %arg6[%c293] : memref<400xf32, #tpu.memory_space<smem>>
    %2188 = vector.broadcast %2187 : f32 to vector<2x2xf32>
    %2189 = arith.mulf %2188, %2178 : vector<2x2xf32>
    %2190 = arith.addf %2172, %2189 : vector<2x2xf32>
    %c393 = arith.constant 393 : index
    %2191 = memref.load %arg6[%c393] : memref<400xf32, #tpu.memory_space<smem>>
    %2192 = vector.broadcast %2191 : f32 to vector<2x2xf32>
    %2193 = arith.mulf %2192, %2178 : vector<2x2xf32>
    %2194 = arith.addf %2176, %2193 : vector<2x2xf32>
    %c3_504 = arith.constant 3 : index
    %c3_505 = arith.constant 3 : index
    %c4_506 = arith.constant 4 : index
    %2195 = vector.load %arg10[%c3_504, %c3_505, %c4_506] : memref<4x6x6xf32, #tpu.memory_space<vmem>>, vector<1x2x2xf32>
    %2196 = vector.shape_cast %2195 : vector<1x2x2xf32> to vector<2x2xf32>
    %c94_507 = arith.constant 94 : index
    %2197 = memref.load %arg6[%c94_507] : memref<400xf32, #tpu.memory_space<smem>>
    %2198 = vector.broadcast %2197 : f32 to vector<2x2xf32>
    %2199 = arith.mulf %2198, %2196 : vector<2x2xf32>
    %2200 = arith.addf %2182, %2199 : vector<2x2xf32>
    %c194 = arith.constant 194 : index
    %2201 = memref.load %arg6[%c194] : memref<400xf32, #tpu.memory_space<smem>>
    %2202 = vector.broadcast %2201 : f32 to vector<2x2xf32>
    %2203 = arith.mulf %2202, %2196 : vector<2x2xf32>
    %2204 = arith.addf %2186, %2203 : vector<2x2xf32>
    %c294 = arith.constant 294 : index
    %2205 = memref.load %arg6[%c294] : memref<400xf32, #tpu.memory_space<smem>>
    %2206 = vector.broadcast %2205 : f32 to vector<2x2xf32>
    %2207 = arith.mulf %2206, %2196 : vector<2x2xf32>
    %2208 = arith.addf %2190, %2207 : vector<2x2xf32>
    %c394 = arith.constant 394 : index
    %2209 = memref.load %arg6[%c394] : memref<400xf32, #tpu.memory_space<smem>>
    %2210 = vector.broadcast %2209 : f32 to vector<2x2xf32>
    %2211 = arith.mulf %2210, %2196 : vector<2x2xf32>
    %2212 = arith.addf %2194, %2211 : vector<2x2xf32>
    %c3_508 = arith.constant 3 : index
    %c4_509 = arith.constant 4 : index
    %c0_510 = arith.constant 0 : index
    %2213 = vector.load %arg10[%c3_508, %c4_509, %c0_510] : memref<4x6x6xf32, #tpu.memory_space<vmem>>, vector<1x2x2xf32>
    %2214 = vector.shape_cast %2213 : vector<1x2x2xf32> to vector<2x2xf32>
    %c95_511 = arith.constant 95 : index
    %2215 = memref.load %arg6[%c95_511] : memref<400xf32, #tpu.memory_space<smem>>
    %2216 = vector.broadcast %2215 : f32 to vector<2x2xf32>
    %2217 = arith.mulf %2216, %2214 : vector<2x2xf32>
    %2218 = arith.addf %2200, %2217 : vector<2x2xf32>
    %c195 = arith.constant 195 : index
    %2219 = memref.load %arg6[%c195] : memref<400xf32, #tpu.memory_space<smem>>
    %2220 = vector.broadcast %2219 : f32 to vector<2x2xf32>
    %2221 = arith.mulf %2220, %2214 : vector<2x2xf32>
    %2222 = arith.addf %2204, %2221 : vector<2x2xf32>
    %c295 = arith.constant 295 : index
    %2223 = memref.load %arg6[%c295] : memref<400xf32, #tpu.memory_space<smem>>
    %2224 = vector.broadcast %2223 : f32 to vector<2x2xf32>
    %2225 = arith.mulf %2224, %2214 : vector<2x2xf32>
    %2226 = arith.addf %2208, %2225 : vector<2x2xf32>
    %c395 = arith.constant 395 : index
    %2227 = memref.load %arg6[%c395] : memref<400xf32, #tpu.memory_space<smem>>
    %2228 = vector.broadcast %2227 : f32 to vector<2x2xf32>
    %2229 = arith.mulf %2228, %2214 : vector<2x2xf32>
    %2230 = arith.addf %2212, %2229 : vector<2x2xf32>
    %c3_512 = arith.constant 3 : index
    %c4_513 = arith.constant 4 : index
    %c1_514 = arith.constant 1 : index
    %2231 = vector.load %arg10[%c3_512, %c4_513, %c1_514] : memref<4x6x6xf32, #tpu.memory_space<vmem>>, vector<1x2x2xf32>
    %2232 = vector.shape_cast %2231 : vector<1x2x2xf32> to vector<2x2xf32>
    %c96_515 = arith.constant 96 : index
    %2233 = memref.load %arg6[%c96_515] : memref<400xf32, #tpu.memory_space<smem>>
    %2234 = vector.broadcast %2233 : f32 to vector<2x2xf32>
    %2235 = arith.mulf %2234, %2232 : vector<2x2xf32>
    %2236 = arith.addf %2218, %2235 : vector<2x2xf32>
    %c196 = arith.constant 196 : index
    %2237 = memref.load %arg6[%c196] : memref<400xf32, #tpu.memory_space<smem>>
    %2238 = vector.broadcast %2237 : f32 to vector<2x2xf32>
    %2239 = arith.mulf %2238, %2232 : vector<2x2xf32>
    %2240 = arith.addf %2222, %2239 : vector<2x2xf32>
    %c296 = arith.constant 296 : index
    %2241 = memref.load %arg6[%c296] : memref<400xf32, #tpu.memory_space<smem>>
    %2242 = vector.broadcast %2241 : f32 to vector<2x2xf32>
    %2243 = arith.mulf %2242, %2232 : vector<2x2xf32>
    %2244 = arith.addf %2226, %2243 : vector<2x2xf32>
    %c396 = arith.constant 396 : index
    %2245 = memref.load %arg6[%c396] : memref<400xf32, #tpu.memory_space<smem>>
    %2246 = vector.broadcast %2245 : f32 to vector<2x2xf32>
    %2247 = arith.mulf %2246, %2232 : vector<2x2xf32>
    %2248 = arith.addf %2230, %2247 : vector<2x2xf32>
    %c3_516 = arith.constant 3 : index
    %c4_517 = arith.constant 4 : index
    %c2_518 = arith.constant 2 : index
    %2249 = vector.load %arg10[%c3_516, %c4_517, %c2_518] : memref<4x6x6xf32, #tpu.memory_space<vmem>>, vector<1x2x2xf32>
    %2250 = vector.shape_cast %2249 : vector<1x2x2xf32> to vector<2x2xf32>
    %c97_519 = arith.constant 97 : index
    %2251 = memref.load %arg6[%c97_519] : memref<400xf32, #tpu.memory_space<smem>>
    %2252 = vector.broadcast %2251 : f32 to vector<2x2xf32>
    %2253 = arith.mulf %2252, %2250 : vector<2x2xf32>
    %2254 = arith.addf %2236, %2253 : vector<2x2xf32>
    %c197 = arith.constant 197 : index
    %2255 = memref.load %arg6[%c197] : memref<400xf32, #tpu.memory_space<smem>>
    %2256 = vector.broadcast %2255 : f32 to vector<2x2xf32>
    %2257 = arith.mulf %2256, %2250 : vector<2x2xf32>
    %2258 = arith.addf %2240, %2257 : vector<2x2xf32>
    %c297 = arith.constant 297 : index
    %2259 = memref.load %arg6[%c297] : memref<400xf32, #tpu.memory_space<smem>>
    %2260 = vector.broadcast %2259 : f32 to vector<2x2xf32>
    %2261 = arith.mulf %2260, %2250 : vector<2x2xf32>
    %2262 = arith.addf %2244, %2261 : vector<2x2xf32>
    %c397 = arith.constant 397 : index
    %2263 = memref.load %arg6[%c397] : memref<400xf32, #tpu.memory_space<smem>>
    %2264 = vector.broadcast %2263 : f32 to vector<2x2xf32>
    %2265 = arith.mulf %2264, %2250 : vector<2x2xf32>
    %2266 = arith.addf %2248, %2265 : vector<2x2xf32>
    %c3_520 = arith.constant 3 : index
    %c4_521 = arith.constant 4 : index
    %c3_522 = arith.constant 3 : index
    %2267 = vector.load %arg10[%c3_520, %c4_521, %c3_522] : memref<4x6x6xf32, #tpu.memory_space<vmem>>, vector<1x2x2xf32>
    %2268 = vector.shape_cast %2267 : vector<1x2x2xf32> to vector<2x2xf32>
    %c98_523 = arith.constant 98 : index
    %2269 = memref.load %arg6[%c98_523] : memref<400xf32, #tpu.memory_space<smem>>
    %2270 = vector.broadcast %2269 : f32 to vector<2x2xf32>
    %2271 = arith.mulf %2270, %2268 : vector<2x2xf32>
    %2272 = arith.addf %2254, %2271 : vector<2x2xf32>
    %c198 = arith.constant 198 : index
    %2273 = memref.load %arg6[%c198] : memref<400xf32, #tpu.memory_space<smem>>
    %2274 = vector.broadcast %2273 : f32 to vector<2x2xf32>
    %2275 = arith.mulf %2274, %2268 : vector<2x2xf32>
    %2276 = arith.addf %2258, %2275 : vector<2x2xf32>
    %c298 = arith.constant 298 : index
    %2277 = memref.load %arg6[%c298] : memref<400xf32, #tpu.memory_space<smem>>
    %2278 = vector.broadcast %2277 : f32 to vector<2x2xf32>
    %2279 = arith.mulf %2278, %2268 : vector<2x2xf32>
    %2280 = arith.addf %2262, %2279 : vector<2x2xf32>
    %c398 = arith.constant 398 : index
    %2281 = memref.load %arg6[%c398] : memref<400xf32, #tpu.memory_space<smem>>
    %2282 = vector.broadcast %2281 : f32 to vector<2x2xf32>
    %2283 = arith.mulf %2282, %2268 : vector<2x2xf32>
    %2284 = arith.addf %2266, %2283 : vector<2x2xf32>
    %c3_524 = arith.constant 3 : index
    %c4_525 = arith.constant 4 : index
    %c4_526 = arith.constant 4 : index
    %2285 = vector.load %arg10[%c3_524, %c4_525, %c4_526] : memref<4x6x6xf32, #tpu.memory_space<vmem>>, vector<1x2x2xf32>
    %2286 = vector.shape_cast %2285 : vector<1x2x2xf32> to vector<2x2xf32>
    %c99_527 = arith.constant 99 : index
    %2287 = memref.load %arg6[%c99_527] : memref<400xf32, #tpu.memory_space<smem>>
    %2288 = vector.broadcast %2287 : f32 to vector<2x2xf32>
    %2289 = arith.mulf %2288, %2286 : vector<2x2xf32>
    %2290 = arith.addf %2272, %2289 : vector<2x2xf32>
    %c199 = arith.constant 199 : index
    %2291 = memref.load %arg6[%c199] : memref<400xf32, #tpu.memory_space<smem>>
    %2292 = vector.broadcast %2291 : f32 to vector<2x2xf32>
    %2293 = arith.mulf %2292, %2286 : vector<2x2xf32>
    %2294 = arith.addf %2276, %2293 : vector<2x2xf32>
    %c299 = arith.constant 299 : index
    %2295 = memref.load %arg6[%c299] : memref<400xf32, #tpu.memory_space<smem>>
    %2296 = vector.broadcast %2295 : f32 to vector<2x2xf32>
    %2297 = arith.mulf %2296, %2286 : vector<2x2xf32>
    %2298 = arith.addf %2280, %2297 : vector<2x2xf32>
    %c399 = arith.constant 399 : index
    %2299 = memref.load %arg6[%c399] : memref<400xf32, #tpu.memory_space<smem>>
    %2300 = vector.broadcast %2299 : f32 to vector<2x2xf32>
    %2301 = arith.mulf %2300, %2286 : vector<2x2xf32>
    %2302 = arith.addf %2284, %2301 : vector<2x2xf32>
    %c0_528 = arith.constant 0 : index
    %2303 = memref.load %arg8[%c0_528] : memref<1xf32, #tpu.memory_space<smem>>
    %c0_529 = arith.constant 0 : index
    %2304 = memref.load %arg7[%c0_529] : memref<4xf32, #tpu.memory_space<smem>>
    %2305 = vector.broadcast %2304 : f32 to vector<2x2xf32>
    %2306 = arith.addf %2290, %2305 : vector<2x2xf32>
    %cst_530 = arith.constant 0.000000e+00 : f32
    %2307 = vector.broadcast %cst_530 : f32 to vector<2x2xf32>
    %2308 = arith.cmpf ogt, %2306, %2307 : vector<2x2xf32>
    %2309 = vector.broadcast %2303 : f32 to vector<2x2xf32>
    %2310 = arith.mulf %2309, %2306 : vector<2x2xf32>
    %2311 = arith.select %2308, %2306, %2310 : vector<2x2xi1>, vector<2x2xf32>
    %c0_531 = arith.constant 0 : index
    %c0_532 = arith.constant 0 : index
    %c0_533 = arith.constant 0 : index
    %c0_534 = arith.constant 0 : index
    %2312 = vector.load %arg9[%c0_531, %c0_532, %c0_533, %c0_534] : memref<1x4x2x2xf32, #tpu.memory_space<vmem>>, vector<1x1x2x2xf32>
    %2313 = vector.shape_cast %2312 : vector<1x1x2x2xf32> to vector<2x2xf32>
    %2314 = vector.shape_cast %2311 : vector<2x2xf32> to vector<1x1x2x2xf32>
    tpu.vector_store %arg9[%c0_531, %c0_532, %c0_533, %c0_534], %2314 {strides = array<i32>} : memref<1x4x2x2xf32, #tpu.memory_space<vmem>>, vector<1x1x2x2xf32>,
    %c1_535 = arith.constant 1 : index
    %2315 = memref.load %arg7[%c1_535] : memref<4xf32, #tpu.memory_space<smem>>
    %2316 = vector.broadcast %2315 : f32 to vector<2x2xf32>
    %2317 = arith.addf %2294, %2316 : vector<2x2xf32>
    %cst_536 = arith.constant 0.000000e+00 : f32
    %2318 = vector.broadcast %cst_536 : f32 to vector<2x2xf32>
    %2319 = arith.cmpf ogt, %2317, %2318 : vector<2x2xf32>
    %2320 = vector.broadcast %2303 : f32 to vector<2x2xf32>
    %2321 = arith.mulf %2320, %2317 : vector<2x2xf32>
    %2322 = arith.select %2319, %2317, %2321 : vector<2x2xi1>, vector<2x2xf32>
    %c0_537 = arith.constant 0 : index
    %c1_538 = arith.constant 1 : index
    %c0_539 = arith.constant 0 : index
    %c0_540 = arith.constant 0 : index
    %2323 = vector.load %arg9[%c0_537, %c1_538, %c0_539, %c0_540] : memref<1x4x2x2xf32, #tpu.memory_space<vmem>>, vector<1x1x2x2xf32>
    %2324 = vector.shape_cast %2323 : vector<1x1x2x2xf32> to vector<2x2xf32>
    %2325 = vector.shape_cast %2322 : vector<2x2xf32> to vector<1x1x2x2xf32>
    tpu.vector_store %arg9[%c0_537, %c1_538, %c0_539, %c0_540], %2325 {strides = array<i32>} : memref<1x4x2x2xf32, #tpu.memory_space<vmem>>, vector<1x1x2x2xf32>,
    %c2_541 = arith.constant 2 : index
    %2326 = memref.load %arg7[%c2_541] : memref<4xf32, #tpu.memory_space<smem>>
    %2327 = vector.broadcast %2326 : f32 to vector<2x2xf32>
    %2328 = arith.addf %2298, %2327 : vector<2x2xf32>
    %cst_542 = arith.constant 0.000000e+00 : f32
    %2329 = vector.broadcast %cst_542 : f32 to vector<2x2xf32>
    %2330 = arith.cmpf ogt, %2328, %2329 : vector<2x2xf32>
    %2331 = vector.broadcast %2303 : f32 to vector<2x2xf32>
    %2332 = arith.mulf %2331, %2328 : vector<2x2xf32>
    %2333 = arith.select %2330, %2328, %2332 : vector<2x2xi1>, vector<2x2xf32>
    %c0_543 = arith.constant 0 : index
    %c2_544 = arith.constant 2 : index
    %c0_545 = arith.constant 0 : index
    %c0_546 = arith.constant 0 : index
    %2334 = vector.load %arg9[%c0_543, %c2_544, %c0_545, %c0_546] : memref<1x4x2x2xf32, #tpu.memory_space<vmem>>, vector<1x1x2x2xf32>
    %2335 = vector.shape_cast %2334 : vector<1x1x2x2xf32> to vector<2x2xf32>
    %2336 = vector.shape_cast %2333 : vector<2x2xf32> to vector<1x1x2x2xf32>
    tpu.vector_store %arg9[%c0_543, %c2_544, %c0_545, %c0_546], %2336 {strides = array<i32>} : memref<1x4x2x2xf32, #tpu.memory_space<vmem>>, vector<1x1x2x2xf32>,
    %c3_547 = arith.constant 3 : index
    %2337 = memref.load %arg7[%c3_547] : memref<4xf32, #tpu.memory_space<smem>>
    %2338 = vector.broadcast %2337 : f32 to vector<2x2xf32>
    %2339 = arith.addf %2302, %2338 : vector<2x2xf32>
    %cst_548 = arith.constant 0.000000e+00 : f32
    %2340 = vector.broadcast %cst_548 : f32 to vector<2x2xf32>
    %2341 = arith.cmpf ogt, %2339, %2340 : vector<2x2xf32>
    %2342 = vector.broadcast %2303 : f32 to vector<2x2xf32>
    %2343 = arith.mulf %2342, %2339 : vector<2x2xf32>
    %2344 = arith.select %2341, %2339, %2343 : vector<2x2xi1>, vector<2x2xf32>
    %c0_549 = arith.constant 0 : index
    %c3_550 = arith.constant 3 : index
    %c0_551 = arith.constant 0 : index
    %c0_552 = arith.constant 0 : index
    %2345 = vector.load %arg9[%c0_549, %c3_550, %c0_551, %c0_552] : memref<1x4x2x2xf32, #tpu.memory_space<vmem>>, vector<1x1x2x2xf32>
    %2346 = vector.shape_cast %2345 : vector<1x1x2x2xf32> to vector<2x2xf32>
    %2347 = vector.shape_cast %2344 : vector<2x2xf32> to vector<1x1x2x2xf32>
    tpu.vector_store %arg9[%c0_549, %c3_550, %c0_551, %c0_552], %2347 {strides = array<i32>} : memref<1x4x2x2xf32, #tpu.memory_space<vmem>>, vector<1x1x2x2xf32>,
    return
  }
  func.func @transform_0(%arg0: i32, %arg1: i32) -> (i32, i32, i32, i32) {
    %c0_i32 = arith.constant 0 : i32
    %c0_i32_0 = arith.constant 0 : i32
    %c0_i32_1 = arith.constant 0 : i32
    return %arg0, %arg1, %c0_i32, %c0_i32_0 : i32, i32, i32, i32
  }
  func.func @transform_1(%arg0: i32, %arg1: i32) -> i32 {
    %c0_i32 = arith.constant 0 : i32
    %c0_i32_0 = arith.constant 0 : i32
    return %c0_i32 : i32
  }
  func.func @transform_2(%arg0: i32, %arg1: i32) -> i32 {
    %c0_i32 = arith.constant 0 : i32
    %c0_i32_0 = arith.constant 0 : i32
    return %c0_i32 : i32
  }
  func.func @transform_3(%arg0: i32, %arg1: i32) -> i32 {
    %c0_i32 = arith.constant 0 : i32
    %c0_i32_0 = arith.constant 0 : i32
    return %c0_i32 : i32
  }
  func.func @transform_4(%arg0: i32, %arg1: i32) -> i32 {
    %c0_i32 = arith.constant 0 : i32
    %c0_i32_0 = arith.constant 0 : i32
    return %c0_i32 : i32
  }
  func.func @transform_5(%arg0: i32, %arg1: i32) -> i32 {
    %c0_i32 = arith.constant 0 : i32
    %c0_i32_0 = arith.constant 0 : i32
    return %c0_i32 : i32
  }
  func.func @transform_6(%arg0: i32, %arg1: i32) -> i32 {
    %c0_i32 = arith.constant 0 : i32
    %c0_i32_0 = arith.constant 0 : i32
    return %c0_i32 : i32
  }
  func.func @transform_7(%arg0: i32, %arg1: i32) -> (i32, i32, i32, i32) {
    %c0_i32 = arith.constant 0 : i32
    %c0_i32_0 = arith.constant 0 : i32
    %c0_i32_1 = arith.constant 0 : i32
    return %arg0, %c0_i32, %arg1, %c0_i32_0 : i32, i32, i32, i32
  }
}

</mosaic_0001>

<llo_original>
// kernel: tpu_custom_call.1
$region0: #{tpu_custom_call.1}
  #allocation0 [shape = 'u32[]', space=smem, size = 0x4, offset = 0x4, fixed_abs, tag = 'smem constant byte address 0x4 - core index']
  #allocation1 [shape = 'u32[144,128]{1,0:T(1,128)}', space=vmem, size = 0x12000, scoped, tag = 'internal scratch']
  #allocation2 [shape = 'f32[4,6,6]{2,1,0:T(8,128)}', space=vmem, size = 0x4000, scoped, tag = 'scratch operand']
  #allocation3 [shape = 'f32[1]{0:T(128)S(6)}', space=smem, size = 0x200, scoped, tag = 'scoped memory for tpu_custom_call.1']
  #allocation4 [shape = 'f32[1]{0:T(128)S(6)}', space=smem, size = 0x200, scoped, tag = 'scoped memory for tpu_custom_call.1']
  %s0 = inlined_call_operand.vmem [shape: f32[2,1,32,8], index: 0, kind: input, shape index: {}]
  %s1 = inlined_call_operand.vmem [shape: f32[100], index: 1, kind: input, shape index: {}]
  %s2 = inlined_call_operand.vmem [shape: f32[4], index: 2, kind: input, shape index: {}]
  %s3 = inlined_call_operand.<no memory space> [shape: f32[1], index: 3, kind: input, shape index: {}]
  %s4 = inlined_call_operand.vmem [shape: f32[400], index: 4, kind: input, shape index: {}]
  %s5 = inlined_call_operand.vmem [shape: f32[4], index: 5, kind: input, shape index: {}]
  %s6 = inlined_call_operand.<no memory space> [shape: f32[1], index: 6, kind: input, shape index: {}]
  %s7 = inlined_call_operand.vmem [shape: f32[2,4,2,2], index: 7, kind: output, shape index: {}]
  %s8 = sld [smem:[#allocation0]]
  $region77: #{tpu_custom_call.1} parent=0
    _
  %s10 = ssub.s32 1, %s8
  %s11 = scalar_select 0, %s10, %s8
  %12 = sst [smem:[#allocation3]] %s3
  %13 = sst [smem:[#allocation4]] %s6
  $region1: #{tpu_custom_call.1} parent=0
    #allocation5 [shape = 'u8[512]{0}', space=smem, size = 0x200, scoped, tag = 'input window, operand 1, single buffered']
    #allocation6 [shape = 's32[2]{0}', space=sflag, size = 0x8, scoped, tag = 'scoped memory for tpu_custom_call.1']
    #allocation7 [shape = 'u8[512]{0}', space=smem, size = 0x200, scoped, tag = 'input window, operand 2, single buffered']
    #allocation8 [shape = 's32[1]{0}', space=sflag, size = 0x4, scoped, tag = 'scoped memory for tpu_custom_call.1']
    #allocation9 [shape = 'u8[2048]{0}', space=smem, size = 0x800, scoped, tag = 'input window, operand 4, single buffered']
    #allocation10 [shape = 'u8[512]{0}', space=smem, size = 0x200, scoped, tag = 'input window, operand 5, single buffered']
    #allocation11 [shape = 's32[1]{0}', space=sflag, size = 0x4, scoped, tag = 'scoped memory for tpu_custom_call.1']
    %14 = vsyncpa [#allocation6], 0
    %15 = vsyncpa [#allocation8], 0
    %16 = vsyncpa [#allocation11], 0
    loop: start=0, step=1, limit=4
    $region2: #{tpu_custom_call.1} parent=1 // loop_pre_header
      _
    $region3: #{tpu_custom_call.1} parent=1 // loop_header
      %s18 = sphi 0, %s22
      %p19 = scmp.ge.s32.totalorder %s18, 4
      %s25 = sphi 0, %s37
      %s26 = sphi 0, %s33
      %s27 = sphi 0, %s25
      %s28 = sphi 0, %s26
      %s29 = sphi 0, %s27
      %s30 = sphi 0, %s28
      %s42 = sphi 0, %s44
      %s45 = sphi 0, %s42
      %s46 = sphi 0, %s45
      %s62 = sphi 0, %s46
      %s66 = sphi 0, %s66
      %s68 = sphi 0, %s66
      %s69 = sphi 0, %s68
      %s83 = sphi 0, %s69
      %s87 = sphi 0, %s87
      %s89 = sphi 0, %s87
      %s90 = sphi 0, %s89
      %s104 = sphi 0, %s90
      %s108 = sphi 0, %s108
      %s110 = sphi 0, %s108
      %s111 = sphi 0, %s110
      %s125 = sphi 0, %s111
      %s129 = sphi 0, %s129
      %s131 = sphi 0, %s129
      %s132 = sphi 0, %s131
      %s146 = sphi 0, %s132
      %s150 = sphi 0, %s150
      %s152 = sphi 0, %s150
      %s153 = sphi 0, %s152
      %s167 = sphi 0, %s153
      %s171 = sphi 0, %s171
      %s173 = sphi 0, %s171
      %s174 = sphi 0, %s173
      %s188 = sphi 0, %s174
      %s196 = sphi 0, %s198
      %s199 = sphi 0, %s196
      %s200 = sphi 0, %s199
      %s216 = sphi 0, %s200
    $region4: #{tpu_custom_call.1} parent=1 // loop_header_branch
      %21 = sbr.rel (%p19) target = $region8
    $region5: #{tpu_custom_call.1} parent=1 // loop_body
      %s23 = ssub.s32 %s18, 1
      %s24 = ssub.s32 %s18, 2
      %s31 = sadd.s32 1, %s26
      %p32 = scmp.ge.s32.totalorder %s31, 1
      %s33 = scalar_select %p32, 0, %s31
      %s34 = sadd.s32 1, %s25
      %s35 = scalar_select %p32, %s34, %s25
      %p36 = scmp.ge.s32.totalorder %s35, 2
      %s37 = scalar_select %p36, 0, %s35
      %s38 = ssub.s32 %s25, %s37
      %s39 = ssub.s32 %s26, %s33
      %s40 = sor.u32 %s38, %s39
      %p41 = scmp.eq.s32.totalorder %s40, 0
      %s43 = sadd.s32 %s42, 1
      %s44 = scalar_select %p41, %s42, %s43
      %p47 = pneg %p41
      %p48 = scmp.eq.s32.totalorder %s18, 1
      %p49 = por %p47, %p48
      %p50 = scmp.ne.s32.totalorder %s42, %s45
      %p51 = scmp.eq.s32.totalorder %s18, 0
      %p52 = por %p50, %p51
      %p53 = scmp.ne.s32.totalorder %s42, %s45
      %p54 = scmp.eq.s32.totalorder %s23, 1
      %p55 = por %p53, %p54
      %p56 = scmp.ne.s32.totalorder %s45, %s46
      %p57 = scmp.eq.s32.totalorder %s23, 0
      %p58 = por %p56, %p57
      %p59 = scmp.ne.s32.totalorder %s45, %s46
      %p60 = scmp.eq.s32.totalorder %s24, 1
      %p61 = por %p59, %p60
      %p63 = scmp.ne.s32.totalorder %s46, %s62
      %p64 = scmp.eq.s32.totalorder %s24, 0
      %p65 = por %p63, %p64
      %s67 = sadd.s32 %s66, 1
      %p70 = scmp.eq.s32.totalorder %s18, 1
      %p71 = scmp.ne.s32.totalorder %s66, %s68
      %p72 = scmp.eq.s32.totalorder %s18, 0
      %p73 = por %p71, %p72
      %p74 = scmp.ne.s32.totalorder %s66, %s68
      %p75 = scmp.eq.s32.totalorder %s23, 1
      %p76 = por %p74, %p75
      %p77 = scmp.ne.s32.totalorder %s68, %s69
      %p78 = scmp.eq.s32.totalorder %s23, 0
      %p79 = por %p77, %p78
      %p80 = scmp.ne.s32.totalorder %s68, %s69
      %p81 = scmp.eq.s32.totalorder %s24, 1
      %p82 = por %p80, %p81
      %p84 = scmp.ne.s32.totalorder %s69, %s83
      %p85 = scmp.eq.s32.totalorder %s24, 0
      %p86 = por %p84, %p85
      %s88 = sadd.s32 %s87, 1
      %p91 = scmp.eq.s32.totalorder %s18, 1
      %p92 = scmp.ne.s32.totalorder %s87, %s89
      %p93 = scmp.eq.s32.totalorder %s18, 0
      %p94 = por %p92, %p93
      %p95 = scmp.ne.s32.totalorder %s87, %s89
      %p96 = scmp.eq.s32.totalorder %s23, 1
      %p97 = por %p95, %p96
      %p98 = scmp.ne.s32.totalorder %s89, %s90
      %p99 = scmp.eq.s32.totalorder %s23, 0
      %p100 = por %p98, %p99
      %p101 = scmp.ne.s32.totalorder %s89, %s90
      %p102 = scmp.eq.s32.totalorder %s24, 1
      %p103 = por %p101, %p102
      %p105 = scmp.ne.s32.totalorder %s90, %s104
      %p106 = scmp.eq.s32.totalorder %s24, 0
      %p107 = por %p105, %p106
      %s109 = sadd.s32 %s108, 1
      %p112 = scmp.eq.s32.totalorder %s18, 1
      %p113 = scmp.ne.s32.totalorder %s108, %s110
      %p114 = scmp.eq.s32.totalorder %s18, 0
      %p115 = por %p113, %p114
      %p116 = scmp.ne.s32.totalorder %s108, %s110
      %p117 = scmp.eq.s32.totalorder %s23, 1
      %p118 = por %p116, %p117
      %p119 = scmp.ne.s32.totalorder %s110, %s111
      %p120 = scmp.eq.s32.totalorder %s23, 0
      %p121 = por %p119, %p120
      %p122 = scmp.ne.s32.totalorder %s110, %s111
      %p123 = scmp.eq.s32.totalorder %s24, 1
      %p124 = por %p122, %p123
      %p126 = scmp.ne.s32.totalorder %s111, %s125
      %p127 = scmp.eq.s32.totalorder %s24, 0
      %p128 = por %p126, %p127
      %s130 = sadd.s32 %s129, 1
      %p133 = scmp.eq.s32.totalorder %s18, 1
      %p134 = scmp.ne.s32.totalorder %s129, %s131
      %p135 = scmp.eq.s32.totalorder %s18, 0
      %p136 = por %p134, %p135
      %p137 = scmp.ne.s32.totalorder %s129, %s131
      %p138 = scmp.eq.s32.totalorder %s23, 1
      %p139 = por %p137, %p138
      %p140 = scmp.ne.s32.totalorder %s131, %s132
      %p141 = scmp.eq.s32.totalorder %s23, 0
      %p142 = por %p140, %p141
      %p143 = scmp.ne.s32.totalorder %s131, %s132
      %p144 = scmp.eq.s32.totalorder %s24, 1
      %p145 = por %p143, %p144
      %p147 = scmp.ne.s32.totalorder %s132, %s146
      %p148 = scmp.eq.s32.totalorder %s24, 0
      %p149 = por %p147, %p148
      %s151 = sadd.s32 %s150, 1
      %p154 = scmp.eq.s32.totalorder %s18, 1
      %p155 = scmp.ne.s32.totalorder %s150, %s152
      %p156 = scmp.eq.s32.totalorder %s18, 0
      %p157 = por %p155, %p156
      %p158 = scmp.ne.s32.totalorder %s150, %s152
      %p159 = scmp.eq.s32.totalorder %s23, 1
      %p160 = por %p158, %p159
      %p161 = scmp.ne.s32.totalorder %s152, %s153
      %p162 = scmp.eq.s32.totalorder %s23, 0
      %p163 = por %p161, %p162
      %p164 = scmp.ne.s32.totalorder %s152, %s153
      %p165 = scmp.eq.s32.totalorder %s24, 1
      %p166 = por %p164, %p165
      %p168 = scmp.ne.s32.totalorder %s153, %s167
      %p169 = scmp.eq.s32.totalorder %s24, 0
      %p170 = por %p168, %p169
      %s172 = sadd.s32 %s171, 1
      %p175 = scmp.eq.s32.totalorder %s18, 1
      %p176 = scmp.ne.s32.totalorder %s171, %s173
      %p177 = scmp.eq.s32.totalorder %s18, 0
      %p178 = por %p176, %p177
      %p179 = scmp.ne.s32.totalorder %s171, %s173
      %p180 = scmp.eq.s32.totalorder %s23, 1
      %p181 = por %p179, %p180
      %p182 = scmp.ne.s32.totalorder %s173, %s174
      %p183 = scmp.eq.s32.totalorder %s23, 0
      %p184 = por %p182, %p183
      %p185 = scmp.ne.s32.totalorder %s173, %s174
      %p186 = scmp.eq.s32.totalorder %s24, 1
      %p187 = por %p185, %p186
      %p189 = scmp.ne.s32.totalorder %s174, %s188
      %p190 = scmp.eq.s32.totalorder %s24, 0
      %p191 = por %p189, %p190
      %s192 = ssub.s32 %s25, %s37
      %s193 = ssub.s32 %s26, %s33
      %s194 = sor.u32 %s192, %s193
      %p195 = scmp.eq.s32.totalorder %s194, 0
      %s197 = sadd.s32 %s196, 1
      %s198 = scalar_select %p195, %s196, %s197
      %p201 = pneg %p195
      %p202 = scmp.eq.s32.totalorder %s18, 1
      %p203 = por %p201, %p202
      %p204 = scmp.ne.s32.totalorder %s196, %s199
      %p205 = scmp.eq.s32.totalorder %s18, 0
      %p206 = por %p204, %p205
      %p207 = scmp.ne.s32.totalorder %s196, %s199
      %p208 = scmp.eq.s32.totalorder %s23, 1
      %p209 = por %p207, %p208
      %p210 = scmp.ne.s32.totalorder %s199, %s200
      %p211 = scmp.eq.s32.totalorder %s23, 0
      %p212 = por %p210, %p211
      %p213 = scmp.ne.s32.totalorder %s199, %s200
      %p214 = scmp.eq.s32.totalorder %s24, 1
      %p215 = por %p213, %p214
      %p217 = scmp.ne.s32.totalorder %s200, %s216
      %p218 = scmp.eq.s32.totalorder %s24, 0
      %p219 = por %p217, %p218
      %p220 = scmp.le.s32.totalorder 1, %s18
      %p221 = scmp.lt.s32.totalorder %s18, 3
      %p222 = pnand %p220, %p221
      %p223 = pneg %p222
      // Predicated region
      $region9: #{tpu_custom_call.1} parent=5 // pred_check
        _
      $region10: #{tpu_custom_call.1} parent=5 // pred_check_branch
        %225 = sbr.rel (%p222) target = $region12
      $region11: #{tpu_custom_call.1} parent=5 // pred_region
        %s226 = ssub.s32 %s18, 1
        // Predicated region
        $region13: #{tpu_custom_call.1} parent=11 // pred_check
          %p227 = pneg %p79
        $region14: #{tpu_custom_call.1} parent=11 // pred_check_branch
          %229 = sbr.rel (%p227) target = $region16
        $region15: #{tpu_custom_call.1} parent=11 // pred_region
          %s231 = ssub.s32 16, 16
          %232 = vsyncadd [#allocation6], %s231
          %s234 = sshll.u32 %s1, 4
          %s235 = int_to_ptr.vmem [resolvable:$true] %s234
          %237 = dma.vmem_to_smem %s235, 16, [#allocation5], [#allocation6]
        $region16: #{tpu_custom_call.1} parent=11 // pred_fallthru
          _
        // Predicated region
        $region17: #{tpu_custom_call.1} parent=11 // pred_check
          %p238 = pneg %p100
        $region18: #{tpu_custom_call.1} parent=11 // pred_check_branch
          %240 = sbr.rel (%p238) target = $region20
        $region19: #{tpu_custom_call.1} parent=11 // pred_region
          %s242 = ssub.s32 16, 16
          %243 = vsyncadd [#allocation8], %s242
          %s245 = sshll.u32 %s2, 4
          %s246 = int_to_ptr.vmem [resolvable:$true] %s245
          %248 = dma.vmem_to_smem %s246, 16, [#allocation7], [#allocation8]
        $region20: #{tpu_custom_call.1} parent=11 // pred_fallthru
          _
        // Predicated region
        $region21: #{tpu_custom_call.1} parent=11 // pred_check
          %p249 = pneg %p121
        $region22: #{tpu_custom_call.1} parent=11 // pred_check_branch
          %251 = sbr.rel (%p249) target = $region24
        $region23: #{tpu_custom_call.1} parent=11 // pred_region
          _
        $region24: #{tpu_custom_call.1} parent=11 // pred_fallthru
          _
        // Predicated region
        $region25: #{tpu_custom_call.1} parent=11 // pred_check
          %p252 = pneg %p142
        $region26: #{tpu_custom_call.1} parent=11 // pred_check_branch
          %254 = sbr.rel (%p252) target = $region28
        $region27: #{tpu_custom_call.1} parent=11 // pred_region
          %s256 = ssub.s32 64, 64
          %257 = vsyncadd [#allocation8], %s256
          %s259 = sshll.u32 %s4, 4
          %s260 = int_to_ptr.vmem [resolvable:$true] %s259
          %262 = dma.vmem_to_smem %s260, 64, [#allocation9], [#allocation8]
        $region28: #{tpu_custom_call.1} parent=11 // pred_fallthru
          _
        // Predicated region
        $region29: #{tpu_custom_call.1} parent=11 // pred_check
          %p263 = pneg %p163
        $region30: #{tpu_custom_call.1} parent=11 // pred_check_branch
          %265 = sbr.rel (%p263) target = $region32
        $region31: #{tpu_custom_call.1} parent=11 // pred_region
          %s267 = ssub.s32 16, 16
          %268 = vsyncadd [#allocation11], %s267
          %s270 = sshll.u32 %s5, 4
          %s271 = int_to_ptr.vmem [resolvable:$true] %s270
          %273 = dma.vmem_to_smem %s271, 16, [#allocation10], [#allocation11]
        $region32: #{tpu_custom_call.1} parent=11 // pred_fallthru
          _
        // Predicated region
        $region33: #{tpu_custom_call.1} parent=11 // pred_check
          %p274 = pneg %p184
        $region34: #{tpu_custom_call.1} parent=11 // pred_check_branch
          %276 = sbr.rel (%p274) target = $region36
        $region35: #{tpu_custom_call.1} parent=11 // pred_region
          _
        $region36: #{tpu_custom_call.1} parent=11 // pred_fallthru
          _
      $region12: #{tpu_custom_call.1} parent=5 // pred_fallthru
        _
      %p277 = scmp.lt.s32.totalorder %s18, 2
      // Predicated region
      $region37: #{tpu_custom_call.1} parent=5 // pred_check
        %p278 = pneg %p277
      $region38: #{tpu_custom_call.1} parent=5 // pred_check_branch
        %280 = sbr.rel (%p278) target = $region40
      $region39: #{tpu_custom_call.1} parent=5 // pred_region
        // Predicated region
        $region41: #{tpu_custom_call.1} parent=39 // pred_check
          %p281 = pneg %p52
        $region42: #{tpu_custom_call.1} parent=39 // pred_check_branch
          %283 = sbr.rel (%p281) target = $region44
        $region43: #{tpu_custom_call.1} parent=39 // pred_region
          %p284 = scmp.lt.s32.totalorder %s25, 1
          %s285 = scalar_select %p284, %s25, 1
          %p286 = scmp.lt.s32.totalorder %s26, 0
          %s287 = scalar_select %p286, %s26, 0
          %s288 = smul.addr %s287, 4
          %s289 = smul.addr %s285, 4
          %s290 = sadd.s32 %s288, %s289
          %s291 = smul.addr %s290, 8
          %s292 = scalar_lea.vmem %s0, %s291
        $region44: #{tpu_custom_call.1} parent=39 // pred_fallthru
          _
      $region40: #{tpu_custom_call.1} parent=5 // pred_fallthru
        _
      %p293 = scmp.le.s32.totalorder 1, %s18
      %p294 = scmp.lt.s32.totalorder %s18, 3
      %p295 = pnand %p293, %p294
      %p296 = pneg %p295
      // Predicated region
      $region45: #{tpu_custom_call.1} parent=5 // pred_check
        _
      $region46: #{tpu_custom_call.1} parent=5 // pred_check_branch
        %298 = sbr.rel (%p295) target = $region48
      $region47: #{tpu_custom_call.1} parent=5 // pred_region
        %s299 = ssub.s32 %s18, 1
        // Predicated region
        $region49: #{tpu_custom_call.1} parent=47 // pred_check
          %p300 = pneg %p79
        $region50: #{tpu_custom_call.1} parent=47 // pred_check_branch
          %302 = sbr.rel (%p300) target = $region52
        $region51: #{tpu_custom_call.1} parent=47 // pred_region
          %303 = dma.done [#allocation6], 16
        $region52: #{tpu_custom_call.1} parent=47 // pred_fallthru
          _
        // Predicated region
        $region53: #{tpu_custom_call.1} parent=47 // pred_check
          %p304 = pneg %p100
        $region54: #{tpu_custom_call.1} parent=47 // pred_check_branch
          %306 = sbr.rel (%p304) target = $region56
        $region55: #{tpu_custom_call.1} parent=47 // pred_region
          %307 = dma.done [#allocation8], 16
        $region56: #{tpu_custom_call.1} parent=47 // pred_fallthru
          _
        // Predicated region
        $region57: #{tpu_custom_call.1} parent=47 // pred_check
          %p308 = pneg %p142
        $region58: #{tpu_custom_call.1} parent=47 // pred_check_branch
          %310 = sbr.rel (%p308) target = $region60
        $region59: #{tpu_custom_call.1} parent=47 // pred_region
          %311 = dma.done [#allocation8], 64
        $region60: #{tpu_custom_call.1} parent=47 // pred_fallthru
          _
        // Predicated region
        $region61: #{tpu_custom_call.1} parent=47 // pred_check
          %p312 = pneg %p163
        $region62: #{tpu_custom_call.1} parent=47 // pred_check_branch
          %314 = sbr.rel (%p312) target = $region64
        $region63: #{tpu_custom_call.1} parent=47 // pred_region
          %315 = dma.done [#allocation11], 16
        $region64: #{tpu_custom_call.1} parent=47 // pred_fallthru
          _
        %316 = sfence
        %p317 = scmp.lt.s32.totalorder %s27, 1
        %s318 = scalar_select %p317, %s27, 1
        %p319 = scmp.lt.s32.totalorder %s28, 0
        %s320 = scalar_select %p319, %s28, 0
        %s321 = smul.addr %s320, 4
        %s322 = smul.addr %s318, 4
        %s323 = sadd.s32 %s321, %s322
        %s324 = smul.addr %s323, 8
        %s325 = scalar_lea.vmem %s0, %s324
        %p326 = pneg %p58
        %p327 = pneg %p55
        %p328 = pneg %p79
        %p329 = pneg %p76
        %p330 = pneg %p100
        %p331 = pneg %p97
        %p332 = pneg %p121
        %p333 = pneg %p118
        %p334 = pneg %p142
        %p335 = pneg %p139
        %p336 = pneg %p163
        %p337 = pneg %p160
        %p338 = pneg %p184
        %p339 = pneg %p181
        %p340 = pneg %p212
        %p341 = pneg %p209
        %p342 = scmp.lt.s32.totalorder %s27, 1
        %s343 = scalar_select %p342, %s27, 1
        %p344 = scmp.lt.s32.totalorder %s28, 0
        %s345 = scalar_select %p344, %s28, 0
        %s346 = smul.addr %s343, 4
        %s347 = sadd.s32 %s345, %s346
        %s348 = smul.addr %s347, 2
        %s349 = scalar_lea.vmem %s7, %s348
        %p350 = scmp.lt.s32.totalorder %s27, 1
        %s351 = scalar_select %p350, %s27, 1
        %p352 = scmp.lt.s32.totalorder %s28, 0
        %s353 = scalar_select %p352, %s28, 0
        %s354 = smul.addr %s353, 4
        %s355 = smul.addr %s351, 4
        %s356 = sadd.s32 %s354, %s355
        %s357 = smul.addr %s356, 8
        %s358 = scalar_lea.vmem %s0, %s357
        %p359 = scmp.lt.s32.totalorder %s27, 1
        %s360 = scalar_select %p359, %s27, 1
        %p361 = scmp.lt.s32.totalorder %s28, 0
        %s362 = scalar_select %p361, %s28, 0
        %s363 = smul.addr %s360, 4
        %s364 = sadd.s32 %s362, %s363
        %s365 = smul.addr %s364, 2
        %s366 = scalar_lea.vmem %s7, %s365
        %v367 = vld [vmem:[%s358] sm:$0x3f]
        %s368 = sld [smem:[#allocation5]]
        %v369 = vstv %s368
        %v370 = vmul.f32 %v369, %v367
        %v371 = vadd.f32 %v370, 0.0
        %s372 = sld [smem:[#allocation5 + $0x19]]
        %v373 = vstv %s372
        %v374 = vmul.f32 %v373, %v367
        %v375 = vadd.f32 %v374, 0.0
        %s376 = sld [smem:[#allocation5 + $0x32]]
        %v377 = vstv %s376
        %v378 = vmul.f32 %v377, %v367
        %v379 = vadd.f32 %v378, 0.0
        %s380 = sld [smem:[#allocation5 + $0x4b]]
        %v381 = vstv %s380
        %v382 = vmul.f32 %v381, %v367
        %v383 = vadd.f32 %v382, 0.0
        %v384 = vld [vmem:[%s358 + $0x8] sm:$0x3f]
        %s385 = sld [smem:[#allocation5 + $0x1]]
        %v386 = vstv %s385
        %v387 = vmul.f32 %v386, %v384
        %v388 = vadd.f32 %v371, %v387
        %s389 = sld [smem:[#allocation5 + $0x1a]]
        %v390 = vstv %s389
        %v391 = vmul.f32 %v390, %v384
        %v392 = vadd.f32 %v375, %v391
        %s393 = sld [smem:[#allocation5 + $0x33]]
        %v394 = vstv %s393
        %v395 = vmul.f32 %v394, %v384
        %v396 = vadd.f32 %v379, %v395
        %s397 = sld [smem:[#allocation5 + $0x4c]]
        %v398 = vstv %s397
        %v399 = vmul.f32 %v398, %v384
        %v400 = vadd.f32 %v383, %v399
        %s401 = sld [smem:[#allocation5 + $0x2]]
        %v402 = vstv %s401
        %v403 = vmul.f32 %v402, %v367
        %405 = vrot.lane.b32.xlu0 %v403, 127
        %v406 = vpop.permute.xlu0 %405
        %v408 = vadd.f32 %v388, %v406
        %s409 = sld [smem:[#allocation5 + $0x1b]]
        %v410 = vstv %s409
        %v411 = vmul.f32 %v410, %v367
        %413 = vrot.lane.b32.xlu0 %v411, 127
        %v414 = vpop.permute.xlu0 %413
        %v416 = vadd.f32 %v392, %v414
        %s417 = sld [smem:[#allocation5 + $0x34]]
        %v418 = vstv %s417
        %v419 = vmul.f32 %v418, %v367
        %421 = vrot.lane.b32.xlu0 %v419, 127
        %v422 = vpop.permute.xlu0 %421
        %v424 = vadd.f32 %v396, %v422
        %s425 = sld [smem:[#allocation5 + $0x4d]]
        %v426 = vstv %s425
        %v427 = vmul.f32 %v426, %v367
        %429 = vrot.lane.b32.xlu0 %v427, 127
        %v430 = vpop.permute.xlu0 %429
        %v432 = vadd.f32 %v400, %v430
        %s433 = sld [smem:[#allocation5 + $0x3]]
        %v434 = vstv %s433
        %v435 = vmul.f32 %v434, %v384
        %437 = vrot.lane.b32.xlu0 %v435, 127
        %v438 = vpop.permute.xlu0 %437
        %v440 = vadd.f32 %v408, %v438
        %s441 = sld [smem:[#allocation5 + $0x1c]]
        %v442 = vstv %s441
        %v443 = vmul.f32 %v442, %v384
        %445 = vrot.lane.b32.xlu0 %v443, 127
        %v446 = vpop.permute.xlu0 %445
        %v448 = vadd.f32 %v416, %v446
        %s449 = sld [smem:[#allocation5 + $0x35]]
        %v450 = vstv %s449
        %v451 = vmul.f32 %v450, %v384
        %453 = vrot.lane.b32.xlu0 %v451, 127
        %v454 = vpop.permute.xlu0 %453
        %v456 = vadd.f32 %v424, %v454
        %s457 = sld [smem:[#allocation5 + $0x4e]]
        %v458 = vstv %s457
        %v459 = vmul.f32 %v458, %v384
        %461 = vrot.lane.b32.xlu0 %v459, 127
        %v462 = vpop.permute.xlu0 %461
        %v464 = vadd.f32 %v432, %v462
        %s465 = sld [smem:[#allocation5 + $0x4]]
        %v466 = vstv %s465
        %v467 = vmul.f32 %v466, %v367
        %469 = vrot.lane.b32.xlu0 %v467, 126
        %v470 = vpop.permute.xlu0 %469
        %v472 = vadd.f32 %v440, %v470
        %s473 = sld [smem:[#allocation5 + $0x1d]]
        %v474 = vstv %s473
        %v475 = vmul.f32 %v474, %v367
        %477 = vrot.lane.b32.xlu0 %v475, 126
        %v478 = vpop.permute.xlu0 %477
        %v480 = vadd.f32 %v448, %v478
        %s481 = sld [smem:[#allocation5 + $0x36]]
        %v482 = vstv %s481
        %v483 = vmul.f32 %v482, %v367
        %485 = vrot.lane.b32.xlu0 %v483, 126
        %v486 = vpop.permute.xlu0 %485
        %v488 = vadd.f32 %v456, %v486
        %s489 = sld [smem:[#allocation5 + $0x4f]]
        %v490 = vstv %s489
        %v491 = vmul.f32 %v490, %v367
        %493 = vrot.lane.b32.xlu0 %v491, 126
        %v494 = vpop.permute.xlu0 %493
        %v496 = vadd.f32 %v464, %v494
        %v497 = vld [vmem:[%s358 + $0x10] sm:$0x3f]
        %s498 = sld [smem:[#allocation5 + $0x5]]
        %v499 = vstv %s498
        %v500 = vmul.f32 %v499, %v497
        %v501 = vadd.f32 %v472, %v500
        %s502 = sld [smem:[#allocation5 + $0x1e]]
        %v503 = vstv %s502
        %v504 = vmul.f32 %v503, %v497
        %v505 = vadd.f32 %v480, %v504
        %s506 = sld [smem:[#allocation5 + $0x37]]
        %v507 = vstv %s506
        %v508 = vmul.f32 %v507, %v497
        %v509 = vadd.f32 %v488, %v508
        %s510 = sld [smem:[#allocation5 + $0x50]]
        %v511 = vstv %s510
        %v512 = vmul.f32 %v511, %v497
        %v513 = vadd.f32 %v496, %v512
        %v514 = vld [vmem:[%s358 + $0x18] sm:$0x3f]
        %s515 = sld [smem:[#allocation5 + $0x6]]
        %v516 = vstv %s515
        %v517 = vmul.f32 %v516, %v514
        %v518 = vadd.f32 %v501, %v517
        %s519 = sld [smem:[#allocation5 + $0x1f]]
        %v520 = vstv %s519
        %v521 = vmul.f32 %v520, %v514
        %v522 = vadd.f32 %v505, %v521
        %s523 = sld [smem:[#allocation5 + $0x38]]
        %v524 = vstv %s523
        %v525 = vmul.f32 %v524, %v514
        %v526 = vadd.f32 %v509, %v525
        %s527 = sld [smem:[#allocation5 + $0x51]]
        %v528 = vstv %s527
        %v529 = vmul.f32 %v528, %v514
        %v530 = vadd.f32 %v513, %v529
        %s531 = sld [smem:[#allocation5 + $0x7]]
        %v532 = vstv %s531
        %v533 = vmul.f32 %v532, %v497
        %535 = vrot.lane.b32.xlu0 %v533, 127
        %v536 = vpop.permute.xlu0 %535
        %v538 = vadd.f32 %v518, %v536
        %s539 = sld [smem:[#allocation5 + $0x20]]
        %v540 = vstv %s539
        %v541 = vmul.f32 %v540, %v497
        %543 = vrot.lane.b32.xlu0 %v541, 127
        %v544 = vpop.permute.xlu0 %543
        %v546 = vadd.f32 %v522, %v544
        %s547 = sld [smem:[#allocation5 + $0x39]]
        %v548 = vstv %s547
        %v549 = vmul.f32 %v548, %v497
        %551 = vrot.lane.b32.xlu0 %v549, 127
        %v552 = vpop.permute.xlu0 %551
        %v554 = vadd.f32 %v526, %v552
        %s555 = sld [smem:[#allocation5 + $0x52]]
        %v556 = vstv %s555
        %v557 = vmul.f32 %v556, %v497
        %559 = vrot.lane.b32.xlu0 %v557, 127
        %v560 = vpop.permute.xlu0 %559
        %v562 = vadd.f32 %v530, %v560
        %s563 = sld [smem:[#allocation5 + $0x8]]
        %v564 = vstv %s563
        %v565 = vmul.f32 %v564, %v514
        %567 = vrot.lane.b32.xlu0 %v565, 127
        %v568 = vpop.permute.xlu0 %567
        %v570 = vadd.f32 %v538, %v568
        %s571 = sld [smem:[#allocation5 + $0x21]]
        %v572 = vstv %s571
        %v573 = vmul.f32 %v572, %v514
        %575 = vrot.lane.b32.xlu0 %v573, 127
        %v576 = vpop.permute.xlu0 %575
        %v578 = vadd.f32 %v546, %v576
        %s579 = sld [smem:[#allocation5 + $0x3a]]
        %v580 = vstv %s579
        %v581 = vmul.f32 %v580, %v514
        %583 = vrot.lane.b32.xlu0 %v581, 127
        %v584 = vpop.permute.xlu0 %583
        %v586 = vadd.f32 %v554, %v584
        %s587 = sld [smem:[#allocation5 + $0x53]]
        %v588 = vstv %s587
        %v589 = vmul.f32 %v588, %v514
        %591 = vrot.lane.b32.xlu0 %v589, 127
        %v592 = vpop.permute.xlu0 %591
        %v594 = vadd.f32 %v562, %v592
        %s595 = sld [smem:[#allocation5 + $0x9]]
        %v596 = vstv %s595
        %v597 = vmul.f32 %v596, %v497
        %599 = vrot.lane.b32.xlu0 %v597, 126
        %v600 = vpop.permute.xlu0 %599
        %v602 = vadd.f32 %v570, %v600
        %s603 = sld [smem:[#allocation5 + $0x22]]
        %v604 = vstv %s603
        %v605 = vmul.f32 %v604, %v497
        %607 = vrot.lane.b32.xlu0 %v605, 126
        %v608 = vpop.permute.xlu0 %607
        %v610 = vadd.f32 %v578, %v608
        %s611 = sld [smem:[#allocation5 + $0x3b]]
        %v612 = vstv %s611
        %v613 = vmul.f32 %v612, %v497
        %615 = vrot.lane.b32.xlu0 %v613, 126
        %v616 = vpop.permute.xlu0 %615
        %v618 = vadd.f32 %v586, %v616
        %s619 = sld [smem:[#allocation5 + $0x54]]
        %v620 = vstv %s619
        %v621 = vmul.f32 %v620, %v497
        %623 = vrot.lane.b32.xlu0 %v621, 126
        %v624 = vpop.permute.xlu0 %623
        %v626 = vadd.f32 %v594, %v624
        %v627 = vld [vmem:[%s358 + $0x1] sm:$0x3f]
        %s628 = sld [smem:[#allocation5 + $0xa]]
        %v629 = vstv %s628
        %v630 = vmul.f32 %v629, %v627
        %v631 = vadd.f32 %v602, %v630
        %s632 = sld [smem:[#allocation5 + $0x23]]
        %v633 = vstv %s632
        %v634 = vmul.f32 %v633, %v627
        %v635 = vadd.f32 %v610, %v634
        %s636 = sld [smem:[#allocation5 + $0x3c]]
        %v637 = vstv %s636
        %v638 = vmul.f32 %v637, %v627
        %v639 = vadd.f32 %v618, %v638
        %s640 = sld [smem:[#allocation5 + $0x55]]
        %v641 = vstv %s640
        %v642 = vmul.f32 %v641, %v627
        %v643 = vadd.f32 %v626, %v642
        %v644 = vld [vmem:[%s358 + $0x9] sm:$0x3f]
        %s645 = sld [smem:[#allocation5 + $0xb]]
        %v646 = vstv %s645
        %v647 = vmul.f32 %v646, %v644
        %v648 = vadd.f32 %v631, %v647
        %s649 = sld [smem:[#allocation5 + $0x24]]
        %v650 = vstv %s649
        %v651 = vmul.f32 %v650, %v644
        %v652 = vadd.f32 %v635, %v651
        %s653 = sld [smem:[#allocation5 + $0x3d]]
        %v654 = vstv %s653
        %v655 = vmul.f32 %v654, %v644
        %v656 = vadd.f32 %v639, %v655
        %s657 = sld [smem:[#allocation5 + $0x56]]
        %v658 = vstv %s657
        %v659 = vmul.f32 %v658, %v644
        %v660 = vadd.f32 %v643, %v659
        %s661 = sld [smem:[#allocation5 + $0xc]]
        %v662 = vstv %s661
        %v663 = vmul.f32 %v662, %v627
        %665 = vrot.lane.b32.xlu0 %v663, 127
        %v666 = vpop.permute.xlu0 %665
        %v668 = vadd.f32 %v648, %v666
        %s669 = sld [smem:[#allocation5 + $0x25]]
        %v670 = vstv %s669
        %v671 = vmul.f32 %v670, %v627
        %673 = vrot.lane.b32.xlu0 %v671, 127
        %v674 = vpop.permute.xlu0 %673
        %v676 = vadd.f32 %v652, %v674
        %s677 = sld [smem:[#allocation5 + $0x3e]]
        %v678 = vstv %s677
        %v679 = vmul.f32 %v678, %v627
        %681 = vrot.lane.b32.xlu0 %v679, 127
        %v682 = vpop.permute.xlu0 %681
        %v684 = vadd.f32 %v656, %v682
        %s685 = sld [smem:[#allocation5 + $0x57]]
        %v686 = vstv %s685
        %v687 = vmul.f32 %v686, %v627
        %689 = vrot.lane.b32.xlu0 %v687, 127
        %v690 = vpop.permute.xlu0 %689
        %v692 = vadd.f32 %v660, %v690
        %s693 = sld [smem:[#allocation5 + $0xd]]
        %v694 = vstv %s693
        %v695 = vmul.f32 %v694, %v644
        %697 = vrot.lane.b32.xlu0 %v695, 127
        %v698 = vpop.permute.xlu0 %697
        %v700 = vadd.f32 %v668, %v698
        %s701 = sld [smem:[#allocation5 + $0x26]]
        %v702 = vstv %s701
        %v703 = vmul.f32 %v702, %v644
        %705 = vrot.lane.b32.xlu0 %v703, 127
        %v706 = vpop.permute.xlu0 %705
        %v708 = vadd.f32 %v676, %v706
        %s709 = sld [smem:[#allocation5 + $0x3f]]
        %v710 = vstv %s709
        %v711 = vmul.f32 %v710, %v644
        %713 = vrot.lane.b32.xlu0 %v711, 127
        %v714 = vpop.permute.xlu0 %713
        %v716 = vadd.f32 %v684, %v714
        %s717 = sld [smem:[#allocation5 + $0x58]]
        %v718 = vstv %s717
        %v719 = vmul.f32 %v718, %v644
        %721 = vrot.lane.b32.xlu0 %v719, 127
        %v722 = vpop.permute.xlu0 %721
        %v724 = vadd.f32 %v692, %v722
        %s725 = sld [smem:[#allocation5 + $0xe]]
        %v726 = vstv %s725
        %v727 = vmul.f32 %v726, %v627
        %729 = vrot.lane.b32.xlu0 %v727, 126
        %v730 = vpop.permute.xlu0 %729
        %v732 = vadd.f32 %v700, %v730
        %s733 = sld [smem:[#allocation5 + $0x27]]
        %v734 = vstv %s733
        %v735 = vmul.f32 %v734, %v627
        %737 = vrot.lane.b32.xlu0 %v735, 126
        %v738 = vpop.permute.xlu0 %737
        %v740 = vadd.f32 %v708, %v738
        %s741 = sld [smem:[#allocation5 + $0x40]]
        %v742 = vstv %s741
        %v743 = vmul.f32 %v742, %v627
        %745 = vrot.lane.b32.xlu0 %v743, 126
        %v746 = vpop.permute.xlu0 %745
        %v748 = vadd.f32 %v716, %v746
        %s749 = sld [smem:[#allocation5 + $0x59]]
        %v750 = vstv %s749
        %v751 = vmul.f32 %v750, %v627
        %753 = vrot.lane.b32.xlu0 %v751, 126
        %v754 = vpop.permute.xlu0 %753
        %v756 = vadd.f32 %v724, %v754
        %v757 = vld [vmem:[%s358 + $0x11] sm:$0x3f]
        %s758 = sld [smem:[#allocation5 + $0xf]]
        %v759 = vstv %s758
        %v760 = vmul.f32 %v759, %v757
        %v761 = vadd.f32 %v732, %v760
        %s762 = sld [smem:[#allocation5 + $0x28]]
        %v763 = vstv %s762
        %v764 = vmul.f32 %v763, %v757
        %v765 = vadd.f32 %v740, %v764
        %s766 = sld [smem:[#allocation5 + $0x41]]
        %v767 = vstv %s766
        %v768 = vmul.f32 %v767, %v757
        %v769 = vadd.f32 %v748, %v768
        %s770 = sld [smem:[#allocation5 + $0x5a]]
        %v771 = vstv %s770
        %v772 = vmul.f32 %v771, %v757
        %v773 = vadd.f32 %v756, %v772
        %v774 = vld [vmem:[%s358 + $0x19] sm:$0x3f]
        %s775 = sld [smem:[#allocation5 + $0x10]]
        %v776 = vstv %s775
        %v777 = vmul.f32 %v776, %v774
        %v778 = vadd.f32 %v761, %v777
        %s779 = sld [smem:[#allocation5 + $0x29]]
        %v780 = vstv %s779
        %v781 = vmul.f32 %v780, %v774
        %v782 = vadd.f32 %v765, %v781
        %s783 = sld [smem:[#allocation5 + $0x42]]
        %v784 = vstv %s783
        %v785 = vmul.f32 %v784, %v774
        %v786 = vadd.f32 %v769, %v785
        %s787 = sld [smem:[#allocation5 + $0x5b]]
        %v788 = vstv %s787
        %v789 = vmul.f32 %v788, %v774
        %v790 = vadd.f32 %v773, %v789
        %s791 = sld [smem:[#allocation5 + $0x11]]
        %v792 = vstv %s791
        %v793 = vmul.f32 %v792, %v757
        %795 = vrot.lane.b32.xlu0 %v793, 127
        %v796 = vpop.permute.xlu0 %795
        %v798 = vadd.f32 %v778, %v796
        %s799 = sld [smem:[#allocation5 + $0x2a]]
        %v800 = vstv %s799
        %v801 = vmul.f32 %v800, %v757
        %803 = vrot.lane.b32.xlu0 %v801, 127
        %v804 = vpop.permute.xlu0 %803
        %v806 = vadd.f32 %v782, %v804
        %s807 = sld [smem:[#allocation5 + $0x43]]
        %v808 = vstv %s807
        %v809 = vmul.f32 %v808, %v757
        %811 = vrot.lane.b32.xlu0 %v809, 127
        %v812 = vpop.permute.xlu0 %811
        %v814 = vadd.f32 %v786, %v812
        %s815 = sld [smem:[#allocation5 + $0x5c]]
        %v816 = vstv %s815
        %v817 = vmul.f32 %v816, %v757
        %819 = vrot.lane.b32.xlu0 %v817, 127
        %v820 = vpop.permute.xlu0 %819
        %v822 = vadd.f32 %v790, %v820
        %s823 = sld [smem:[#allocation5 + $0x12]]
        %v824 = vstv %s823
        %v825 = vmul.f32 %v824, %v774
        %827 = vrot.lane.b32.xlu0 %v825, 127
        %v828 = vpop.permute.xlu0 %827
        %v830 = vadd.f32 %v798, %v828
        %s831 = sld [smem:[#allocation5 + $0x2b]]
        %v832 = vstv %s831
        %v833 = vmul.f32 %v832, %v774
        %835 = vrot.lane.b32.xlu0 %v833, 127
        %v836 = vpop.permute.xlu0 %835
        %v838 = vadd.f32 %v806, %v836
        %s839 = sld [smem:[#allocation5 + $0x44]]
        %v840 = vstv %s839
        %v841 = vmul.f32 %v840, %v774
        %843 = vrot.lane.b32.xlu0 %v841, 127
        %v844 = vpop.permute.xlu0 %843
        %v846 = vadd.f32 %v814, %v844
        %s847 = sld [smem:[#allocation5 + $0x5d]]
        %v848 = vstv %s847
        %v849 = vmul.f32 %v848, %v774
        %851 = vrot.lane.b32.xlu0 %v849, 127
        %v852 = vpop.permute.xlu0 %851
        %v854 = vadd.f32 %v822, %v852
        %s855 = sld [smem:[#allocation5 + $0x13]]
        %v856 = vstv %s855
        %v857 = vmul.f32 %v856, %v757
        %859 = vrot.lane.b32.xlu0 %v857, 126
        %v860 = vpop.permute.xlu0 %859
        %v862 = vadd.f32 %v830, %v860
        %s863 = sld [smem:[#allocation5 + $0x2c]]
        %v864 = vstv %s863
        %v865 = vmul.f32 %v864, %v757
        %867 = vrot.lane.b32.xlu0 %v865, 126
        %v868 = vpop.permute.xlu0 %867
        %v870 = vadd.f32 %v838, %v868
        %s871 = sld [smem:[#allocation5 + $0x45]]
        %v872 = vstv %s871
        %v873 = vmul.f32 %v872, %v757
        %875 = vrot.lane.b32.xlu0 %v873, 126
        %v876 = vpop.permute.xlu0 %875
        %v878 = vadd.f32 %v846, %v876
        %s879 = sld [smem:[#allocation5 + $0x5e]]
        %v880 = vstv %s879
        %v881 = vmul.f32 %v880, %v757
        %883 = vrot.lane.b32.xlu0 %v881, 126
        %v884 = vpop.permute.xlu0 %883
        %v886 = vadd.f32 %v854, %v884
        %v887 = vld [vmem:[%s358 + $0x2] sm:$0x3f]
        %s888 = sld [smem:[#allocation5 + $0x14]]
        %v889 = vstv %s888
        %v890 = vmul.f32 %v889, %v887
        %v891 = vadd.f32 %v862, %v890
        %s892 = sld [smem:[#allocation5 + $0x2d]]
        %v893 = vstv %s892
        %v894 = vmul.f32 %v893, %v887
        %v895 = vadd.f32 %v870, %v894
        %s896 = sld [smem:[#allocation5 + $0x46]]
        %v897 = vstv %s896
        %v898 = vmul.f32 %v897, %v887
        %v899 = vadd.f32 %v878, %v898
        %s900 = sld [smem:[#allocation5 + $0x5f]]
        %v901 = vstv %s900
        %v902 = vmul.f32 %v901, %v887
        %v903 = vadd.f32 %v886, %v902
        %v904 = vld [vmem:[%s358 + $0xa] sm:$0x3f]
        %s905 = sld [smem:[#allocation5 + $0x15]]
        %v906 = vstv %s905
        %v907 = vmul.f32 %v906, %v904
        %v908 = vadd.f32 %v891, %v907
        %s909 = sld [smem:[#allocation5 + $0x2e]]
        %v910 = vstv %s909
        %v911 = vmul.f32 %v910, %v904
        %v912 = vadd.f32 %v895, %v911
        %s913 = sld [smem:[#allocation5 + $0x47]]
        %v914 = vstv %s913
        %v915 = vmul.f32 %v914, %v904
        %v916 = vadd.f32 %v899, %v915
        %s917 = sld [smem:[#allocation5 + $0x60]]
        %v918 = vstv %s917
        %v919 = vmul.f32 %v918, %v904
        %v920 = vadd.f32 %v903, %v919
        %s921 = sld [smem:[#allocation5 + $0x16]]
        %v922 = vstv %s921
        %v923 = vmul.f32 %v922, %v887
        %925 = vrot.lane.b32.xlu0 %v923, 127
        %v926 = vpop.permute.xlu0 %925
        %v928 = vadd.f32 %v908, %v926
        %s929 = sld [smem:[#allocation5 + $0x2f]]
        %v930 = vstv %s929
        %v931 = vmul.f32 %v930, %v887
        %933 = vrot.lane.b32.xlu0 %v931, 127
        %v934 = vpop.permute.xlu0 %933
        %v936 = vadd.f32 %v912, %v934
        %s937 = sld [smem:[#allocation5 + $0x48]]
        %v938 = vstv %s937
        %v939 = vmul.f32 %v938, %v887
        %941 = vrot.lane.b32.xlu0 %v939, 127
        %v942 = vpop.permute.xlu0 %941
        %v944 = vadd.f32 %v916, %v942
        %s945 = sld [smem:[#allocation5 + $0x61]]
        %v946 = vstv %s945
        %v947 = vmul.f32 %v946, %v887
        %949 = vrot.lane.b32.xlu0 %v947, 127
        %v950 = vpop.permute.xlu0 %949
        %v952 = vadd.f32 %v920, %v950
        %s953 = sld [smem:[#allocation5 + $0x17]]
        %v954 = vstv %s953
        %v955 = vmul.f32 %v954, %v904
        %957 = vrot.lane.b32.xlu0 %v955, 127
        %v958 = vpop.permute.xlu0 %957
        %v960 = vadd.f32 %v928, %v958
        %s961 = sld [smem:[#allocation5 + $0x30]]
        %v962 = vstv %s961
        %v963 = vmul.f32 %v962, %v904
        %965 = vrot.lane.b32.xlu0 %v963, 127
        %v966 = vpop.permute.xlu0 %965
        %v968 = vadd.f32 %v936, %v966
        %s969 = sld [smem:[#allocation5 + $0x49]]
        %v970 = vstv %s969
        %v971 = vmul.f32 %v970, %v904
        %973 = vrot.lane.b32.xlu0 %v971, 127
        %v974 = vpop.permute.xlu0 %973
        %v976 = vadd.f32 %v944, %v974
        %s977 = sld [smem:[#allocation5 + $0x62]]
        %v978 = vstv %s977
        %v979 = vmul.f32 %v978, %v904
        %981 = vrot.lane.b32.xlu0 %v979, 127
        %v982 = vpop.permute.xlu0 %981
        %v984 = vadd.f32 %v952, %v982
        %s985 = sld [smem:[#allocation5 + $0x18]]
        %v986 = vstv %s985
        %v987 = vmul.f32 %v986, %v887
        %989 = vrot.lane.b32.xlu0 %v987, 126
        %v990 = vpop.permute.xlu0 %989
        %v992 = vadd.f32 %v960, %v990
        %s993 = sld [smem:[#allocation5 + $0x31]]
        %v994 = vstv %s993
        %v995 = vmul.f32 %v994, %v887
        %997 = vrot.lane.b32.xlu0 %v995, 126
        %v998 = vpop.permute.xlu0 %997
        %v1000 = vadd.f32 %v968, %v998
        %s1001 = sld [smem:[#allocation5 + $0x4a]]
        %v1002 = vstv %s1001
        %v1003 = vmul.f32 %v1002, %v887
        %1005 = vrot.lane.b32.xlu0 %v1003, 126
        %v1006 = vpop.permute.xlu0 %1005
        %v1008 = vadd.f32 %v976, %v1006
        %s1009 = sld [smem:[#allocation5 + $0x63]]
        %v1010 = vstv %s1009
        %v1011 = vmul.f32 %v1010, %v887
        %1013 = vrot.lane.b32.xlu0 %v1011, 126
        %v1014 = vpop.permute.xlu0 %1013
        %v1016 = vadd.f32 %v984, %v1014
        %s1017 = sld [smem:[#allocation3]]
        %s1018 = sld [smem:[#allocation7]]
        %v1019 = vstv %s1018
        %v1020 = vadd.f32 %v992, %v1019
        %vm1021 = vcmp.gt.f32.partialorder %v1020, 0.0
        %v1022 = vstv %s1017
        %v1023 = vmul.f32 %v1022, %v1020
        %v1024 = vsel %vm1021, %v1020, %v1023
        %vm1025 = vcmask 46080
        %1026 = vst.msk [vmem:[#allocation2] sm:$0x3f] %vm1025, %v1024
        %s1027 = sld [smem:[#allocation7 + $0x1]]
        %v1028 = vstv %s1027
        %v1029 = vadd.f32 %v1000, %v1028
        %vm1030 = vcmp.gt.f32.partialorder %v1029, 0.0
        %v1031 = vmul.f32 %v1022, %v1029
        %v1032 = vsel %vm1030, %v1029, %v1031
        %s1033 = scalar_lea.vmem [#allocation2], 8
        %1034 = vst.msk [vmem:[%s1033] sm:$0x3f] %vm1025, %v1032
        %s1035 = sld [smem:[#allocation7 + $0x2]]
        %v1036 = vstv %s1035
        %v1037 = vadd.f32 %v1008, %v1036
        %vm1038 = vcmp.gt.f32.partialorder %v1037, 0.0
        %v1039 = vmul.f32 %v1022, %v1037
        %v1040 = vsel %vm1038, %v1037, %v1039
        %s1041 = scalar_lea.vmem [#allocation2], 16
        %1042 = vst.msk [vmem:[%s1041] sm:$0x3f] %vm1025, %v1040
        %s1043 = sld [smem:[#allocation7 + $0x3]]
        %v1044 = vstv %s1043
        %v1045 = vadd.f32 %v1016, %v1044
        %vm1046 = vcmp.gt.f32.partialorder %v1045, 0.0
        %v1047 = vmul.f32 %v1022, %v1045
        %v1048 = vsel %vm1046, %v1045, %v1047
        %s1049 = scalar_lea.vmem [#allocation2], 24
        %1050 = vst.msk [vmem:[%s1049] sm:$0x3f] %vm1025, %v1048
        %v1051 = vld [vmem:[#allocation2] sm:$0x3]
        %s1052 = sld [smem:[#allocation9]]
        %v1053 = vstv %s1052
        %v1054 = vmul.f32 %v1053, %v1051
        %v1055 = vadd.f32 %v1054, 0.0
        %s1056 = sld [smem:[#allocation9 + $0x64]]
        %v1057 = vstv %s1056
        %v1058 = vmul.f32 %v1057, %v1051
        %v1059 = vadd.f32 %v1058, 0.0
        %s1060 = sld [smem:[#allocation9 + $0xc8]]
        %v1061 = vstv %s1060
        %v1062 = vmul.f32 %v1061, %v1051
        %v1063 = vadd.f32 %v1062, 0.0
        %s1064 = sld [smem:[#allocation9 + $0x12c]]
        %v1065 = vstv %s1064
        %v1066 = vmul.f32 %v1065, %v1051
        %v1067 = vadd.f32 %v1066, 0.0
        %s1068 = sld [smem:[#allocation9 + $0x1]]
        %v1069 = vstv %s1068
        %v1070 = vmul.f32 %v1069, %v1051
        %1072 = vrot.lane.b32.xlu0 %v1070, 127
        %v1073 = vpop.permute.xlu0 %1072
        %v1075 = vadd.f32 %v1055, %v1073
        %s1076 = sld [smem:[#allocation9 + $0x65]]
        %v1077 = vstv %s1076
        %v1078 = vmul.f32 %v1077, %v1051
        %1080 = vrot.lane.b32.xlu0 %v1078, 127
        %v1081 = vpop.permute.xlu0 %1080
        %v1083 = vadd.f32 %v1059, %v1081
        %s1084 = sld [smem:[#allocation9 + $0xc9]]
        %v1085 = vstv %s1084
        %v1086 = vmul.f32 %v1085, %v1051
        %1088 = vrot.lane.b32.xlu0 %v1086, 127
        %v1089 = vpop.permute.xlu0 %1088
        %v1091 = vadd.f32 %v1063, %v1089
        %s1092 = sld [smem:[#allocation9 + $0x12d]]
        %v1093 = vstv %s1092
        %v1094 = vmul.f32 %v1093, %v1051
        %1096 = vrot.lane.b32.xlu0 %v1094, 127
        %v1097 = vpop.permute.xlu0 %1096
        %v1099 = vadd.f32 %v1067, %v1097
        %s1100 = sld [smem:[#allocation9 + $0x2]]
        %v1101 = vstv %s1100
        %v1102 = vmul.f32 %v1101, %v1051
        %1104 = vrot.lane.b32.xlu0 %v1102, 126
        %v1105 = vpop.permute.xlu0 %1104
        %v1107 = vadd.f32 %v1075, %v1105
        %s1108 = sld [smem:[#allocation9 + $0x66]]
        %v1109 = vstv %s1108
        %v1110 = vmul.f32 %v1109, %v1051
        %1112 = vrot.lane.b32.xlu0 %v1110, 126
        %v1113 = vpop.permute.xlu0 %1112
        %v1115 = vadd.f32 %v1083, %v1113
        %s1116 = sld [smem:[#allocation9 + $0xca]]
        %v1117 = vstv %s1116
        %v1118 = vmul.f32 %v1117, %v1051
        %1120 = vrot.lane.b32.xlu0 %v1118, 126
        %v1121 = vpop.permute.xlu0 %1120
        %v1123 = vadd.f32 %v1091, %v1121
        %s1124 = sld [smem:[#allocation9 + $0x12e]]
        %v1125 = vstv %s1124
        %v1126 = vmul.f32 %v1125, %v1051
        %1128 = vrot.lane.b32.xlu0 %v1126, 126
        %v1129 = vpop.permute.xlu0 %1128
        %v1131 = vadd.f32 %v1099, %v1129
        %s1132 = sld [smem:[#allocation9 + $0x3]]
        %v1133 = vstv %s1132
        %v1134 = vmul.f32 %v1133, %v1051
        %1136 = vrot.lane.b32.xlu0 %v1134, 125
        %v1137 = vpop.permute.xlu0 %1136
        %v1139 = vadd.f32 %v1107, %v1137
        %s1140 = sld [smem:[#allocation9 + $0x67]]
        %v1141 = vstv %s1140
        %v1142 = vmul.f32 %v1141, %v1051
        %1144 = vrot.lane.b32.xlu0 %v1142, 125
        %v1145 = vpop.permute.xlu0 %1144
        %v1147 = vadd.f32 %v1115, %v1145
        %s1148 = sld [smem:[#allocation9 + $0xcb]]
        %v1149 = vstv %s1148
        %v1150 = vmul.f32 %v1149, %v1051
        %1152 = vrot.lane.b32.xlu0 %v1150, 125
        %v1153 = vpop.permute.xlu0 %1152
        %v1155 = vadd.f32 %v1123, %v1153
        %s1156 = sld [smem:[#allocation9 + $0x12f]]
        %v1157 = vstv %s1156
        %v1158 = vmul.f32 %v1157, %v1051
        %1160 = vrot.lane.b32.xlu0 %v1158, 125
        %v1161 = vpop.permute.xlu0 %1160
        %v1163 = vadd.f32 %v1131, %v1161
        %s1164 = sld [smem:[#allocation9 + $0x4]]
        %v1165 = vstv %s1164
        %v1166 = vmul.f32 %v1165, %v1051
        %1168 = vrot.lane.b32.xlu0 %v1166, 124
        %v1169 = vpop.permute.xlu0 %1168
        %v1171 = vadd.f32 %v1139, %v1169
        %s1172 = sld [smem:[#allocation9 + $0x68]]
        %v1173 = vstv %s1172
        %v1174 = vmul.f32 %v1173, %v1051
        %1176 = vrot.lane.b32.xlu0 %v1174, 124
        %v1177 = vpop.permute.xlu0 %1176
        %v1179 = vadd.f32 %v1147, %v1177
        %s1180 = sld [smem:[#allocation9 + $0xcc]]
        %v1181 = vstv %s1180
        %v1182 = vmul.f32 %v1181, %v1051
        %1184 = vrot.lane.b32.xlu0 %v1182, 124
        %v1185 = vpop.permute.xlu0 %1184
        %v1187 = vadd.f32 %v1155, %v1185
        %s1188 = sld [smem:[#allocation9 + $0x130]]
        %v1189 = vstv %s1188
        %v1190 = vmul.f32 %v1189, %v1051
        %1192 = vrot.lane.b32.xlu0 %v1190, 124
        %v1193 = vpop.permute.xlu0 %1192
        %v1195 = vadd.f32 %v1163, %v1193
        %v1196 = vld [vmem:[#allocation2 + $0x1] sm:$0x3]
        %s1197 = sld [smem:[#allocation9 + $0x5]]
        %v1198 = vstv %s1197
        %v1199 = vmul.f32 %v1198, %v1196
        %v1200 = vadd.f32 %v1171, %v1199
        %s1201 = sld [smem:[#allocation9 + $0x69]]
        %v1202 = vstv %s1201
        %v1203 = vmul.f32 %v1202, %v1196
        %v1204 = vadd.f32 %v1179, %v1203
        %s1205 = sld [smem:[#allocation9 + $0xcd]]
        %v1206 = vstv %s1205
        %v1207 = vmul.f32 %v1206, %v1196
        %v1208 = vadd.f32 %v1187, %v1207
        %s1209 = sld [smem:[#allocation9 + $0x131]]
        %v1210 = vstv %s1209
        %v1211 = vmul.f32 %v1210, %v1196
        %v1212 = vadd.f32 %v1195, %v1211
        %s1213 = sld [smem:[#allocation9 + $0x6]]
        %v1214 = vstv %s1213
        %v1215 = vmul.f32 %v1214, %v1196
        %1217 = vrot.lane.b32.xlu0 %v1215, 127
        %v1218 = vpop.permute.xlu0 %1217
        %v1220 = vadd.f32 %v1200, %v1218
        %s1221 = sld [smem:[#allocation9 + $0x6a]]
        %v1222 = vstv %s1221
        %v1223 = vmul.f32 %v1222, %v1196
        %1225 = vrot.lane.b32.xlu0 %v1223, 127
        %v1226 = vpop.permute.xlu0 %1225
        %v1228 = vadd.f32 %v1204, %v1226
        %s1229 = sld [smem:[#allocation9 + $0xce]]
        %v1230 = vstv %s1229
        %v1231 = vmul.f32 %v1230, %v1196
        %1233 = vrot.lane.b32.xlu0 %v1231, 127
        %v1234 = vpop.permute.xlu0 %1233
        %v1236 = vadd.f32 %v1208, %v1234
        %s1237 = sld [smem:[#allocation9 + $0x132]]
        %v1238 = vstv %s1237
        %v1239 = vmul.f32 %v1238, %v1196
        %1241 = vrot.lane.b32.xlu0 %v1239, 127
        %v1242 = vpop.permute.xlu0 %1241
        %v1244 = vadd.f32 %v1212, %v1242
        %s1245 = sld [smem:[#allocation9 + $0x7]]
        %v1246 = vstv %s1245
        %v1247 = vmul.f32 %v1246, %v1196
        %1249 = vrot.lane.b32.xlu0 %v1247, 126
        %v1250 = vpop.permute.xlu0 %1249
        %v1252 = vadd.f32 %v1220, %v1250
        %s1253 = sld [smem:[#allocation9 + $0x6b]]
        %v1254 = vstv %s1253
        %v1255 = vmul.f32 %v1254, %v1196
        %1257 = vrot.lane.b32.xlu0 %v1255, 126
        %v1258 = vpop.permute.xlu0 %1257
        %v1260 = vadd.f32 %v1228, %v1258
        %s1261 = sld [smem:[#allocation9 + $0xcf]]
        %v1262 = vstv %s1261
        %v1263 = vmul.f32 %v1262, %v1196
        %1265 = vrot.lane.b32.xlu0 %v1263, 126
        %v1266 = vpop.permute.xlu0 %1265
        %v1268 = vadd.f32 %v1236, %v1266
        %s1269 = sld [smem:[#allocation9 + $0x133]]
        %v1270 = vstv %s1269
        %v1271 = vmul.f32 %v1270, %v1196
        %1273 = vrot.lane.b32.xlu0 %v1271, 126
        %v1274 = vpop.permute.xlu0 %1273
        %v1276 = vadd.f32 %v1244, %v1274
        %s1277 = sld [smem:[#allocation9 + $0x8]]
        %v1278 = vstv %s1277
        %v1279 = vmul.f32 %v1278, %v1196
        %1281 = vrot.lane.b32.xlu0 %v1279, 125
        %v1282 = vpop.permute.xlu0 %1281
        %v1284 = vadd.f32 %v1252, %v1282
        %s1285 = sld [smem:[#allocation9 + $0x6c]]
        %v1286 = vstv %s1285
        %v1287 = vmul.f32 %v1286, %v1196
        %1289 = vrot.lane.b32.xlu0 %v1287, 125
        %v1290 = vpop.permute.xlu0 %1289
        %v1292 = vadd.f32 %v1260, %v1290
        %s1293 = sld [smem:[#allocation9 + $0xd0]]
        %v1294 = vstv %s1293
        %v1295 = vmul.f32 %v1294, %v1196
        %1297 = vrot.lane.b32.xlu0 %v1295, 125
        %v1298 = vpop.permute.xlu0 %1297
        %v1300 = vadd.f32 %v1268, %v1298
        %s1301 = sld [smem:[#allocation9 + $0x134]]
        %v1302 = vstv %s1301
        %v1303 = vmul.f32 %v1302, %v1196
        %1305 = vrot.lane.b32.xlu0 %v1303, 125
        %v1306 = vpop.permute.xlu0 %1305
        %v1308 = vadd.f32 %v1276, %v1306
        %s1309 = sld [smem:[#allocation9 + $0x9]]
        %v1310 = vstv %s1309
        %v1311 = vmul.f32 %v1310, %v1196
        %1313 = vrot.lane.b32.xlu0 %v1311, 124
        %v1314 = vpop.permute.xlu0 %1313
        %v1316 = vadd.f32 %v1284, %v1314
        %s1317 = sld [smem:[#allocation9 + $0x6d]]
        %v1318 = vstv %s1317
        %v1319 = vmul.f32 %v1318, %v1196
        %1321 = vrot.lane.b32.xlu0 %v1319, 124
        %v1322 = vpop.permute.xlu0 %1321
        %v1324 = vadd.f32 %v1292, %v1322
        %s1325 = sld [smem:[#allocation9 + $0xd1]]
        %v1326 = vstv %s1325
        %v1327 = vmul.f32 %v1326, %v1196
        %1329 = vrot.lane.b32.xlu0 %v1327, 124
        %v1330 = vpop.permute.xlu0 %1329
        %v1332 = vadd.f32 %v1300, %v1330
        %s1333 = sld [smem:[#allocation9 + $0x135]]
        %v1334 = vstv %s1333
        %v1335 = vmul.f32 %v1334, %v1196
        %1337 = vrot.lane.b32.xlu0 %v1335, 124
        %v1338 = vpop.permute.xlu0 %1337
        %v1340 = vadd.f32 %v1308, %v1338
        %v1341 = vld [vmem:[#allocation2 + $0x2] sm:$0x3]
        %s1342 = sld [smem:[#allocation9 + $0xa]]
        %v1343 = vstv %s1342
        %v1344 = vmul.f32 %v1343, %v1341
        %v1345 = vadd.f32 %v1316, %v1344
        %s1346 = sld [smem:[#allocation9 + $0x6e]]
        %v1347 = vstv %s1346
        %v1348 = vmul.f32 %v1347, %v1341
        %v1349 = vadd.f32 %v1324, %v1348
        %s1350 = sld [smem:[#allocation9 + $0xd2]]
        %v1351 = vstv %s1350
        %v1352 = vmul.f32 %v1351, %v1341
        %v1353 = vadd.f32 %v1332, %v1352
        %s1354 = sld [smem:[#allocation9 + $0x136]]
        %v1355 = vstv %s1354
        %v1356 = vmul.f32 %v1355, %v1341
        %v1357 = vadd.f32 %v1340, %v1356
        %s1358 = sld [smem:[#allocation9 + $0xb]]
        %v1359 = vstv %s1358
        %v1360 = vmul.f32 %v1359, %v1341
        %1362 = vrot.lane.b32.xlu0 %v1360, 127
        %v1363 = vpop.permute.xlu0 %1362
        %v1365 = vadd.f32 %v1345, %v1363
        %s1366 = sld [smem:[#allocation9 + $0x6f]]
        %v1367 = vstv %s1366
        %v1368 = vmul.f32 %v1367, %v1341
        %1370 = vrot.lane.b32.xlu0 %v1368, 127
        %v1371 = vpop.permute.xlu0 %1370
        %v1373 = vadd.f32 %v1349, %v1371
        %s1374 = sld [smem:[#allocation9 + $0xd3]]
        %v1375 = vstv %s1374
        %v1376 = vmul.f32 %v1375, %v1341
        %1378 = vrot.lane.b32.xlu0 %v1376, 127
        %v1379 = vpop.permute.xlu0 %1378
        %v1381 = vadd.f32 %v1353, %v1379
        %s1382 = sld [smem:[#allocation9 + $0x137]]
        %v1383 = vstv %s1382
        %v1384 = vmul.f32 %v1383, %v1341
        %1386 = vrot.lane.b32.xlu0 %v1384, 127
        %v1387 = vpop.permute.xlu0 %1386
        %v1389 = vadd.f32 %v1357, %v1387
        %s1390 = sld [smem:[#allocation9 + $0xc]]
        %v1391 = vstv %s1390
        %v1392 = vmul.f32 %v1391, %v1341
        %1394 = vrot.lane.b32.xlu0 %v1392, 126
        %v1395 = vpop.permute.xlu0 %1394
        %v1397 = vadd.f32 %v1365, %v1395
        %s1398 = sld [smem:[#allocation9 + $0x70]]
        %v1399 = vstv %s1398
        %v1400 = vmul.f32 %v1399, %v1341
        %1402 = vrot.lane.b32.xlu0 %v1400, 126
        %v1403 = vpop.permute.xlu0 %1402
        %v1405 = vadd.f32 %v1373, %v1403
        %s1406 = sld [smem:[#allocation9 + $0xd4]]
        %v1407 = vstv %s1406
        %v1408 = vmul.f32 %v1407, %v1341
        %1410 = vrot.lane.b32.xlu0 %v1408, 126
        %v1411 = vpop.permute.xlu0 %1410
        %v1413 = vadd.f32 %v1381, %v1411
        %s1414 = sld [smem:[#allocation9 + $0x138]]
        %v1415 = vstv %s1414
        %v1416 = vmul.f32 %v1415, %v1341
        %1418 = vrot.lane.b32.xlu0 %v1416, 126
        %v1419 = vpop.permute.xlu0 %1418
        %v1421 = vadd.f32 %v1389, %v1419
        %s1422 = sld [smem:[#allocation9 + $0xd]]
        %v1423 = vstv %s1422
        %v1424 = vmul.f32 %v1423, %v1341
        %1426 = vrot.lane.b32.xlu0 %v1424, 125
        %v1427 = vpop.permute.xlu0 %1426
        %v1429 = vadd.f32 %v1397, %v1427
        %s1430 = sld [smem:[#allocation9 + $0x71]]
        %v1431 = vstv %s1430
        %v1432 = vmul.f32 %v1431, %v1341
        %1434 = vrot.lane.b32.xlu0 %v1432, 125
        %v1435 = vpop.permute.xlu0 %1434
        %v1437 = vadd.f32 %v1405, %v1435
        %s1438 = sld [smem:[#allocation9 + $0xd5]]
        %v1439 = vstv %s1438
        %v1440 = vmul.f32 %v1439, %v1341
        %1442 = vrot.lane.b32.xlu0 %v1440, 125
        %v1443 = vpop.permute.xlu0 %1442
        %v1445 = vadd.f32 %v1413, %v1443
        %s1446 = sld [smem:[#allocation9 + $0x139]]
        %v1447 = vstv %s1446
        %v1448 = vmul.f32 %v1447, %v1341
        %1450 = vrot.lane.b32.xlu0 %v1448, 125
        %v1451 = vpop.permute.xlu0 %1450
        %v1453 = vadd.f32 %v1421, %v1451
        %s1454 = sld [smem:[#allocation9 + $0xe]]
        %v1455 = vstv %s1454
        %v1456 = vmul.f32 %v1455, %v1341
        %1458 = vrot.lane.b32.xlu0 %v1456, 124
        %v1459 = vpop.permute.xlu0 %1458
        %v1461 = vadd.f32 %v1429, %v1459
        %s1462 = sld [smem:[#allocation9 + $0x72]]
        %v1463 = vstv %s1462
        %v1464 = vmul.f32 %v1463, %v1341
        %1466 = vrot.lane.b32.xlu0 %v1464, 124
        %v1467 = vpop.permute.xlu0 %1466
        %v1469 = vadd.f32 %v1437, %v1467
        %s1470 = sld [smem:[#allocation9 + $0xd6]]
        %v1471 = vstv %s1470
        %v1472 = vmul.f32 %v1471, %v1341
        %1474 = vrot.lane.b32.xlu0 %v1472, 124
        %v1475 = vpop.permute.xlu0 %1474
        %v1477 = vadd.f32 %v1445, %v1475
        %s1478 = sld [smem:[#allocation9 + $0x13a]]
        %v1479 = vstv %s1478
        %v1480 = vmul.f32 %v1479, %v1341
        %1482 = vrot.lane.b32.xlu0 %v1480, 124
        %v1483 = vpop.permute.xlu0 %1482
        %v1485 = vadd.f32 %v1453, %v1483
        %v1486 = vld [vmem:[#allocation2 + $0x3] sm:$0x3]
        %s1487 = sld [smem:[#allocation9 + $0xf]]
        %v1488 = vstv %s1487
        %v1489 = vmul.f32 %v1488, %v1486
        %v1490 = vadd.f32 %v1461, %v1489
        %s1491 = sld [smem:[#allocation9 + $0x73]]
        %v1492 = vstv %s1491
        %v1493 = vmul.f32 %v1492, %v1486
        %v1494 = vadd.f32 %v1469, %v1493
        %s1495 = sld [smem:[#allocation9 + $0xd7]]
        %v1496 = vstv %s1495
        %v1497 = vmul.f32 %v1496, %v1486
        %v1498 = vadd.f32 %v1477, %v1497
        %s1499 = sld [smem:[#allocation9 + $0x13b]]
        %v1500 = vstv %s1499
        %v1501 = vmul.f32 %v1500, %v1486
        %v1502 = vadd.f32 %v1485, %v1501
        %s1503 = sld [smem:[#allocation9 + $0x10]]
        %v1504 = vstv %s1503
        %v1505 = vmul.f32 %v1504, %v1486
        %1507 = vrot.lane.b32.xlu0 %v1505, 127
        %v1508 = vpop.permute.xlu0 %1507
        %v1510 = vadd.f32 %v1490, %v1508
        %s1511 = sld [smem:[#allocation9 + $0x74]]
        %v1512 = vstv %s1511
        %v1513 = vmul.f32 %v1512, %v1486
        %1515 = vrot.lane.b32.xlu0 %v1513, 127
        %v1516 = vpop.permute.xlu0 %1515
        %v1518 = vadd.f32 %v1494, %v1516
        %s1519 = sld [smem:[#allocation9 + $0xd8]]
        %v1520 = vstv %s1519
        %v1521 = vmul.f32 %v1520, %v1486
        %1523 = vrot.lane.b32.xlu0 %v1521, 127
        %v1524 = vpop.permute.xlu0 %1523
        %v1526 = vadd.f32 %v1498, %v1524
        %s1527 = sld [smem:[#allocation9 + $0x13c]]
        %v1528 = vstv %s1527
        %v1529 = vmul.f32 %v1528, %v1486
        %1531 = vrot.lane.b32.xlu0 %v1529, 127
        %v1532 = vpop.permute.xlu0 %1531
        %v1534 = vadd.f32 %v1502, %v1532
        %s1535 = sld [smem:[#allocation9 + $0x11]]
        %v1536 = vstv %s1535
        %v1537 = vmul.f32 %v1536, %v1486
        %1539 = vrot.lane.b32.xlu0 %v1537, 126
        %v1540 = vpop.permute.xlu0 %1539
        %v1542 = vadd.f32 %v1510, %v1540
        %s1543 = sld [smem:[#allocation9 + $0x75]]
        %v1544 = vstv %s1543
        %v1545 = vmul.f32 %v1544, %v1486
        %1547 = vrot.lane.b32.xlu0 %v1545, 126
        %v1548 = vpop.permute.xlu0 %1547
        %v1550 = vadd.f32 %v1518, %v1548
        %s1551 = sld [smem:[#allocation9 + $0xd9]]
        %v1552 = vstv %s1551
        %v1553 = vmul.f32 %v1552, %v1486
        %1555 = vrot.lane.b32.xlu0 %v1553, 126
        %v1556 = vpop.permute.xlu0 %1555
        %v1558 = vadd.f32 %v1526, %v1556
        %s1559 = sld [smem:[#allocation9 + $0x13d]]
        %v1560 = vstv %s1559
        %v1561 = vmul.f32 %v1560, %v1486
        %1563 = vrot.lane.b32.xlu0 %v1561, 126
        %v1564 = vpop.permute.xlu0 %1563
        %v1566 = vadd.f32 %v1534, %v1564
        %s1567 = sld [smem:[#allocation9 + $0x12]]
        %v1568 = vstv %s1567
        %v1569 = vmul.f32 %v1568, %v1486
        %1571 = vrot.lane.b32.xlu0 %v1569, 125
        %v1572 = vpop.permute.xlu0 %1571
        %v1574 = vadd.f32 %v1542, %v1572
        %s1575 = sld [smem:[#allocation9 + $0x76]]
        %v1576 = vstv %s1575
        %v1577 = vmul.f32 %v1576, %v1486
        %1579 = vrot.lane.b32.xlu0 %v1577, 125
        %v1580 = vpop.permute.xlu0 %1579
        %v1582 = vadd.f32 %v1550, %v1580
        %s1583 = sld [smem:[#allocation9 + $0xda]]
        %v1584 = vstv %s1583
        %v1585 = vmul.f32 %v1584, %v1486
        %1587 = vrot.lane.b32.xlu0 %v1585, 125
        %v1588 = vpop.permute.xlu0 %1587
        %v1590 = vadd.f32 %v1558, %v1588
        %s1591 = sld [smem:[#allocation9 + $0x13e]]
        %v1592 = vstv %s1591
        %v1593 = vmul.f32 %v1592, %v1486
        %1595 = vrot.lane.b32.xlu0 %v1593, 125
        %v1596 = vpop.permute.xlu0 %1595
        %v1598 = vadd.f32 %v1566, %v1596
        %s1599 = sld [smem:[#allocation9 + $0x13]]
        %v1600 = vstv %s1599
        %v1601 = vmul.f32 %v1600, %v1486
        %1603 = vrot.lane.b32.xlu0 %v1601, 124
        %v1604 = vpop.permute.xlu0 %1603
        %v1606 = vadd.f32 %v1574, %v1604
        %s1607 = sld [smem:[#allocation9 + $0x77]]
        %v1608 = vstv %s1607
        %v1609 = vmul.f32 %v1608, %v1486
        %1611 = vrot.lane.b32.xlu0 %v1609, 124
        %v1612 = vpop.permute.xlu0 %1611
        %v1614 = vadd.f32 %v1582, %v1612
        %s1615 = sld [smem:[#allocation9 + $0xdb]]
        %v1616 = vstv %s1615
        %v1617 = vmul.f32 %v1616, %v1486
        %1619 = vrot.lane.b32.xlu0 %v1617, 124
        %v1620 = vpop.permute.xlu0 %1619
        %v1622 = vadd.f32 %v1590, %v1620
        %s1623 = sld [smem:[#allocation9 + $0x13f]]
        %v1624 = vstv %s1623
        %v1625 = vmul.f32 %v1624, %v1486
        %1627 = vrot.lane.b32.xlu0 %v1625, 124
        %v1628 = vpop.permute.xlu0 %1627
        %v1630 = vadd.f32 %v1598, %v1628
        %v1631 = vld [vmem:[#allocation2 + $0x4] sm:$0x3]
        %s1632 = sld [smem:[#allocation9 + $0x14]]
        %v1633 = vstv %s1632
        %v1634 = vmul.f32 %v1633, %v1631
        %v1635 = vadd.f32 %v1606, %v1634
        %s1636 = sld [smem:[#allocation9 + $0x78]]
        %v1637 = vstv %s1636
        %v1638 = vmul.f32 %v1637, %v1631
        %v1639 = vadd.f32 %v1614, %v1638
        %s1640 = sld [smem:[#allocation9 + $0xdc]]
        %v1641 = vstv %s1640
        %v1642 = vmul.f32 %v1641, %v1631
        %v1643 = vadd.f32 %v1622, %v1642
        %s1644 = sld [smem:[#allocation9 + $0x140]]
        %v1645 = vstv %s1644
        %v1646 = vmul.f32 %v1645, %v1631
        %v1647 = vadd.f32 %v1630, %v1646
        %s1648 = sld [smem:[#allocation9 + $0x15]]
        %v1649 = vstv %s1648
        %v1650 = vmul.f32 %v1649, %v1631
        %1652 = vrot.lane.b32.xlu0 %v1650, 127
        %v1653 = vpop.permute.xlu0 %1652
        %v1655 = vadd.f32 %v1635, %v1653
        %s1656 = sld [smem:[#allocation9 + $0x79]]
        %v1657 = vstv %s1656
        %v1658 = vmul.f32 %v1657, %v1631
        %1660 = vrot.lane.b32.xlu0 %v1658, 127
        %v1661 = vpop.permute.xlu0 %1660
        %v1663 = vadd.f32 %v1639, %v1661
        %s1664 = sld [smem:[#allocation9 + $0xdd]]
        %v1665 = vstv %s1664
        %v1666 = vmul.f32 %v1665, %v1631
        %1668 = vrot.lane.b32.xlu0 %v1666, 127
        %v1669 = vpop.permute.xlu0 %1668
        %v1671 = vadd.f32 %v1643, %v1669
        %s1672 = sld [smem:[#allocation9 + $0x141]]
        %v1673 = vstv %s1672
        %v1674 = vmul.f32 %v1673, %v1631
        %1676 = vrot.lane.b32.xlu0 %v1674, 127
        %v1677 = vpop.permute.xlu0 %1676
        %v1679 = vadd.f32 %v1647, %v1677
        %s1680 = sld [smem:[#allocation9 + $0x16]]
        %v1681 = vstv %s1680
        %v1682 = vmul.f32 %v1681, %v1631
        %1684 = vrot.lane.b32.xlu0 %v1682, 126
        %v1685 = vpop.permute.xlu0 %1684
        %v1687 = vadd.f32 %v1655, %v1685
        %s1688 = sld [smem:[#allocation9 + $0x7a]]
        %v1689 = vstv %s1688
        %v1690 = vmul.f32 %v1689, %v1631
        %1692 = vrot.lane.b32.xlu0 %v1690, 126
        %v1693 = vpop.permute.xlu0 %1692
        %v1695 = vadd.f32 %v1663, %v1693
        %s1696 = sld [smem:[#allocation9 + $0xde]]
        %v1697 = vstv %s1696
        %v1698 = vmul.f32 %v1697, %v1631
        %1700 = vrot.lane.b32.xlu0 %v1698, 126
        %v1701 = vpop.permute.xlu0 %1700
        %v1703 = vadd.f32 %v1671, %v1701
        %s1704 = sld [smem:[#allocation9 + $0x142]]
        %v1705 = vstv %s1704
        %v1706 = vmul.f32 %v1705, %v1631
        %1708 = vrot.lane.b32.xlu0 %v1706, 126
        %v1709 = vpop.permute.xlu0 %1708
        %v1711 = vadd.f32 %v1679, %v1709
        %s1712 = sld [smem:[#allocation9 + $0x17]]
        %v1713 = vstv %s1712
        %v1714 = vmul.f32 %v1713, %v1631
        %1716 = vrot.lane.b32.xlu0 %v1714, 125
        %v1717 = vpop.permute.xlu0 %1716
        %v1719 = vadd.f32 %v1687, %v1717
        %s1720 = sld [smem:[#allocation9 + $0x7b]]
        %v1721 = vstv %s1720
        %v1722 = vmul.f32 %v1721, %v1631
        %1724 = vrot.lane.b32.xlu0 %v1722, 125
        %v1725 = vpop.permute.xlu0 %1724
        %v1727 = vadd.f32 %v1695, %v1725
        %s1728 = sld [smem:[#allocation9 + $0xdf]]
        %v1729 = vstv %s1728
        %v1730 = vmul.f32 %v1729, %v1631
        %1732 = vrot.lane.b32.xlu0 %v1730, 125
        %v1733 = vpop.permute.xlu0 %1732
        %v1735 = vadd.f32 %v1703, %v1733
        %s1736 = sld [smem:[#allocation9 + $0x143]]
        %v1737 = vstv %s1736
        %v1738 = vmul.f32 %v1737, %v1631
        %1740 = vrot.lane.b32.xlu0 %v1738, 125
        %v1741 = vpop.permute.xlu0 %1740
        %v1743 = vadd.f32 %v1711, %v1741
        %s1744 = sld [smem:[#allocation9 + $0x18]]
        %v1745 = vstv %s1744
        %v1746 = vmul.f32 %v1745, %v1631
        %1748 = vrot.lane.b32.xlu0 %v1746, 124
        %v1749 = vpop.permute.xlu0 %1748
        %v1751 = vadd.f32 %v1719, %v1749
        %s1752 = sld [smem:[#allocation9 + $0x7c]]
        %v1753 = vstv %s1752
        %v1754 = vmul.f32 %v1753, %v1631
        %1756 = vrot.lane.b32.xlu0 %v1754, 124
        %v1757 = vpop.permute.xlu0 %1756
        %v1759 = vadd.f32 %v1727, %v1757
        %s1760 = sld [smem:[#allocation9 + $0xe0]]
        %v1761 = vstv %s1760
        %v1762 = vmul.f32 %v1761, %v1631
        %1764 = vrot.lane.b32.xlu0 %v1762, 124
        %v1765 = vpop.permute.xlu0 %1764
        %v1767 = vadd.f32 %v1735, %v1765
        %s1768 = sld [smem:[#allocation9 + $0x144]]
        %v1769 = vstv %s1768
        %v1770 = vmul.f32 %v1769, %v1631
        %1772 = vrot.lane.b32.xlu0 %v1770, 124
        %v1773 = vpop.permute.xlu0 %1772
        %v1775 = vadd.f32 %v1743, %v1773
        %v1776 = vld [vmem:[%s1033] sm:$0x3]
        %s1777 = sld [smem:[#allocation9 + $0x19]]
        %v1778 = vstv %s1777
        %v1779 = vmul.f32 %v1778, %v1776
        %v1780 = vadd.f32 %v1751, %v1779
        %s1781 = sld [smem:[#allocation9 + $0x7d]]
        %v1782 = vstv %s1781
        %v1783 = vmul.f32 %v1782, %v1776
        %v1784 = vadd.f32 %v1759, %v1783
        %s1785 = sld [smem:[#allocation9 + $0xe1]]
        %v1786 = vstv %s1785
        %v1787 = vmul.f32 %v1786, %v1776
        %v1788 = vadd.f32 %v1767, %v1787
        %s1789 = sld [smem:[#allocation9 + $0x145]]
        %v1790 = vstv %s1789
        %v1791 = vmul.f32 %v1790, %v1776
        %v1792 = vadd.f32 %v1775, %v1791
        %s1793 = sld [smem:[#allocation9 + $0x1a]]
        %v1794 = vstv %s1793
        %v1795 = vmul.f32 %v1794, %v1776
        %1797 = vrot.lane.b32.xlu0 %v1795, 127
        %v1798 = vpop.permute.xlu0 %1797
        %v1800 = vadd.f32 %v1780, %v1798
        %s1801 = sld [smem:[#allocation9 + $0x7e]]
        %v1802 = vstv %s1801
        %v1803 = vmul.f32 %v1802, %v1776
        %1805 = vrot.lane.b32.xlu0 %v1803, 127
        %v1806 = vpop.permute.xlu0 %1805
        %v1808 = vadd.f32 %v1784, %v1806
        %s1809 = sld [smem:[#allocation9 + $0xe2]]
        %v1810 = vstv %s1809
        %v1811 = vmul.f32 %v1810, %v1776
        %1813 = vrot.lane.b32.xlu0 %v1811, 127
        %v1814 = vpop.permute.xlu0 %1813
        %v1816 = vadd.f32 %v1788, %v1814
        %s1817 = sld [smem:[#allocation9 + $0x146]]
        %v1818 = vstv %s1817
        %v1819 = vmul.f32 %v1818, %v1776
        %1821 = vrot.lane.b32.xlu0 %v1819, 127
        %v1822 = vpop.permute.xlu0 %1821
        %v1824 = vadd.f32 %v1792, %v1822
        %s1825 = sld [smem:[#allocation9 + $0x1b]]
        %v1826 = vstv %s1825
        %v1827 = vmul.f32 %v1826, %v1776
        %1829 = vrot.lane.b32.xlu0 %v1827, 126
        %v1830 = vpop.permute.xlu0 %1829
        %v1832 = vadd.f32 %v1800, %v1830
        %s1833 = sld [smem:[#allocation9 + $0x7f]]
        %v1834 = vstv %s1833
        %v1835 = vmul.f32 %v1834, %v1776
        %1837 = vrot.lane.b32.xlu0 %v1835, 126
        %v1838 = vpop.permute.xlu0 %1837
        %v1840 = vadd.f32 %v1808, %v1838
        %s1841 = sld [smem:[#allocation9 + $0xe3]]
        %v1842 = vstv %s1841
        %v1843 = vmul.f32 %v1842, %v1776
        %1845 = vrot.lane.b32.xlu0 %v1843, 126
        %v1846 = vpop.permute.xlu0 %1845
        %v1848 = vadd.f32 %v1816, %v1846
        %s1849 = sld [smem:[#allocation9 + $0x147]]
        %v1850 = vstv %s1849
        %v1851 = vmul.f32 %v1850, %v1776
        %1853 = vrot.lane.b32.xlu0 %v1851, 126
        %v1854 = vpop.permute.xlu0 %1853
        %v1856 = vadd.f32 %v1824, %v1854
        %s1857 = sld [smem:[#allocation9 + $0x1c]]
        %v1858 = vstv %s1857
        %v1859 = vmul.f32 %v1858, %v1776
        %1861 = vrot.lane.b32.xlu0 %v1859, 125
        %v1862 = vpop.permute.xlu0 %1861
        %v1864 = vadd.f32 %v1832, %v1862
        %s1865 = sld [smem:[#allocation9 + $0x80]]
        %v1866 = vstv %s1865
        %v1867 = vmul.f32 %v1866, %v1776
        %1869 = vrot.lane.b32.xlu0 %v1867, 125
        %v1870 = vpop.permute.xlu0 %1869
        %v1872 = vadd.f32 %v1840, %v1870
        %s1873 = sld [smem:[#allocation9 + $0xe4]]
        %v1874 = vstv %s1873
        %v1875 = vmul.f32 %v1874, %v1776
        %1877 = vrot.lane.b32.xlu0 %v1875, 125
        %v1878 = vpop.permute.xlu0 %1877
        %v1880 = vadd.f32 %v1848, %v1878
        %s1881 = sld [smem:[#allocation9 + $0x148]]
        %v1882 = vstv %s1881
        %v1883 = vmul.f32 %v1882, %v1776
        %1885 = vrot.lane.b32.xlu0 %v1883, 125
        %v1886 = vpop.permute.xlu0 %1885
        %v1888 = vadd.f32 %v1856, %v1886
        %s1889 = sld [smem:[#allocation9 + $0x1d]]
        %v1890 = vstv %s1889
        %v1891 = vmul.f32 %v1890, %v1776
        %1893 = vrot.lane.b32.xlu0 %v1891, 124
        %v1894 = vpop.permute.xlu0 %1893
        %v1896 = vadd.f32 %v1864, %v1894
        %s1897 = sld [smem:[#allocation9 + $0x81]]
        %v1898 = vstv %s1897
        %v1899 = vmul.f32 %v1898, %v1776
        %1901 = vrot.lane.b32.xlu0 %v1899, 124
        %v1902 = vpop.permute.xlu0 %1901
        %v1904 = vadd.f32 %v1872, %v1902
        %s1905 = sld [smem:[#allocation9 + $0xe5]]
        %v1906 = vstv %s1905
        %v1907 = vmul.f32 %v1906, %v1776
        %1909 = vrot.lane.b32.xlu0 %v1907, 124
        %v1910 = vpop.permute.xlu0 %1909
        %v1912 = vadd.f32 %v1880, %v1910
        %s1913 = sld [smem:[#allocation9 + $0x149]]
        %v1914 = vstv %s1913
        %v1915 = vmul.f32 %v1914, %v1776
        %1917 = vrot.lane.b32.xlu0 %v1915, 124
        %v1918 = vpop.permute.xlu0 %1917
        %v1920 = vadd.f32 %v1888, %v1918
        %v1921 = vld [vmem:[%s1033 + $0x1] sm:$0x3]
        %s1922 = sld [smem:[#allocation9 + $0x1e]]
        %v1923 = vstv %s1922
        %v1924 = vmul.f32 %v1923, %v1921
        %v1925 = vadd.f32 %v1896, %v1924
        %s1926 = sld [smem:[#allocation9 + $0x82]]
        %v1927 = vstv %s1926
        %v1928 = vmul.f32 %v1927, %v1921
        %v1929 = vadd.f32 %v1904, %v1928
        %s1930 = sld [smem:[#allocation9 + $0xe6]]
        %v1931 = vstv %s1930
        %v1932 = vmul.f32 %v1931, %v1921
        %v1933 = vadd.f32 %v1912, %v1932
        %s1934 = sld [smem:[#allocation9 + $0x14a]]
        %v1935 = vstv %s1934
        %v1936 = vmul.f32 %v1935, %v1921
        %v1937 = vadd.f32 %v1920, %v1936
        %s1938 = sld [smem:[#allocation9 + $0x1f]]
        %v1939 = vstv %s1938
        %v1940 = vmul.f32 %v1939, %v1921
        %1942 = vrot.lane.b32.xlu0 %v1940, 127
        %v1943 = vpop.permute.xlu0 %1942
        %v1945 = vadd.f32 %v1925, %v1943
        %s1946 = sld [smem:[#allocation9 + $0x83]]
        %v1947 = vstv %s1946
        %v1948 = vmul.f32 %v1947, %v1921
        %1950 = vrot.lane.b32.xlu0 %v1948, 127
        %v1951 = vpop.permute.xlu0 %1950
        %v1953 = vadd.f32 %v1929, %v1951
        %s1954 = sld [smem:[#allocation9 + $0xe7]]
        %v1955 = vstv %s1954
        %v1956 = vmul.f32 %v1955, %v1921
        %1958 = vrot.lane.b32.xlu0 %v1956, 127
        %v1959 = vpop.permute.xlu0 %1958
        %v1961 = vadd.f32 %v1933, %v1959
        %s1962 = sld [smem:[#allocation9 + $0x14b]]
        %v1963 = vstv %s1962
        %v1964 = vmul.f32 %v1963, %v1921
        %1966 = vrot.lane.b32.xlu0 %v1964, 127
        %v1967 = vpop.permute.xlu0 %1966
        %v1969 = vadd.f32 %v1937, %v1967
        %s1970 = sld [smem:[#allocation9 + $0x20]]
        %v1971 = vstv %s1970
        %v1972 = vmul.f32 %v1971, %v1921
        %1974 = vrot.lane.b32.xlu0 %v1972, 126
        %v1975 = vpop.permute.xlu0 %1974
        %v1977 = vadd.f32 %v1945, %v1975
        %s1978 = sld [smem:[#allocation9 + $0x84]]
        %v1979 = vstv %s1978
        %v1980 = vmul.f32 %v1979, %v1921
        %1982 = vrot.lane.b32.xlu0 %v1980, 126
        %v1983 = vpop.permute.xlu0 %1982
        %v1985 = vadd.f32 %v1953, %v1983
        %s1986 = sld [smem:[#allocation9 + $0xe8]]
        %v1987 = vstv %s1986
        %v1988 = vmul.f32 %v1987, %v1921
        %1990 = vrot.lane.b32.xlu0 %v1988, 126
        %v1991 = vpop.permute.xlu0 %1990
        %v1993 = vadd.f32 %v1961, %v1991
        %s1994 = sld [smem:[#allocation9 + $0x14c]]
        %v1995 = vstv %s1994
        %v1996 = vmul.f32 %v1995, %v1921
        %1998 = vrot.lane.b32.xlu0 %v1996, 126
        %v1999 = vpop.permute.xlu0 %1998
        %v2001 = vadd.f32 %v1969, %v1999
        %s2002 = sld [smem:[#allocation9 + $0x21]]
        %v2003 = vstv %s2002
        %v2004 = vmul.f32 %v2003, %v1921
        %2006 = vrot.lane.b32.xlu0 %v2004, 125
        %v2007 = vpop.permute.xlu0 %2006
        %v2009 = vadd.f32 %v1977, %v2007
        %s2010 = sld [smem:[#allocation9 + $0x85]]
        %v2011 = vstv %s2010
        %v2012 = vmul.f32 %v2011, %v1921
        %2014 = vrot.lane.b32.xlu0 %v2012, 125
        %v2015 = vpop.permute.xlu0 %2014
        %v2017 = vadd.f32 %v1985, %v2015
        %s2018 = sld [smem:[#allocation9 + $0xe9]]
        %v2019 = vstv %s2018
        %v2020 = vmul.f32 %v2019, %v1921
        %2022 = vrot.lane.b32.xlu0 %v2020, 125
        %v2023 = vpop.permute.xlu0 %2022
        %v2025 = vadd.f32 %v1993, %v2023
        %s2026 = sld [smem:[#allocation9 + $0x14d]]
        %v2027 = vstv %s2026
        %v2028 = vmul.f32 %v2027, %v1921
        %2030 = vrot.lane.b32.xlu0 %v2028, 125
        %v2031 = vpop.permute.xlu0 %2030
        %v2033 = vadd.f32 %v2001, %v2031
        %s2034 = sld [smem:[#allocation9 + $0x22]]
        %v2035 = vstv %s2034
        %v2036 = vmul.f32 %v2035, %v1921
        %2038 = vrot.lane.b32.xlu0 %v2036, 124
        %v2039 = vpop.permute.xlu0 %2038
        %v2041 = vadd.f32 %v2009, %v2039
        %s2042 = sld [smem:[#allocation9 + $0x86]]
        %v2043 = vstv %s2042
        %v2044 = vmul.f32 %v2043, %v1921
        %2046 = vrot.lane.b32.xlu0 %v2044, 124
        %v2047 = vpop.permute.xlu0 %2046
        %v2049 = vadd.f32 %v2017, %v2047
        %s2050 = sld [smem:[#allocation9 + $0xea]]
        %v2051 = vstv %s2050
        %v2052 = vmul.f32 %v2051, %v1921
        %2054 = vrot.lane.b32.xlu0 %v2052, 124
        %v2055 = vpop.permute.xlu0 %2054
        %v2057 = vadd.f32 %v2025, %v2055
        %s2058 = sld [smem:[#allocation9 + $0x14e]]
        %v2059 = vstv %s2058
        %v2060 = vmul.f32 %v2059, %v1921
        %2062 = vrot.lane.b32.xlu0 %v2060, 124
        %v2063 = vpop.permute.xlu0 %2062
        %v2065 = vadd.f32 %v2033, %v2063
        %v2066 = vld [vmem:[%s1033 + $0x2] sm:$0x3]
        %s2067 = sld [smem:[#allocation9 + $0x23]]
        %v2068 = vstv %s2067
        %v2069 = vmul.f32 %v2068, %v2066
        %v2070 = vadd.f32 %v2041, %v2069
        %s2071 = sld [smem:[#allocation9 + $0x87]]
        %v2072 = vstv %s2071
        %v2073 = vmul.f32 %v2072, %v2066
        %v2074 = vadd.f32 %v2049, %v2073
        %s2075 = sld [smem:[#allocation9 + $0xeb]]
        %v2076 = vstv %s2075
        %v2077 = vmul.f32 %v2076, %v2066
        %v2078 = vadd.f32 %v2057, %v2077
        %s2079 = sld [smem:[#allocation9 + $0x14f]]
        %v2080 = vstv %s2079
        %v2081 = vmul.f32 %v2080, %v2066
        %v2082 = vadd.f32 %v2065, %v2081
        %s2083 = sld [smem:[#allocation9 + $0x24]]
        %v2084 = vstv %s2083
        %v2085 = vmul.f32 %v2084, %v2066
        %2087 = vrot.lane.b32.xlu0 %v2085, 127
        %v2088 = vpop.permute.xlu0 %2087
        %v2090 = vadd.f32 %v2070, %v2088
        %s2091 = sld [smem:[#allocation9 + $0x88]]
        %v2092 = vstv %s2091
        %v2093 = vmul.f32 %v2092, %v2066
        %2095 = vrot.lane.b32.xlu0 %v2093, 127
        %v2096 = vpop.permute.xlu0 %2095
        %v2098 = vadd.f32 %v2074, %v2096
        %s2099 = sld [smem:[#allocation9 + $0xec]]
        %v2100 = vstv %s2099
        %v2101 = vmul.f32 %v2100, %v2066
        %2103 = vrot.lane.b32.xlu0 %v2101, 127
        %v2104 = vpop.permute.xlu0 %2103
        %v2106 = vadd.f32 %v2078, %v2104
        %s2107 = sld [smem:[#allocation9 + $0x150]]
        %v2108 = vstv %s2107
        %v2109 = vmul.f32 %v2108, %v2066
        %2111 = vrot.lane.b32.xlu0 %v2109, 127
        %v2112 = vpop.permute.xlu0 %2111
        %v2114 = vadd.f32 %v2082, %v2112
        %s2115 = sld [smem:[#allocation9 + $0x25]]
        %v2116 = vstv %s2115
        %v2117 = vmul.f32 %v2116, %v2066
        %2119 = vrot.lane.b32.xlu0 %v2117, 126
        %v2120 = vpop.permute.xlu0 %2119
        %v2122 = vadd.f32 %v2090, %v2120
        %s2123 = sld [smem:[#allocation9 + $0x89]]
        %v2124 = vstv %s2123
        %v2125 = vmul.f32 %v2124, %v2066
        %2127 = vrot.lane.b32.xlu0 %v2125, 126
        %v2128 = vpop.permute.xlu0 %2127
        %v2130 = vadd.f32 %v2098, %v2128
        %s2131 = sld [smem:[#allocation9 + $0xed]]
        %v2132 = vstv %s2131
        %v2133 = vmul.f32 %v2132, %v2066
        %2135 = vrot.lane.b32.xlu0 %v2133, 126
        %v2136 = vpop.permute.xlu0 %2135
        %v2138 = vadd.f32 %v2106, %v2136
        %s2139 = sld [smem:[#allocation9 + $0x151]]
        %v2140 = vstv %s2139
        %v2141 = vmul.f32 %v2140, %v2066
        %2143 = vrot.lane.b32.xlu0 %v2141, 126
        %v2144 = vpop.permute.xlu0 %2143
        %v2146 = vadd.f32 %v2114, %v2144
        %s2147 = sld [smem:[#allocation9 + $0x26]]
        %v2148 = vstv %s2147
        %v2149 = vmul.f32 %v2148, %v2066
        %2151 = vrot.lane.b32.xlu0 %v2149, 125
        %v2152 = vpop.permute.xlu0 %2151
        %v2154 = vadd.f32 %v2122, %v2152
        %s2155 = sld [smem:[#allocation9 + $0x8a]]
        %v2156 = vstv %s2155
        %v2157 = vmul.f32 %v2156, %v2066
        %2159 = vrot.lane.b32.xlu0 %v2157, 125
        %v2160 = vpop.permute.xlu0 %2159
        %v2162 = vadd.f32 %v2130, %v2160
        %s2163 = sld [smem:[#allocation9 + $0xee]]
        %v2164 = vstv %s2163
        %v2165 = vmul.f32 %v2164, %v2066
        %2167 = vrot.lane.b32.xlu0 %v2165, 125
        %v2168 = vpop.permute.xlu0 %2167
        %v2170 = vadd.f32 %v2138, %v2168
        %s2171 = sld [smem:[#allocation9 + $0x152]]
        %v2172 = vstv %s2171
        %v2173 = vmul.f32 %v2172, %v2066
        %2175 = vrot.lane.b32.xlu0 %v2173, 125
        %v2176 = vpop.permute.xlu0 %2175
        %v2178 = vadd.f32 %v2146, %v2176
        %s2179 = sld [smem:[#allocation9 + $0x27]]
        %v2180 = vstv %s2179
        %v2181 = vmul.f32 %v2180, %v2066
        %2183 = vrot.lane.b32.xlu0 %v2181, 124
        %v2184 = vpop.permute.xlu0 %2183
        %v2186 = vadd.f32 %v2154, %v2184
        %s2187 = sld [smem:[#allocation9 + $0x8b]]
        %v2188 = vstv %s2187
        %v2189 = vmul.f32 %v2188, %v2066
        %2191 = vrot.lane.b32.xlu0 %v2189, 124
        %v2192 = vpop.permute.xlu0 %2191
        %v2194 = vadd.f32 %v2162, %v2192
        %s2195 = sld [smem:[#allocation9 + $0xef]]
        %v2196 = vstv %s2195
        %v2197 = vmul.f32 %v2196, %v2066
        %2199 = vrot.lane.b32.xlu0 %v2197, 124
        %v2200 = vpop.permute.xlu0 %2199
        %v2202 = vadd.f32 %v2170, %v2200
        %s2203 = sld [smem:[#allocation9 + $0x153]]
        %v2204 = vstv %s2203
        %v2205 = vmul.f32 %v2204, %v2066
        %2207 = vrot.lane.b32.xlu0 %v2205, 124
        %v2208 = vpop.permute.xlu0 %2207
        %v2210 = vadd.f32 %v2178, %v2208
        %v2211 = vld [vmem:[%s1033 + $0x3] sm:$0x3]
        %s2212 = sld [smem:[#allocation9 + $0x28]]
        %v2213 = vstv %s2212
        %v2214 = vmul.f32 %v2213, %v2211
        %v2215 = vadd.f32 %v2186, %v2214
        %s2216 = sld [smem:[#allocation9 + $0x8c]]
        %v2217 = vstv %s2216
        %v2218 = vmul.f32 %v2217, %v2211
        %v2219 = vadd.f32 %v2194, %v2218
        %s2220 = sld [smem:[#allocation9 + $0xf0]]
        %v2221 = vstv %s2220
        %v2222 = vmul.f32 %v2221, %v2211
        %v2223 = vadd.f32 %v2202, %v2222
        %s2224 = sld [smem:[#allocation9 + $0x154]]
        %v2225 = vstv %s2224
        %v2226 = vmul.f32 %v2225, %v2211
        %v2227 = vadd.f32 %v2210, %v2226
        %s2228 = sld [smem:[#allocation9 + $0x29]]
        %v2229 = vstv %s2228
        %v2230 = vmul.f32 %v2229, %v2211
        %2232 = vrot.lane.b32.xlu0 %v2230, 127
        %v2233 = vpop.permute.xlu0 %2232
        %v2235 = vadd.f32 %v2215, %v2233
        %s2236 = sld [smem:[#allocation9 + $0x8d]]
        %v2237 = vstv %s2236
        %v2238 = vmul.f32 %v2237, %v2211
        %2240 = vrot.lane.b32.xlu0 %v2238, 127
        %v2241 = vpop.permute.xlu0 %2240
        %v2243 = vadd.f32 %v2219, %v2241
        %s2244 = sld [smem:[#allocation9 + $0xf1]]
        %v2245 = vstv %s2244
        %v2246 = vmul.f32 %v2245, %v2211
        %2248 = vrot.lane.b32.xlu0 %v2246, 127
        %v2249 = vpop.permute.xlu0 %2248
        %v2251 = vadd.f32 %v2223, %v2249
        %s2252 = sld [smem:[#allocation9 + $0x155]]
        %v2253 = vstv %s2252
        %v2254 = vmul.f32 %v2253, %v2211
        %2256 = vrot.lane.b32.xlu0 %v2254, 127
        %v2257 = vpop.permute.xlu0 %2256
        %v2259 = vadd.f32 %v2227, %v2257
        %s2260 = sld [smem:[#allocation9 + $0x2a]]
        %v2261 = vstv %s2260
        %v2262 = vmul.f32 %v2261, %v2211
        %2264 = vrot.lane.b32.xlu0 %v2262, 126
        %v2265 = vpop.permute.xlu0 %2264
        %v2267 = vadd.f32 %v2235, %v2265
        %s2268 = sld [smem:[#allocation9 + $0x8e]]
        %v2269 = vstv %s2268
        %v2270 = vmul.f32 %v2269, %v2211
        %2272 = vrot.lane.b32.xlu0 %v2270, 126
        %v2273 = vpop.permute.xlu0 %2272
        %v2275 = vadd.f32 %v2243, %v2273
        %s2276 = sld [smem:[#allocation9 + $0xf2]]
        %v2277 = vstv %s2276
        %v2278 = vmul.f32 %v2277, %v2211
        %2280 = vrot.lane.b32.xlu0 %v2278, 126
        %v2281 = vpop.permute.xlu0 %2280
        %v2283 = vadd.f32 %v2251, %v2281
        %s2284 = sld [smem:[#allocation9 + $0x156]]
        %v2285 = vstv %s2284
        %v2286 = vmul.f32 %v2285, %v2211
        %2288 = vrot.lane.b32.xlu0 %v2286, 126
        %v2289 = vpop.permute.xlu0 %2288
        %v2291 = vadd.f32 %v2259, %v2289
        %s2292 = sld [smem:[#allocation9 + $0x2b]]
        %v2293 = vstv %s2292
        %v2294 = vmul.f32 %v2293, %v2211
        %2296 = vrot.lane.b32.xlu0 %v2294, 125
        %v2297 = vpop.permute.xlu0 %2296
        %v2299 = vadd.f32 %v2267, %v2297
        %s2300 = sld [smem:[#allocation9 + $0x8f]]
        %v2301 = vstv %s2300
        %v2302 = vmul.f32 %v2301, %v2211
        %2304 = vrot.lane.b32.xlu0 %v2302, 125
        %v2305 = vpop.permute.xlu0 %2304
        %v2307 = vadd.f32 %v2275, %v2305
        %s2308 = sld [smem:[#allocation9 + $0xf3]]
        %v2309 = vstv %s2308
        %v2310 = vmul.f32 %v2309, %v2211
        %2312 = vrot.lane.b32.xlu0 %v2310, 125
        %v2313 = vpop.permute.xlu0 %2312
        %v2315 = vadd.f32 %v2283, %v2313
        %s2316 = sld [smem:[#allocation9 + $0x157]]
        %v2317 = vstv %s2316
        %v2318 = vmul.f32 %v2317, %v2211
        %2320 = vrot.lane.b32.xlu0 %v2318, 125
        %v2321 = vpop.permute.xlu0 %2320
        %v2323 = vadd.f32 %v2291, %v2321
        %s2324 = sld [smem:[#allocation9 + $0x2c]]
        %v2325 = vstv %s2324
        %v2326 = vmul.f32 %v2325, %v2211
        %2328 = vrot.lane.b32.xlu0 %v2326, 124
        %v2329 = vpop.permute.xlu0 %2328
        %v2331 = vadd.f32 %v2299, %v2329
        %s2332 = sld [smem:[#allocation9 + $0x90]]
        %v2333 = vstv %s2332
        %v2334 = vmul.f32 %v2333, %v2211
        %2336 = vrot.lane.b32.xlu0 %v2334, 124
        %v2337 = vpop.permute.xlu0 %2336
        %v2339 = vadd.f32 %v2307, %v2337
        %s2340 = sld [smem:[#allocation9 + $0xf4]]
        %v2341 = vstv %s2340
        %v2342 = vmul.f32 %v2341, %v2211
        %2344 = vrot.lane.b32.xlu0 %v2342, 124
        %v2345 = vpop.permute.xlu0 %2344
        %v2347 = vadd.f32 %v2315, %v2345
        %s2348 = sld [smem:[#allocation9 + $0x158]]
        %v2349 = vstv %s2348
        %v2350 = vmul.f32 %v2349, %v2211
        %2352 = vrot.lane.b32.xlu0 %v2350, 124
        %v2353 = vpop.permute.xlu0 %2352
        %v2355 = vadd.f32 %v2323, %v2353
        %v2356 = vld [vmem:[%s1033 + $0x4] sm:$0x3]
        %s2357 = sld [smem:[#allocation9 + $0x2d]]
        %v2358 = vstv %s2357
        %v2359 = vmul.f32 %v2358, %v2356
        %v2360 = vadd.f32 %v2331, %v2359
        %s2361 = sld [smem:[#allocation9 + $0x91]]
        %v2362 = vstv %s2361
        %v2363 = vmul.f32 %v2362, %v2356
        %v2364 = vadd.f32 %v2339, %v2363
        %s2365 = sld [smem:[#allocation9 + $0xf5]]
        %v2366 = vstv %s2365
        %v2367 = vmul.f32 %v2366, %v2356
        %v2368 = vadd.f32 %v2347, %v2367
        %s2369 = sld [smem:[#allocation9 + $0x159]]
        %v2370 = vstv %s2369
        %v2371 = vmul.f32 %v2370, %v2356
        %v2372 = vadd.f32 %v2355, %v2371
        %s2373 = sld [smem:[#allocation9 + $0x2e]]
        %v2374 = vstv %s2373
        %v2375 = vmul.f32 %v2374, %v2356
        %2377 = vrot.lane.b32.xlu0 %v2375, 127
        %v2378 = vpop.permute.xlu0 %2377
        %v2380 = vadd.f32 %v2360, %v2378
        %s2381 = sld [smem:[#allocation9 + $0x92]]
        %v2382 = vstv %s2381
        %v2383 = vmul.f32 %v2382, %v2356
        %2385 = vrot.lane.b32.xlu0 %v2383, 127
        %v2386 = vpop.permute.xlu0 %2385
        %v2388 = vadd.f32 %v2364, %v2386
        %s2389 = sld [smem:[#allocation9 + $0xf6]]
        %v2390 = vstv %s2389
        %v2391 = vmul.f32 %v2390, %v2356
        %2393 = vrot.lane.b32.xlu0 %v2391, 127
        %v2394 = vpop.permute.xlu0 %2393
        %v2396 = vadd.f32 %v2368, %v2394
        %s2397 = sld [smem:[#allocation9 + $0x15a]]
        %v2398 = vstv %s2397
        %v2399 = vmul.f32 %v2398, %v2356
        %2401 = vrot.lane.b32.xlu0 %v2399, 127
        %v2402 = vpop.permute.xlu0 %2401
        %v2404 = vadd.f32 %v2372, %v2402
        %s2405 = sld [smem:[#allocation9 + $0x2f]]
        %v2406 = vstv %s2405
        %v2407 = vmul.f32 %v2406, %v2356
        %2409 = vrot.lane.b32.xlu0 %v2407, 126
        %v2410 = vpop.permute.xlu0 %2409
        %v2412 = vadd.f32 %v2380, %v2410
        %s2413 = sld [smem:[#allocation9 + $0x93]]
        %v2414 = vstv %s2413
        %v2415 = vmul.f32 %v2414, %v2356
        %2417 = vrot.lane.b32.xlu0 %v2415, 126
        %v2418 = vpop.permute.xlu0 %2417
        %v2420 = vadd.f32 %v2388, %v2418
        %s2421 = sld [smem:[#allocation9 + $0xf7]]
        %v2422 = vstv %s2421
        %v2423 = vmul.f32 %v2422, %v2356
        %2425 = vrot.lane.b32.xlu0 %v2423, 126
        %v2426 = vpop.permute.xlu0 %2425
        %v2428 = vadd.f32 %v2396, %v2426
        %s2429 = sld [smem:[#allocation9 + $0x15b]]
        %v2430 = vstv %s2429
        %v2431 = vmul.f32 %v2430, %v2356
        %2433 = vrot.lane.b32.xlu0 %v2431, 126
        %v2434 = vpop.permute.xlu0 %2433
        %v2436 = vadd.f32 %v2404, %v2434
        %s2437 = sld [smem:[#allocation9 + $0x30]]
        %v2438 = vstv %s2437
        %v2439 = vmul.f32 %v2438, %v2356
        %2441 = vrot.lane.b32.xlu0 %v2439, 125
        %v2442 = vpop.permute.xlu0 %2441
        %v2444 = vadd.f32 %v2412, %v2442
        %s2445 = sld [smem:[#allocation9 + $0x94]]
        %v2446 = vstv %s2445
        %v2447 = vmul.f32 %v2446, %v2356
        %2449 = vrot.lane.b32.xlu0 %v2447, 125
        %v2450 = vpop.permute.xlu0 %2449
        %v2452 = vadd.f32 %v2420, %v2450
        %s2453 = sld [smem:[#allocation9 + $0xf8]]
        %v2454 = vstv %s2453
        %v2455 = vmul.f32 %v2454, %v2356
        %2457 = vrot.lane.b32.xlu0 %v2455, 125
        %v2458 = vpop.permute.xlu0 %2457
        %v2460 = vadd.f32 %v2428, %v2458
        %s2461 = sld [smem:[#allocation9 + $0x15c]]
        %v2462 = vstv %s2461
        %v2463 = vmul.f32 %v2462, %v2356
        %2465 = vrot.lane.b32.xlu0 %v2463, 125
        %v2466 = vpop.permute.xlu0 %2465
        %v2468 = vadd.f32 %v2436, %v2466
        %s2469 = sld [smem:[#allocation9 + $0x31]]
        %v2470 = vstv %s2469
        %v2471 = vmul.f32 %v2470, %v2356
        %2473 = vrot.lane.b32.xlu0 %v2471, 124
        %v2474 = vpop.permute.xlu0 %2473
        %v2476 = vadd.f32 %v2444, %v2474
        %s2477 = sld [smem:[#allocation9 + $0x95]]
        %v2478 = vstv %s2477
        %v2479 = vmul.f32 %v2478, %v2356
        %2481 = vrot.lane.b32.xlu0 %v2479, 124
        %v2482 = vpop.permute.xlu0 %2481
        %v2484 = vadd.f32 %v2452, %v2482
        %s2485 = sld [smem:[#allocation9 + $0xf9]]
        %v2486 = vstv %s2485
        %v2487 = vmul.f32 %v2486, %v2356
        %2489 = vrot.lane.b32.xlu0 %v2487, 124
        %v2490 = vpop.permute.xlu0 %2489
        %v2492 = vadd.f32 %v2460, %v2490
        %s2493 = sld [smem:[#allocation9 + $0x15d]]
        %v2494 = vstv %s2493
        %v2495 = vmul.f32 %v2494, %v2356
        %2497 = vrot.lane.b32.xlu0 %v2495, 124
        %v2498 = vpop.permute.xlu0 %2497
        %v2500 = vadd.f32 %v2468, %v2498
        %v2501 = vld [vmem:[%s1041] sm:$0x3]
        %s2502 = sld [smem:[#allocation9 + $0x32]]
        %v2503 = vstv %s2502
        %v2504 = vmul.f32 %v2503, %v2501
        %v2505 = vadd.f32 %v2476, %v2504
        %s2506 = sld [smem:[#allocation9 + $0x96]]
        %v2507 = vstv %s2506
        %v2508 = vmul.f32 %v2507, %v2501
        %v2509 = vadd.f32 %v2484, %v2508
        %s2510 = sld [smem:[#allocation9 + $0xfa]]
        %v2511 = vstv %s2510
        %v2512 = vmul.f32 %v2511, %v2501
        %v2513 = vadd.f32 %v2492, %v2512
        %s2514 = sld [smem:[#allocation9 + $0x15e]]
        %v2515 = vstv %s2514
        %v2516 = vmul.f32 %v2515, %v2501
        %v2517 = vadd.f32 %v2500, %v2516
        %s2518 = sld [smem:[#allocation9 + $0x33]]
        %v2519 = vstv %s2518
        %v2520 = vmul.f32 %v2519, %v2501
        %2522 = vrot.lane.b32.xlu0 %v2520, 127
        %v2523 = vpop.permute.xlu0 %2522
        %v2525 = vadd.f32 %v2505, %v2523
        %s2526 = sld [smem:[#allocation9 + $0x97]]
        %v2527 = vstv %s2526
        %v2528 = vmul.f32 %v2527, %v2501
        %2530 = vrot.lane.b32.xlu0 %v2528, 127
        %v2531 = vpop.permute.xlu0 %2530
        %v2533 = vadd.f32 %v2509, %v2531
        %s2534 = sld [smem:[#allocation9 + $0xfb]]
        %v2535 = vstv %s2534
        %v2536 = vmul.f32 %v2535, %v2501
        %2538 = vrot.lane.b32.xlu0 %v2536, 127
        %v2539 = vpop.permute.xlu0 %2538
        %v2541 = vadd.f32 %v2513, %v2539
        %s2542 = sld [smem:[#allocation9 + $0x15f]]
        %v2543 = vstv %s2542
        %v2544 = vmul.f32 %v2543, %v2501
        %2546 = vrot.lane.b32.xlu0 %v2544, 127
        %v2547 = vpop.permute.xlu0 %2546
        %v2549 = vadd.f32 %v2517, %v2547
        %s2550 = sld [smem:[#allocation9 + $0x34]]
        %v2551 = vstv %s2550
        %v2552 = vmul.f32 %v2551, %v2501
        %2554 = vrot.lane.b32.xlu0 %v2552, 126
        %v2555 = vpop.permute.xlu0 %2554
        %v2557 = vadd.f32 %v2525, %v2555
        %s2558 = sld [smem:[#allocation9 + $0x98]]
        %v2559 = vstv %s2558
        %v2560 = vmul.f32 %v2559, %v2501
        %2562 = vrot.lane.b32.xlu0 %v2560, 126
        %v2563 = vpop.permute.xlu0 %2562
        %v2565 = vadd.f32 %v2533, %v2563
        %s2566 = sld [smem:[#allocation9 + $0xfc]]
        %v2567 = vstv %s2566
        %v2568 = vmul.f32 %v2567, %v2501
        %2570 = vrot.lane.b32.xlu0 %v2568, 126
        %v2571 = vpop.permute.xlu0 %2570
        %v2573 = vadd.f32 %v2541, %v2571
        %s2574 = sld [smem:[#allocation9 + $0x160]]
        %v2575 = vstv %s2574
        %v2576 = vmul.f32 %v2575, %v2501
        %2578 = vrot.lane.b32.xlu0 %v2576, 126
        %v2579 = vpop.permute.xlu0 %2578
        %v2581 = vadd.f32 %v2549, %v2579
        %s2582 = sld [smem:[#allocation9 + $0x35]]
        %v2583 = vstv %s2582
        %v2584 = vmul.f32 %v2583, %v2501
        %2586 = vrot.lane.b32.xlu0 %v2584, 125
        %v2587 = vpop.permute.xlu0 %2586
        %v2589 = vadd.f32 %v2557, %v2587
        %s2590 = sld [smem:[#allocation9 + $0x99]]
        %v2591 = vstv %s2590
        %v2592 = vmul.f32 %v2591, %v2501
        %2594 = vrot.lane.b32.xlu0 %v2592, 125
        %v2595 = vpop.permute.xlu0 %2594
        %v2597 = vadd.f32 %v2565, %v2595
        %s2598 = sld [smem:[#allocation9 + $0xfd]]
        %v2599 = vstv %s2598
        %v2600 = vmul.f32 %v2599, %v2501
        %2602 = vrot.lane.b32.xlu0 %v2600, 125
        %v2603 = vpop.permute.xlu0 %2602
        %v2605 = vadd.f32 %v2573, %v2603
        %s2606 = sld [smem:[#allocation9 + $0x161]]
        %v2607 = vstv %s2606
        %v2608 = vmul.f32 %v2607, %v2501
        %2610 = vrot.lane.b32.xlu0 %v2608, 125
        %v2611 = vpop.permute.xlu0 %2610
        %v2613 = vadd.f32 %v2581, %v2611
        %s2614 = sld [smem:[#allocation9 + $0x36]]
        %v2615 = vstv %s2614
        %v2616 = vmul.f32 %v2615, %v2501
        %2618 = vrot.lane.b32.xlu0 %v2616, 124
        %v2619 = vpop.permute.xlu0 %2618
        %v2621 = vadd.f32 %v2589, %v2619
        %s2622 = sld [smem:[#allocation9 + $0x9a]]
        %v2623 = vstv %s2622
        %v2624 = vmul.f32 %v2623, %v2501
        %2626 = vrot.lane.b32.xlu0 %v2624, 124
        %v2627 = vpop.permute.xlu0 %2626
        %v2629 = vadd.f32 %v2597, %v2627
        %s2630 = sld [smem:[#allocation9 + $0xfe]]
        %v2631 = vstv %s2630
        %v2632 = vmul.f32 %v2631, %v2501
        %2634 = vrot.lane.b32.xlu0 %v2632, 124
        %v2635 = vpop.permute.xlu0 %2634
        %v2637 = vadd.f32 %v2605, %v2635
        %s2638 = sld [smem:[#allocation9 + $0x162]]
        %v2639 = vstv %s2638
        %v2640 = vmul.f32 %v2639, %v2501
        %2642 = vrot.lane.b32.xlu0 %v2640, 124
        %v2643 = vpop.permute.xlu0 %2642
        %v2645 = vadd.f32 %v2613, %v2643
        %v2646 = vld [vmem:[%s1041 + $0x1] sm:$0x3]
        %s2647 = sld [smem:[#allocation9 + $0x37]]
        %v2648 = vstv %s2647
        %v2649 = vmul.f32 %v2648, %v2646
        %v2650 = vadd.f32 %v2621, %v2649
        %s2651 = sld [smem:[#allocation9 + $0x9b]]
        %v2652 = vstv %s2651
        %v2653 = vmul.f32 %v2652, %v2646
        %v2654 = vadd.f32 %v2629, %v2653
        %s2655 = sld [smem:[#allocation9 + $0xff]]
        %v2656 = vstv %s2655
        %v2657 = vmul.f32 %v2656, %v2646
        %v2658 = vadd.f32 %v2637, %v2657
        %s2659 = sld [smem:[#allocation9 + $0x163]]
        %v2660 = vstv %s2659
        %v2661 = vmul.f32 %v2660, %v2646
        %v2662 = vadd.f32 %v2645, %v2661
        %s2663 = sld [smem:[#allocation9 + $0x38]]
        %v2664 = vstv %s2663
        %v2665 = vmul.f32 %v2664, %v2646
        %2667 = vrot.lane.b32.xlu0 %v2665, 127
        %v2668 = vpop.permute.xlu0 %2667
        %v2670 = vadd.f32 %v2650, %v2668
        %s2671 = sld [smem:[#allocation9 + $0x9c]]
        %v2672 = vstv %s2671
        %v2673 = vmul.f32 %v2672, %v2646
        %2675 = vrot.lane.b32.xlu0 %v2673, 127
        %v2676 = vpop.permute.xlu0 %2675
        %v2678 = vadd.f32 %v2654, %v2676
        %s2679 = sld [smem:[#allocation9 + $0x100]]
        %v2680 = vstv %s2679
        %v2681 = vmul.f32 %v2680, %v2646
        %2683 = vrot.lane.b32.xlu0 %v2681, 127
        %v2684 = vpop.permute.xlu0 %2683
        %v2686 = vadd.f32 %v2658, %v2684
        %s2687 = sld [smem:[#allocation9 + $0x164]]
        %v2688 = vstv %s2687
        %v2689 = vmul.f32 %v2688, %v2646
        %2691 = vrot.lane.b32.xlu0 %v2689, 127
        %v2692 = vpop.permute.xlu0 %2691
        %v2694 = vadd.f32 %v2662, %v2692
        %s2695 = sld [smem:[#allocation9 + $0x39]]
        %v2696 = vstv %s2695
        %v2697 = vmul.f32 %v2696, %v2646
        %2699 = vrot.lane.b32.xlu0 %v2697, 126
        %v2700 = vpop.permute.xlu0 %2699
        %v2702 = vadd.f32 %v2670, %v2700
        %s2703 = sld [smem:[#allocation9 + $0x9d]]
        %v2704 = vstv %s2703
        %v2705 = vmul.f32 %v2704, %v2646
        %2707 = vrot.lane.b32.xlu0 %v2705, 126
        %v2708 = vpop.permute.xlu0 %2707
        %v2710 = vadd.f32 %v2678, %v2708
        %s2711 = sld [smem:[#allocation9 + $0x101]]
        %v2712 = vstv %s2711
        %v2713 = vmul.f32 %v2712, %v2646
        %2715 = vrot.lane.b32.xlu0 %v2713, 126
        %v2716 = vpop.permute.xlu0 %2715
        %v2718 = vadd.f32 %v2686, %v2716
        %s2719 = sld [smem:[#allocation9 + $0x165]]
        %v2720 = vstv %s2719
        %v2721 = vmul.f32 %v2720, %v2646
        %2723 = vrot.lane.b32.xlu0 %v2721, 126
        %v2724 = vpop.permute.xlu0 %2723
        %v2726 = vadd.f32 %v2694, %v2724
        %s2727 = sld [smem:[#allocation9 + $0x3a]]
        %v2728 = vstv %s2727
        %v2729 = vmul.f32 %v2728, %v2646
        %2731 = vrot.lane.b32.xlu0 %v2729, 125
        %v2732 = vpop.permute.xlu0 %2731
        %v2734 = vadd.f32 %v2702, %v2732
        %s2735 = sld [smem:[#allocation9 + $0x9e]]
        %v2736 = vstv %s2735
        %v2737 = vmul.f32 %v2736, %v2646
        %2739 = vrot.lane.b32.xlu0 %v2737, 125
        %v2740 = vpop.permute.xlu0 %2739
        %v2742 = vadd.f32 %v2710, %v2740
        %s2743 = sld [smem:[#allocation9 + $0x102]]
        %v2744 = vstv %s2743
        %v2745 = vmul.f32 %v2744, %v2646
        %2747 = vrot.lane.b32.xlu0 %v2745, 125
        %v2748 = vpop.permute.xlu0 %2747
        %v2750 = vadd.f32 %v2718, %v2748
        %s2751 = sld [smem:[#allocation9 + $0x166]]
        %v2752 = vstv %s2751
        %v2753 = vmul.f32 %v2752, %v2646
        %2755 = vrot.lane.b32.xlu0 %v2753, 125
        %v2756 = vpop.permute.xlu0 %2755
        %v2758 = vadd.f32 %v2726, %v2756
        %s2759 = sld [smem:[#allocation9 + $0x3b]]
        %v2760 = vstv %s2759
        %v2761 = vmul.f32 %v2760, %v2646
        %2763 = vrot.lane.b32.xlu0 %v2761, 124
        %v2764 = vpop.permute.xlu0 %2763
        %v2766 = vadd.f32 %v2734, %v2764
        %s2767 = sld [smem:[#allocation9 + $0x9f]]
        %v2768 = vstv %s2767
        %v2769 = vmul.f32 %v2768, %v2646
        %2771 = vrot.lane.b32.xlu0 %v2769, 124
        %v2772 = vpop.permute.xlu0 %2771
        %v2774 = vadd.f32 %v2742, %v2772
        %s2775 = sld [smem:[#allocation9 + $0x103]]
        %v2776 = vstv %s2775
        %v2777 = vmul.f32 %v2776, %v2646
        %2779 = vrot.lane.b32.xlu0 %v2777, 124
        %v2780 = vpop.permute.xlu0 %2779
        %v2782 = vadd.f32 %v2750, %v2780
        %s2783 = sld [smem:[#allocation9 + $0x167]]
        %v2784 = vstv %s2783
        %v2785 = vmul.f32 %v2784, %v2646
        %2787 = vrot.lane.b32.xlu0 %v2785, 124
        %v2788 = vpop.permute.xlu0 %2787
        %v2790 = vadd.f32 %v2758, %v2788
        %v2791 = vld [vmem:[%s1041 + $0x2] sm:$0x3]
        %s2792 = sld [smem:[#allocation9 + $0x3c]]
        %v2793 = vstv %s2792
        %v2794 = vmul.f32 %v2793, %v2791
        %v2795 = vadd.f32 %v2766, %v2794
        %s2796 = sld [smem:[#allocation9 + $0xa0]]
        %v2797 = vstv %s2796
        %v2798 = vmul.f32 %v2797, %v2791
        %v2799 = vadd.f32 %v2774, %v2798
        %s2800 = sld [smem:[#allocation9 + $0x104]]
        %v2801 = vstv %s2800
        %v2802 = vmul.f32 %v2801, %v2791
        %v2803 = vadd.f32 %v2782, %v2802
        %s2804 = sld [smem:[#allocation9 + $0x168]]
        %v2805 = vstv %s2804
        %v2806 = vmul.f32 %v2805, %v2791
        %v2807 = vadd.f32 %v2790, %v2806
        %s2808 = sld [smem:[#allocation9 + $0x3d]]
        %v2809 = vstv %s2808
        %v2810 = vmul.f32 %v2809, %v2791
        %2812 = vrot.lane.b32.xlu0 %v2810, 127
        %v2813 = vpop.permute.xlu0 %2812
        %v2815 = vadd.f32 %v2795, %v2813
        %s2816 = sld [smem:[#allocation9 + $0xa1]]
        %v2817 = vstv %s2816
        %v2818 = vmul.f32 %v2817, %v2791
        %2820 = vrot.lane.b32.xlu0 %v2818, 127
        %v2821 = vpop.permute.xlu0 %2820
        %v2823 = vadd.f32 %v2799, %v2821
        %s2824 = sld [smem:[#allocation9 + $0x105]]
        %v2825 = vstv %s2824
        %v2826 = vmul.f32 %v2825, %v2791
        %2828 = vrot.lane.b32.xlu0 %v2826, 127
        %v2829 = vpop.permute.xlu0 %2828
        %v2831 = vadd.f32 %v2803, %v2829
        %s2832 = sld [smem:[#allocation9 + $0x169]]
        %v2833 = vstv %s2832
        %v2834 = vmul.f32 %v2833, %v2791
        %2836 = vrot.lane.b32.xlu0 %v2834, 127
        %v2837 = vpop.permute.xlu0 %2836
        %v2839 = vadd.f32 %v2807, %v2837
        %s2840 = sld [smem:[#allocation9 + $0x3e]]
        %v2841 = vstv %s2840
        %v2842 = vmul.f32 %v2841, %v2791
        %2844 = vrot.lane.b32.xlu0 %v2842, 126
        %v2845 = vpop.permute.xlu0 %2844
        %v2847 = vadd.f32 %v2815, %v2845
        %s2848 = sld [smem:[#allocation9 + $0xa2]]
        %v2849 = vstv %s2848
        %v2850 = vmul.f32 %v2849, %v2791
        %2852 = vrot.lane.b32.xlu0 %v2850, 126
        %v2853 = vpop.permute.xlu0 %2852
        %v2855 = vadd.f32 %v2823, %v2853
        %s2856 = sld [smem:[#allocation9 + $0x106]]
        %v2857 = vstv %s2856
        %v2858 = vmul.f32 %v2857, %v2791
        %2860 = vrot.lane.b32.xlu0 %v2858, 126
        %v2861 = vpop.permute.xlu0 %2860
        %v2863 = vadd.f32 %v2831, %v2861
        %s2864 = sld [smem:[#allocation9 + $0x16a]]
        %v2865 = vstv %s2864
        %v2866 = vmul.f32 %v2865, %v2791
        %2868 = vrot.lane.b32.xlu0 %v2866, 126
        %v2869 = vpop.permute.xlu0 %2868
        %v2871 = vadd.f32 %v2839, %v2869
        %s2872 = sld [smem:[#allocation9 + $0x3f]]
        %v2873 = vstv %s2872
        %v2874 = vmul.f32 %v2873, %v2791
        %2876 = vrot.lane.b32.xlu0 %v2874, 125
        %v2877 = vpop.permute.xlu0 %2876
        %v2879 = vadd.f32 %v2847, %v2877
        %s2880 = sld [smem:[#allocation9 + $0xa3]]
        %v2881 = vstv %s2880
        %v2882 = vmul.f32 %v2881, %v2791
        %2884 = vrot.lane.b32.xlu0 %v2882, 125
        %v2885 = vpop.permute.xlu0 %2884
        %v2887 = vadd.f32 %v2855, %v2885
        %s2888 = sld [smem:[#allocation9 + $0x107]]
        %v2889 = vstv %s2888
        %v2890 = vmul.f32 %v2889, %v2791
        %2892 = vrot.lane.b32.xlu0 %v2890, 125
        %v2893 = vpop.permute.xlu0 %2892
        %v2895 = vadd.f32 %v2863, %v2893
        %s2896 = sld [smem:[#allocation9 + $0x16b]]
        %v2897 = vstv %s2896
        %v2898 = vmul.f32 %v2897, %v2791
        %2900 = vrot.lane.b32.xlu0 %v2898, 125
        %v2901 = vpop.permute.xlu0 %2900
        %v2903 = vadd.f32 %v2871, %v2901
        %s2904 = sld [smem:[#allocation9 + $0x40]]
        %v2905 = vstv %s2904
        %v2906 = vmul.f32 %v2905, %v2791
        %2908 = vrot.lane.b32.xlu0 %v2906, 124
        %v2909 = vpop.permute.xlu0 %2908
        %v2911 = vadd.f32 %v2879, %v2909
        %s2912 = sld [smem:[#allocation9 + $0xa4]]
        %v2913 = vstv %s2912
        %v2914 = vmul.f32 %v2913, %v2791
        %2916 = vrot.lane.b32.xlu0 %v2914, 124
        %v2917 = vpop.permute.xlu0 %2916
        %v2919 = vadd.f32 %v2887, %v2917
        %s2920 = sld [smem:[#allocation9 + $0x108]]
        %v2921 = vstv %s2920
        %v2922 = vmul.f32 %v2921, %v2791
        %2924 = vrot.lane.b32.xlu0 %v2922, 124
        %v2925 = vpop.permute.xlu0 %2924
        %v2927 = vadd.f32 %v2895, %v2925
        %s2928 = sld [smem:[#allocation9 + $0x16c]]
        %v2929 = vstv %s2928
        %v2930 = vmul.f32 %v2929, %v2791
        %2932 = vrot.lane.b32.xlu0 %v2930, 124
        %v2933 = vpop.permute.xlu0 %2932
        %v2935 = vadd.f32 %v2903, %v2933
        %v2936 = vld [vmem:[%s1041 + $0x3] sm:$0x3]
        %s2937 = sld [smem:[#allocation9 + $0x41]]
        %v2938 = vstv %s2937
        %v2939 = vmul.f32 %v2938, %v2936
        %v2940 = vadd.f32 %v2911, %v2939
        %s2941 = sld [smem:[#allocation9 + $0xa5]]
        %v2942 = vstv %s2941
        %v2943 = vmul.f32 %v2942, %v2936
        %v2944 = vadd.f32 %v2919, %v2943
        %s2945 = sld [smem:[#allocation9 + $0x109]]
        %v2946 = vstv %s2945
        %v2947 = vmul.f32 %v2946, %v2936
        %v2948 = vadd.f32 %v2927, %v2947
        %s2949 = sld [smem:[#allocation9 + $0x16d]]
        %v2950 = vstv %s2949
        %v2951 = vmul.f32 %v2950, %v2936
        %v2952 = vadd.f32 %v2935, %v2951
        %s2953 = sld [smem:[#allocation9 + $0x42]]
        %v2954 = vstv %s2953
        %v2955 = vmul.f32 %v2954, %v2936
        %2957 = vrot.lane.b32.xlu0 %v2955, 127
        %v2958 = vpop.permute.xlu0 %2957
        %v2960 = vadd.f32 %v2940, %v2958
        %s2961 = sld [smem:[#allocation9 + $0xa6]]
        %v2962 = vstv %s2961
        %v2963 = vmul.f32 %v2962, %v2936
        %2965 = vrot.lane.b32.xlu0 %v2963, 127
        %v2966 = vpop.permute.xlu0 %2965
        %v2968 = vadd.f32 %v2944, %v2966
        %s2969 = sld [smem:[#allocation9 + $0x10a]]
        %v2970 = vstv %s2969
        %v2971 = vmul.f32 %v2970, %v2936
        %2973 = vrot.lane.b32.xlu0 %v2971, 127
        %v2974 = vpop.permute.xlu0 %2973
        %v2976 = vadd.f32 %v2948, %v2974
        %s2977 = sld [smem:[#allocation9 + $0x16e]]
        %v2978 = vstv %s2977
        %v2979 = vmul.f32 %v2978, %v2936
        %2981 = vrot.lane.b32.xlu0 %v2979, 127
        %v2982 = vpop.permute.xlu0 %2981
        %v2984 = vadd.f32 %v2952, %v2982
        %s2985 = sld [smem:[#allocation9 + $0x43]]
        %v2986 = vstv %s2985
        %v2987 = vmul.f32 %v2986, %v2936
        %2989 = vrot.lane.b32.xlu0 %v2987, 126
        %v2990 = vpop.permute.xlu0 %2989
        %v2992 = vadd.f32 %v2960, %v2990
        %s2993 = sld [smem:[#allocation9 + $0xa7]]
        %v2994 = vstv %s2993
        %v2995 = vmul.f32 %v2994, %v2936
        %2997 = vrot.lane.b32.xlu0 %v2995, 126
        %v2998 = vpop.permute.xlu0 %2997
        %v3000 = vadd.f32 %v2968, %v2998
        %s3001 = sld [smem:[#allocation9 + $0x10b]]
        %v3002 = vstv %s3001
        %v3003 = vmul.f32 %v3002, %v2936
        %3005 = vrot.lane.b32.xlu0 %v3003, 126
        %v3006 = vpop.permute.xlu0 %3005
        %v3008 = vadd.f32 %v2976, %v3006
        %s3009 = sld [smem:[#allocation9 + $0x16f]]
        %v3010 = vstv %s3009
        %v3011 = vmul.f32 %v3010, %v2936
        %3013 = vrot.lane.b32.xlu0 %v3011, 126
        %v3014 = vpop.permute.xlu0 %3013
        %v3016 = vadd.f32 %v2984, %v3014
        %s3017 = sld [smem:[#allocation9 + $0x44]]
        %v3018 = vstv %s3017
        %v3019 = vmul.f32 %v3018, %v2936
        %3021 = vrot.lane.b32.xlu0 %v3019, 125
        %v3022 = vpop.permute.xlu0 %3021
        %v3024 = vadd.f32 %v2992, %v3022
        %s3025 = sld [smem:[#allocation9 + $0xa8]]
        %v3026 = vstv %s3025
        %v3027 = vmul.f32 %v3026, %v2936
        %3029 = vrot.lane.b32.xlu0 %v3027, 125
        %v3030 = vpop.permute.xlu0 %3029
        %v3032 = vadd.f32 %v3000, %v3030
        %s3033 = sld [smem:[#allocation9 + $0x10c]]
        %v3034 = vstv %s3033
        %v3035 = vmul.f32 %v3034, %v2936
        %3037 = vrot.lane.b32.xlu0 %v3035, 125
        %v3038 = vpop.permute.xlu0 %3037
        %v3040 = vadd.f32 %v3008, %v3038
        %s3041 = sld [smem:[#allocation9 + $0x170]]
        %v3042 = vstv %s3041
        %v3043 = vmul.f32 %v3042, %v2936
        %3045 = vrot.lane.b32.xlu0 %v3043, 125
        %v3046 = vpop.permute.xlu0 %3045
        %v3048 = vadd.f32 %v3016, %v3046
        %s3049 = sld [smem:[#allocation9 + $0x45]]
        %v3050 = vstv %s3049
        %v3051 = vmul.f32 %v3050, %v2936
        %3053 = vrot.lane.b32.xlu0 %v3051, 124
        %v3054 = vpop.permute.xlu0 %3053
        %v3056 = vadd.f32 %v3024, %v3054
        %s3057 = sld [smem:[#allocation9 + $0xa9]]
        %v3058 = vstv %s3057
        %v3059 = vmul.f32 %v3058, %v2936
        %3061 = vrot.lane.b32.xlu0 %v3059, 124
        %v3062 = vpop.permute.xlu0 %3061
        %v3064 = vadd.f32 %v3032, %v3062
        %s3065 = sld [smem:[#allocation9 + $0x10d]]
        %v3066 = vstv %s3065
        %v3067 = vmul.f32 %v3066, %v2936
        %3069 = vrot.lane.b32.xlu0 %v3067, 124
        %v3070 = vpop.permute.xlu0 %3069
        %v3072 = vadd.f32 %v3040, %v3070
        %s3073 = sld [smem:[#allocation9 + $0x171]]
        %v3074 = vstv %s3073
        %v3075 = vmul.f32 %v3074, %v2936
        %3077 = vrot.lane.b32.xlu0 %v3075, 124
        %v3078 = vpop.permute.xlu0 %3077
        %v3080 = vadd.f32 %v3048, %v3078
        %v3081 = vld [vmem:[%s1041 + $0x4] sm:$0x3]
        %s3082 = sld [smem:[#allocation9 + $0x46]]
        %v3083 = vstv %s3082
        %v3084 = vmul.f32 %v3083, %v3081
        %v3085 = vadd.f32 %v3056, %v3084
        %s3086 = sld [smem:[#allocation9 + $0xaa]]
        %v3087 = vstv %s3086
        %v3088 = vmul.f32 %v3087, %v3081
        %v3089 = vadd.f32 %v3064, %v3088
        %s3090 = sld [smem:[#allocation9 + $0x10e]]
        %v3091 = vstv %s3090
        %v3092 = vmul.f32 %v3091, %v3081
        %v3093 = vadd.f32 %v3072, %v3092
        %s3094 = sld [smem:[#allocation9 + $0x172]]
        %v3095 = vstv %s3094
        %v3096 = vmul.f32 %v3095, %v3081
        %v3097 = vadd.f32 %v3080, %v3096
        %s3098 = sld [smem:[#allocation9 + $0x47]]
        %v3099 = vstv %s3098
        %v3100 = vmul.f32 %v3099, %v3081
        %3102 = vrot.lane.b32.xlu0 %v3100, 127
        %v3103 = vpop.permute.xlu0 %3102
        %v3105 = vadd.f32 %v3085, %v3103
        %s3106 = sld [smem:[#allocation9 + $0xab]]
        %v3107 = vstv %s3106
        %v3108 = vmul.f32 %v3107, %v3081
        %3110 = vrot.lane.b32.xlu0 %v3108, 127
        %v3111 = vpop.permute.xlu0 %3110
        %v3113 = vadd.f32 %v3089, %v3111
        %s3114 = sld [smem:[#allocation9 + $0x10f]]
        %v3115 = vstv %s3114
        %v3116 = vmul.f32 %v3115, %v3081
        %3118 = vrot.lane.b32.xlu0 %v3116, 127
        %v3119 = vpop.permute.xlu0 %3118
        %v3121 = vadd.f32 %v3093, %v3119
        %s3122 = sld [smem:[#allocation9 + $0x173]]
        %v3123 = vstv %s3122
        %v3124 = vmul.f32 %v3123, %v3081
        %3126 = vrot.lane.b32.xlu0 %v3124, 127
        %v3127 = vpop.permute.xlu0 %3126
        %v3129 = vadd.f32 %v3097, %v3127
        %s3130 = sld [smem:[#allocation9 + $0x48]]
        %v3131 = vstv %s3130
        %v3132 = vmul.f32 %v3131, %v3081
        %3134 = vrot.lane.b32.xlu0 %v3132, 126
        %v3135 = vpop.permute.xlu0 %3134
        %v3137 = vadd.f32 %v3105, %v3135
        %s3138 = sld [smem:[#allocation9 + $0xac]]
        %v3139 = vstv %s3138
        %v3140 = vmul.f32 %v3139, %v3081
        %3142 = vrot.lane.b32.xlu0 %v3140, 126
        %v3143 = vpop.permute.xlu0 %3142
        %v3145 = vadd.f32 %v3113, %v3143
        %s3146 = sld [smem:[#allocation9 + $0x110]]
        %v3147 = vstv %s3146
        %v3148 = vmul.f32 %v3147, %v3081
        %3150 = vrot.lane.b32.xlu0 %v3148, 126
        %v3151 = vpop.permute.xlu0 %3150
        %v3153 = vadd.f32 %v3121, %v3151
        %s3154 = sld [smem:[#allocation9 + $0x174]]
        %v3155 = vstv %s3154
        %v3156 = vmul.f32 %v3155, %v3081
        %3158 = vrot.lane.b32.xlu0 %v3156, 126
        %v3159 = vpop.permute.xlu0 %3158
        %v3161 = vadd.f32 %v3129, %v3159
        %s3162 = sld [smem:[#allocation9 + $0x49]]
        %v3163 = vstv %s3162
        %v3164 = vmul.f32 %v3163, %v3081
        %3166 = vrot.lane.b32.xlu0 %v3164, 125
        %v3167 = vpop.permute.xlu0 %3166
        %v3169 = vadd.f32 %v3137, %v3167
        %s3170 = sld [smem:[#allocation9 + $0xad]]
        %v3171 = vstv %s3170
        %v3172 = vmul.f32 %v3171, %v3081
        %3174 = vrot.lane.b32.xlu0 %v3172, 125
        %v3175 = vpop.permute.xlu0 %3174
        %v3177 = vadd.f32 %v3145, %v3175
        %s3178 = sld [smem:[#allocation9 + $0x111]]
        %v3179 = vstv %s3178
        %v3180 = vmul.f32 %v3179, %v3081
        %3182 = vrot.lane.b32.xlu0 %v3180, 125
        %v3183 = vpop.permute.xlu0 %3182
        %v3185 = vadd.f32 %v3153, %v3183
        %s3186 = sld [smem:[#allocation9 + $0x175]]
        %v3187 = vstv %s3186
        %v3188 = vmul.f32 %v3187, %v3081
        %3190 = vrot.lane.b32.xlu0 %v3188, 125
        %v3191 = vpop.permute.xlu0 %3190
        %v3193 = vadd.f32 %v3161, %v3191
        %s3194 = sld [smem:[#allocation9 + $0x4a]]
        %v3195 = vstv %s3194
        %v3196 = vmul.f32 %v3195, %v3081
        %3198 = vrot.lane.b32.xlu0 %v3196, 124
        %v3199 = vpop.permute.xlu0 %3198
        %v3201 = vadd.f32 %v3169, %v3199
        %s3202 = sld [smem:[#allocation9 + $0xae]]
        %v3203 = vstv %s3202
        %v3204 = vmul.f32 %v3203, %v3081
        %3206 = vrot.lane.b32.xlu0 %v3204, 124
        %v3207 = vpop.permute.xlu0 %3206
        %v3209 = vadd.f32 %v3177, %v3207
        %s3210 = sld [smem:[#allocation9 + $0x112]]
        %v3211 = vstv %s3210
        %v3212 = vmul.f32 %v3211, %v3081
        %3214 = vrot.lane.b32.xlu0 %v3212, 124
        %v3215 = vpop.permute.xlu0 %3214
        %v3217 = vadd.f32 %v3185, %v3215
        %s3218 = sld [smem:[#allocation9 + $0x176]]
        %v3219 = vstv %s3218
        %v3220 = vmul.f32 %v3219, %v3081
        %3222 = vrot.lane.b32.xlu0 %v3220, 124
        %v3223 = vpop.permute.xlu0 %3222
        %v3225 = vadd.f32 %v3193, %v3223
        %v3226 = vld [vmem:[%s1049] sm:$0x3]
        %s3227 = sld [smem:[#allocation9 + $0x4b]]
        %v3228 = vstv %s3227
        %v3229 = vmul.f32 %v3228, %v3226
        %v3230 = vadd.f32 %v3201, %v3229
        %s3231 = sld [smem:[#allocation9 + $0xaf]]
        %v3232 = vstv %s3231
        %v3233 = vmul.f32 %v3232, %v3226
        %v3234 = vadd.f32 %v3209, %v3233
        %s3235 = sld [smem:[#allocation9 + $0x113]]
        %v3236 = vstv %s3235
        %v3237 = vmul.f32 %v3236, %v3226
        %v3238 = vadd.f32 %v3217, %v3237
        %s3239 = sld [smem:[#allocation9 + $0x177]]
        %v3240 = vstv %s3239
        %v3241 = vmul.f32 %v3240, %v3226
        %v3242 = vadd.f32 %v3225, %v3241
        %s3243 = sld [smem:[#allocation9 + $0x4c]]
        %v3244 = vstv %s3243
        %v3245 = vmul.f32 %v3244, %v3226
        %3247 = vrot.lane.b32.xlu0 %v3245, 127
        %v3248 = vpop.permute.xlu0 %3247
        %v3250 = vadd.f32 %v3230, %v3248
        %s3251 = sld [smem:[#allocation9 + $0xb0]]
        %v3252 = vstv %s3251
        %v3253 = vmul.f32 %v3252, %v3226
        %3255 = vrot.lane.b32.xlu0 %v3253, 127
        %v3256 = vpop.permute.xlu0 %3255
        %v3258 = vadd.f32 %v3234, %v3256
        %s3259 = sld [smem:[#allocation9 + $0x114]]
        %v3260 = vstv %s3259
        %v3261 = vmul.f32 %v3260, %v3226
        %3263 = vrot.lane.b32.xlu0 %v3261, 127
        %v3264 = vpop.permute.xlu0 %3263
        %v3266 = vadd.f32 %v3238, %v3264
        %s3267 = sld [smem:[#allocation9 + $0x178]]
        %v3268 = vstv %s3267
        %v3269 = vmul.f32 %v3268, %v3226
        %3271 = vrot.lane.b32.xlu0 %v3269, 127
        %v3272 = vpop.permute.xlu0 %3271
        %v3274 = vadd.f32 %v3242, %v3272
        %s3275 = sld [smem:[#allocation9 + $0x4d]]
        %v3276 = vstv %s3275
        %v3277 = vmul.f32 %v3276, %v3226
        %3279 = vrot.lane.b32.xlu0 %v3277, 126
        %v3280 = vpop.permute.xlu0 %3279
        %v3282 = vadd.f32 %v3250, %v3280
        %s3283 = sld [smem:[#allocation9 + $0xb1]]
        %v3284 = vstv %s3283
        %v3285 = vmul.f32 %v3284, %v3226
        %3287 = vrot.lane.b32.xlu0 %v3285, 126
        %v3288 = vpop.permute.xlu0 %3287
        %v3290 = vadd.f32 %v3258, %v3288
        %s3291 = sld [smem:[#allocation9 + $0x115]]
        %v3292 = vstv %s3291
        %v3293 = vmul.f32 %v3292, %v3226
        %3295 = vrot.lane.b32.xlu0 %v3293, 126
        %v3296 = vpop.permute.xlu0 %3295
        %v3298 = vadd.f32 %v3266, %v3296
        %s3299 = sld [smem:[#allocation9 + $0x179]]
        %v3300 = vstv %s3299
        %v3301 = vmul.f32 %v3300, %v3226
        %3303 = vrot.lane.b32.xlu0 %v3301, 126
        %v3304 = vpop.permute.xlu0 %3303
        %v3306 = vadd.f32 %v3274, %v3304
        %s3307 = sld [smem:[#allocation9 + $0x4e]]
        %v3308 = vstv %s3307
        %v3309 = vmul.f32 %v3308, %v3226
        %3311 = vrot.lane.b32.xlu0 %v3309, 125
        %v3312 = vpop.permute.xlu0 %3311
        %v3314 = vadd.f32 %v3282, %v3312
        %s3315 = sld [smem:[#allocation9 + $0xb2]]
        %v3316 = vstv %s3315
        %v3317 = vmul.f32 %v3316, %v3226
        %3319 = vrot.lane.b32.xlu0 %v3317, 125
        %v3320 = vpop.permute.xlu0 %3319
        %v3322 = vadd.f32 %v3290, %v3320
        %s3323 = sld [smem:[#allocation9 + $0x116]]
        %v3324 = vstv %s3323
        %v3325 = vmul.f32 %v3324, %v3226
        %3327 = vrot.lane.b32.xlu0 %v3325, 125
        %v3328 = vpop.permute.xlu0 %3327
        %v3330 = vadd.f32 %v3298, %v3328
        %s3331 = sld [smem:[#allocation9 + $0x17a]]
        %v3332 = vstv %s3331
        %v3333 = vmul.f32 %v3332, %v3226
        %3335 = vrot.lane.b32.xlu0 %v3333, 125
        %v3336 = vpop.permute.xlu0 %3335
        %v3338 = vadd.f32 %v3306, %v3336
        %s3339 = sld [smem:[#allocation9 + $0x4f]]
        %v3340 = vstv %s3339
        %v3341 = vmul.f32 %v3340, %v3226
        %3343 = vrot.lane.b32.xlu0 %v3341, 124
        %v3344 = vpop.permute.xlu0 %3343
        %v3346 = vadd.f32 %v3314, %v3344
        %s3347 = sld [smem:[#allocation9 + $0xb3]]
        %v3348 = vstv %s3347
        %v3349 = vmul.f32 %v3348, %v3226
        %3351 = vrot.lane.b32.xlu0 %v3349, 124
        %v3352 = vpop.permute.xlu0 %3351
        %v3354 = vadd.f32 %v3322, %v3352
        %s3355 = sld [smem:[#allocation9 + $0x117]]
        %v3356 = vstv %s3355
        %v3357 = vmul.f32 %v3356, %v3226
        %3359 = vrot.lane.b32.xlu0 %v3357, 124
        %v3360 = vpop.permute.xlu0 %3359
        %v3362 = vadd.f32 %v3330, %v3360
        %s3363 = sld [smem:[#allocation9 + $0x17b]]
        %v3364 = vstv %s3363
        %v3365 = vmul.f32 %v3364, %v3226
        %3367 = vrot.lane.b32.xlu0 %v3365, 124
        %v3368 = vpop.permute.xlu0 %3367
        %v3370 = vadd.f32 %v3338, %v3368
        %v3371 = vld [vmem:[%s1049 + $0x1] sm:$0x3]
        %s3372 = sld [smem:[#allocation9 + $0x50]]
        %v3373 = vstv %s3372
        %v3374 = vmul.f32 %v3373, %v3371
        %v3375 = vadd.f32 %v3346, %v3374
        %s3376 = sld [smem:[#allocation9 + $0xb4]]
        %v3377 = vstv %s3376
        %v3378 = vmul.f32 %v3377, %v3371
        %v3379 = vadd.f32 %v3354, %v3378
        %s3380 = sld [smem:[#allocation9 + $0x118]]
        %v3381 = vstv %s3380
        %v3382 = vmul.f32 %v3381, %v3371
        %v3383 = vadd.f32 %v3362, %v3382
        %s3384 = sld [smem:[#allocation9 + $0x17c]]
        %v3385 = vstv %s3384
        %v3386 = vmul.f32 %v3385, %v3371
        %v3387 = vadd.f32 %v3370, %v3386
        %s3388 = sld [smem:[#allocation9 + $0x51]]
        %v3389 = vstv %s3388
        %v3390 = vmul.f32 %v3389, %v3371
        %3392 = vrot.lane.b32.xlu0 %v3390, 127
        %v3393 = vpop.permute.xlu0 %3392
        %v3395 = vadd.f32 %v3375, %v3393
        %s3396 = sld [smem:[#allocation9 + $0xb5]]
        %v3397 = vstv %s3396
        %v3398 = vmul.f32 %v3397, %v3371
        %3400 = vrot.lane.b32.xlu0 %v3398, 127
        %v3401 = vpop.permute.xlu0 %3400
        %v3403 = vadd.f32 %v3379, %v3401
        %s3404 = sld [smem:[#allocation9 + $0x119]]
        %v3405 = vstv %s3404
        %v3406 = vmul.f32 %v3405, %v3371
        %3408 = vrot.lane.b32.xlu0 %v3406, 127
        %v3409 = vpop.permute.xlu0 %3408
        %v3411 = vadd.f32 %v3383, %v3409
        %s3412 = sld [smem:[#allocation9 + $0x17d]]
        %v3413 = vstv %s3412
        %v3414 = vmul.f32 %v3413, %v3371
        %3416 = vrot.lane.b32.xlu0 %v3414, 127
        %v3417 = vpop.permute.xlu0 %3416
        %v3419 = vadd.f32 %v3387, %v3417
        %s3420 = sld [smem:[#allocation9 + $0x52]]
        %v3421 = vstv %s3420
        %v3422 = vmul.f32 %v3421, %v3371
        %3424 = vrot.lane.b32.xlu0 %v3422, 126
        %v3425 = vpop.permute.xlu0 %3424
        %v3427 = vadd.f32 %v3395, %v3425
        %s3428 = sld [smem:[#allocation9 + $0xb6]]
        %v3429 = vstv %s3428
        %v3430 = vmul.f32 %v3429, %v3371
        %3432 = vrot.lane.b32.xlu0 %v3430, 126
        %v3433 = vpop.permute.xlu0 %3432
        %v3435 = vadd.f32 %v3403, %v3433
        %s3436 = sld [smem:[#allocation9 + $0x11a]]
        %v3437 = vstv %s3436
        %v3438 = vmul.f32 %v3437, %v3371
        %3440 = vrot.lane.b32.xlu0 %v3438, 126
        %v3441 = vpop.permute.xlu0 %3440
        %v3443 = vadd.f32 %v3411, %v3441
        %s3444 = sld [smem:[#allocation9 + $0x17e]]
        %v3445 = vstv %s3444
        %v3446 = vmul.f32 %v3445, %v3371
        %3448 = vrot.lane.b32.xlu0 %v3446, 126
        %v3449 = vpop.permute.xlu0 %3448
        %v3451 = vadd.f32 %v3419, %v3449
        %s3452 = sld [smem:[#allocation9 + $0x53]]
        %v3453 = vstv %s3452
        %v3454 = vmul.f32 %v3453, %v3371
        %3456 = vrot.lane.b32.xlu0 %v3454, 125
        %v3457 = vpop.permute.xlu0 %3456
        %v3459 = vadd.f32 %v3427, %v3457
        %s3460 = sld [smem:[#allocation9 + $0xb7]]
        %v3461 = vstv %s3460
        %v3462 = vmul.f32 %v3461, %v3371
        %3464 = vrot.lane.b32.xlu0 %v3462, 125
        %v3465 = vpop.permute.xlu0 %3464
        %v3467 = vadd.f32 %v3435, %v3465
        %s3468 = sld [smem:[#allocation9 + $0x11b]]
        %v3469 = vstv %s3468
        %v3470 = vmul.f32 %v3469, %v3371
        %3472 = vrot.lane.b32.xlu0 %v3470, 125
        %v3473 = vpop.permute.xlu0 %3472
        %v3475 = vadd.f32 %v3443, %v3473
        %s3476 = sld [smem:[#allocation9 + $0x17f]]
        %v3477 = vstv %s3476
        %v3478 = vmul.f32 %v3477, %v3371
        %3480 = vrot.lane.b32.xlu0 %v3478, 125
        %v3481 = vpop.permute.xlu0 %3480
        %v3483 = vadd.f32 %v3451, %v3481
        %s3484 = sld [smem:[#allocation9 + $0x54]]
        %v3485 = vstv %s3484
        %v3486 = vmul.f32 %v3485, %v3371
        %3488 = vrot.lane.b32.xlu0 %v3486, 124
        %v3489 = vpop.permute.xlu0 %3488
        %v3491 = vadd.f32 %v3459, %v3489
        %s3492 = sld [smem:[#allocation9 + $0xb8]]
        %v3493 = vstv %s3492
        %v3494 = vmul.f32 %v3493, %v3371
        %3496 = vrot.lane.b32.xlu0 %v3494, 124
        %v3497 = vpop.permute.xlu0 %3496
        %v3499 = vadd.f32 %v3467, %v3497
        %s3500 = sld [smem:[#allocation9 + $0x11c]]
        %v3501 = vstv %s3500
        %v3502 = vmul.f32 %v3501, %v3371
        %3504 = vrot.lane.b32.xlu0 %v3502, 124
        %v3505 = vpop.permute.xlu0 %3504
        %v3507 = vadd.f32 %v3475, %v3505
        %s3508 = sld [smem:[#allocation9 + $0x180]]
        %v3509 = vstv %s3508
        %v3510 = vmul.f32 %v3509, %v3371
        %3512 = vrot.lane.b32.xlu0 %v3510, 124
        %v3513 = vpop.permute.xlu0 %3512
        %v3515 = vadd.f32 %v3483, %v3513
        %v3516 = vld [vmem:[%s1049 + $0x2] sm:$0x3]
        %s3517 = sld [smem:[#allocation9 + $0x55]]
        %v3518 = vstv %s3517
        %v3519 = vmul.f32 %v3518, %v3516
        %v3520 = vadd.f32 %v3491, %v3519
        %s3521 = sld [smem:[#allocation9 + $0xb9]]
        %v3522 = vstv %s3521
        %v3523 = vmul.f32 %v3522, %v3516
        %v3524 = vadd.f32 %v3499, %v3523
        %s3525 = sld [smem:[#allocation9 + $0x11d]]
        %v3526 = vstv %s3525
        %v3527 = vmul.f32 %v3526, %v3516
        %v3528 = vadd.f32 %v3507, %v3527
        %s3529 = sld [smem:[#allocation9 + $0x181]]
        %v3530 = vstv %s3529
        %v3531 = vmul.f32 %v3530, %v3516
        %v3532 = vadd.f32 %v3515, %v3531
        %s3533 = sld [smem:[#allocation9 + $0x56]]
        %v3534 = vstv %s3533
        %v3535 = vmul.f32 %v3534, %v3516
        %3537 = vrot.lane.b32.xlu0 %v3535, 127
        %v3538 = vpop.permute.xlu0 %3537
        %v3540 = vadd.f32 %v3520, %v3538
        %s3541 = sld [smem:[#allocation9 + $0xba]]
        %v3542 = vstv %s3541
        %v3543 = vmul.f32 %v3542, %v3516
        %3545 = vrot.lane.b32.xlu0 %v3543, 127
        %v3546 = vpop.permute.xlu0 %3545
        %v3548 = vadd.f32 %v3524, %v3546
        %s3549 = sld [smem:[#allocation9 + $0x11e]]
        %v3550 = vstv %s3549
        %v3551 = vmul.f32 %v3550, %v3516
        %3553 = vrot.lane.b32.xlu0 %v3551, 127
        %v3554 = vpop.permute.xlu0 %3553
        %v3556 = vadd.f32 %v3528, %v3554
        %s3557 = sld [smem:[#allocation9 + $0x182]]
        %v3558 = vstv %s3557
        %v3559 = vmul.f32 %v3558, %v3516
        %3561 = vrot.lane.b32.xlu0 %v3559, 127
        %v3562 = vpop.permute.xlu0 %3561
        %v3564 = vadd.f32 %v3532, %v3562
        %s3565 = sld [smem:[#allocation9 + $0x57]]
        %v3566 = vstv %s3565
        %v3567 = vmul.f32 %v3566, %v3516
        %3569 = vrot.lane.b32.xlu0 %v3567, 126
        %v3570 = vpop.permute.xlu0 %3569
        %v3572 = vadd.f32 %v3540, %v3570
        %s3573 = sld [smem:[#allocation9 + $0xbb]]
        %v3574 = vstv %s3573
        %v3575 = vmul.f32 %v3574, %v3516
        %3577 = vrot.lane.b32.xlu0 %v3575, 126
        %v3578 = vpop.permute.xlu0 %3577
        %v3580 = vadd.f32 %v3548, %v3578
        %s3581 = sld [smem:[#allocation9 + $0x11f]]
        %v3582 = vstv %s3581
        %v3583 = vmul.f32 %v3582, %v3516
        %3585 = vrot.lane.b32.xlu0 %v3583, 126
        %v3586 = vpop.permute.xlu0 %3585
        %v3588 = vadd.f32 %v3556, %v3586
        %s3589 = sld [smem:[#allocation9 + $0x183]]
        %v3590 = vstv %s3589
        %v3591 = vmul.f32 %v3590, %v3516
        %3593 = vrot.lane.b32.xlu0 %v3591, 126
        %v3594 = vpop.permute.xlu0 %3593
        %v3596 = vadd.f32 %v3564, %v3594
        %s3597 = sld [smem:[#allocation9 + $0x58]]
        %v3598 = vstv %s3597
        %v3599 = vmul.f32 %v3598, %v3516
        %3601 = vrot.lane.b32.xlu0 %v3599, 125
        %v3602 = vpop.permute.xlu0 %3601
        %v3604 = vadd.f32 %v3572, %v3602
        %s3605 = sld [smem:[#allocation9 + $0xbc]]
        %v3606 = vstv %s3605
        %v3607 = vmul.f32 %v3606, %v3516
        %3609 = vrot.lane.b32.xlu0 %v3607, 125
        %v3610 = vpop.permute.xlu0 %3609
        %v3612 = vadd.f32 %v3580, %v3610
        %s3613 = sld [smem:[#allocation9 + $0x120]]
        %v3614 = vstv %s3613
        %v3615 = vmul.f32 %v3614, %v3516
        %3617 = vrot.lane.b32.xlu0 %v3615, 125
        %v3618 = vpop.permute.xlu0 %3617
        %v3620 = vadd.f32 %v3588, %v3618
        %s3621 = sld [smem:[#allocation9 + $0x184]]
        %v3622 = vstv %s3621
        %v3623 = vmul.f32 %v3622, %v3516
        %3625 = vrot.lane.b32.xlu0 %v3623, 125
        %v3626 = vpop.permute.xlu0 %3625
        %v3628 = vadd.f32 %v3596, %v3626
        %s3629 = sld [smem:[#allocation9 + $0x59]]
        %v3630 = vstv %s3629
        %v3631 = vmul.f32 %v3630, %v3516
        %3633 = vrot.lane.b32.xlu0 %v3631, 124
        %v3634 = vpop.permute.xlu0 %3633
        %v3636 = vadd.f32 %v3604, %v3634
        %s3637 = sld [smem:[#allocation9 + $0xbd]]
        %v3638 = vstv %s3637
        %v3639 = vmul.f32 %v3638, %v3516
        %3641 = vrot.lane.b32.xlu0 %v3639, 124
        %v3642 = vpop.permute.xlu0 %3641
        %v3644 = vadd.f32 %v3612, %v3642
        %s3645 = sld [smem:[#allocation9 + $0x121]]
        %v3646 = vstv %s3645
        %v3647 = vmul.f32 %v3646, %v3516
        %3649 = vrot.lane.b32.xlu0 %v3647, 124
        %v3650 = vpop.permute.xlu0 %3649
        %v3652 = vadd.f32 %v3620, %v3650
        %s3653 = sld [smem:[#allocation9 + $0x185]]
        %v3654 = vstv %s3653
        %v3655 = vmul.f32 %v3654, %v3516
        %3657 = vrot.lane.b32.xlu0 %v3655, 124
        %v3658 = vpop.permute.xlu0 %3657
        %v3660 = vadd.f32 %v3628, %v3658
        %v3661 = vld [vmem:[%s1049 + $0x3] sm:$0x3]
        %s3662 = sld [smem:[#allocation9 + $0x5a]]
        %v3663 = vstv %s3662
        %v3664 = vmul.f32 %v3663, %v3661
        %v3665 = vadd.f32 %v3636, %v3664
        %s3666 = sld [smem:[#allocation9 + $0xbe]]
        %v3667 = vstv %s3666
        %v3668 = vmul.f32 %v3667, %v3661
        %v3669 = vadd.f32 %v3644, %v3668
        %s3670 = sld [smem:[#allocation9 + $0x122]]
        %v3671 = vstv %s3670
        %v3672 = vmul.f32 %v3671, %v3661
        %v3673 = vadd.f32 %v3652, %v3672
        %s3674 = sld [smem:[#allocation9 + $0x186]]
        %v3675 = vstv %s3674
        %v3676 = vmul.f32 %v3675, %v3661
        %v3677 = vadd.f32 %v3660, %v3676
        %s3678 = sld [smem:[#allocation9 + $0x5b]]
        %v3679 = vstv %s3678
        %v3680 = vmul.f32 %v3679, %v3661
        %3682 = vrot.lane.b32.xlu0 %v3680, 127
        %v3683 = vpop.permute.xlu0 %3682
        %v3685 = vadd.f32 %v3665, %v3683
        %s3686 = sld [smem:[#allocation9 + $0xbf]]
        %v3687 = vstv %s3686
        %v3688 = vmul.f32 %v3687, %v3661
        %3690 = vrot.lane.b32.xlu0 %v3688, 127
        %v3691 = vpop.permute.xlu0 %3690
        %v3693 = vadd.f32 %v3669, %v3691
        %s3694 = sld [smem:[#allocation9 + $0x123]]
        %v3695 = vstv %s3694
        %v3696 = vmul.f32 %v3695, %v3661
        %3698 = vrot.lane.b32.xlu0 %v3696, 127
        %v3699 = vpop.permute.xlu0 %3698
        %v3701 = vadd.f32 %v3673, %v3699
        %s3702 = sld [smem:[#allocation9 + $0x187]]
        %v3703 = vstv %s3702
        %v3704 = vmul.f32 %v3703, %v3661
        %3706 = vrot.lane.b32.xlu0 %v3704, 127
        %v3707 = vpop.permute.xlu0 %3706
        %v3709 = vadd.f32 %v3677, %v3707
        %s3710 = sld [smem:[#allocation9 + $0x5c]]
        %v3711 = vstv %s3710
        %v3712 = vmul.f32 %v3711, %v3661
        %3714 = vrot.lane.b32.xlu0 %v3712, 126
        %v3715 = vpop.permute.xlu0 %3714
        %v3717 = vadd.f32 %v3685, %v3715
        %s3718 = sld [smem:[#allocation9 + $0xc0]]
        %v3719 = vstv %s3718
        %v3720 = vmul.f32 %v3719, %v3661
        %3722 = vrot.lane.b32.xlu0 %v3720, 126
        %v3723 = vpop.permute.xlu0 %3722
        %v3725 = vadd.f32 %v3693, %v3723
        %s3726 = sld [smem:[#allocation9 + $0x124]]
        %v3727 = vstv %s3726
        %v3728 = vmul.f32 %v3727, %v3661
        %3730 = vrot.lane.b32.xlu0 %v3728, 126
        %v3731 = vpop.permute.xlu0 %3730
        %v3733 = vadd.f32 %v3701, %v3731
        %s3734 = sld [smem:[#allocation9 + $0x188]]
        %v3735 = vstv %s3734
        %v3736 = vmul.f32 %v3735, %v3661
        %3738 = vrot.lane.b32.xlu0 %v3736, 126
        %v3739 = vpop.permute.xlu0 %3738
        %v3741 = vadd.f32 %v3709, %v3739
        %s3742 = sld [smem:[#allocation9 + $0x5d]]
        %v3743 = vstv %s3742
        %v3744 = vmul.f32 %v3743, %v3661
        %3746 = vrot.lane.b32.xlu0 %v3744, 125
        %v3747 = vpop.permute.xlu0 %3746
        %v3749 = vadd.f32 %v3717, %v3747
        %s3750 = sld [smem:[#allocation9 + $0xc1]]
        %v3751 = vstv %s3750
        %v3752 = vmul.f32 %v3751, %v3661
        %3754 = vrot.lane.b32.xlu0 %v3752, 125
        %v3755 = vpop.permute.xlu0 %3754
        %v3757 = vadd.f32 %v3725, %v3755
        %s3758 = sld [smem:[#allocation9 + $0x125]]
        %v3759 = vstv %s3758
        %v3760 = vmul.f32 %v3759, %v3661
        %3762 = vrot.lane.b32.xlu0 %v3760, 125
        %v3763 = vpop.permute.xlu0 %3762
        %v3765 = vadd.f32 %v3733, %v3763
        %s3766 = sld [smem:[#allocation9 + $0x189]]
        %v3767 = vstv %s3766
        %v3768 = vmul.f32 %v3767, %v3661
        %3770 = vrot.lane.b32.xlu0 %v3768, 125
        %v3771 = vpop.permute.xlu0 %3770
        %v3773 = vadd.f32 %v3741, %v3771
        %s3774 = sld [smem:[#allocation9 + $0x5e]]
        %v3775 = vstv %s3774
        %v3776 = vmul.f32 %v3775, %v3661
        %3778 = vrot.lane.b32.xlu0 %v3776, 124
        %v3779 = vpop.permute.xlu0 %3778
        %v3781 = vadd.f32 %v3749, %v3779
        %s3782 = sld [smem:[#allocation9 + $0xc2]]
        %v3783 = vstv %s3782
        %v3784 = vmul.f32 %v3783, %v3661
        %3786 = vrot.lane.b32.xlu0 %v3784, 124
        %v3787 = vpop.permute.xlu0 %3786
        %v3789 = vadd.f32 %v3757, %v3787
        %s3790 = sld [smem:[#allocation9 + $0x126]]
        %v3791 = vstv %s3790
        %v3792 = vmul.f32 %v3791, %v3661
        %3794 = vrot.lane.b32.xlu0 %v3792, 124
        %v3795 = vpop.permute.xlu0 %3794
        %v3797 = vadd.f32 %v3765, %v3795
        %s3798 = sld [smem:[#allocation9 + $0x18a]]
        %v3799 = vstv %s3798
        %v3800 = vmul.f32 %v3799, %v3661
        %3802 = vrot.lane.b32.xlu0 %v3800, 124
        %v3803 = vpop.permute.xlu0 %3802
        %v3805 = vadd.f32 %v3773, %v3803
        %v3806 = vld [vmem:[%s1049 + $0x4] sm:$0x3]
        %s3807 = sld [smem:[#allocation9 + $0x5f]]
        %v3808 = vstv %s3807
        %v3809 = vmul.f32 %v3808, %v3806
        %v3810 = vadd.f32 %v3781, %v3809
        %s3811 = sld [smem:[#allocation9 + $0xc3]]
        %v3812 = vstv %s3811
        %v3813 = vmul.f32 %v3812, %v3806
        %v3814 = vadd.f32 %v3789, %v3813
        %s3815 = sld [smem:[#allocation9 + $0x127]]
        %v3816 = vstv %s3815
        %v3817 = vmul.f32 %v3816, %v3806
        %v3818 = vadd.f32 %v3797, %v3817
        %s3819 = sld [smem:[#allocation9 + $0x18b]]
        %v3820 = vstv %s3819
        %v3821 = vmul.f32 %v3820, %v3806
        %v3822 = vadd.f32 %v3805, %v3821
        %s3823 = sld [smem:[#allocation9 + $0x60]]
        %v3824 = vstv %s3823
        %v3825 = vmul.f32 %v3824, %v3806
        %3827 = vrot.lane.b32.xlu0 %v3825, 127
        %v3828 = vpop.permute.xlu0 %3827
        %v3830 = vadd.f32 %v3810, %v3828
        %s3831 = sld [smem:[#allocation9 + $0xc4]]
        %v3832 = vstv %s3831
        %v3833 = vmul.f32 %v3832, %v3806
        %3835 = vrot.lane.b32.xlu0 %v3833, 127
        %v3836 = vpop.permute.xlu0 %3835
        %v3838 = vadd.f32 %v3814, %v3836
        %s3839 = sld [smem:[#allocation9 + $0x128]]
        %v3840 = vstv %s3839
        %v3841 = vmul.f32 %v3840, %v3806
        %3843 = vrot.lane.b32.xlu0 %v3841, 127
        %v3844 = vpop.permute.xlu0 %3843
        %v3846 = vadd.f32 %v3818, %v3844
        %s3847 = sld [smem:[#allocation9 + $0x18c]]
        %v3848 = vstv %s3847
        %v3849 = vmul.f32 %v3848, %v3806
        %3851 = vrot.lane.b32.xlu0 %v3849, 127
        %v3852 = vpop.permute.xlu0 %3851
        %v3854 = vadd.f32 %v3822, %v3852
        %s3855 = sld [smem:[#allocation9 + $0x61]]
        %v3856 = vstv %s3855
        %v3857 = vmul.f32 %v3856, %v3806
        %3859 = vrot.lane.b32.xlu0 %v3857, 126
        %v3860 = vpop.permute.xlu0 %3859
        %v3862 = vadd.f32 %v3830, %v3860
        %s3863 = sld [smem:[#allocation9 + $0xc5]]
        %v3864 = vstv %s3863
        %v3865 = vmul.f32 %v3864, %v3806
        %3867 = vrot.lane.b32.xlu0 %v3865, 126
        %v3868 = vpop.permute.xlu0 %3867
        %v3870 = vadd.f32 %v3838, %v3868
        %s3871 = sld [smem:[#allocation9 + $0x129]]
        %v3872 = vstv %s3871
        %v3873 = vmul.f32 %v3872, %v3806
        %3875 = vrot.lane.b32.xlu0 %v3873, 126
        %v3876 = vpop.permute.xlu0 %3875
        %v3878 = vadd.f32 %v3846, %v3876
        %s3879 = sld [smem:[#allocation9 + $0x18d]]
        %v3880 = vstv %s3879
        %v3881 = vmul.f32 %v3880, %v3806
        %3883 = vrot.lane.b32.xlu0 %v3881, 126
        %v3884 = vpop.permute.xlu0 %3883
        %v3886 = vadd.f32 %v3854, %v3884
        %s3887 = sld [smem:[#allocation9 + $0x62]]
        %v3888 = vstv %s3887
        %v3889 = vmul.f32 %v3888, %v3806
        %3891 = vrot.lane.b32.xlu0 %v3889, 125
        %v3892 = vpop.permute.xlu0 %3891
        %v3894 = vadd.f32 %v3862, %v3892
        %s3895 = sld [smem:[#allocation9 + $0xc6]]
        %v3896 = vstv %s3895
        %v3897 = vmul.f32 %v3896, %v3806
        %3899 = vrot.lane.b32.xlu0 %v3897, 125
        %v3900 = vpop.permute.xlu0 %3899
        %v3902 = vadd.f32 %v3870, %v3900
        %s3903 = sld [smem:[#allocation9 + $0x12a]]
        %v3904 = vstv %s3903
        %v3905 = vmul.f32 %v3904, %v3806
        %3907 = vrot.lane.b32.xlu0 %v3905, 125
        %v3908 = vpop.permute.xlu0 %3907
        %v3910 = vadd.f32 %v3878, %v3908
        %s3911 = sld [smem:[#allocation9 + $0x18e]]
        %v3912 = vstv %s3911
        %v3913 = vmul.f32 %v3912, %v3806
        %3915 = vrot.lane.b32.xlu0 %v3913, 125
        %v3916 = vpop.permute.xlu0 %3915
        %v3918 = vadd.f32 %v3886, %v3916
        %s3919 = sld [smem:[#allocation9 + $0x63]]
        %v3920 = vstv %s3919
        %v3921 = vmul.f32 %v3920, %v3806
        %3923 = vrot.lane.b32.xlu0 %v3921, 124
        %v3924 = vpop.permute.xlu0 %3923
        %v3926 = vadd.f32 %v3894, %v3924
        %s3927 = sld [smem:[#allocation9 + $0xc7]]
        %v3928 = vstv %s3927
        %v3929 = vmul.f32 %v3928, %v3806
        %3931 = vrot.lane.b32.xlu0 %v3929, 124
        %v3932 = vpop.permute.xlu0 %3931
        %v3934 = vadd.f32 %v3902, %v3932
        %s3935 = sld [smem:[#allocation9 + $0x12b]]
        %v3936 = vstv %s3935
        %v3937 = vmul.f32 %v3936, %v3806
        %3939 = vrot.lane.b32.xlu0 %v3937, 124
        %v3940 = vpop.permute.xlu0 %3939
        %v3942 = vadd.f32 %v3910, %v3940
        %s3943 = sld [smem:[#allocation9 + $0x18f]]
        %v3944 = vstv %s3943
        %v3945 = vmul.f32 %v3944, %v3806
        %3947 = vrot.lane.b32.xlu0 %v3945, 124
        %v3948 = vpop.permute.xlu0 %3947
        %v3950 = vadd.f32 %v3918, %v3948
        %s3951 = sld [smem:[#allocation4]]
        %s3952 = sld [smem:[#allocation10]]
        %v3953 = vstv %s3952
        %v3954 = vadd.f32 %v3926, %v3953
        %vm3955 = vcmp.gt.f32.partialorder %v3954, 0.0
        %v3956 = vstv %s3951
        %v3957 = vmul.f32 %v3956, %v3954
        %v3958 = vsel %vm3955, %v3954, %v3957
        %vm3959 = vcmask 9216
        %3960 = vst.msk [vmem:[%s366] sm:$0x3] %vm3959, %v3958
        %s3961 = sld [smem:[#allocation10 + $0x1]]
        %v3962 = vstv %s3961
        %v3963 = vadd.f32 %v3934, %v3962
        %vm3964 = vcmp.gt.f32.partialorder %v3963, 0.0
        %v3965 = vmul.f32 %v3956, %v3963
        %v3966 = vsel %vm3964, %v3963, %v3965
        %s3967 = scalar_lea.vmem %s366, 2
        %3968 = vst.msk [vmem:[%s3967] sm:$0x3] %vm3959, %v3966
        %s3969 = sld [smem:[#allocation10 + $0x2]]
        %v3970 = vstv %s3969
        %v3971 = vadd.f32 %v3942, %v3970
        %vm3972 = vcmp.gt.f32.partialorder %v3971, 0.0
        %v3973 = vmul.f32 %v3956, %v3971
        %v3974 = vsel %vm3972, %v3971, %v3973
        %s3975 = scalar_lea.vmem %s366, 4
        %3976 = vst.msk [vmem:[%s3975] sm:$0x3] %vm3959, %v3974
        %s3977 = sld [smem:[#allocation10 + $0x3]]
        %v3978 = vstv %s3977
        %v3979 = vadd.f32 %v3950, %v3978
        %vm3980 = vcmp.gt.f32.partialorder %v3979, 0.0
        %v3981 = vmul.f32 %v3956, %v3979
        %v3982 = vsel %vm3980, %v3979, %v3981
        %s3983 = scalar_lea.vmem %s366, 6
        %3984 = vst.msk [vmem:[%s3983] sm:$0x3] %vm3959, %v3982
        %p3985 = scmp.lt.s32.totalorder %s27, 1
        %s3986 = scalar_select %p3985, %s27, 1
        %p3987 = scmp.lt.s32.totalorder %s28, 0
        %s3988 = scalar_select %p3987, %s28, 0
        %s3989 = smul.addr %s3986, 4
        %s3990 = sadd.s32 %s3988, %s3989
        %s3991 = smul.addr %s3990, 2
        %s3992 = scalar_lea.vmem %s7, %s3991
        // Predicated region
        $region65: #{tpu_custom_call.1} parent=47 // pred_check
          %p3993 = pneg %p209
        $region66: #{tpu_custom_call.1} parent=47 // pred_check_branch
          %3995 = sbr.rel (%p3993) target = $region68
        $region67: #{tpu_custom_call.1} parent=47 // pred_region
          _
        $region68: #{tpu_custom_call.1} parent=47 // pred_fallthru
          _
      $region48: #{tpu_custom_call.1} parent=5 // pred_fallthru
        _
      %p3996 = scmp.le.s32.totalorder 2, %s18
      // Predicated region
      $region69: #{tpu_custom_call.1} parent=5 // pred_check
        %p3997 = pneg %p3996
      $region70: #{tpu_custom_call.1} parent=5 // pred_check_branch
        %3999 = sbr.rel (%p3997) target = $region72
      $region71: #{tpu_custom_call.1} parent=5 // pred_region
        %s4000 = ssub.s32 %s18, 2
        // Predicated region
        $region73: #{tpu_custom_call.1} parent=71 // pred_check
          %p4001 = pneg %p215
        $region74: #{tpu_custom_call.1} parent=71 // pred_check_branch
          %4003 = sbr.rel (%p4001) target = $region76
        $region75: #{tpu_custom_call.1} parent=71 // pred_region
          %p4004 = scmp.lt.s32.totalorder %s29, 1
          %s4005 = scalar_select %p4004, %s29, 1
          %p4006 = scmp.lt.s32.totalorder %s30, 0
          %s4007 = scalar_select %p4006, %s30, 0
          %s4008 = smul.addr %s4005, 4
          %s4009 = sadd.s32 %s4007, %s4008
          %s4010 = smul.addr %s4009, 2
          %s4011 = scalar_lea.vmem %s7, %s4010
        $region76: #{tpu_custom_call.1} parent=71 // pred_fallthru
          _
      $region72: #{tpu_custom_call.1} parent=5 // pred_fallthru
        _
    $region6: #{tpu_custom_call.1} parent=1 // loop_footer
      %s22 = sadd.s32 1, %s18
    $region7: #{tpu_custom_call.1} parent=1 // loop_footer_branch
      %17 = sbr.rel target = $region3
    $region8: #{tpu_custom_call.1} parent=1 // loop_exit
      _
    %4012 = vsyncpa [#allocation6], 1
    %s4013 = scalar_lea.sflag [#allocation6], 1
    %4014 = vsyncpa %s4013, 1
    %4015 = vsyncpa [#allocation8], 1
    %4016 = vsyncpa [#allocation11], 1

</llo_original>
